<compile_context>
chip_gen: v6e
topology: v6e:2x2x1
jax: 0.10.0
libtpu: 0.0.40
codegen_flags: <defaults>
</compile_context>

<pallas_src>
import jax
import jax.numpy as jnp
from jax.experimental import pallas as pl
from jax.experimental.pallas import tpu as pltpu

# --- module hyper-parameters (stand-ins for `opt.*`) -------------------------
KERNEL_SIZES = (3, 5, 7)   # opt.kernel_sizes (odd => conv output length == size_data)
KERNEL_NUM = 8             # opt.kernel_num  (Conv1d out_channels)
LINEAR_DIMS = (64, 32, 16, 8, 2)
NUM_BLOCKS = KERNEL_NUM * len(KERNEL_SIZES)     # 24 (kernel-size, channel) pairs
INV_POOL = 1.0 / NUM_BLOCKS                     # fused channel + kernel-size avg


def _round_up(n, m):
    return ((n + m - 1) // m) * m


def cnn_kernel(x_ref, toep_ref, cbias_ref,
               w1_ref, b1_ref, w2_ref, b2_ref, w3_ref, b3_ref,
               w4_ref, b4_ref, w5_ref, b5_ref,
               out_ref):
    x = x_ref[...]                                   # (TB, L) f32
    L = x.shape[1]

    # All 3 kernel sizes x 8 channels of the padded Conv1d in ONE MXU matmul
    # against the banded Toeplitz weights (zero padding baked into the bands).
    y = jnp.dot(x, toep_ref[...],
                preferred_element_type=jnp.float32)  # (TB, 24*L)
    y = jnp.maximum(y + cbias_ref[...], 0.0)         # per-channel bias + ReLU

    # Average over channels and kernel sizes: sum the 24 L-wide column blocks
    # (lane-block aligned when L % 128 == 0) and apply one fused scale.
    total = y[:, 0:L]
    for j in range(1, NUM_BLOCKS):
        total = total + y[:, j * L:(j + 1) * L]
    h = total * INV_POOL
    # TODO(synk): nn.Dropout(0.35) layers are identity here (inference mode).

    # 5-layer ReLU MLP on the MXU (f32 in, f32 accumulate).
    for w_r, b_r in ((w1_ref, b1_ref), (w2_ref, b2_ref), (w3_ref, b3_ref),
                     (w4_ref, b4_ref), (w5_ref, b5_ref)):
        h = jnp.dot(h, w_r[...], preferred_element_type=jnp.float32) + b_r[...]
        h = jnp.maximum(h, 0.0)                      # final ReLU kept: module applies it
    out_ref[...] = h                                 # (TB, 2)


def build_conv_toeplitz(params, size_data):
    """Banded weight matrix (L, 24*L) and bias row (1, 24*L) such that
    relu(x @ T + bias)[:, j*L:(j+1)*L], with j = ks_idx*KERNEL_NUM + c, equals
    the ReLU'd padded Conv1d(1, C, K) output of channel c for kernel size K."""
    L = size_data
    li = jnp.arange(L)[:, None]                      # input position
    lo = jnp.arange(L)[None, :]                      # output position
    blocks, biases = [], []
    for K, cw, cb in zip(KERNEL_SIZES, params["conv_w"], params["conv_b"]):
        pad = K // 2
        k = li - lo + pad                            # tap index, (L, L)
        valid = (k >= 0) & (k < K)                   # off-band => padded-zero input
        kc = jnp.clip(k, 0, K - 1)
        for c in range(KERNEL_NUM):
            blocks.append(jnp.where(valid, cw[c][kc], 0.0))
        biases.append(jnp.repeat(cb, L))             # constant bias per L-wide block
    toep = jnp.concatenate(blocks, axis=1).astype(jnp.float32)        # (L, 24*L)
    bias_row = jnp.concatenate(biases)[None, :].astype(jnp.float32)   # (1, 24*L)
    return toep, bias_row


def class_cnn_forward(x, params, *, batch_tile=256):
    B, L = x.shape
    toep, cbias = build_conv_toeplitz(params, L)
    # Toeplitz grows as 24*L^2*4 bytes (1.5 MiB at L=128); keep it comfortably
    # resident in VMEM on every generation (v7x physical VMEM is 64 MiB).
    assert toep.size * 4 <= 16 * 1024 * 1024, (
        "banded conv weights too large for single-shot VMEM residency; "
        "block the conv matmul along its output columns for this size_data")

    TB = min(_round_up(batch_tile, 8), _round_up(B, 8))   # f32 sublane multiple
    B_pad = _round_up(B, TB)
    if B_pad != B:
        x = jnp.pad(x, ((0, B_pad - B), (0, 0)))     # padded rows are row-independent
    grid = (B_pad // TB,)

    flat_inputs = [x, toep, cbias]
    in_specs = [pl.BlockSpec((TB, L), lambda i: (i, 0)),
                pl.BlockSpec(memory_space=pltpu.MemorySpace.VMEM),   # Toeplitz
                pl.BlockSpec(memory_space=pltpu.MemorySpace.VMEM)]   # conv bias row
    # linear weights / biases -> VMEM (matmul operands, grid-invariant)
    for lw, lb in zip(params["lin_w"], params["lin_b"]):
        flat_inputs += [lw, lb]
        in_specs += [pl.BlockSpec(memory_space=pltpu.MemorySpace.VMEM),
                     pl.BlockSpec(memory_space=pltpu.MemorySpace.VMEM)]

    out = pl.pallas_call(
        cnn_kernel,
        out_shape=jax.ShapeDtypeStruct((B_pad, LINEAR_DIMS[-1]), jnp.float32),
        grid=grid,
        in_specs=in_specs,
        out_specs=pl.BlockSpec((TB, LINEAR_DIMS[-1]), lambda i: (i, 0)),
        compiler_params=pltpu.CompilerParams(
            # Batch tiles shard across v7x's two TensorCores; switch to
            # pltpu.CORE_PARALLEL only if a trace shows a single TC in use.
            dimension_semantics=("parallel",),
            vmem_limit_bytes=32 * 1024 * 1024),       # safe on v7x's 64 MiB VMEM
    )(*flat_inputs)
    return out[:B]


def make_params(key, size_data):
    """Deterministic synthetic parameters matching the nn.Module shapes."""
    keys = jax.random.split(key, 2 * len(KERNEL_SIZES) + 2 * len(LINEAR_DIMS))
    ki = iter(keys)
    conv_w, conv_b = [], []
    for K in KERNEL_SIZES:
        # torch Conv1d(1, C, K): weight (C, 1, K) -> stored as (C, K)
        conv_w.append(0.2 * jax.random.normal(next(ki), (KERNEL_NUM, K), jnp.float32))
        conv_b.append(0.1 * jax.random.normal(next(ki), (KERNEL_NUM,), jnp.float32))
    lin_w, lin_b = [], []
    d_in = size_data
    for d_out in LINEAR_DIMS:
        # torch Linear(d_in, d_out): weight (d_out, d_in) -> stored transposed (d_in, d_out)
        lin_w.append(jax.random.normal(next(ki), (d_in, d_out), jnp.float32)
                     / jnp.sqrt(jnp.float32(d_in)))
        lin_b.append(0.1 * jax.random.normal(next(ki), (1, d_out), jnp.float32))
        d_in = d_out
    return {"conv_w": conv_w, "conv_b": conv_b, "lin_w": lin_w, "lin_b": lin_b}


def reference_forward(x, params):
    """Pure-JAX reference mirroring the PyTorch forward (eval mode)."""
    xs = []
    for K, cw, cb in zip(KERNEL_SIZES, params["conv_w"], params["conv_b"]):
        pad = K // 2
        conv = jax.lax.conv_general_dilated(
            x[:, None, :], cw[:, None, :],
            window_strides=(1,), padding=[(pad, pad)],
            dimension_numbers=("NCH", "OIH", "NCH"))
        conv = conv + cb[None, :, None]
        xs.append(jnp.mean(jax.nn.relu(conv), axis=1))          # avg over channels
    h = jnp.mean(jnp.stack(xs, axis=1), axis=1)                 # avg over kernel sizes
    for w, b in zip(params["lin_w"], params["lin_b"]):
        h = jax.nn.relu(h @ w + b)
    return h


if __name__ == "__main__":
    # B=300 with the default batch_tile=256 gives a 2-tile grid (even count for
    # v7x megacore) and exercises batch padding (300 -> 512).
    B, SIZE_DATA = 300, 128
    key = jax.random.PRNGKey(0)
    kx, kp = jax.random.split(key)
    x = jax.random.normal(kx, (B, SIZE_DATA), jnp.float32)
    params = make_params(kp, SIZE_DATA)

    out = class_cnn_forward(x, params)
    out = jax.block_until_ready(out)

    ref = reference_forward(x, params)
    assert out.shape == (B, 2), out.shape
    assert jnp.allclose(out, ref, atol=1e-4, rtol=1e-4), (out, ref)
    print("KERNEL_OK")
</pallas_src>

<mosaic_0001>
module attributes {stable_mosaic.version = 11 : i64} {
  func.func @cnn_kernel(%arg0: i32, %arg1: memref<256x128xf32, #tpu.memory_space<vmem>>, %arg2: memref<128x3072xf32, #tpu.memory_space<vmem>>, %arg3: memref<1x3072xf32, #tpu.memory_space<vmem>>, %arg4: memref<128x64xf32, #tpu.memory_space<vmem>>, %arg5: memref<1x64xf32, #tpu.memory_space<vmem>>, %arg6: memref<64x32xf32, #tpu.memory_space<vmem>>, %arg7: memref<1x32xf32, #tpu.memory_space<vmem>>, %arg8: memref<32x16xf32, #tpu.memory_space<vmem>>, %arg9: memref<1x16xf32, #tpu.memory_space<vmem>>, %arg10: memref<16x8xf32, #tpu.memory_space<vmem>>, %arg11: memref<1x8xf32, #tpu.memory_space<vmem>>, %arg12: memref<8x2xf32, #tpu.memory_space<vmem>>, %arg13: memref<1x2xf32, #tpu.memory_space<vmem>>, %arg14: memref<256x2xf32, #tpu.memory_space<vmem>>) attributes {dimension_semantics = [#tpu.dimension_semantics<parallel>], iteration_bounds = array<i64: 2>, scalar_prefetch = 0 : i64, scratch_operands = 0 : i64, tpu.core_type = #tpu.core_type<tc>, window_params = [{transform_indices = @transform_0, window_bounds = array<i64: 256, 128>}, {pipeline_mode = #tpu.pipeline_mode<synchronous>, transform_indices = @transform_1, window_bounds = array<i64: 128, 3072>}, {pipeline_mode = #tpu.pipeline_mode<synchronous>, transform_indices = @transform_2, window_bounds = array<i64: 1, 3072>}, {pipeline_mode = #tpu.pipeline_mode<synchronous>, transform_indices = @transform_3, window_bounds = array<i64: 128, 64>}, {pipeline_mode = #tpu.pipeline_mode<synchronous>, transform_indices = @transform_4, window_bounds = array<i64: 1, 64>}, {pipeline_mode = #tpu.pipeline_mode<synchronous>, transform_indices = @transform_5, window_bounds = array<i64: 64, 32>}, {pipeline_mode = #tpu.pipeline_mode<synchronous>, transform_indices = @transform_6, window_bounds = array<i64: 1, 32>}, {pipeline_mode = #tpu.pipeline_mode<synchronous>, transform_indices = @transform_7, window_bounds = array<i64: 32, 16>}, {pipeline_mode = #tpu.pipeline_mode<synchronous>, transform_indices = @transform_8, window_bounds = array<i64: 1, 16>}, {pipeline_mode = #tpu.pipeline_mode<synchronous>, transform_indices = @transform_9, window_bounds = array<i64: 16, 8>}, {pipeline_mode = #tpu.pipeline_mode<synchronous>, transform_indices = @transform_10, window_bounds = array<i64: 1, 8>}, {pipeline_mode = #tpu.pipeline_mode<synchronous>, transform_indices = @transform_11, window_bounds = array<i64: 8, 2>}, {pipeline_mode = #tpu.pipeline_mode<synchronous>, transform_indices = @transform_12, window_bounds = array<i64: 1, 2>}, {transform_indices = @transform_13, window_bounds = array<i64: 256, 2>}]} {
    %c0 = arith.constant 0 : index
    %c0_0 = arith.constant 0 : index
    %0 = vector.load %arg1[%c0, %c0_0] : memref<256x128xf32, #tpu.memory_space<vmem>>, vector<256x128xf32>
    %c0_1 = arith.constant 0 : index
    %c0_2 = arith.constant 0 : index
    %1 = vector.load %arg2[%c0_1, %c0_2] : memref<128x3072xf32, #tpu.memory_space<vmem>>, vector<128x3072xf32>
    %cst = arith.constant dense<0.000000e+00> : vector<256x3072xf32>
    %2 = tpu.matmul %0, %1, %cst {dimension_numbers = #tpu.dot_dimension_numbers<[1], [0], [0], [1], [0, 0, 1, 1], [], []>} : vector<256x128xf32>, vector<128x3072xf32>, vector<256x3072xf32> -> vector<256x3072xf32>
    %c0_3 = arith.constant 0 : index
    %c0_4 = arith.constant 0 : index
    %3 = vector.load %arg3[%c0_3, %c0_4] : memref<1x3072xf32, #tpu.memory_space<vmem>>, vector<1x3072xf32>
    %4 = vector.broadcast %3 : vector<1x3072xf32> to vector<256x3072xf32>
    %5 = arith.addf %2, %4 : vector<256x3072xf32>
    %cst_5 = arith.constant 0.000000e+00 : f32
    %6 = vector.broadcast %cst_5 : f32 to vector<256x3072xf32>
    %7 = arith.maximumf %5, %6 : vector<256x3072xf32>
    %8 = vector.extract_strided_slice %7 {offsets = [0, 0], sizes = [256, 128], strides = [1, 1]} : vector<256x3072xf32> to vector<256x128xf32>
    %9 = vector.extract_strided_slice %7 {offsets = [0, 128], sizes = [256, 128], strides = [1, 1]} : vector<256x3072xf32> to vector<256x128xf32>
    %10 = arith.addf %8, %9 : vector<256x128xf32>
    %11 = vector.extract_strided_slice %7 {offsets = [0, 256], sizes = [256, 128], strides = [1, 1]} : vector<256x3072xf32> to vector<256x128xf32>
    %12 = arith.addf %10, %11 : vector<256x128xf32>
    %13 = vector.extract_strided_slice %7 {offsets = [0, 384], sizes = [256, 128], strides = [1, 1]} : vector<256x3072xf32> to vector<256x128xf32>
    %14 = arith.addf %12, %13 : vector<256x128xf32>
    %15 = vector.extract_strided_slice %7 {offsets = [0, 512], sizes = [256, 128], strides = [1, 1]} : vector<256x3072xf32> to vector<256x128xf32>
    %16 = arith.addf %14, %15 : vector<256x128xf32>
    %17 = vector.extract_strided_slice %7 {offsets = [0, 640], sizes = [256, 128], strides = [1, 1]} : vector<256x3072xf32> to vector<256x128xf32>
    %18 = arith.addf %16, %17 : vector<256x128xf32>
    %19 = vector.extract_strided_slice %7 {offsets = [0, 768], sizes = [256, 128], strides = [1, 1]} : vector<256x3072xf32> to vector<256x128xf32>
    %20 = arith.addf %18, %19 : vector<256x128xf32>
    %21 = vector.extract_strided_slice %7 {offsets = [0, 896], sizes = [256, 128], strides = [1, 1]} : vector<256x3072xf32> to vector<256x128xf32>
    %22 = arith.addf %20, %21 : vector<256x128xf32>
    %23 = vector.extract_strided_slice %7 {offsets = [0, 1024], sizes = [256, 128], strides = [1, 1]} : vector<256x3072xf32> to vector<256x128xf32>
    %24 = arith.addf %22, %23 : vector<256x128xf32>
    %25 = vector.extract_strided_slice %7 {offsets = [0, 1152], sizes = [256, 128], strides = [1, 1]} : vector<256x3072xf32> to vector<256x128xf32>
    %26 = arith.addf %24, %25 : vector<256x128xf32>
    %27 = vector.extract_strided_slice %7 {offsets = [0, 1280], sizes = [256, 128], strides = [1, 1]} : vector<256x3072xf32> to vector<256x128xf32>
    %28 = arith.addf %26, %27 : vector<256x128xf32>
    %29 = vector.extract_strided_slice %7 {offsets = [0, 1408], sizes = [256, 128], strides = [1, 1]} : vector<256x3072xf32> to vector<256x128xf32>
    %30 = arith.addf %28, %29 : vector<256x128xf32>
    %31 = vector.extract_strided_slice %7 {offsets = [0, 1536], sizes = [256, 128], strides = [1, 1]} : vector<256x3072xf32> to vector<256x128xf32>
    %32 = arith.addf %30, %31 : vector<256x128xf32>
    %33 = vector.extract_strided_slice %7 {offsets = [0, 1664], sizes = [256, 128], strides = [1, 1]} : vector<256x3072xf32> to vector<256x128xf32>
    %34 = arith.addf %32, %33 : vector<256x128xf32>
    %35 = vector.extract_strided_slice %7 {offsets = [0, 1792], sizes = [256, 128], strides = [1, 1]} : vector<256x3072xf32> to vector<256x128xf32>
    %36 = arith.addf %34, %35 : vector<256x128xf32>
    %37 = vector.extract_strided_slice %7 {offsets = [0, 1920], sizes = [256, 128], strides = [1, 1]} : vector<256x3072xf32> to vector<256x128xf32>
    %38 = arith.addf %36, %37 : vector<256x128xf32>
    %39 = vector.extract_strided_slice %7 {offsets = [0, 2048], sizes = [256, 128], strides = [1, 1]} : vector<256x3072xf32> to vector<256x128xf32>
    %40 = arith.addf %38, %39 : vector<256x128xf32>
    %41 = vector.extract_strided_slice %7 {offsets = [0, 2176], sizes = [256, 128], strides = [1, 1]} : vector<256x3072xf32> to vector<256x128xf32>
    %42 = arith.addf %40, %41 : vector<256x128xf32>
    %43 = vector.extract_strided_slice %7 {offsets = [0, 2304], sizes = [256, 128], strides = [1, 1]} : vector<256x3072xf32> to vector<256x128xf32>
    %44 = arith.addf %42, %43 : vector<256x128xf32>
    %45 = vector.extract_strided_slice %7 {offsets = [0, 2432], sizes = [256, 128], strides = [1, 1]} : vector<256x3072xf32> to vector<256x128xf32>
    %46 = arith.addf %44, %45 : vector<256x128xf32>
    %47 = vector.extract_strided_slice %7 {offsets = [0, 2560], sizes = [256, 128], strides = [1, 1]} : vector<256x3072xf32> to vector<256x128xf32>
    %48 = arith.addf %46, %47 : vector<256x128xf32>
    %49 = vector.extract_strided_slice %7 {offsets = [0, 2688], sizes = [256, 128], strides = [1, 1]} : vector<256x3072xf32> to vector<256x128xf32>
    %50 = arith.addf %48, %49 : vector<256x128xf32>
    %51 = vector.extract_strided_slice %7 {offsets = [0, 2816], sizes = [256, 128], strides = [1, 1]} : vector<256x3072xf32> to vector<256x128xf32>
    %52 = arith.addf %50, %51 : vector<256x128xf32>
    %53 = vector.extract_strided_slice %7 {offsets = [0, 2944], sizes = [256, 128], strides = [1, 1]} : vector<256x3072xf32> to vector<256x128xf32>
    %54 = arith.addf %52, %53 : vector<256x128xf32>
    %cst_6 = arith.constant 0.0416666679 : f32
    %55 = vector.broadcast %cst_6 : f32 to vector<256x128xf32>
    %56 = arith.mulf %54, %55 : vector<256x128xf32>
    %c0_7 = arith.constant 0 : index
    %c0_8 = arith.constant 0 : index
    %57 = vector.load %arg4[%c0_7, %c0_8] : memref<128x64xf32, #tpu.memory_space<vmem>>, vector<128x64xf32>
    %cst_9 = arith.constant dense<0.000000e+00> : vector<256x64xf32>
    %58 = tpu.matmul %56, %57, %cst_9 {dimension_numbers = #tpu.dot_dimension_numbers<[1], [0], [0], [1], [0, 0, 1, 1], [], []>} : vector<256x128xf32>, vector<128x64xf32>, vector<256x64xf32> -> vector<256x64xf32>
    %c0_10 = arith.constant 0 : index
    %c0_11 = arith.constant 0 : index
    %59 = vector.load %arg5[%c0_10, %c0_11] : memref<1x64xf32, #tpu.memory_space<vmem>>, vector<1x64xf32>
    %60 = vector.broadcast %59 : vector<1x64xf32> to vector<256x64xf32>
    %61 = arith.addf %58, %60 : vector<256x64xf32>
    %cst_12 = arith.constant 0.000000e+00 : f32
    %62 = vector.broadcast %cst_12 : f32 to vector<256x64xf32>
    %63 = arith.maximumf %61, %62 : vector<256x64xf32>
    %c0_13 = arith.constant 0 : index
    %c0_14 = arith.constant 0 : index
    %64 = vector.load %arg6[%c0_13, %c0_14] : memref<64x32xf32, #tpu.memory_space<vmem>>, vector<64x32xf32>
    %cst_15 = arith.constant dense<0.000000e+00> : vector<256x32xf32>
    %65 = tpu.matmul %63, %64, %cst_15 {dimension_numbers = #tpu.dot_dimension_numbers<[1], [0], [0], [1], [0, 0, 1, 1], [], []>} : vector<256x64xf32>, vector<64x32xf32>, vector<256x32xf32> -> vector<256x32xf32>
    %c0_16 = arith.constant 0 : index
    %c0_17 = arith.constant 0 : index
    %66 = vector.load %arg7[%c0_16, %c0_17] : memref<1x32xf32, #tpu.memory_space<vmem>>, vector<1x32xf32>
    %67 = vector.broadcast %66 : vector<1x32xf32> to vector<256x32xf32>
    %68 = arith.addf %65, %67 : vector<256x32xf32>
    %cst_18 = arith.constant 0.000000e+00 : f32
    %69 = vector.broadcast %cst_18 : f32 to vector<256x32xf32>
    %70 = arith.maximumf %68, %69 : vector<256x32xf32>
    %c0_19 = arith.constant 0 : index
    %c0_20 = arith.constant 0 : index
    %71 = vector.load %arg8[%c0_19, %c0_20] : memref<32x16xf32, #tpu.memory_space<vmem>>, vector<32x16xf32>
    %cst_21 = arith.constant dense<0.000000e+00> : vector<256x16xf32>
    %72 = tpu.matmul %70, %71, %cst_21 {dimension_numbers = #tpu.dot_dimension_numbers<[1], [0], [0], [1], [0, 0, 1, 1], [], []>} : vector<256x32xf32>, vector<32x16xf32>, vector<256x16xf32> -> vector<256x16xf32>
    %c0_22 = arith.constant 0 : index
    %c0_23 = arith.constant 0 : index
    %73 = vector.load %arg9[%c0_22, %c0_23] : memref<1x16xf32, #tpu.memory_space<vmem>>, vector<1x16xf32>
    %74 = vector.broadcast %73 : vector<1x16xf32> to vector<256x16xf32>
    %75 = arith.addf %72, %74 : vector<256x16xf32>
    %cst_24 = arith.constant 0.000000e+00 : f32
    %76 = vector.broadcast %cst_24 : f32 to vector<256x16xf32>
    %77 = arith.maximumf %75, %76 : vector<256x16xf32>
    %c0_25 = arith.constant 0 : index
    %c0_26 = arith.constant 0 : index
    %78 = vector.load %arg10[%c0_25, %c0_26] : memref<16x8xf32, #tpu.memory_space<vmem>>, vector<16x8xf32>
    %cst_27 = arith.constant dense<0.000000e+00> : vector<256x8xf32>
    %79 = tpu.matmul %77, %78, %cst_27 {dimension_numbers = #tpu.dot_dimension_numbers<[1], [0], [0], [1], [0, 0, 1, 1], [], []>} : vector<256x16xf32>, vector<16x8xf32>, vector<256x8xf32> -> vector<256x8xf32>
    %c0_28 = arith.constant 0 : index
    %c0_29 = arith.constant 0 : index
    %80 = vector.load %arg11[%c0_28, %c0_29] : memref<1x8xf32, #tpu.memory_space<vmem>>, vector<1x8xf32>
    %81 = vector.broadcast %80 : vector<1x8xf32> to vector<256x8xf32>
    %82 = arith.addf %79, %81 : vector<256x8xf32>
    %cst_30 = arith.constant 0.000000e+00 : f32
    %83 = vector.broadcast %cst_30 : f32 to vector<256x8xf32>
    %84 = arith.maximumf %82, %83 : vector<256x8xf32>
    %c0_31 = arith.constant 0 : index
    %c0_32 = arith.constant 0 : index
    %85 = vector.load %arg12[%c0_31, %c0_32] : memref<8x2xf32, #tpu.memory_space<vmem>>, vector<8x2xf32>
    %cst_33 = arith.constant dense<0.000000e+00> : vector<256x2xf32>
    %86 = tpu.matmul %84, %85, %cst_33 {dimension_numbers = #tpu.dot_dimension_numbers<[1], [0], [0], [1], [0, 0, 1, 1], [], []>} : vector<256x8xf32>, vector<8x2xf32>, vector<256x2xf32> -> vector<256x2xf32>
    %c0_34 = arith.constant 0 : index
    %c0_35 = arith.constant 0 : index
    %87 = vector.load %arg13[%c0_34, %c0_35] : memref<1x2xf32, #tpu.memory_space<vmem>>, vector<1x2xf32>
    %88 = vector.broadcast %87 : vector<1x2xf32> to vector<256x2xf32>
    %89 = arith.addf %86, %88 : vector<256x2xf32>
    %cst_36 = arith.constant 0.000000e+00 : f32
    %90 = vector.broadcast %cst_36 : f32 to vector<256x2xf32>
    %91 = arith.maximumf %89, %90 : vector<256x2xf32>
    %c0_37 = arith.constant 0 : index
    %c0_38 = arith.constant 0 : index
    %92 = vector.load %arg14[%c0_37, %c0_38] : memref<256x2xf32, #tpu.memory_space<vmem>>, vector<256x2xf32>
    tpu.vector_store %arg14[%c0_37, %c0_38], %91 {strides = array<i32>} : memref<256x2xf32, #tpu.memory_space<vmem>>, vector<256x2xf32>,
    return
  }
  func.func @transform_0(%arg0: i32) -> (i32, i32) {
    %c0_i32 = arith.constant 0 : i32
    %c0_i32_0 = arith.constant 0 : i32
    return %arg0, %c0_i32 : i32, i32
  }
  func.func @transform_1(%arg0: i32) -> (i32, i32) {
    %c0_i32 = arith.constant 0 : i32
    %c0_i32_0 = arith.constant 0 : i32
    %c0_i32_1 = arith.constant 0 : i32
    return %c0_i32, %c0_i32_0 : i32, i32
  }
  func.func @transform_2(%arg0: i32) -> (i32, i32) {
    %c0_i32 = arith.constant 0 : i32
    %c0_i32_0 = arith.constant 0 : i32
    %c0_i32_1 = arith.constant 0 : i32
    return %c0_i32, %c0_i32_0 : i32, i32
  }
  func.func @transform_3(%arg0: i32) -> (i32, i32) {
    %c0_i32 = arith.constant 0 : i32
    %c0_i32_0 = arith.constant 0 : i32
    %c0_i32_1 = arith.constant 0 : i32
    return %c0_i32, %c0_i32_0 : i32, i32
  }
  func.func @transform_4(%arg0: i32) -> (i32, i32) {
    %c0_i32 = arith.constant 0 : i32
    %c0_i32_0 = arith.constant 0 : i32
    %c0_i32_1 = arith.constant 0 : i32
    return %c0_i32, %c0_i32_0 : i32, i32
  }
  func.func @transform_5(%arg0: i32) -> (i32, i32) {
    %c0_i32 = arith.constant 0 : i32
    %c0_i32_0 = arith.constant 0 : i32
    %c0_i32_1 = arith.constant 0 : i32
    return %c0_i32, %c0_i32_0 : i32, i32
  }
  func.func @transform_6(%arg0: i32) -> (i32, i32) {
    %c0_i32 = arith.constant 0 : i32
    %c0_i32_0 = arith.constant 0 : i32
    %c0_i32_1 = arith.constant 0 : i32
    return %c0_i32, %c0_i32_0 : i32, i32
  }
  func.func @transform_7(%arg0: i32) -> (i32, i32) {
    %c0_i32 = arith.constant 0 : i32
    %c0_i32_0 = arith.constant 0 : i32
    %c0_i32_1 = arith.constant 0 : i32
    return %c0_i32, %c0_i32_0 : i32, i32
  }
  func.func @transform_8(%arg0: i32) -> (i32, i32) {
    %c0_i32 = arith.constant 0 : i32
    %c0_i32_0 = arith.constant 0 : i32
    %c0_i32_1 = arith.constant 0 : i32
    return %c0_i32, %c0_i32_0 : i32, i32
  }
  func.func @transform_9(%arg0: i32) -> (i32, i32) {
    %c0_i32 = arith.constant 0 : i32
    %c0_i32_0 = arith.constant 0 : i32
    %c0_i32_1 = arith.constant 0 : i32
    return %c0_i32, %c0_i32_0 : i32, i32
  }
  func.func @transform_10(%arg0: i32) -> (i32, i32) {
    %c0_i32 = arith.constant 0 : i32
    %c0_i32_0 = arith.constant 0 : i32
    %c0_i32_1 = arith.constant 0 : i32
    return %c0_i32, %c0_i32_0 : i32, i32
  }
  func.func @transform_11(%arg0: i32) -> (i32, i32) {
    %c0_i32 = arith.constant 0 : i32
    %c0_i32_0 = arith.constant 0 : i32
    %c0_i32_1 = arith.constant 0 : i32
    return %c0_i32, %c0_i32_0 : i32, i32
  }
  func.func @transform_12(%arg0: i32) -> (i32, i32) {
    %c0_i32 = arith.constant 0 : i32
    %c0_i32_0 = arith.constant 0 : i32
    %c0_i32_1 = arith.constant 0 : i32
    return %c0_i32, %c0_i32_0 : i32, i32
  }
  func.func @transform_13(%arg0: i32) -> (i32, i32) {
    %c0_i32 = arith.constant 0 : i32
    %c0_i32_0 = arith.constant 0 : i32
    return %arg0, %c0_i32 : i32, i32
  }
}

</mosaic_0001>

<llo_original>
// kernel: tpu_custom_call.1
$region0: #{tpu_custom_call.1}
  #allocation0 [shape = 'u32[]', space=smem, size = 0x4, offset = 0x4, fixed_abs, tag = 'smem constant byte address 0x4 - core index']
  #allocation1 [shape = 'u32[144,128]{1,0:T(1,128)}', space=vmem, size = 0x12000, scoped, tag = 'internal scratch']
  %s0 = inlined_call_operand.hbm [shape: f32[512,128], index: 0, kind: input, shape index: {}]
  %s1 = inlined_call_operand.hbm [shape: f32[128,3072], index: 1, kind: input, shape index: {}]
  %s2 = inlined_call_operand.hbm [shape: f32[1,3072], index: 2, kind: input, shape index: {}]
  %s3 = inlined_call_operand.vmem [shape: f32[128,64], index: 3, kind: input, shape index: {}]
  %s4 = inlined_call_operand.hbm [shape: f32[1,64], index: 4, kind: input, shape index: {}]
  %s5 = inlined_call_operand.vmem [shape: f32[64,32], index: 5, kind: input, shape index: {}]
  %s6 = inlined_call_operand.hbm [shape: f32[1,32], index: 6, kind: input, shape index: {}]
  %s7 = inlined_call_operand.vmem [shape: f32[32,16], index: 7, kind: input, shape index: {}]
  %s8 = inlined_call_operand.hbm [shape: f32[1,16], index: 8, kind: input, shape index: {}]
  %s9 = inlined_call_operand.vmem [shape: f32[16,8], index: 9, kind: input, shape index: {}]
  %s10 = inlined_call_operand.hbm [shape: f32[1,8], index: 10, kind: input, shape index: {}]
  %s11 = inlined_call_operand.vmem [shape: f32[8,2], index: 11, kind: input, shape index: {}]
  %s12 = inlined_call_operand.hbm [shape: f32[1,2], index: 12, kind: input, shape index: {}]
  %s13 = inlined_call_operand.vmem [shape: f32[512,2], index: 13, kind: output, shape index: {}]
  %s14 = sld [smem:[#allocation0]]
  $region117: #{tpu_custom_call.1} parent=0
    _
  %s16 = ssub.s32 1, %s14
  %s17 = scalar_select 0, %s16, %s14
  $region1: #{tpu_custom_call.1} parent=0
    #allocation2 [shape = 'u8[262144]{0}', space=vmem, size = 0x40000, scoped, tag = 'input window, operand 0']
    #allocation3 [shape = 's32[2]{0}', space=sflag, size = 0x8, scoped, tag = 'scoped memory for tpu_custom_call.1']
    #allocation4 [shape = 'u8[1572864]{0}', space=vmem, size = 0x180000, scoped, tag = 'input window, operand 1, single buffered']
    #allocation5 [shape = 's32[1]{0}', space=sflag, size = 0x4, scoped, tag = 'scoped memory for tpu_custom_call.1']
    #allocation6 [shape = 'u8[12288]{0}', space=vmem, size = 0x3000, scoped, tag = 'input window, operand 2, single buffered']
    #allocation7 [shape = 'u8[512]{0}', space=vmem, size = 0x400, scoped, tag = 'input window, operand 4, single buffered']
    #allocation8 [shape = 's32[1]{0}', space=sflag, size = 0x4, scoped, tag = 'scoped memory for tpu_custom_call.1']
    #allocation9 [shape = 'u8[512]{0}', space=vmem, size = 0x400, scoped, tag = 'input window, operand 6, single buffered']
    #allocation10 [shape = 'u8[512]{0}', space=vmem, size = 0x400, scoped, tag = 'input window, operand 8, single buffered']
    #allocation11 [shape = 's32[1]{0}', space=sflag, size = 0x4, scoped, tag = 'scoped memory for tpu_custom_call.1']
    #allocation12 [shape = 'u8[512]{0}', space=vmem, size = 0x400, scoped, tag = 'input window, operand 10, single buffered']
    #allocation13 [shape = 'u8[512]{0}', space=vmem, size = 0x400, scoped, tag = 'input window, operand 12, single buffered']
    #allocation14 [shape = 's32[1]{0}', space=sflag, size = 0x4, scoped, tag = 'scoped memory for tpu_custom_call.1']
    %18 = vsyncpa [#allocation3], 0
    %s19 = scalar_lea.sflag [#allocation3], 1
    %20 = vsyncpa %s19, 0
    %21 = vsyncpa [#allocation5], 0
    %22 = vsyncpa [#allocation8], 0
    %23 = vsyncpa [#allocation11], 0
    %24 = vsyncpa [#allocation14], 0
    loop: start=0, step=1, limit=4
    $region2: #{tpu_custom_call.1} parent=1 // loop_pre_header
      _
    $region3: #{tpu_custom_call.1} parent=1 // loop_header
      %s26 = sphi 0, %s30
      %p27 = scmp.ge.s32.totalorder %s26, 4
      %s36 = sphi 0, %s38
      %s39 = sphi 0, %s36
      %s40 = sphi 0, %s39
      %s56 = sphi 0, %s40
      %s60 = sphi 0, %s60
      %s62 = sphi 0, %s60
      %s63 = sphi 0, %s62
      %s77 = sphi 0, %s63
      %s81 = sphi 0, %s81
      %s83 = sphi 0, %s81
      %s84 = sphi 0, %s83
      %s98 = sphi 0, %s84
      %s102 = sphi 0, %s102
      %s104 = sphi 0, %s102
      %s105 = sphi 0, %s104
      %s119 = sphi 0, %s105
      %s123 = sphi 0, %s123
      %s125 = sphi 0, %s123
      %s126 = sphi 0, %s125
      %s140 = sphi 0, %s126
      %s144 = sphi 0, %s144
      %s146 = sphi 0, %s144
      %s147 = sphi 0, %s146
      %s161 = sphi 0, %s147
      %s165 = sphi 0, %s165
      %s167 = sphi 0, %s165
      %s168 = sphi 0, %s167
      %s182 = sphi 0, %s168
      %s186 = sphi 0, %s186
      %s188 = sphi 0, %s186
      %s189 = sphi 0, %s188
      %s203 = sphi 0, %s189
      %s207 = sphi 0, %s207
      %s209 = sphi 0, %s207
      %s210 = sphi 0, %s209
      %s224 = sphi 0, %s210
      %s228 = sphi 0, %s228
      %s230 = sphi 0, %s228
      %s231 = sphi 0, %s230
      %s245 = sphi 0, %s231
      %s249 = sphi 0, %s249
      %s251 = sphi 0, %s249
      %s252 = sphi 0, %s251
      %s266 = sphi 0, %s252
      %s270 = sphi 0, %s270
      %s272 = sphi 0, %s270
      %s273 = sphi 0, %s272
      %s287 = sphi 0, %s273
      %s291 = sphi 0, %s291
      %s293 = sphi 0, %s291
      %s294 = sphi 0, %s293
      %s308 = sphi 0, %s294
      %s314 = sphi 0, %s316
      %s317 = sphi 0, %s314
      %s318 = sphi 0, %s317
      %s334 = sphi 0, %s318
    $region4: #{tpu_custom_call.1} parent=1 // loop_header_branch
      %29 = sbr.rel (%p27) target = $region8
    $region5: #{tpu_custom_call.1} parent=1 // loop_body
      %s31 = ssub.s32 %s26, 1
      %s32 = ssub.s32 %s26, 2
      %s33 = sadd.s32 %s26, 1
      %s34 = ssub.s32 %s26, %s33
      %p35 = scmp.eq.s32.totalorder %s34, 0
      %s37 = sadd.s32 %s36, 1
      %s38 = scalar_select %p35, %s36, %s37
      %p41 = pneg %p35
      %p42 = scmp.eq.s32.totalorder %s26, 1
      %p43 = por %p41, %p42
      %p44 = scmp.ne.s32.totalorder %s36, %s39
      %p45 = scmp.eq.s32.totalorder %s26, 0
      %p46 = por %p44, %p45
      %p47 = scmp.ne.s32.totalorder %s36, %s39
      %p48 = scmp.eq.s32.totalorder %s31, 1
      %p49 = por %p47, %p48
      %p50 = scmp.ne.s32.totalorder %s39, %s40
      %p51 = scmp.eq.s32.totalorder %s31, 0
      %p52 = por %p50, %p51
      %p53 = scmp.ne.s32.totalorder %s39, %s40
      %p54 = scmp.eq.s32.totalorder %s32, 1
      %p55 = por %p53, %p54
      %p57 = scmp.ne.s32.totalorder %s40, %s56
      %p58 = scmp.eq.s32.totalorder %s32, 0
      %p59 = por %p57, %p58
      %s61 = sadd.s32 %s60, 1
      %p64 = scmp.eq.s32.totalorder %s26, 1
      %p65 = scmp.ne.s32.totalorder %s60, %s62
      %p66 = scmp.eq.s32.totalorder %s26, 0
      %p67 = por %p65, %p66
      %p68 = scmp.ne.s32.totalorder %s60, %s62
      %p69 = scmp.eq.s32.totalorder %s31, 1
      %p70 = por %p68, %p69
      %p71 = scmp.ne.s32.totalorder %s62, %s63
      %p72 = scmp.eq.s32.totalorder %s31, 0
      %p73 = por %p71, %p72
      %p74 = scmp.ne.s32.totalorder %s62, %s63
      %p75 = scmp.eq.s32.totalorder %s32, 1
      %p76 = por %p74, %p75
      %p78 = scmp.ne.s32.totalorder %s63, %s77
      %p79 = scmp.eq.s32.totalorder %s32, 0
      %p80 = por %p78, %p79
      %s82 = sadd.s32 %s81, 1
      %p85 = scmp.eq.s32.totalorder %s26, 1
      %p86 = scmp.ne.s32.totalorder %s81, %s83
      %p87 = scmp.eq.s32.totalorder %s26, 0
      %p88 = por %p86, %p87
      %p89 = scmp.ne.s32.totalorder %s81, %s83
      %p90 = scmp.eq.s32.totalorder %s31, 1
      %p91 = por %p89, %p90
      %p92 = scmp.ne.s32.totalorder %s83, %s84
      %p93 = scmp.eq.s32.totalorder %s31, 0
      %p94 = por %p92, %p93
      %p95 = scmp.ne.s32.totalorder %s83, %s84
      %p96 = scmp.eq.s32.totalorder %s32, 1
      %p97 = por %p95, %p96
      %p99 = scmp.ne.s32.totalorder %s84, %s98
      %p100 = scmp.eq.s32.totalorder %s32, 0
      %p101 = por %p99, %p100
      %s103 = sadd.s32 %s102, 1
      %p106 = scmp.eq.s32.totalorder %s26, 1
      %p107 = scmp.ne.s32.totalorder %s102, %s104
      %p108 = scmp.eq.s32.totalorder %s26, 0
      %p109 = por %p107, %p108
      %p110 = scmp.ne.s32.totalorder %s102, %s104
      %p111 = scmp.eq.s32.totalorder %s31, 1
      %p112 = por %p110, %p111
      %p113 = scmp.ne.s32.totalorder %s104, %s105
      %p114 = scmp.eq.s32.totalorder %s31, 0
      %p115 = por %p113, %p114
      %p116 = scmp.ne.s32.totalorder %s104, %s105
      %p117 = scmp.eq.s32.totalorder %s32, 1
      %p118 = por %p116, %p117
      %p120 = scmp.ne.s32.totalorder %s105, %s119
      %p121 = scmp.eq.s32.totalorder %s32, 0
      %p122 = por %p120, %p121
      %s124 = sadd.s32 %s123, 1
      %p127 = scmp.eq.s32.totalorder %s26, 1
      %p128 = scmp.ne.s32.totalorder %s123, %s125
      %p129 = scmp.eq.s32.totalorder %s26, 0
      %p130 = por %p128, %p129
      %p131 = scmp.ne.s32.totalorder %s123, %s125
      %p132 = scmp.eq.s32.totalorder %s31, 1
      %p133 = por %p131, %p132
      %p134 = scmp.ne.s32.totalorder %s125, %s126
      %p135 = scmp.eq.s32.totalorder %s31, 0
      %p136 = por %p134, %p135
      %p137 = scmp.ne.s32.totalorder %s125, %s126
      %p138 = scmp.eq.s32.totalorder %s32, 1
      %p139 = por %p137, %p138
      %p141 = scmp.ne.s32.totalorder %s126, %s140
      %p142 = scmp.eq.s32.totalorder %s32, 0
      %p143 = por %p141, %p142
      %s145 = sadd.s32 %s144, 1
      %p148 = scmp.eq.s32.totalorder %s26, 1
      %p149 = scmp.ne.s32.totalorder %s144, %s146
      %p150 = scmp.eq.s32.totalorder %s26, 0
      %p151 = por %p149, %p150
      %p152 = scmp.ne.s32.totalorder %s144, %s146
      %p153 = scmp.eq.s32.totalorder %s31, 1
      %p154 = por %p152, %p153
      %p155 = scmp.ne.s32.totalorder %s146, %s147
      %p156 = scmp.eq.s32.totalorder %s31, 0
      %p157 = por %p155, %p156
      %p158 = scmp.ne.s32.totalorder %s146, %s147
      %p159 = scmp.eq.s32.totalorder %s32, 1
      %p160 = por %p158, %p159
      %p162 = scmp.ne.s32.totalorder %s147, %s161
      %p163 = scmp.eq.s32.totalorder %s32, 0
      %p164 = por %p162, %p163
      %s166 = sadd.s32 %s165, 1
      %p169 = scmp.eq.s32.totalorder %s26, 1
      %p170 = scmp.ne.s32.totalorder %s165, %s167
      %p171 = scmp.eq.s32.totalorder %s26, 0
      %p172 = por %p170, %p171
      %p173 = scmp.ne.s32.totalorder %s165, %s167
      %p174 = scmp.eq.s32.totalorder %s31, 1
      %p175 = por %p173, %p174
      %p176 = scmp.ne.s32.totalorder %s167, %s168
      %p177 = scmp.eq.s32.totalorder %s31, 0
      %p178 = por %p176, %p177
      %p179 = scmp.ne.s32.totalorder %s167, %s168
      %p180 = scmp.eq.s32.totalorder %s32, 1
      %p181 = por %p179, %p180
      %p183 = scmp.ne.s32.totalorder %s168, %s182
      %p184 = scmp.eq.s32.totalorder %s32, 0
      %p185 = por %p183, %p184
      %s187 = sadd.s32 %s186, 1
      %p190 = scmp.eq.s32.totalorder %s26, 1
      %p191 = scmp.ne.s32.totalorder %s186, %s188
      %p192 = scmp.eq.s32.totalorder %s26, 0
      %p193 = por %p191, %p192
      %p194 = scmp.ne.s32.totalorder %s186, %s188
      %p195 = scmp.eq.s32.totalorder %s31, 1
      %p196 = por %p194, %p195
      %p197 = scmp.ne.s32.totalorder %s188, %s189
      %p198 = scmp.eq.s32.totalorder %s31, 0
      %p199 = por %p197, %p198
      %p200 = scmp.ne.s32.totalorder %s188, %s189
      %p201 = scmp.eq.s32.totalorder %s32, 1
      %p202 = por %p200, %p201
      %p204 = scmp.ne.s32.totalorder %s189, %s203
      %p205 = scmp.eq.s32.totalorder %s32, 0
      %p206 = por %p204, %p205
      %s208 = sadd.s32 %s207, 1
      %p211 = scmp.eq.s32.totalorder %s26, 1
      %p212 = scmp.ne.s32.totalorder %s207, %s209
      %p213 = scmp.eq.s32.totalorder %s26, 0
      %p214 = por %p212, %p213
      %p215 = scmp.ne.s32.totalorder %s207, %s209
      %p216 = scmp.eq.s32.totalorder %s31, 1
      %p217 = por %p215, %p216
      %p218 = scmp.ne.s32.totalorder %s209, %s210
      %p219 = scmp.eq.s32.totalorder %s31, 0
      %p220 = por %p218, %p219
      %p221 = scmp.ne.s32.totalorder %s209, %s210
      %p222 = scmp.eq.s32.totalorder %s32, 1
      %p223 = por %p221, %p222
      %p225 = scmp.ne.s32.totalorder %s210, %s224
      %p226 = scmp.eq.s32.totalorder %s32, 0
      %p227 = por %p225, %p226
      %s229 = sadd.s32 %s228, 1
      %p232 = scmp.eq.s32.totalorder %s26, 1
      %p233 = scmp.ne.s32.totalorder %s228, %s230
      %p234 = scmp.eq.s32.totalorder %s26, 0
      %p235 = por %p233, %p234
      %p236 = scmp.ne.s32.totalorder %s228, %s230
      %p237 = scmp.eq.s32.totalorder %s31, 1
      %p238 = por %p236, %p237
      %p239 = scmp.ne.s32.totalorder %s230, %s231
      %p240 = scmp.eq.s32.totalorder %s31, 0
      %p241 = por %p239, %p240
      %p242 = scmp.ne.s32.totalorder %s230, %s231
      %p243 = scmp.eq.s32.totalorder %s32, 1
      %p244 = por %p242, %p243
      %p246 = scmp.ne.s32.totalorder %s231, %s245
      %p247 = scmp.eq.s32.totalorder %s32, 0
      %p248 = por %p246, %p247
      %s250 = sadd.s32 %s249, 1
      %p253 = scmp.eq.s32.totalorder %s26, 1
      %p254 = scmp.ne.s32.totalorder %s249, %s251
      %p255 = scmp.eq.s32.totalorder %s26, 0
      %p256 = por %p254, %p255
      %p257 = scmp.ne.s32.totalorder %s249, %s251
      %p258 = scmp.eq.s32.totalorder %s31, 1
      %p259 = por %p257, %p258
      %p260 = scmp.ne.s32.totalorder %s251, %s252
      %p261 = scmp.eq.s32.totalorder %s31, 0
      %p262 = por %p260, %p261
      %p263 = scmp.ne.s32.totalorder %s251, %s252
      %p264 = scmp.eq.s32.totalorder %s32, 1
      %p265 = por %p263, %p264
      %p267 = scmp.ne.s32.totalorder %s252, %s266
      %p268 = scmp.eq.s32.totalorder %s32, 0
      %p269 = por %p267, %p268
      %s271 = sadd.s32 %s270, 1
      %p274 = scmp.eq.s32.totalorder %s26, 1
      %p275 = scmp.ne.s32.totalorder %s270, %s272
      %p276 = scmp.eq.s32.totalorder %s26, 0
      %p277 = por %p275, %p276
      %p278 = scmp.ne.s32.totalorder %s270, %s272
      %p279 = scmp.eq.s32.totalorder %s31, 1
      %p280 = por %p278, %p279
      %p281 = scmp.ne.s32.totalorder %s272, %s273
      %p282 = scmp.eq.s32.totalorder %s31, 0
      %p283 = por %p281, %p282
      %p284 = scmp.ne.s32.totalorder %s272, %s273
      %p285 = scmp.eq.s32.totalorder %s32, 1
      %p286 = por %p284, %p285
      %p288 = scmp.ne.s32.totalorder %s273, %s287
      %p289 = scmp.eq.s32.totalorder %s32, 0
      %p290 = por %p288, %p289
      %s292 = sadd.s32 %s291, 1
      %p295 = scmp.eq.s32.totalorder %s26, 1
      %p296 = scmp.ne.s32.totalorder %s291, %s293
      %p297 = scmp.eq.s32.totalorder %s26, 0
      %p298 = por %p296, %p297
      %p299 = scmp.ne.s32.totalorder %s291, %s293
      %p300 = scmp.eq.s32.totalorder %s31, 1
      %p301 = por %p299, %p300
      %p302 = scmp.ne.s32.totalorder %s293, %s294
      %p303 = scmp.eq.s32.totalorder %s31, 0
      %p304 = por %p302, %p303
      %p305 = scmp.ne.s32.totalorder %s293, %s294
      %p306 = scmp.eq.s32.totalorder %s32, 1
      %p307 = por %p305, %p306
      %p309 = scmp.ne.s32.totalorder %s294, %s308
      %p310 = scmp.eq.s32.totalorder %s32, 0
      %p311 = por %p309, %p310
      %s312 = ssub.s32 %s26, %s33
      %p313 = scmp.eq.s32.totalorder %s312, 0
      %s315 = sadd.s32 %s314, 1
      %s316 = scalar_select %p313, %s314, %s315
      %p319 = pneg %p313
      %p320 = scmp.eq.s32.totalorder %s26, 1
      %p321 = por %p319, %p320
      %p322 = scmp.ne.s32.totalorder %s314, %s317
      %p323 = scmp.eq.s32.totalorder %s26, 0
      %p324 = por %p322, %p323
      %p325 = scmp.ne.s32.totalorder %s314, %s317
      %p326 = scmp.eq.s32.totalorder %s31, 1
      %p327 = por %p325, %p326
      %p328 = scmp.ne.s32.totalorder %s317, %s318
      %p329 = scmp.eq.s32.totalorder %s31, 0
      %p330 = por %p328, %p329
      %p331 = scmp.ne.s32.totalorder %s317, %s318
      %p332 = scmp.eq.s32.totalorder %s32, 1
      %p333 = por %p331, %p332
      %p335 = scmp.ne.s32.totalorder %s318, %s334
      %p336 = scmp.eq.s32.totalorder %s32, 0
      %p337 = por %p335, %p336
      %p338 = scmp.le.s32.totalorder 1, %s26
      %p339 = scmp.lt.s32.totalorder %s26, 3
      %p340 = pnand %p338, %p339
      %p341 = pneg %p340
      // Predicated region
      $region9: #{tpu_custom_call.1} parent=5 // pred_check
        _
      $region10: #{tpu_custom_call.1} parent=5 // pred_check_branch
        %343 = sbr.rel (%p340) target = $region12
      $region11: #{tpu_custom_call.1} parent=5 // pred_region
        %s344 = ssub.s32 %s26, 1
        // Predicated region
        $region13: #{tpu_custom_call.1} parent=11 // pred_check
          %p345 = pneg %p73
        $region14: #{tpu_custom_call.1} parent=11 // pred_check_branch
          %347 = sbr.rel (%p345) target = $region16
        $region15: #{tpu_custom_call.1} parent=11 // pred_region
          %s349 = ssub.s32 49152, 49152
          %350 = vsyncadd [#allocation5], %s349
          %s351 = sshll.u32 [#allocation4], 4
          %s352 = int_to_ptr.vmem [resolvable:$true] %s351
          %357 = dma.hbm_to_vmem [thread:$0]  %s1, 49152, %s352, [#allocation5], 3072, 3072, 192
        $region16: #{tpu_custom_call.1} parent=11 // pred_fallthru
          _
        // Predicated region
        $region17: #{tpu_custom_call.1} parent=11 // pred_check
          %p358 = pneg %p94
        $region18: #{tpu_custom_call.1} parent=11 // pred_check_branch
          %360 = sbr.rel (%p358) target = $region20
        $region19: #{tpu_custom_call.1} parent=11 // pred_region
          %s362 = ssub.s32 384, 384
          %363 = vsyncadd [#allocation5], %s362
          %s365 = sshll.u32 [#allocation6], 4
          %s366 = int_to_ptr.vmem [resolvable:$true] %s365
          %368 = dma.hbm_to_vmem [thread:$0]  %s2, 384, %s366, [#allocation5]
        $region20: #{tpu_custom_call.1} parent=11 // pred_fallthru
          _
        // Predicated region
        $region21: #{tpu_custom_call.1} parent=11 // pred_check
          %p369 = pneg %p115
        $region22: #{tpu_custom_call.1} parent=11 // pred_check_branch
          %371 = sbr.rel (%p369) target = $region24
        $region23: #{tpu_custom_call.1} parent=11 // pred_region
          _
        $region24: #{tpu_custom_call.1} parent=11 // pred_fallthru
          _
        // Predicated region
        $region25: #{tpu_custom_call.1} parent=11 // pred_check
          %p372 = pneg %p136
        $region26: #{tpu_custom_call.1} parent=11 // pred_check_branch
          %374 = sbr.rel (%p372) target = $region28
        $region27: #{tpu_custom_call.1} parent=11 // pred_region
          %s376 = ssub.s32 16, 16
          %377 = vsyncadd [#allocation8], %s376
          %s379 = sshll.u32 [#allocation7], 4
          %s380 = int_to_ptr.vmem [resolvable:$true] %s379
          %382 = dma.hbm_to_vmem [thread:$0]  %s4, 16, %s380, [#allocation8]
        $region28: #{tpu_custom_call.1} parent=11 // pred_fallthru
          _
        // Predicated region
        $region29: #{tpu_custom_call.1} parent=11 // pred_check
          %p383 = pneg %p157
        $region30: #{tpu_custom_call.1} parent=11 // pred_check_branch
          %385 = sbr.rel (%p383) target = $region32
        $region31: #{tpu_custom_call.1} parent=11 // pred_region
          _
        $region32: #{tpu_custom_call.1} parent=11 // pred_fallthru
          _
        // Predicated region
        $region33: #{tpu_custom_call.1} parent=11 // pred_check
          %p386 = pneg %p178
        $region34: #{tpu_custom_call.1} parent=11 // pred_check_branch
          %388 = sbr.rel (%p386) target = $region36
        $region35: #{tpu_custom_call.1} parent=11 // pred_region
          %s390 = ssub.s32 16, 16
          %391 = vsyncadd [#allocation8], %s390
          %s393 = sshll.u32 [#allocation9], 4
          %s394 = int_to_ptr.vmem [resolvable:$true] %s393
          %396 = dma.hbm_to_vmem [thread:$0]  %s6, 16, %s394, [#allocation8]
        $region36: #{tpu_custom_call.1} parent=11 // pred_fallthru
          _
        // Predicated region
        $region37: #{tpu_custom_call.1} parent=11 // pred_check
          %p397 = pneg %p199
        $region38: #{tpu_custom_call.1} parent=11 // pred_check_branch
          %399 = sbr.rel (%p397) target = $region40
        $region39: #{tpu_custom_call.1} parent=11 // pred_region
          _
        $region40: #{tpu_custom_call.1} parent=11 // pred_fallthru
          _
        // Predicated region
        $region41: #{tpu_custom_call.1} parent=11 // pred_check
          %p400 = pneg %p220
        $region42: #{tpu_custom_call.1} parent=11 // pred_check_branch
          %402 = sbr.rel (%p400) target = $region44
        $region43: #{tpu_custom_call.1} parent=11 // pred_region
          %s404 = ssub.s32 16, 16
          %405 = vsyncadd [#allocation11], %s404
          %s407 = sshll.u32 [#allocation10], 4
          %s408 = int_to_ptr.vmem [resolvable:$true] %s407
          %410 = dma.hbm_to_vmem [thread:$0]  %s8, 16, %s408, [#allocation11]
        $region44: #{tpu_custom_call.1} parent=11 // pred_fallthru
          _
        // Predicated region
        $region45: #{tpu_custom_call.1} parent=11 // pred_check
          %p411 = pneg %p241
        $region46: #{tpu_custom_call.1} parent=11 // pred_check_branch
          %413 = sbr.rel (%p411) target = $region48
        $region47: #{tpu_custom_call.1} parent=11 // pred_region
          _
        $region48: #{tpu_custom_call.1} parent=11 // pred_fallthru
          _
        // Predicated region
        $region49: #{tpu_custom_call.1} parent=11 // pred_check
          %p414 = pneg %p262
        $region50: #{tpu_custom_call.1} parent=11 // pred_check_branch
          %416 = sbr.rel (%p414) target = $region52
        $region51: #{tpu_custom_call.1} parent=11 // pred_region
          %s418 = ssub.s32 16, 16
          %419 = vsyncadd [#allocation11], %s418
          %s421 = sshll.u32 [#allocation12], 4
          %s422 = int_to_ptr.vmem [resolvable:$true] %s421
          %424 = dma.hbm_to_vmem [thread:$0]  %s10, 16, %s422, [#allocation11]
        $region52: #{tpu_custom_call.1} parent=11 // pred_fallthru
          _
        // Predicated region
        $region53: #{tpu_custom_call.1} parent=11 // pred_check
          %p425 = pneg %p283
        $region54: #{tpu_custom_call.1} parent=11 // pred_check_branch
          %427 = sbr.rel (%p425) target = $region56
        $region55: #{tpu_custom_call.1} parent=11 // pred_region
          _
        $region56: #{tpu_custom_call.1} parent=11 // pred_fallthru
          _
        // Predicated region
        $region57: #{tpu_custom_call.1} parent=11 // pred_check
          %p428 = pneg %p304
        $region58: #{tpu_custom_call.1} parent=11 // pred_check_branch
          %430 = sbr.rel (%p428) target = $region60
        $region59: #{tpu_custom_call.1} parent=11 // pred_region
          %s432 = ssub.s32 16, 16
          %433 = vsyncadd [#allocation14], %s432
          %s435 = sshll.u32 [#allocation13], 4
          %s436 = int_to_ptr.vmem [resolvable:$true] %s435
          %438 = dma.hbm_to_vmem [thread:$0]  %s12, 16, %s436, [#allocation14]
        $region60: #{tpu_custom_call.1} parent=11 // pred_fallthru
          _
      $region12: #{tpu_custom_call.1} parent=5 // pred_fallthru
        _
      %p439 = scmp.lt.s32.totalorder %s26, 2
      // Predicated region
      $region61: #{tpu_custom_call.1} parent=5 // pred_check
        %p440 = pneg %p439
      $region62: #{tpu_custom_call.1} parent=5 // pred_check_branch
        %442 = sbr.rel (%p440) target = $region64
      $region63: #{tpu_custom_call.1} parent=5 // pred_region
        // Predicated region
        $region65: #{tpu_custom_call.1} parent=63 // pred_check
          %p443 = pneg %p46
        $region66: #{tpu_custom_call.1} parent=63 // pred_check_branch
          %445 = sbr.rel (%p443) target = $region68
        $region67: #{tpu_custom_call.1} parent=63 // pred_region
          %s446 = sand.u32 %s36, 1
          %s447 = scalar_lea.sflag [#allocation3], %s446
          %s448 = sand.u32 %s36, 1
          %s449 = smul.addr %s448, 256
          %s450 = scalar_lea.vmem [#allocation2], %s449
          %s451 = smul.u32 32, %s26
          %s453 = ssub.s32 4096, 4096
          %454 = vsyncadd %s447, %s453
          %s455 = smul.addr %s451, 128
          %s456 = scalar_lea.hbm %s0, %s455
          %s457 = sshll.u32 %s450, 4
          %s458 = int_to_ptr.vmem [resolvable:$true] %s457
          %463 = dma.hbm_to_vmem [thread:$0]  %s456, 4096, %s458, %s447, 128, 128, 8
        $region68: #{tpu_custom_call.1} parent=63 // pred_fallthru
          _
      $region64: #{tpu_custom_call.1} parent=5 // pred_fallthru
        _
      %p464 = scmp.le.s32.totalorder 1, %s26
      %p465 = scmp.lt.s32.totalorder %s26, 3
      %p466 = pnand %p464, %p465
      %p467 = pneg %p466
      // Predicated region
      $region69: #{tpu_custom_call.1} parent=5 // pred_check
        _
      $region70: #{tpu_custom_call.1} parent=5 // pred_check_branch
        %469 = sbr.rel (%p466) target = $region72
      $region71: #{tpu_custom_call.1} parent=5 // pred_region
        %s470 = ssub.s32 %s26, 1
        %s471 = sand.u32 %s39, 1
        %s472 = scalar_lea.sflag [#allocation3], %s471
        %s473 = sand.u32 %s39, 1
        %s474 = smul.addr %s473, 256
        %s475 = scalar_lea.vmem [#allocation2], %s474
        // Predicated region
        $region73: #{tpu_custom_call.1} parent=71 // pred_check
          %p476 = pneg %p52
        $region74: #{tpu_custom_call.1} parent=71 // pred_check_branch
          %478 = sbr.rel (%p476) target = $region76
        $region75: #{tpu_custom_call.1} parent=71 // pred_region
          %479 = dma.done %s472, 4096
        $region76: #{tpu_custom_call.1} parent=71 // pred_fallthru
          _
        // Predicated region
        $region77: #{tpu_custom_call.1} parent=71 // pred_check
          %p480 = pneg %p73
        $region78: #{tpu_custom_call.1} parent=71 // pred_check_branch
          %482 = sbr.rel (%p480) target = $region80
        $region79: #{tpu_custom_call.1} parent=71 // pred_region
          %483 = dma.done [#allocation5], 49152
        $region80: #{tpu_custom_call.1} parent=71 // pred_fallthru
          _
        // Predicated region
        $region81: #{tpu_custom_call.1} parent=71 // pred_check
          %p484 = pneg %p94
        $region82: #{tpu_custom_call.1} parent=71 // pred_check_branch
          %486 = sbr.rel (%p484) target = $region84
        $region83: #{tpu_custom_call.1} parent=71 // pred_region
          %487 = dma.done [#allocation5], 384
        $region84: #{tpu_custom_call.1} parent=71 // pred_fallthru
          _
        // Predicated region
        $region85: #{tpu_custom_call.1} parent=71 // pred_check
          %p488 = pneg %p136
        $region86: #{tpu_custom_call.1} parent=71 // pred_check_branch
          %490 = sbr.rel (%p488) target = $region88
        $region87: #{tpu_custom_call.1} parent=71 // pred_region
          %491 = dma.done [#allocation8], 16
        $region88: #{tpu_custom_call.1} parent=71 // pred_fallthru
          _
        // Predicated region
        $region89: #{tpu_custom_call.1} parent=71 // pred_check
          %p492 = pneg %p178
        $region90: #{tpu_custom_call.1} parent=71 // pred_check_branch
          %494 = sbr.rel (%p492) target = $region92
        $region91: #{tpu_custom_call.1} parent=71 // pred_region
          %495 = dma.done [#allocation8], 16
        $region92: #{tpu_custom_call.1} parent=71 // pred_fallthru
          _
        // Predicated region
        $region93: #{tpu_custom_call.1} parent=71 // pred_check
          %p496 = pneg %p220
        $region94: #{tpu_custom_call.1} parent=71 // pred_check_branch
          %498 = sbr.rel (%p496) target = $region96
        $region95: #{tpu_custom_call.1} parent=71 // pred_region
          %499 = dma.done [#allocation11], 16
        $region96: #{tpu_custom_call.1} parent=71 // pred_fallthru
          _
        // Predicated region
        $region97: #{tpu_custom_call.1} parent=71 // pred_check
          %p500 = pneg %p262
        $region98: #{tpu_custom_call.1} parent=71 // pred_check_branch
          %502 = sbr.rel (%p500) target = $region100
        $region99: #{tpu_custom_call.1} parent=71 // pred_region
          %503 = dma.done [#allocation11], 16
        $region100: #{tpu_custom_call.1} parent=71 // pred_fallthru
          _
        // Predicated region
        $region101: #{tpu_custom_call.1} parent=71 // pred_check
          %p504 = pneg %p304
        $region102: #{tpu_custom_call.1} parent=71 // pred_check_branch
          %506 = sbr.rel (%p504) target = $region104
        $region103: #{tpu_custom_call.1} parent=71 // pred_region
          %507 = dma.done [#allocation14], 16
        $region104: #{tpu_custom_call.1} parent=71 // pred_fallthru
          _
        %s508 = sand.u32 %s39, 1
        %s509 = scalar_lea.sflag [#allocation3], %s508
        %s510 = sand.u32 %s39, 1
        %s511 = smul.addr %s510, 256
        %s512 = scalar_lea.vmem [#allocation2], %s511
        %p513 = pneg %p52
        %p514 = pneg %p49
        %p515 = pneg %p73
        %p516 = pneg %p70
        %p517 = pneg %p94
        %p518 = pneg %p91
        %p519 = pneg %p115
        %p520 = pneg %p112
        %p521 = pneg %p136
        %p522 = pneg %p133
        %p523 = pneg %p157
        %p524 = pneg %p154
        %p525 = pneg %p178
        %p526 = pneg %p175
        %p527 = pneg %p199
        %p528 = pneg %p196
        %p529 = pneg %p220
        %p530 = pneg %p217
        %p531 = pneg %p241
        %p532 = pneg %p238
        %p533 = pneg %p262
        %p534 = pneg %p259
        %p535 = pneg %p283
        %p536 = pneg %p280
        %p537 = pneg %p304
        %p538 = pneg %p301
        %p539 = pneg %p330
        %p540 = pneg %p327
        %s541 = smul.u32 32, %s31
        %p542 = scmp.lt.s32.totalorder %s541, 63
        %s543 = scalar_select %p542, %s541, 63
        %s544 = smul.addr %s543, 8
        %s545 = scalar_lea.vmem %s13, %s544
        %s546 = smul.u32 32, %s31
        %s547 = smul.u32 32, %s31
        %p548 = scmp.lt.s32.totalorder %s547, 63
        %s549 = scalar_select %p548, %s547, 63
        %s550 = smul.addr %s549, 8
        %s551 = scalar_lea.vmem %s13, %s550
        %s552 = smul.u32 32, %s31
        %v553 = vld [vmem:[%s475] sm:$0xff]
        %v554 = vld [vmem:[%s475 + $0x8] sm:$0xff]
        %v555 = vld [vmem:[%s475 + $0x10] sm:$0xff]
        %v556 = vld [vmem:[%s475 + $0x18] sm:$0xff]
        %v557 = vld [vmem:[%s475 + $0x20] sm:$0xff]
        %v558 = vld [vmem:[%s475 + $0x28] sm:$0xff]
        %v559 = vld [vmem:[%s475 + $0x30] sm:$0xff]
        %v560 = vld [vmem:[%s475 + $0x38] sm:$0xff]
        %v561 = vld [vmem:[%s475 + $0x40] sm:$0xff]
        %v562 = vld [vmem:[%s475 + $0x48] sm:$0xff]
        %v563 = vld [vmem:[%s475 + $0x50] sm:$0xff]
        %v564 = vld [vmem:[%s475 + $0x58] sm:$0xff]
        %v565 = vld [vmem:[%s475 + $0x60] sm:$0xff]
        %v566 = vld [vmem:[%s475 + $0x68] sm:$0xff]
        %v567 = vld [vmem:[%s475 + $0x70] sm:$0xff]
        %v568 = vld [vmem:[%s475 + $0x78] sm:$0xff]
        %v569 = vld [vmem:[%s475 + $0x80] sm:$0xff]
        %v570 = vld [vmem:[%s475 + $0x88] sm:$0xff]
        %v571 = vld [vmem:[%s475 + $0x90] sm:$0xff]
        %v572 = vld [vmem:[%s475 + $0x98] sm:$0xff]
        %v573 = vld [vmem:[%s475 + $0xa0] sm:$0xff]
        %v574 = vld [vmem:[%s475 + $0xa8] sm:$0xff]
        %v575 = vld [vmem:[%s475 + $0xb0] sm:$0xff]
        %v576 = vld [vmem:[%s475 + $0xb8] sm:$0xff]
        %v577 = vld [vmem:[%s475 + $0xc0] sm:$0xff]
        %v578 = vld [vmem:[%s475 + $0xc8] sm:$0xff]
        %v579 = vld [vmem:[%s475 + $0xd0] sm:$0xff]
        %v580 = vld [vmem:[%s475 + $0xd8] sm:$0xff]
        %v581 = vld [vmem:[%s475 + $0xe0] sm:$0xff]
        %v582 = vld [vmem:[%s475 + $0xe8] sm:$0xff]
        %v583 = vld [vmem:[%s475 + $0xf0] sm:$0xff]
        %v584 = vld [vmem:[%s475 + $0xf8] sm:$0xff]
        %v585 = vld [vmem:[#allocation4] sm:$0xff]
        %v586 = vld [vmem:[#allocation4 + $0x8] sm:$0xff]
        %v587 = vld [vmem:[#allocation4 + $0x10] sm:$0xff]
        %v588 = vld [vmem:[#allocation4 + $0x18] sm:$0xff]
        %v589 = vld [vmem:[#allocation4 + $0x20] sm:$0xff]
        %v590 = vld [vmem:[#allocation4 + $0x28] sm:$0xff]
        %v591 = vld [vmem:[#allocation4 + $0x30] sm:$0xff]
        %v592 = vld [vmem:[#allocation4 + $0x38] sm:$0xff]
        %v593 = vld [vmem:[#allocation4 + $0x40] sm:$0xff]
        %v594 = vld [vmem:[#allocation4 + $0x48] sm:$0xff]
        %v595 = vld [vmem:[#allocation4 + $0x50] sm:$0xff]
        %v596 = vld [vmem:[#allocation4 + $0x58] sm:$0xff]
        %v597 = vld [vmem:[#allocation4 + $0x60] sm:$0xff]
        %v598 = vld [vmem:[#allocation4 + $0x68] sm:$0xff]
        %v599 = vld [vmem:[#allocation4 + $0x70] sm:$0xff]
        %v600 = vld [vmem:[#allocation4 + $0x78] sm:$0xff]
        %v601 = vld [vmem:[#allocation4 + $0x80] sm:$0xff]
        %v602 = vld [vmem:[#allocation4 + $0x88] sm:$0xff]
        %v603 = vld [vmem:[#allocation4 + $0x90] sm:$0xff]
        %v604 = vld [vmem:[#allocation4 + $0x98] sm:$0xff]
        %v605 = vld [vmem:[#allocation4 + $0xa0] sm:$0xff]
        %v606 = vld [vmem:[#allocation4 + $0xa8] sm:$0xff]
        %v607 = vld [vmem:[#allocation4 + $0xb0] sm:$0xff]
        %v608 = vld [vmem:[#allocation4 + $0xb8] sm:$0xff]
        %v609 = vld [vmem:[#allocation4 + $0xc0] sm:$0xff]
        %v610 = vld [vmem:[#allocation4 + $0xc8] sm:$0xff]
        %v611 = vld [vmem:[#allocation4 + $0xd0] sm:$0xff]
        %v612 = vld [vmem:[#allocation4 + $0xd8] sm:$0xff]
        %v613 = vld [vmem:[#allocation4 + $0xe0] sm:$0xff]
        %v614 = vld [vmem:[#allocation4 + $0xe8] sm:$0xff]
        %v615 = vld [vmem:[#allocation4 + $0xf0] sm:$0xff]
        %v616 = vld [vmem:[#allocation4 + $0xf8] sm:$0xff]
        %v617 = vld [vmem:[#allocation4 + $0x100] sm:$0xff]
        %v618 = vld [vmem:[#allocation4 + $0x108] sm:$0xff]
        %v619 = vld [vmem:[#allocation4 + $0x110] sm:$0xff]
        %v620 = vld [vmem:[#allocation4 + $0x118] sm:$0xff]
        %v621 = vld [vmem:[#allocation4 + $0x120] sm:$0xff]
        %v622 = vld [vmem:[#allocation4 + $0x128] sm:$0xff]
        %v623 = vld [vmem:[#allocation4 + $0x130] sm:$0xff]
        %v624 = vld [vmem:[#allocation4 + $0x138] sm:$0xff]
        %v625 = vld [vmem:[#allocation4 + $0x140] sm:$0xff]
        %v626 = vld [vmem:[#allocation4 + $0x148] sm:$0xff]
        %v627 = vld [vmem:[#allocation4 + $0x150] sm:$0xff]
        %v628 = vld [vmem:[#allocation4 + $0x158] sm:$0xff]
        %v629 = vld [vmem:[#allocation4 + $0x160] sm:$0xff]
        %v630 = vld [vmem:[#allocation4 + $0x168] sm:$0xff]
        %v631 = vld [vmem:[#allocation4 + $0x170] sm:$0xff]
        %v632 = vld [vmem:[#allocation4 + $0x178] sm:$0xff]
        %v633 = vld [vmem:[#allocation4 + $0x180] sm:$0xff]
        %v634 = vld [vmem:[#allocation4 + $0x188] sm:$0xff]
        %v635 = vld [vmem:[#allocation4 + $0x190] sm:$0xff]
        %v636 = vld [vmem:[#allocation4 + $0x198] sm:$0xff]
        %v637 = vld [vmem:[#allocation4 + $0x1a0] sm:$0xff]
        %v638 = vld [vmem:[#allocation4 + $0x1a8] sm:$0xff]
        %v639 = vld [vmem:[#allocation4 + $0x1b0] sm:$0xff]
        %v640 = vld [vmem:[#allocation4 + $0x1b8] sm:$0xff]
        %v641 = vld [vmem:[#allocation4 + $0x1c0] sm:$0xff]
        %v642 = vld [vmem:[#allocation4 + $0x1c8] sm:$0xff]
        %v643 = vld [vmem:[#allocation4 + $0x1d0] sm:$0xff]
        %v644 = vld [vmem:[#allocation4 + $0x1d8] sm:$0xff]
        %v645 = vld [vmem:[#allocation4 + $0x1e0] sm:$0xff]
        %v646 = vld [vmem:[#allocation4 + $0x1e8] sm:$0xff]
        %v647 = vld [vmem:[#allocation4 + $0x1f0] sm:$0xff]
        %v648 = vld [vmem:[#allocation4 + $0x1f8] sm:$0xff]
        %v649 = vld [vmem:[#allocation4 + $0x200] sm:$0xff]
        %v650 = vld [vmem:[#allocation4 + $0x208] sm:$0xff]
        %v651 = vld [vmem:[#allocation4 + $0x210] sm:$0xff]
        %v652 = vld [vmem:[#allocation4 + $0x218] sm:$0xff]
        %v653 = vld [vmem:[#allocation4 + $0x220] sm:$0xff]
        %v654 = vld [vmem:[#allocation4 + $0x228] sm:$0xff]
        %v655 = vld [vmem:[#allocation4 + $0x230] sm:$0xff]
        %v656 = vld [vmem:[#allocation4 + $0x238] sm:$0xff]
        %v657 = vld [vmem:[#allocation4 + $0x240] sm:$0xff]
        %v658 = vld [vmem:[#allocation4 + $0x248] sm:$0xff]
        %v659 = vld [vmem:[#allocation4 + $0x250] sm:$0xff]
        %v660 = vld [vmem:[#allocation4 + $0x258] sm:$0xff]
        %v661 = vld [vmem:[#allocation4 + $0x260] sm:$0xff]
        %v662 = vld [vmem:[#allocation4 + $0x268] sm:$0xff]
        %v663 = vld [vmem:[#allocation4 + $0x270] sm:$0xff]
        %v664 = vld [vmem:[#allocation4 + $0x278] sm:$0xff]
        %v665 = vld [vmem:[#allocation4 + $0x280] sm:$0xff]
        %v666 = vld [vmem:[#allocation4 + $0x288] sm:$0xff]
        %v667 = vld [vmem:[#allocation4 + $0x290] sm:$0xff]
        %v668 = vld [vmem:[#allocation4 + $0x298] sm:$0xff]
        %v669 = vld [vmem:[#allocation4 + $0x2a0] sm:$0xff]
        %v670 = vld [vmem:[#allocation4 + $0x2a8] sm:$0xff]
        %v671 = vld [vmem:[#allocation4 + $0x2b0] sm:$0xff]
        %v672 = vld [vmem:[#allocation4 + $0x2b8] sm:$0xff]
        %v673 = vld [vmem:[#allocation4 + $0x2c0] sm:$0xff]
        %v674 = vld [vmem:[#allocation4 + $0x2c8] sm:$0xff]
        %v675 = vld [vmem:[#allocation4 + $0x2d0] sm:$0xff]
        %v676 = vld [vmem:[#allocation4 + $0x2d8] sm:$0xff]
        %v677 = vld [vmem:[#allocation4 + $0x2e0] sm:$0xff]
        %v678 = vld [vmem:[#allocation4 + $0x2e8] sm:$0xff]
        %v679 = vld [vmem:[#allocation4 + $0x2f0] sm:$0xff]
        %v680 = vld [vmem:[#allocation4 + $0x2f8] sm:$0xff]
        %v681 = vld [vmem:[#allocation4 + $0x300] sm:$0xff]
        %v682 = vld [vmem:[#allocation4 + $0x308] sm:$0xff]
        %v683 = vld [vmem:[#allocation4 + $0x310] sm:$0xff]
        %v684 = vld [vmem:[#allocation4 + $0x318] sm:$0xff]
        %v685 = vld [vmem:[#allocation4 + $0x320] sm:$0xff]
        %v686 = vld [vmem:[#allocation4 + $0x328] sm:$0xff]
        %v687 = vld [vmem:[#allocation4 + $0x330] sm:$0xff]
        %v688 = vld [vmem:[#allocation4 + $0x338] sm:$0xff]
        %v689 = vld [vmem:[#allocation4 + $0x340] sm:$0xff]
        %v690 = vld [vmem:[#allocation4 + $0x348] sm:$0xff]
        %v691 = vld [vmem:[#allocation4 + $0x350] sm:$0xff]
        %v692 = vld [vmem:[#allocation4 + $0x358] sm:$0xff]
        %v693 = vld [vmem:[#allocation4 + $0x360] sm:$0xff]
        %v694 = vld [vmem:[#allocation4 + $0x368] sm:$0xff]
        %v695 = vld [vmem:[#allocation4 + $0x370] sm:$0xff]
        %v696 = vld [vmem:[#allocation4 + $0x378] sm:$0xff]
        %v697 = vld [vmem:[#allocation4 + $0x380] sm:$0xff]
        %v698 = vld [vmem:[#allocation4 + $0x388] sm:$0xff]
        %v699 = vld [vmem:[#allocation4 + $0x390] sm:$0xff]
        %v700 = vld [vmem:[#allocation4 + $0x398] sm:$0xff]
        %v701 = vld [vmem:[#allocation4 + $0x3a0] sm:$0xff]
        %v702 = vld [vmem:[#allocation4 + $0x3a8] sm:$0xff]
        %v703 = vld [vmem:[#allocation4 + $0x3b0] sm:$0xff]
        %v704 = vld [vmem:[#allocation4 + $0x3b8] sm:$0xff]
        %v705 = vld [vmem:[#allocation4 + $0x3c0] sm:$0xff]
        %v706 = vld [vmem:[#allocation4 + $0x3c8] sm:$0xff]
        %v707 = vld [vmem:[#allocation4 + $0x3d0] sm:$0xff]
        %v708 = vld [vmem:[#allocation4 + $0x3d8] sm:$0xff]
        %v709 = vld [vmem:[#allocation4 + $0x3e0] sm:$0xff]
        %v710 = vld [vmem:[#allocation4 + $0x3e8] sm:$0xff]
        %v711 = vld [vmem:[#allocation4 + $0x3f0] sm:$0xff]
        %v712 = vld [vmem:[#allocation4 + $0x3f8] sm:$0xff]
        %v713 = vld [vmem:[#allocation4 + $0x400] sm:$0xff]
        %v714 = vld [vmem:[#allocation4 + $0x408] sm:$0xff]
        %v715 = vld [vmem:[#allocation4 + $0x410] sm:$0xff]
        %v716 = vld [vmem:[#allocation4 + $0x418] sm:$0xff]
        %v717 = vld [vmem:[#allocation4 + $0x420] sm:$0xff]
        %v718 = vld [vmem:[#allocation4 + $0x428] sm:$0xff]
        %v719 = vld [vmem:[#allocation4 + $0x430] sm:$0xff]
        %v720 = vld [vmem:[#allocation4 + $0x438] sm:$0xff]
        %v721 = vld [vmem:[#allocation4 + $0x440] sm:$0xff]
        %v722 = vld [vmem:[#allocation4 + $0x448] sm:$0xff]
        %v723 = vld [vmem:[#allocation4 + $0x450] sm:$0xff]
        %v724 = vld [vmem:[#allocation4 + $0x458] sm:$0xff]
        %v725 = vld [vmem:[#allocation4 + $0x460] sm:$0xff]
        %v726 = vld [vmem:[#allocation4 + $0x468] sm:$0xff]
        %v727 = vld [vmem:[#allocation4 + $0x470] sm:$0xff]
        %v728 = vld [vmem:[#allocation4 + $0x478] sm:$0xff]
        %v729 = vld [vmem:[#allocation4 + $0x480] sm:$0xff]
        %v730 = vld [vmem:[#allocation4 + $0x488] sm:$0xff]
        %v731 = vld [vmem:[#allocation4 + $0x490] sm:$0xff]
        %v732 = vld [vmem:[#allocation4 + $0x498] sm:$0xff]
        %v733 = vld [vmem:[#allocation4 + $0x4a0] sm:$0xff]
        %v734 = vld [vmem:[#allocation4 + $0x4a8] sm:$0xff]
        %v735 = vld [vmem:[#allocation4 + $0x4b0] sm:$0xff]
        %v736 = vld [vmem:[#allocation4 + $0x4b8] sm:$0xff]
        %v737 = vld [vmem:[#allocation4 + $0x4c0] sm:$0xff]
        %v738 = vld [vmem:[#allocation4 + $0x4c8] sm:$0xff]
        %v739 = vld [vmem:[#allocation4 + $0x4d0] sm:$0xff]
        %v740 = vld [vmem:[#allocation4 + $0x4d8] sm:$0xff]
        %v741 = vld [vmem:[#allocation4 + $0x4e0] sm:$0xff]
        %v742 = vld [vmem:[#allocation4 + $0x4e8] sm:$0xff]
        %v743 = vld [vmem:[#allocation4 + $0x4f0] sm:$0xff]
        %v744 = vld [vmem:[#allocation4 + $0x4f8] sm:$0xff]
        %v745 = vld [vmem:[#allocation4 + $0x500] sm:$0xff]
        %v746 = vld [vmem:[#allocation4 + $0x508] sm:$0xff]
        %v747 = vld [vmem:[#allocation4 + $0x510] sm:$0xff]
        %v748 = vld [vmem:[#allocation4 + $0x518] sm:$0xff]
        %v749 = vld [vmem:[#allocation4 + $0x520] sm:$0xff]
        %v750 = vld [vmem:[#allocation4 + $0x528] sm:$0xff]
        %v751 = vld [vmem:[#allocation4 + $0x530] sm:$0xff]
        %v752 = vld [vmem:[#allocation4 + $0x538] sm:$0xff]
        %v753 = vld [vmem:[#allocation4 + $0x540] sm:$0xff]
        %v754 = vld [vmem:[#allocation4 + $0x548] sm:$0xff]
        %v755 = vld [vmem:[#allocation4 + $0x550] sm:$0xff]
        %v756 = vld [vmem:[#allocation4 + $0x558] sm:$0xff]
        %v757 = vld [vmem:[#allocation4 + $0x560] sm:$0xff]
        %v758 = vld [vmem:[#allocation4 + $0x568] sm:$0xff]
        %v759 = vld [vmem:[#allocation4 + $0x570] sm:$0xff]
        %v760 = vld [vmem:[#allocation4 + $0x578] sm:$0xff]
        %v761 = vld [vmem:[#allocation4 + $0x580] sm:$0xff]
        %v762 = vld [vmem:[#allocation4 + $0x588] sm:$0xff]
        %v763 = vld [vmem:[#allocation4 + $0x590] sm:$0xff]
        %v764 = vld [vmem:[#allocation4 + $0x598] sm:$0xff]
        %v765 = vld [vmem:[#allocation4 + $0x5a0] sm:$0xff]
        %v766 = vld [vmem:[#allocation4 + $0x5a8] sm:$0xff]
        %v767 = vld [vmem:[#allocation4 + $0x5b0] sm:$0xff]
        %v768 = vld [vmem:[#allocation4 + $0x5b8] sm:$0xff]
        %v769 = vld [vmem:[#allocation4 + $0x5c0] sm:$0xff]
        %v770 = vld [vmem:[#allocation4 + $0x5c8] sm:$0xff]
        %v771 = vld [vmem:[#allocation4 + $0x5d0] sm:$0xff]
        %v772 = vld [vmem:[#allocation4 + $0x5d8] sm:$0xff]
        %v773 = vld [vmem:[#allocation4 + $0x5e0] sm:$0xff]
        %v774 = vld [vmem:[#allocation4 + $0x5e8] sm:$0xff]
        %v775 = vld [vmem:[#allocation4 + $0x5f0] sm:$0xff]
        %v776 = vld [vmem:[#allocation4 + $0x5f8] sm:$0xff]
        %v777 = vld [vmem:[#allocation4 + $0x600] sm:$0xff]
        %v778 = vld [vmem:[#allocation4 + $0x608] sm:$0xff]
        %v779 = vld [vmem:[#allocation4 + $0x610] sm:$0xff]
        %v780 = vld [vmem:[#allocation4 + $0x618] sm:$0xff]
        %v781 = vld [vmem:[#allocation4 + $0x620] sm:$0xff]
        %v782 = vld [vmem:[#allocation4 + $0x628] sm:$0xff]
        %v783 = vld [vmem:[#allocation4 + $0x630] sm:$0xff]
        %v784 = vld [vmem:[#allocation4 + $0x638] sm:$0xff]
        %v785 = vld [vmem:[#allocation4 + $0x640] sm:$0xff]
        %v786 = vld [vmem:[#allocation4 + $0x648] sm:$0xff]
        %v787 = vld [vmem:[#allocation4 + $0x650] sm:$0xff]
        %v788 = vld [vmem:[#allocation4 + $0x658] sm:$0xff]
        %v789 = vld [vmem:[#allocation4 + $0x660] sm:$0xff]
        %v790 = vld [vmem:[#allocation4 + $0x668] sm:$0xff]
        %v791 = vld [vmem:[#allocation4 + $0x670] sm:$0xff]
        %v792 = vld [vmem:[#allocation4 + $0x678] sm:$0xff]
        %v793 = vld [vmem:[#allocation4 + $0x680] sm:$0xff]
        %v794 = vld [vmem:[#allocation4 + $0x688] sm:$0xff]
        %v795 = vld [vmem:[#allocation4 + $0x690] sm:$0xff]
        %v796 = vld [vmem:[#allocation4 + $0x698] sm:$0xff]
        %v797 = vld [vmem:[#allocation4 + $0x6a0] sm:$0xff]
        %v798 = vld [vmem:[#allocation4 + $0x6a8] sm:$0xff]
        %v799 = vld [vmem:[#allocation4 + $0x6b0] sm:$0xff]
        %v800 = vld [vmem:[#allocation4 + $0x6b8] sm:$0xff]
        %v801 = vld [vmem:[#allocation4 + $0x6c0] sm:$0xff]
        %v802 = vld [vmem:[#allocation4 + $0x6c8] sm:$0xff]
        %v803 = vld [vmem:[#allocation4 + $0x6d0] sm:$0xff]
        %v804 = vld [vmem:[#allocation4 + $0x6d8] sm:$0xff]
        %v805 = vld [vmem:[#allocation4 + $0x6e0] sm:$0xff]
        %v806 = vld [vmem:[#allocation4 + $0x6e8] sm:$0xff]
        %v807 = vld [vmem:[#allocation4 + $0x6f0] sm:$0xff]
        %v808 = vld [vmem:[#allocation4 + $0x6f8] sm:$0xff]
        %v809 = vld [vmem:[#allocation4 + $0x700] sm:$0xff]
        %v810 = vld [vmem:[#allocation4 + $0x708] sm:$0xff]
        %v811 = vld [vmem:[#allocation4 + $0x710] sm:$0xff]
        %v812 = vld [vmem:[#allocation4 + $0x718] sm:$0xff]
        %v813 = vld [vmem:[#allocation4 + $0x720] sm:$0xff]
        %v814 = vld [vmem:[#allocation4 + $0x728] sm:$0xff]
        %v815 = vld [vmem:[#allocation4 + $0x730] sm:$0xff]
        %v816 = vld [vmem:[#allocation4 + $0x738] sm:$0xff]
        %v817 = vld [vmem:[#allocation4 + $0x740] sm:$0xff]
        %v818 = vld [vmem:[#allocation4 + $0x748] sm:$0xff]
        %v819 = vld [vmem:[#allocation4 + $0x750] sm:$0xff]
        %v820 = vld [vmem:[#allocation4 + $0x758] sm:$0xff]
        %v821 = vld [vmem:[#allocation4 + $0x760] sm:$0xff]
        %v822 = vld [vmem:[#allocation4 + $0x768] sm:$0xff]
        %v823 = vld [vmem:[#allocation4 + $0x770] sm:$0xff]
        %v824 = vld [vmem:[#allocation4 + $0x778] sm:$0xff]
        %v825 = vld [vmem:[#allocation4 + $0x780] sm:$0xff]
        %v826 = vld [vmem:[#allocation4 + $0x788] sm:$0xff]
        %v827 = vld [vmem:[#allocation4 + $0x790] sm:$0xff]
        %v828 = vld [vmem:[#allocation4 + $0x798] sm:$0xff]
        %v829 = vld [vmem:[#allocation4 + $0x7a0] sm:$0xff]
        %v830 = vld [vmem:[#allocation4 + $0x7a8] sm:$0xff]
        %v831 = vld [vmem:[#allocation4 + $0x7b0] sm:$0xff]
        %v832 = vld [vmem:[#allocation4 + $0x7b8] sm:$0xff]
        %v833 = vld [vmem:[#allocation4 + $0x7c0] sm:$0xff]
        %v834 = vld [vmem:[#allocation4 + $0x7c8] sm:$0xff]
        %v835 = vld [vmem:[#allocation4 + $0x7d0] sm:$0xff]
        %v836 = vld [vmem:[#allocation4 + $0x7d8] sm:$0xff]
        %v837 = vld [vmem:[#allocation4 + $0x7e0] sm:$0xff]
        %v838 = vld [vmem:[#allocation4 + $0x7e8] sm:$0xff]
        %v839 = vld [vmem:[#allocation4 + $0x7f0] sm:$0xff]
        %v840 = vld [vmem:[#allocation4 + $0x7f8] sm:$0xff]
        %v841 = vld [vmem:[#allocation4 + $0x800] sm:$0xff]
        %v842 = vld [vmem:[#allocation4 + $0x808] sm:$0xff]
        %v843 = vld [vmem:[#allocation4 + $0x810] sm:$0xff]
        %v844 = vld [vmem:[#allocation4 + $0x818] sm:$0xff]
        %v845 = vld [vmem:[#allocation4 + $0x820] sm:$0xff]
        %v846 = vld [vmem:[#allocation4 + $0x828] sm:$0xff]
        %v847 = vld [vmem:[#allocation4 + $0x830] sm:$0xff]
        %v848 = vld [vmem:[#allocation4 + $0x838] sm:$0xff]
        %v849 = vld [vmem:[#allocation4 + $0x840] sm:$0xff]
        %v850 = vld [vmem:[#allocation4 + $0x848] sm:$0xff]
        %v851 = vld [vmem:[#allocation4 + $0x850] sm:$0xff]
        %v852 = vld [vmem:[#allocation4 + $0x858] sm:$0xff]
        %v853 = vld [vmem:[#allocation4 + $0x860] sm:$0xff]
        %v854 = vld [vmem:[#allocation4 + $0x868] sm:$0xff]
        %v855 = vld [vmem:[#allocation4 + $0x870] sm:$0xff]
        %v856 = vld [vmem:[#allocation4 + $0x878] sm:$0xff]
        %v857 = vld [vmem:[#allocation4 + $0x880] sm:$0xff]
        %v858 = vld [vmem:[#allocation4 + $0x888] sm:$0xff]
        %v859 = vld [vmem:[#allocation4 + $0x890] sm:$0xff]
        %v860 = vld [vmem:[#allocation4 + $0x898] sm:$0xff]
        %v861 = vld [vmem:[#allocation4 + $0x8a0] sm:$0xff]
        %v862 = vld [vmem:[#allocation4 + $0x8a8] sm:$0xff]
        %v863 = vld [vmem:[#allocation4 + $0x8b0] sm:$0xff]
        %v864 = vld [vmem:[#allocation4 + $0x8b8] sm:$0xff]
        %v865 = vld [vmem:[#allocation4 + $0x8c0] sm:$0xff]
        %v866 = vld [vmem:[#allocation4 + $0x8c8] sm:$0xff]
        %v867 = vld [vmem:[#allocation4 + $0x8d0] sm:$0xff]
        %v868 = vld [vmem:[#allocation4 + $0x8d8] sm:$0xff]
        %v869 = vld [vmem:[#allocation4 + $0x8e0] sm:$0xff]
        %v870 = vld [vmem:[#allocation4 + $0x8e8] sm:$0xff]
        %v871 = vld [vmem:[#allocation4 + $0x8f0] sm:$0xff]
        %v872 = vld [vmem:[#allocation4 + $0x8f8] sm:$0xff]
        %v873 = vld [vmem:[#allocation4 + $0x900] sm:$0xff]
        %v874 = vld [vmem:[#allocation4 + $0x908] sm:$0xff]
        %v875 = vld [vmem:[#allocation4 + $0x910] sm:$0xff]
        %v876 = vld [vmem:[#allocation4 + $0x918] sm:$0xff]
        %v877 = vld [vmem:[#allocation4 + $0x920] sm:$0xff]
        %v878 = vld [vmem:[#allocation4 + $0x928] sm:$0xff]
        %v879 = vld [vmem:[#allocation4 + $0x930] sm:$0xff]
        %v880 = vld [vmem:[#allocation4 + $0x938] sm:$0xff]
        %v881 = vld [vmem:[#allocation4 + $0x940] sm:$0xff]
        %v882 = vld [vmem:[#allocation4 + $0x948] sm:$0xff]
        %v883 = vld [vmem:[#allocation4 + $0x950] sm:$0xff]
        %v884 = vld [vmem:[#allocation4 + $0x958] sm:$0xff]
        %v885 = vld [vmem:[#allocation4 + $0x960] sm:$0xff]
        %v886 = vld [vmem:[#allocation4 + $0x968] sm:$0xff]
        %v887 = vld [vmem:[#allocation4 + $0x970] sm:$0xff]
        %v888 = vld [vmem:[#allocation4 + $0x978] sm:$0xff]
        %v889 = vld [vmem:[#allocation4 + $0x980] sm:$0xff]
        %v890 = vld [vmem:[#allocation4 + $0x988] sm:$0xff]
        %v891 = vld [vmem:[#allocation4 + $0x990] sm:$0xff]
        %v892 = vld [vmem:[#allocation4 + $0x998] sm:$0xff]
        %v893 = vld [vmem:[#allocation4 + $0x9a0] sm:$0xff]
        %v894 = vld [vmem:[#allocation4 + $0x9a8] sm:$0xff]
        %v895 = vld [vmem:[#allocation4 + $0x9b0] sm:$0xff]
        %v896 = vld [vmem:[#allocation4 + $0x9b8] sm:$0xff]
        %v897 = vld [vmem:[#allocation4 + $0x9c0] sm:$0xff]
        %v898 = vld [vmem:[#allocation4 + $0x9c8] sm:$0xff]
        %v899 = vld [vmem:[#allocation4 + $0x9d0] sm:$0xff]
        %v900 = vld [vmem:[#allocation4 + $0x9d8] sm:$0xff]
        %v901 = vld [vmem:[#allocation4 + $0x9e0] sm:$0xff]
        %v902 = vld [vmem:[#allocation4 + $0x9e8] sm:$0xff]
        %v903 = vld [vmem:[#allocation4 + $0x9f0] sm:$0xff]
        %v904 = vld [vmem:[#allocation4 + $0x9f8] sm:$0xff]
        %v905 = vld [vmem:[#allocation4 + $0xa00] sm:$0xff]
        %v906 = vld [vmem:[#allocation4 + $0xa08] sm:$0xff]
        %v907 = vld [vmem:[#allocation4 + $0xa10] sm:$0xff]
        %v908 = vld [vmem:[#allocation4 + $0xa18] sm:$0xff]
        %v909 = vld [vmem:[#allocation4 + $0xa20] sm:$0xff]
        %v910 = vld [vmem:[#allocation4 + $0xa28] sm:$0xff]
        %v911 = vld [vmem:[#allocation4 + $0xa30] sm:$0xff]
        %v912 = vld [vmem:[#allocation4 + $0xa38] sm:$0xff]
        %v913 = vld [vmem:[#allocation4 + $0xa40] sm:$0xff]
        %v914 = vld [vmem:[#allocation4 + $0xa48] sm:$0xff]
        %v915 = vld [vmem:[#allocation4 + $0xa50] sm:$0xff]
        %v916 = vld [vmem:[#allocation4 + $0xa58] sm:$0xff]
        %v917 = vld [vmem:[#allocation4 + $0xa60] sm:$0xff]
        %v918 = vld [vmem:[#allocation4 + $0xa68] sm:$0xff]
        %v919 = vld [vmem:[#allocation4 + $0xa70] sm:$0xff]
        %v920 = vld [vmem:[#allocation4 + $0xa78] sm:$0xff]
        %v921 = vld [vmem:[#allocation4 + $0xa80] sm:$0xff]
        %v922 = vld [vmem:[#allocation4 + $0xa88] sm:$0xff]
        %v923 = vld [vmem:[#allocation4 + $0xa90] sm:$0xff]
        %v924 = vld [vmem:[#allocation4 + $0xa98] sm:$0xff]
        %v925 = vld [vmem:[#allocation4 + $0xaa0] sm:$0xff]
        %v926 = vld [vmem:[#allocation4 + $0xaa8] sm:$0xff]
        %v927 = vld [vmem:[#allocation4 + $0xab0] sm:$0xff]
        %v928 = vld [vmem:[#allocation4 + $0xab8] sm:$0xff]
        %v929 = vld [vmem:[#allocation4 + $0xac0] sm:$0xff]
        %v930 = vld [vmem:[#allocation4 + $0xac8] sm:$0xff]
        %v931 = vld [vmem:[#allocation4 + $0xad0] sm:$0xff]
        %v932 = vld [vmem:[#allocation4 + $0xad8] sm:$0xff]
        %v933 = vld [vmem:[#allocation4 + $0xae0] sm:$0xff]
        %v934 = vld [vmem:[#allocation4 + $0xae8] sm:$0xff]
        %v935 = vld [vmem:[#allocation4 + $0xaf0] sm:$0xff]
        %v936 = vld [vmem:[#allocation4 + $0xaf8] sm:$0xff]
        %v937 = vld [vmem:[#allocation4 + $0xb00] sm:$0xff]
        %v938 = vld [vmem:[#allocation4 + $0xb08] sm:$0xff]
        %v939 = vld [vmem:[#allocation4 + $0xb10] sm:$0xff]
        %v940 = vld [vmem:[#allocation4 + $0xb18] sm:$0xff]
        %v941 = vld [vmem:[#allocation4 + $0xb20] sm:$0xff]
        %v942 = vld [vmem:[#allocation4 + $0xb28] sm:$0xff]
        %v943 = vld [vmem:[#allocation4 + $0xb30] sm:$0xff]
        %v944 = vld [vmem:[#allocation4 + $0xb38] sm:$0xff]
        %v945 = vld [vmem:[#allocation4 + $0xb40] sm:$0xff]
        %v946 = vld [vmem:[#allocation4 + $0xb48] sm:$0xff]
        %v947 = vld [vmem:[#allocation4 + $0xb50] sm:$0xff]
        %v948 = vld [vmem:[#allocation4 + $0xb58] sm:$0xff]
        %v949 = vld [vmem:[#allocation4 + $0xb60] sm:$0xff]
        %v950 = vld [vmem:[#allocation4 + $0xb68] sm:$0xff]
        %v951 = vld [vmem:[#allocation4 + $0xb70] sm:$0xff]
        %v952 = vld [vmem:[#allocation4 + $0xb78] sm:$0xff]
        %v953 = vld [vmem:[#allocation4 + $0xb80] sm:$0xff]
        %v954 = vld [vmem:[#allocation4 + $0xb88] sm:$0xff]
        %v955 = vld [vmem:[#allocation4 + $0xb90] sm:$0xff]
        %v956 = vld [vmem:[#allocation4 + $0xb98] sm:$0xff]
        %v957 = vld [vmem:[#allocation4 + $0xba0] sm:$0xff]
        %v958 = vld [vmem:[#allocation4 + $0xba8] sm:$0xff]
        %v959 = vld [vmem:[#allocation4 + $0xbb0] sm:$0xff]
        %v960 = vld [vmem:[#allocation4 + $0xbb8] sm:$0xff]
        %v961 = vld [vmem:[#allocation4 + $0xbc0] sm:$0xff]
        %v962 = vld [vmem:[#allocation4 + $0xbc8] sm:$0xff]
        %v963 = vld [vmem:[#allocation4 + $0xbd0] sm:$0xff]
        %v964 = vld [vmem:[#allocation4 + $0xbd8] sm:$0xff]
        %v965 = vld [vmem:[#allocation4 + $0xbe0] sm:$0xff]
        %v966 = vld [vmem:[#allocation4 + $0xbe8] sm:$0xff]
        %v967 = vld [vmem:[#allocation4 + $0xbf0] sm:$0xff]
        %v968 = vld [vmem:[#allocation4 + $0xbf8] sm:$0xff]
        %v969 = vld [vmem:[#allocation6] sm:$0xff]
        %v970 = vld [vmem:[#allocation6 + $0x8] sm:$0xff]
        %v971 = vld [vmem:[#allocation6 + $0x10] sm:$0xff]
        %v975 = vlaneseq
        %v976 = vshrl.u32 %v975, 7
        %v977 = vsub.s32 0, %v976
        %v978 = vrot.slane %v969, %v977
        %v979 = vlaneseq
        %v980 = vshrl.u32 %v979, 7
        %v981 = vsub.s32 1, %v980
        %v982 = vrot.slane %v969, %v981
        %v983 = vlaneseq
        %v984 = vshrl.u32 %v983, 7
        %v985 = vsub.s32 2, %v984
        %v986 = vrot.slane %v969, %v985
        %v987 = vlaneseq
        %v988 = vshrl.u32 %v987, 7
        %v989 = vsub.s32 3, %v988
        %v990 = vrot.slane %v969, %v989
        %v991 = vlaneseq
        %v992 = vshrl.u32 %v991, 7
        %v993 = vsub.s32 4, %v992
        %v994 = vrot.slane %v969, %v993
        %v995 = vlaneseq
        %v996 = vshrl.u32 %v995, 7
        %v997 = vsub.s32 5, %v996
        %v998 = vrot.slane %v969, %v997
        %v999 = vlaneseq
        %v1000 = vshrl.u32 %v999, 7
        %v1001 = vsub.s32 6, %v1000
        %v1002 = vrot.slane %v969, %v1001
        %v1003 = vlaneseq
        %v1004 = vshrl.u32 %v1003, 7
        %v1005 = vsub.s32 7, %v1004
        %v1006 = vrot.slane %v969, %v1005
        %v1007 = vlaneseq
        %v1008 = vshrl.u32 %v1007, 7
        %v1009 = vsub.s32 0, %v1008
        %v1010 = vrot.slane %v970, %v1009
        %v1011 = vlaneseq
        %v1012 = vshrl.u32 %v1011, 7
        %v1013 = vsub.s32 1, %v1012
        %v1014 = vrot.slane %v970, %v1013
        %v1015 = vlaneseq
        %v1016 = vshrl.u32 %v1015, 7
        %v1017 = vsub.s32 2, %v1016
        %v1018 = vrot.slane %v970, %v1017
        %v1019 = vlaneseq
        %v1020 = vshrl.u32 %v1019, 7
        %v1021 = vsub.s32 3, %v1020
        %v1022 = vrot.slane %v970, %v1021
        %v1023 = vlaneseq
        %v1024 = vshrl.u32 %v1023, 7
        %v1025 = vsub.s32 4, %v1024
        %v1026 = vrot.slane %v970, %v1025
        %v1027 = vlaneseq
        %v1028 = vshrl.u32 %v1027, 7
        %v1029 = vsub.s32 5, %v1028
        %v1030 = vrot.slane %v970, %v1029
        %v1031 = vlaneseq
        %v1032 = vshrl.u32 %v1031, 7
        %v1033 = vsub.s32 6, %v1032
        %v1034 = vrot.slane %v970, %v1033
        %v1035 = vlaneseq
        %v1036 = vshrl.u32 %v1035, 7
        %v1037 = vsub.s32 7, %v1036
        %v1038 = vrot.slane %v970, %v1037
        %v1039 = vlaneseq
        %v1040 = vshrl.u32 %v1039, 7
        %v1041 = vsub.s32 0, %v1040
        %v1042 = vrot.slane %v971, %v1041
        %v1043 = vlaneseq
        %v1044 = vshrl.u32 %v1043, 7
        %v1045 = vsub.s32 1, %v1044
        %v1046 = vrot.slane %v971, %v1045
        %v1047 = vlaneseq
        %v1048 = vshrl.u32 %v1047, 7
        %v1049 = vsub.s32 2, %v1048
        %v1050 = vrot.slane %v971, %v1049
        %v1051 = vlaneseq
        %v1052 = vshrl.u32 %v1051, 7
        %v1053 = vsub.s32 3, %v1052
        %v1054 = vrot.slane %v971, %v1053
        %v1055 = vlaneseq
        %v1056 = vshrl.u32 %v1055, 7
        %v1057 = vsub.s32 4, %v1056
        %v1058 = vrot.slane %v971, %v1057
        %v1059 = vlaneseq
        %v1060 = vshrl.u32 %v1059, 7
        %v1061 = vsub.s32 5, %v1060
        %v1062 = vrot.slane %v971, %v1061
        %v1063 = vlaneseq
        %v1064 = vshrl.u32 %v1063, 7
        %v1065 = vsub.s32 6, %v1064
        %v1066 = vrot.slane %v971, %v1065
        %v1067 = vlaneseq
        %v1068 = vshrl.u32 %v1067, 7
        %v1069 = vsub.s32 7, %v1068
        %v1070 = vrot.slane %v971, %v1069
        %1095 = vmatprep.subr.mxu0 %v946
        %1096 = vmatpush1.msra.mxu0 %v945
        %1097 = vmatprep.subr.mxu0 %v922
        %1098 = vmatpush1.msra.mxu0 %v921
        %1099 = vmatprep.subr.mxu0 %v898
        %1100 = vmatpush1.msra.mxu0 %v897
        %1101 = vmatprep.subr.mxu0 %v874
        %1102 = vmatpush1.msra.mxu0 %v873
        %1103 = vmatprep.subr.mxu0 %v850
        %1104 = vmatpush1.msra.mxu0 %v849
        %1105 = vmatprep.subr.mxu0 %v826
        %1106 = vmatpush1.msra.mxu0 %v825
        %1107 = vmatprep.subr.mxu0 %v802
        %1108 = vmatpush1.msra.mxu0 %v801
        %1109 = vmatprep.subr.mxu0 %v778
        %1110 = vmatpush1.msra.mxu0 %v777
        %1111 = vmatprep.subr.mxu0 %v754
        %1112 = vmatpush1.msra.mxu0 %v753
        %1113 = vmatprep.subr.mxu0 %v730
        %1114 = vmatpush1.msra.mxu0 %v729
        %1115 = vmatprep.subr.mxu0 %v706
        %1116 = vmatpush1.msra.mxu0 %v705
        %1117 = vmatprep.subr.mxu0 %v682
        %1118 = vmatpush1.msra.mxu0 %v681
        %1119 = vmatprep.subr.mxu0 %v658
        %1120 = vmatpush1.msra.mxu0 %v657
        %1121 = vmatprep.subr.mxu0 %v634
        %1122 = vmatpush1.msra.mxu0 %v633
        %1123 = vmatprep.subr.mxu0 %v610
        %1124 = vmatpush1.msra.mxu0 %v609
        %1125 = vmatprep.subr.mxu0 %v586
        %1126 = vmatpush1.msra.mxu0 %v585
        %1127 = vmatprep.subr.mxu0 0.0
        %1128 = vmatpush2.msra.mxu0 0.0
        %1129 = vmatprep.subr.mxu0 0.0
        %1130 = vmatpush2.msra.mxu0 0.0
        %1131 = vmatprep.subr.mxu0 0.0
        %1132 = vmatpush2.msra.mxu0 0.0
        %1133 = vmatprep.subr.mxu0 0.0
        %1134 = vmatpush2.msra.mxu0 0.0
        %1135 = vmatprep.subr.mxu0 0.0
        %1136 = vmatpush2.msra.mxu0 0.0
        %1137 = vmatprep.subr.mxu0 0.0
        %1138 = vmatpush2.msra.mxu0 0.0
        %1139 = vmatprep.subr.mxu0 0.0
        %1140 = vmatpush2.msra.mxu0 0.0
        %1141 = vmatprep.subr.mxu0 0.0
        %1142 = vmatpush2.msra.mxu0 0.0
        %1143 = vmatprep.subr.mxu0 0.0
        %1144 = vmatpush2.msra.mxu0 0.0
        %1145 = vmatprep.subr.mxu0 0.0
        %1146 = vmatpush2.msra.mxu0 0.0
        %1147 = vmatprep.subr.mxu0 0.0
        %1148 = vmatpush2.msra.mxu0 0.0
        %1149 = vmatprep.subr.mxu0 0.0
        %1150 = vmatpush2.msra.mxu0 0.0
        %1151 = vmatprep.subr.mxu0 0.0
        %1152 = vmatpush2.msra.mxu0 0.0
        %1153 = vmatprep.subr.mxu0 0.0
        %1154 = vmatpush2.msra.mxu0 0.0
        %1155 = vmatprep.subr.mxu0 0.0
        %1156 = vmatpush2.msra.mxu0 0.0
        %1157 = vmatprep.subr.mxu0 0.0
        %1158 = vmatpush2.msra.mxu0 0.0
        %1159 = vmatprep.mubr.f32.mxu0 0.0
        %1160 = vmatmul.mubr.f32.gmra.mxu0 %v553
        %v1161 = vpop.f32.mrf.mxu0
        %v1162 = vadd.f32 %v978, %v1161
        %v1163 = vpop.f32.mrf.mxu0
        %v1164 = vadd.f32 %v982, %v1163
        %1165 = vmatprep.mubr.f32.mxu0 0.0
        %1166 = vmatmul.mubr.f32.gmra.mxu0 %v554
        %v1167 = vpop.f32.mrf.mxu0
        %v1168 = vadd.f32 %v978, %v1167
        %v1169 = vpop.f32.mrf.mxu0
        %v1170 = vadd.f32 %v982, %v1169
        %1171 = vmatprep.mubr.f32.mxu0 0.0
        %1172 = vmatmul.mubr.f32.gmra.mxu0 %v555
        %v1173 = vpop.f32.mrf.mxu0
        %v1174 = vadd.f32 %v978, %v1173
        %v1175 = vpop.f32.mrf.mxu0
        %v1176 = vadd.f32 %v982, %v1175
        %1177 = vmatprep.mubr.f32.mxu0 0.0
        %1178 = vmatmul.mubr.f32.gmra.mxu0 %v556
        %v1179 = vpop.f32.mrf.mxu0
        %v1180 = vadd.f32 %v978, %v1179
        %v1181 = vpop.f32.mrf.mxu0
        %v1182 = vadd.f32 %v982, %v1181
        %1183 = vmatprep.mubr.f32.mxu0 0.0
        %1184 = vmatmul.mubr.f32.gmra.mxu0 %v557
        %v1185 = vpop.f32.mrf.mxu0
        %v1186 = vadd.f32 %v978, %v1185
        %v1187 = vpop.f32.mrf.mxu0
        %v1188 = vadd.f32 %v982, %v1187
        %1189 = vmatprep.mubr.f32.mxu0 0.0
        %1190 = vmatmul.mubr.f32.gmra.mxu0 %v558
        %v1191 = vpop.f32.mrf.mxu0
        %v1192 = vadd.f32 %v978, %v1191
        %v1193 = vpop.f32.mrf.mxu0
        %v1194 = vadd.f32 %v982, %v1193
        %1195 = vmatprep.mubr.f32.mxu0 0.0
        %1196 = vmatmul.mubr.f32.gmra.mxu0 %v559
        %v1197 = vpop.f32.mrf.mxu0
        %v1198 = vadd.f32 %v978, %v1197
        %v1199 = vpop.f32.mrf.mxu0
        %v1200 = vadd.f32 %v982, %v1199
        %1201 = vmatprep.mubr.f32.mxu0 0.0
        %1202 = vmatmul.mubr.f32.gmra.mxu0 %v560
        %v1203 = vpop.f32.mrf.mxu0
        %v1204 = vadd.f32 %v978, %v1203
        %v1205 = vpop.f32.mrf.mxu0
        %v1206 = vadd.f32 %v982, %v1205
        %1207 = vmatprep.mubr.f32.mxu0 0.0
        %1208 = vmatmul.mubr.f32.gmra.mxu0 %v561
        %v1209 = vpop.f32.mrf.mxu0
        %v1210 = vadd.f32 %v978, %v1209
        %v1211 = vpop.f32.mrf.mxu0
        %v1212 = vadd.f32 %v982, %v1211
        %1213 = vmatprep.mubr.f32.mxu0 0.0
        %1214 = vmatmul.mubr.f32.gmra.mxu0 %v562
        %v1215 = vpop.f32.mrf.mxu0
        %v1216 = vadd.f32 %v978, %v1215
        %v1217 = vpop.f32.mrf.mxu0
        %v1218 = vadd.f32 %v982, %v1217
        %1219 = vmatprep.mubr.f32.mxu0 0.0
        %1220 = vmatmul.mubr.f32.gmra.mxu0 %v563
        %v1221 = vpop.f32.mrf.mxu0
        %v1222 = vadd.f32 %v978, %v1221
        %v1223 = vpop.f32.mrf.mxu0
        %v1224 = vadd.f32 %v982, %v1223
        %1225 = vmatprep.mubr.f32.mxu0 0.0
        %1226 = vmatmul.mubr.f32.gmra.mxu0 %v564
        %v1227 = vpop.f32.mrf.mxu0
        %v1228 = vadd.f32 %v978, %v1227
        %v1229 = vpop.f32.mrf.mxu0
        %v1230 = vadd.f32 %v982, %v1229
        %1231 = vmatprep.mubr.f32.mxu0 0.0
        %1232 = vmatmul.mubr.f32.gmra.mxu0 %v565
        %v1233 = vpop.f32.mrf.mxu0
        %v1234 = vadd.f32 %v978, %v1233
        %v1235 = vpop.f32.mrf.mxu0
        %v1236 = vadd.f32 %v982, %v1235
        %1237 = vmatprep.mubr.f32.mxu0 0.0
        %1238 = vmatmul.mubr.f32.gmra.mxu0 %v566
        %v1239 = vpop.f32.mrf.mxu0
        %v1240 = vadd.f32 %v978, %v1239
        %v1241 = vpop.f32.mrf.mxu0
        %v1242 = vadd.f32 %v982, %v1241
        %1243 = vmatprep.mubr.f32.mxu0 0.0
        %1244 = vmatmul.mubr.f32.gmra.mxu0 %v567
        %v1245 = vpop.f32.mrf.mxu0
        %v1246 = vadd.f32 %v978, %v1245
        %v1247 = vpop.f32.mrf.mxu0
        %v1248 = vadd.f32 %v982, %v1247
        %1249 = vmatprep.mubr.f32.mxu0 0.0
        %1250 = vmatmul.mubr.f32.gmra.mxu0 %v568
        %v1251 = vpop.f32.mrf.mxu0
        %v1252 = vadd.f32 %v978, %v1251
        %v1253 = vpop.f32.mrf.mxu0
        %v1254 = vadd.f32 %v982, %v1253
        %1255 = vmatprep.mubr.f32.mxu0 0.0
        %1256 = vmatmul.mubr.f32.gmra.mxu0 %v569
        %v1257 = vpop.f32.mrf.mxu0
        %v1258 = vadd.f32 %v978, %v1257
        %v1259 = vpop.f32.mrf.mxu0
        %v1260 = vadd.f32 %v982, %v1259
        %1261 = vmatprep.mubr.f32.mxu0 0.0
        %1262 = vmatmul.mubr.f32.gmra.mxu0 %v570
        %v1263 = vpop.f32.mrf.mxu0
        %v1264 = vadd.f32 %v978, %v1263
        %v1265 = vpop.f32.mrf.mxu0
        %v1266 = vadd.f32 %v982, %v1265
        %1267 = vmatprep.mubr.f32.mxu0 0.0
        %1268 = vmatmul.mubr.f32.gmra.mxu0 %v571
        %v1269 = vpop.f32.mrf.mxu0
        %v1270 = vadd.f32 %v978, %v1269
        %v1271 = vpop.f32.mrf.mxu0
        %v1272 = vadd.f32 %v982, %v1271
        %1273 = vmatprep.mubr.f32.mxu0 0.0
        %1274 = vmatmul.mubr.f32.gmra.mxu0 %v572
        %v1275 = vpop.f32.mrf.mxu0
        %v1276 = vadd.f32 %v978, %v1275
        %v1277 = vpop.f32.mrf.mxu0
        %v1278 = vadd.f32 %v982, %v1277
        %1279 = vmatprep.mubr.f32.mxu0 0.0
        %1280 = vmatmul.mubr.f32.gmra.mxu0 %v573
        %v1281 = vpop.f32.mrf.mxu0
        %v1282 = vadd.f32 %v978, %v1281
        %v1283 = vpop.f32.mrf.mxu0
        %v1284 = vadd.f32 %v982, %v1283
        %1285 = vmatprep.mubr.f32.mxu0 0.0
        %1286 = vmatmul.mubr.f32.gmra.mxu0 %v574
        %v1287 = vpop.f32.mrf.mxu0
        %v1288 = vadd.f32 %v978, %v1287
        %v1289 = vpop.f32.mrf.mxu0
        %v1290 = vadd.f32 %v982, %v1289
        %1291 = vmatprep.mubr.f32.mxu0 0.0
        %1292 = vmatmul.mubr.f32.gmra.mxu0 %v575
        %v1293 = vpop.f32.mrf.mxu0
        %v1294 = vadd.f32 %v978, %v1293
        %v1295 = vpop.f32.mrf.mxu0
        %v1296 = vadd.f32 %v982, %v1295
        %1297 = vmatprep.mubr.f32.mxu0 0.0
        %1298 = vmatmul.mubr.f32.gmra.mxu0 %v576
        %v1299 = vpop.f32.mrf.mxu0
        %v1300 = vadd.f32 %v978, %v1299
        %v1301 = vpop.f32.mrf.mxu0
        %v1302 = vadd.f32 %v982, %v1301
        %1303 = vmatprep.mubr.f32.mxu0 0.0
        %1304 = vmatmul.mubr.f32.gmra.mxu0 %v577
        %v1305 = vpop.f32.mrf.mxu0
        %v1306 = vadd.f32 %v978, %v1305
        %v1307 = vpop.f32.mrf.mxu0
        %v1308 = vadd.f32 %v982, %v1307
        %1309 = vmatprep.mubr.f32.mxu0 0.0
        %1310 = vmatmul.mubr.f32.gmra.mxu0 %v578
        %v1311 = vpop.f32.mrf.mxu0
        %v1312 = vadd.f32 %v978, %v1311
        %v1313 = vpop.f32.mrf.mxu0
        %v1314 = vadd.f32 %v982, %v1313
        %1315 = vmatprep.mubr.f32.mxu0 0.0
        %1316 = vmatmul.mubr.f32.gmra.mxu0 %v579
        %v1317 = vpop.f32.mrf.mxu0
        %v1318 = vadd.f32 %v978, %v1317
        %v1319 = vpop.f32.mrf.mxu0
        %v1320 = vadd.f32 %v982, %v1319
        %1321 = vmatprep.mubr.f32.mxu0 0.0
        %1322 = vmatmul.mubr.f32.gmra.mxu0 %v580
        %v1323 = vpop.f32.mrf.mxu0
        %v1324 = vadd.f32 %v978, %v1323
        %v1325 = vpop.f32.mrf.mxu0
        %v1326 = vadd.f32 %v982, %v1325
        %1327 = vmatprep.mubr.f32.mxu0 0.0
        %1328 = vmatmul.mubr.f32.gmra.mxu0 %v581
        %v1329 = vpop.f32.mrf.mxu0
        %v1330 = vadd.f32 %v978, %v1329
        %v1331 = vpop.f32.mrf.mxu0
        %v1332 = vadd.f32 %v982, %v1331
        %1333 = vmatprep.mubr.f32.mxu0 0.0
        %1334 = vmatmul.mubr.f32.gmra.mxu0 %v582
        %v1335 = vpop.f32.mrf.mxu0
        %v1336 = vadd.f32 %v978, %v1335
        %v1337 = vpop.f32.mrf.mxu0
        %v1338 = vadd.f32 %v982, %v1337
        %1339 = vmatprep.mubr.f32.mxu0 0.0
        %1340 = vmatmul.mubr.f32.gmra.mxu0 %v583
        %v1341 = vpop.f32.mrf.mxu0
        %v1342 = vadd.f32 %v978, %v1341
        %v1343 = vpop.f32.mrf.mxu0
        %v1344 = vadd.f32 %v982, %v1343
        %1345 = vmatprep.mubr.f32.mxu0 0.0
        %1346 = vmatmul.mubr.f32.gmra.mxu0 %v584
        %v1347 = vpop.f32.mrf.mxu0
        %v1348 = vadd.f32 %v978, %v1347
        %v1349 = vpop.f32.mrf.mxu0
        %v1350 = vadd.f32 %v982, %v1349
        %1351 = vdwg.mxu0
        %1352 = vmatprep.subr.mxu0 %v948
        %1353 = vmatpush1.msra.mxu0 %v947
        %1354 = vmatprep.subr.mxu0 %v924
        %1355 = vmatpush1.msra.mxu0 %v923
        %1356 = vmatprep.subr.mxu0 %v900
        %1357 = vmatpush1.msra.mxu0 %v899
        %1358 = vmatprep.subr.mxu0 %v876
        %1359 = vmatpush1.msra.mxu0 %v875
        %1360 = vmatprep.subr.mxu0 %v852
        %1361 = vmatpush1.msra.mxu0 %v851
        %1362 = vmatprep.subr.mxu0 %v828
        %1363 = vmatpush1.msra.mxu0 %v827
        %1364 = vmatprep.subr.mxu0 %v804
        %1365 = vmatpush1.msra.mxu0 %v803
        %1366 = vmatprep.subr.mxu0 %v780
        %1367 = vmatpush1.msra.mxu0 %v779
        %1368 = vmatprep.subr.mxu0 %v756
        %1369 = vmatpush1.msra.mxu0 %v755
        %1370 = vmatprep.subr.mxu0 %v732
        %1371 = vmatpush1.msra.mxu0 %v731
        %1372 = vmatprep.subr.mxu0 %v708
        %1373 = vmatpush1.msra.mxu0 %v707
        %1374 = vmatprep.subr.mxu0 %v684
        %1375 = vmatpush1.msra.mxu0 %v683
        %1376 = vmatprep.subr.mxu0 %v660
        %1377 = vmatpush1.msra.mxu0 %v659
        %1378 = vmatprep.subr.mxu0 %v636
        %1379 = vmatpush1.msra.mxu0 %v635
        %1380 = vmatprep.subr.mxu0 %v612
        %1381 = vmatpush1.msra.mxu0 %v611
        %1382 = vmatprep.subr.mxu0 %v588
        %1383 = vmatpush1.msra.mxu0 %v587
        %1384 = vmatprep.subr.mxu0 0.0
        %1385 = vmatpush2.msra.mxu0 0.0
        %1386 = vmatprep.subr.mxu0 0.0
        %1387 = vmatpush2.msra.mxu0 0.0
        %1388 = vmatprep.subr.mxu0 0.0
        %1389 = vmatpush2.msra.mxu0 0.0
        %1390 = vmatprep.subr.mxu0 0.0
        %1391 = vmatpush2.msra.mxu0 0.0
        %1392 = vmatprep.subr.mxu0 0.0
        %1393 = vmatpush2.msra.mxu0 0.0
        %1394 = vmatprep.subr.mxu0 0.0
        %1395 = vmatpush2.msra.mxu0 0.0
        %1396 = vmatprep.subr.mxu0 0.0
        %1397 = vmatpush2.msra.mxu0 0.0
        %1398 = vmatprep.subr.mxu0 0.0
        %1399 = vmatpush2.msra.mxu0 0.0
        %1400 = vmatprep.subr.mxu0 0.0
        %1401 = vmatpush2.msra.mxu0 0.0
        %1402 = vmatprep.subr.mxu0 0.0
        %1403 = vmatpush2.msra.mxu0 0.0
        %1404 = vmatprep.subr.mxu0 0.0
        %1405 = vmatpush2.msra.mxu0 0.0
        %1406 = vmatprep.subr.mxu0 0.0
        %1407 = vmatpush2.msra.mxu0 0.0
        %1408 = vmatprep.subr.mxu0 0.0
        %1409 = vmatpush2.msra.mxu0 0.0
        %1410 = vmatprep.subr.mxu0 0.0
        %1411 = vmatpush2.msra.mxu0 0.0
        %1412 = vmatprep.subr.mxu0 0.0
        %1413 = vmatpush2.msra.mxu0 0.0
        %1414 = vmatprep.subr.mxu0 0.0
        %1415 = vmatpush2.msra.mxu0 0.0
        %1416 = vmatprep.mubr.f32.mxu0 0.0
        %1417 = vmatmul.mubr.f32.gmra.mxu0 %v553
        %v1418 = vpop.f32.mrf.mxu0
        %v1419 = vadd.f32 %v986, %v1418
        %v1420 = vpop.f32.mrf.mxu0
        %v1421 = vadd.f32 %v990, %v1420
        %1422 = vmatprep.mubr.f32.mxu0 0.0
        %1423 = vmatmul.mubr.f32.gmra.mxu0 %v554
        %v1424 = vpop.f32.mrf.mxu0
        %v1425 = vadd.f32 %v986, %v1424
        %v1426 = vpop.f32.mrf.mxu0
        %v1427 = vadd.f32 %v990, %v1426
        %1428 = vmatprep.mubr.f32.mxu0 0.0
        %1429 = vmatmul.mubr.f32.gmra.mxu0 %v555
        %v1430 = vpop.f32.mrf.mxu0
        %v1431 = vadd.f32 %v986, %v1430
        %v1432 = vpop.f32.mrf.mxu0
        %v1433 = vadd.f32 %v990, %v1432
        %1434 = vmatprep.mubr.f32.mxu0 0.0
        %1435 = vmatmul.mubr.f32.gmra.mxu0 %v556
        %v1436 = vpop.f32.mrf.mxu0
        %v1437 = vadd.f32 %v986, %v1436
        %v1438 = vpop.f32.mrf.mxu0
        %v1439 = vadd.f32 %v990, %v1438
        %1440 = vmatprep.mubr.f32.mxu0 0.0
        %1441 = vmatmul.mubr.f32.gmra.mxu0 %v557
        %v1442 = vpop.f32.mrf.mxu0
        %v1443 = vadd.f32 %v986, %v1442
        %v1444 = vpop.f32.mrf.mxu0
        %v1445 = vadd.f32 %v990, %v1444
        %1446 = vmatprep.mubr.f32.mxu0 0.0
        %1447 = vmatmul.mubr.f32.gmra.mxu0 %v558
        %v1448 = vpop.f32.mrf.mxu0
        %v1449 = vadd.f32 %v986, %v1448
        %v1450 = vpop.f32.mrf.mxu0
        %v1451 = vadd.f32 %v990, %v1450
        %1452 = vmatprep.mubr.f32.mxu0 0.0
        %1453 = vmatmul.mubr.f32.gmra.mxu0 %v559
        %v1454 = vpop.f32.mrf.mxu0
        %v1455 = vadd.f32 %v986, %v1454
        %v1456 = vpop.f32.mrf.mxu0
        %v1457 = vadd.f32 %v990, %v1456
        %1458 = vmatprep.mubr.f32.mxu0 0.0
        %1459 = vmatmul.mubr.f32.gmra.mxu0 %v560
        %v1460 = vpop.f32.mrf.mxu0
        %v1461 = vadd.f32 %v986, %v1460
        %v1462 = vpop.f32.mrf.mxu0
        %v1463 = vadd.f32 %v990, %v1462
        %1464 = vmatprep.mubr.f32.mxu0 0.0
        %1465 = vmatmul.mubr.f32.gmra.mxu0 %v561
        %v1466 = vpop.f32.mrf.mxu0
        %v1467 = vadd.f32 %v986, %v1466
        %v1468 = vpop.f32.mrf.mxu0
        %v1469 = vadd.f32 %v990, %v1468
        %1470 = vmatprep.mubr.f32.mxu0 0.0
        %1471 = vmatmul.mubr.f32.gmra.mxu0 %v562
        %v1472 = vpop.f32.mrf.mxu0
        %v1473 = vadd.f32 %v986, %v1472
        %v1474 = vpop.f32.mrf.mxu0
        %v1475 = vadd.f32 %v990, %v1474
        %1476 = vmatprep.mubr.f32.mxu0 0.0
        %1477 = vmatmul.mubr.f32.gmra.mxu0 %v563
        %v1478 = vpop.f32.mrf.mxu0
        %v1479 = vadd.f32 %v986, %v1478
        %v1480 = vpop.f32.mrf.mxu0
        %v1481 = vadd.f32 %v990, %v1480
        %1482 = vmatprep.mubr.f32.mxu0 0.0
        %1483 = vmatmul.mubr.f32.gmra.mxu0 %v564
        %v1484 = vpop.f32.mrf.mxu0
        %v1485 = vadd.f32 %v986, %v1484
        %v1486 = vpop.f32.mrf.mxu0
        %v1487 = vadd.f32 %v990, %v1486
        %1488 = vmatprep.mubr.f32.mxu0 0.0
        %1489 = vmatmul.mubr.f32.gmra.mxu0 %v565
        %v1490 = vpop.f32.mrf.mxu0
        %v1491 = vadd.f32 %v986, %v1490
        %v1492 = vpop.f32.mrf.mxu0
        %v1493 = vadd.f32 %v990, %v1492
        %1494 = vmatprep.mubr.f32.mxu0 0.0
        %1495 = vmatmul.mubr.f32.gmra.mxu0 %v566
        %v1496 = vpop.f32.mrf.mxu0
        %v1497 = vadd.f32 %v986, %v1496
        %v1498 = vpop.f32.mrf.mxu0
        %v1499 = vadd.f32 %v990, %v1498
        %1500 = vmatprep.mubr.f32.mxu0 0.0
        %1501 = vmatmul.mubr.f32.gmra.mxu0 %v567
        %v1502 = vpop.f32.mrf.mxu0
        %v1503 = vadd.f32 %v986, %v1502
        %v1504 = vpop.f32.mrf.mxu0
        %v1505 = vadd.f32 %v990, %v1504
        %1506 = vmatprep.mubr.f32.mxu0 0.0
        %1507 = vmatmul.mubr.f32.gmra.mxu0 %v568
        %v1508 = vpop.f32.mrf.mxu0
        %v1509 = vadd.f32 %v986, %v1508
        %v1510 = vpop.f32.mrf.mxu0
        %v1511 = vadd.f32 %v990, %v1510
        %1512 = vmatprep.mubr.f32.mxu0 0.0
        %1513 = vmatmul.mubr.f32.gmra.mxu0 %v569
        %v1514 = vpop.f32.mrf.mxu0
        %v1515 = vadd.f32 %v986, %v1514
        %v1516 = vpop.f32.mrf.mxu0
        %v1517 = vadd.f32 %v990, %v1516
        %1518 = vmatprep.mubr.f32.mxu0 0.0
        %1519 = vmatmul.mubr.f32.gmra.mxu0 %v570
        %v1520 = vpop.f32.mrf.mxu0
        %v1521 = vadd.f32 %v986, %v1520
        %v1522 = vpop.f32.mrf.mxu0
        %v1523 = vadd.f32 %v990, %v1522
        %1524 = vmatprep.mubr.f32.mxu0 0.0
        %1525 = vmatmul.mubr.f32.gmra.mxu0 %v571
        %v1526 = vpop.f32.mrf.mxu0
        %v1527 = vadd.f32 %v986, %v1526
        %v1528 = vpop.f32.mrf.mxu0
        %v1529 = vadd.f32 %v990, %v1528
        %1530 = vmatprep.mubr.f32.mxu0 0.0
        %1531 = vmatmul.mubr.f32.gmra.mxu0 %v572
        %v1532 = vpop.f32.mrf.mxu0
        %v1533 = vadd.f32 %v986, %v1532
        %v1534 = vpop.f32.mrf.mxu0
        %v1535 = vadd.f32 %v990, %v1534
        %1536 = vmatprep.mubr.f32.mxu0 0.0
        %1537 = vmatmul.mubr.f32.gmra.mxu0 %v573
        %v1538 = vpop.f32.mrf.mxu0
        %v1539 = vadd.f32 %v986, %v1538
        %v1540 = vpop.f32.mrf.mxu0
        %v1541 = vadd.f32 %v990, %v1540
        %1542 = vmatprep.mubr.f32.mxu0 0.0
        %1543 = vmatmul.mubr.f32.gmra.mxu0 %v574
        %v1544 = vpop.f32.mrf.mxu0
        %v1545 = vadd.f32 %v986, %v1544
        %v1546 = vpop.f32.mrf.mxu0
        %v1547 = vadd.f32 %v990, %v1546
        %1548 = vmatprep.mubr.f32.mxu0 0.0
        %1549 = vmatmul.mubr.f32.gmra.mxu0 %v575
        %v1550 = vpop.f32.mrf.mxu0
        %v1551 = vadd.f32 %v986, %v1550
        %v1552 = vpop.f32.mrf.mxu0
        %v1553 = vadd.f32 %v990, %v1552
        %1554 = vmatprep.mubr.f32.mxu0 0.0
        %1555 = vmatmul.mubr.f32.gmra.mxu0 %v576
        %v1556 = vpop.f32.mrf.mxu0
        %v1557 = vadd.f32 %v986, %v1556
        %v1558 = vpop.f32.mrf.mxu0
        %v1559 = vadd.f32 %v990, %v1558
        %1560 = vmatprep.mubr.f32.mxu0 0.0
        %1561 = vmatmul.mubr.f32.gmra.mxu0 %v577
        %v1562 = vpop.f32.mrf.mxu0
        %v1563 = vadd.f32 %v986, %v1562
        %v1564 = vpop.f32.mrf.mxu0
        %v1565 = vadd.f32 %v990, %v1564
        %1566 = vmatprep.mubr.f32.mxu0 0.0
        %1567 = vmatmul.mubr.f32.gmra.mxu0 %v578
        %v1568 = vpop.f32.mrf.mxu0
        %v1569 = vadd.f32 %v986, %v1568
        %v1570 = vpop.f32.mrf.mxu0
        %v1571 = vadd.f32 %v990, %v1570
        %1572 = vmatprep.mubr.f32.mxu0 0.0
        %1573 = vmatmul.mubr.f32.gmra.mxu0 %v579
        %v1574 = vpop.f32.mrf.mxu0
        %v1575 = vadd.f32 %v986, %v1574
        %v1576 = vpop.f32.mrf.mxu0
        %v1577 = vadd.f32 %v990, %v1576
        %1578 = vmatprep.mubr.f32.mxu0 0.0
        %1579 = vmatmul.mubr.f32.gmra.mxu0 %v580
        %v1580 = vpop.f32.mrf.mxu0
        %v1581 = vadd.f32 %v986, %v1580
        %v1582 = vpop.f32.mrf.mxu0
        %v1583 = vadd.f32 %v990, %v1582
        %1584 = vmatprep.mubr.f32.mxu0 0.0
        %1585 = vmatmul.mubr.f32.gmra.mxu0 %v581
        %v1586 = vpop.f32.mrf.mxu0
        %v1587 = vadd.f32 %v986, %v1586
        %v1588 = vpop.f32.mrf.mxu0
        %v1589 = vadd.f32 %v990, %v1588
        %1590 = vmatprep.mubr.f32.mxu0 0.0
        %1591 = vmatmul.mubr.f32.gmra.mxu0 %v582
        %v1592 = vpop.f32.mrf.mxu0
        %v1593 = vadd.f32 %v986, %v1592
        %v1594 = vpop.f32.mrf.mxu0
        %v1595 = vadd.f32 %v990, %v1594
        %1596 = vmatprep.mubr.f32.mxu0 0.0
        %1597 = vmatmul.mubr.f32.gmra.mxu0 %v583
        %v1598 = vpop.f32.mrf.mxu0
        %v1599 = vadd.f32 %v986, %v1598
        %v1600 = vpop.f32.mrf.mxu0
        %v1601 = vadd.f32 %v990, %v1600
        %1602 = vmatprep.mubr.f32.mxu0 0.0
        %1603 = vmatmul.mubr.f32.gmra.mxu0 %v584
        %v1604 = vpop.f32.mrf.mxu0
        %v1605 = vadd.f32 %v986, %v1604
        %v1606 = vpop.f32.mrf.mxu0
        %v1607 = vadd.f32 %v990, %v1606
        %1608 = vdwg.mxu0
        %1609 = vmatprep.subr.mxu0 %v950
        %1610 = vmatpush1.msra.mxu0 %v949
        %1611 = vmatprep.subr.mxu0 %v926
        %1612 = vmatpush1.msra.mxu0 %v925
        %1613 = vmatprep.subr.mxu0 %v902
        %1614 = vmatpush1.msra.mxu0 %v901
        %1615 = vmatprep.subr.mxu0 %v878
        %1616 = vmatpush1.msra.mxu0 %v877
        %1617 = vmatprep.subr.mxu0 %v854
        %1618 = vmatpush1.msra.mxu0 %v853
        %1619 = vmatprep.subr.mxu0 %v830
        %1620 = vmatpush1.msra.mxu0 %v829
        %1621 = vmatprep.subr.mxu0 %v806
        %1622 = vmatpush1.msra.mxu0 %v805
        %1623 = vmatprep.subr.mxu0 %v782
        %1624 = vmatpush1.msra.mxu0 %v781
        %1625 = vmatprep.subr.mxu0 %v758
        %1626 = vmatpush1.msra.mxu0 %v757
        %1627 = vmatprep.subr.mxu0 %v734
        %1628 = vmatpush1.msra.mxu0 %v733
        %1629 = vmatprep.subr.mxu0 %v710
        %1630 = vmatpush1.msra.mxu0 %v709
        %1631 = vmatprep.subr.mxu0 %v686
        %1632 = vmatpush1.msra.mxu0 %v685
        %1633 = vmatprep.subr.mxu0 %v662
        %1634 = vmatpush1.msra.mxu0 %v661
        %1635 = vmatprep.subr.mxu0 %v638
        %1636 = vmatpush1.msra.mxu0 %v637
        %1637 = vmatprep.subr.mxu0 %v614
        %1638 = vmatpush1.msra.mxu0 %v613
        %1639 = vmatprep.subr.mxu0 %v590
        %1640 = vmatpush1.msra.mxu0 %v589
        %1641 = vmatprep.subr.mxu0 0.0
        %1642 = vmatpush2.msra.mxu0 0.0
        %1643 = vmatprep.subr.mxu0 0.0
        %1644 = vmatpush2.msra.mxu0 0.0
        %1645 = vmatprep.subr.mxu0 0.0
        %1646 = vmatpush2.msra.mxu0 0.0
        %1647 = vmatprep.subr.mxu0 0.0
        %1648 = vmatpush2.msra.mxu0 0.0
        %1649 = vmatprep.subr.mxu0 0.0
        %1650 = vmatpush2.msra.mxu0 0.0
        %1651 = vmatprep.subr.mxu0 0.0
        %1652 = vmatpush2.msra.mxu0 0.0
        %1653 = vmatprep.subr.mxu0 0.0
        %1654 = vmatpush2.msra.mxu0 0.0
        %1655 = vmatprep.subr.mxu0 0.0
        %1656 = vmatpush2.msra.mxu0 0.0
        %1657 = vmatprep.subr.mxu0 0.0
        %1658 = vmatpush2.msra.mxu0 0.0
        %1659 = vmatprep.subr.mxu0 0.0
        %1660 = vmatpush2.msra.mxu0 0.0
        %1661 = vmatprep.subr.mxu0 0.0
        %1662 = vmatpush2.msra.mxu0 0.0
        %1663 = vmatprep.subr.mxu0 0.0
        %1664 = vmatpush2.msra.mxu0 0.0
        %1665 = vmatprep.subr.mxu0 0.0
        %1666 = vmatpush2.msra.mxu0 0.0
        %1667 = vmatprep.subr.mxu0 0.0
        %1668 = vmatpush2.msra.mxu0 0.0
        %1669 = vmatprep.subr.mxu0 0.0
        %1670 = vmatpush2.msra.mxu0 0.0
        %1671 = vmatprep.subr.mxu0 0.0
        %1672 = vmatpush2.msra.mxu0 0.0
        %1673 = vmatprep.mubr.f32.mxu0 0.0
        %1674 = vmatmul.mubr.f32.gmra.mxu0 %v553
        %v1675 = vpop.f32.mrf.mxu0
        %v1676 = vadd.f32 %v994, %v1675
        %v1677 = vpop.f32.mrf.mxu0
        %v1678 = vadd.f32 %v998, %v1677
        %1679 = vmatprep.mubr.f32.mxu0 0.0
        %1680 = vmatmul.mubr.f32.gmra.mxu0 %v554
        %v1681 = vpop.f32.mrf.mxu0
        %v1682 = vadd.f32 %v994, %v1681
        %v1683 = vpop.f32.mrf.mxu0
        %v1684 = vadd.f32 %v998, %v1683
        %1685 = vmatprep.mubr.f32.mxu0 0.0
        %1686 = vmatmul.mubr.f32.gmra.mxu0 %v555
        %v1687 = vpop.f32.mrf.mxu0
        %v1688 = vadd.f32 %v994, %v1687
        %v1689 = vpop.f32.mrf.mxu0
        %v1690 = vadd.f32 %v998, %v1689
        %1691 = vmatprep.mubr.f32.mxu0 0.0
        %1692 = vmatmul.mubr.f32.gmra.mxu0 %v556
        %v1693 = vpop.f32.mrf.mxu0
        %v1694 = vadd.f32 %v994, %v1693
        %v1695 = vpop.f32.mrf.mxu0
        %v1696 = vadd.f32 %v998, %v1695
        %1697 = vmatprep.mubr.f32.mxu0 0.0
        %1698 = vmatmul.mubr.f32.gmra.mxu0 %v557
        %v1699 = vpop.f32.mrf.mxu0
        %v1700 = vadd.f32 %v994, %v1699
        %v1701 = vpop.f32.mrf.mxu0
        %v1702 = vadd.f32 %v998, %v1701
        %1703 = vmatprep.mubr.f32.mxu0 0.0
        %1704 = vmatmul.mubr.f32.gmra.mxu0 %v558
        %v1705 = vpop.f32.mrf.mxu0
        %v1706 = vadd.f32 %v994, %v1705
        %v1707 = vpop.f32.mrf.mxu0
        %v1708 = vadd.f32 %v998, %v1707
        %1709 = vmatprep.mubr.f32.mxu0 0.0
        %1710 = vmatmul.mubr.f32.gmra.mxu0 %v559
        %v1711 = vpop.f32.mrf.mxu0
        %v1712 = vadd.f32 %v994, %v1711
        %v1713 = vpop.f32.mrf.mxu0
        %v1714 = vadd.f32 %v998, %v1713
        %1715 = vmatprep.mubr.f32.mxu0 0.0
        %1716 = vmatmul.mubr.f32.gmra.mxu0 %v560
        %v1717 = vpop.f32.mrf.mxu0
        %v1718 = vadd.f32 %v994, %v1717
        %v1719 = vpop.f32.mrf.mxu0
        %v1720 = vadd.f32 %v998, %v1719
        %1721 = vmatprep.mubr.f32.mxu0 0.0
        %1722 = vmatmul.mubr.f32.gmra.mxu0 %v561
        %v1723 = vpop.f32.mrf.mxu0
        %v1724 = vadd.f32 %v994, %v1723
        %v1725 = vpop.f32.mrf.mxu0
        %v1726 = vadd.f32 %v998, %v1725
        %1727 = vmatprep.mubr.f32.mxu0 0.0
        %1728 = vmatmul.mubr.f32.gmra.mxu0 %v562
        %v1729 = vpop.f32.mrf.mxu0
        %v1730 = vadd.f32 %v994, %v1729
        %v1731 = vpop.f32.mrf.mxu0
        %v1732 = vadd.f32 %v998, %v1731
        %1733 = vmatprep.mubr.f32.mxu0 0.0
        %1734 = vmatmul.mubr.f32.gmra.mxu0 %v563
        %v1735 = vpop.f32.mrf.mxu0
        %v1736 = vadd.f32 %v994, %v1735
        %v1737 = vpop.f32.mrf.mxu0
        %v1738 = vadd.f32 %v998, %v1737
        %1739 = vmatprep.mubr.f32.mxu0 0.0
        %1740 = vmatmul.mubr.f32.gmra.mxu0 %v564
        %v1741 = vpop.f32.mrf.mxu0
        %v1742 = vadd.f32 %v994, %v1741
        %v1743 = vpop.f32.mrf.mxu0
        %v1744 = vadd.f32 %v998, %v1743
        %1745 = vmatprep.mubr.f32.mxu0 0.0
        %1746 = vmatmul.mubr.f32.gmra.mxu0 %v565
        %v1747 = vpop.f32.mrf.mxu0
        %v1748 = vadd.f32 %v994, %v1747
        %v1749 = vpop.f32.mrf.mxu0
        %v1750 = vadd.f32 %v998, %v1749
        %1751 = vmatprep.mubr.f32.mxu0 0.0
        %1752 = vmatmul.mubr.f32.gmra.mxu0 %v566
        %v1753 = vpop.f32.mrf.mxu0
        %v1754 = vadd.f32 %v994, %v1753
        %v1755 = vpop.f32.mrf.mxu0
        %v1756 = vadd.f32 %v998, %v1755
        %1757 = vmatprep.mubr.f32.mxu0 0.0
        %1758 = vmatmul.mubr.f32.gmra.mxu0 %v567
        %v1759 = vpop.f32.mrf.mxu0
        %v1760 = vadd.f32 %v994, %v1759
        %v1761 = vpop.f32.mrf.mxu0
        %v1762 = vadd.f32 %v998, %v1761
        %1763 = vmatprep.mubr.f32.mxu0 0.0
        %1764 = vmatmul.mubr.f32.gmra.mxu0 %v568
        %v1765 = vpop.f32.mrf.mxu0
        %v1766 = vadd.f32 %v994, %v1765
        %v1767 = vpop.f32.mrf.mxu0
        %v1768 = vadd.f32 %v998, %v1767
        %1769 = vmatprep.mubr.f32.mxu0 0.0
        %1770 = vmatmul.mubr.f32.gmra.mxu0 %v569
        %v1771 = vpop.f32.mrf.mxu0
        %v1772 = vadd.f32 %v994, %v1771
        %v1773 = vpop.f32.mrf.mxu0
        %v1774 = vadd.f32 %v998, %v1773
        %1775 = vmatprep.mubr.f32.mxu0 0.0
        %1776 = vmatmul.mubr.f32.gmra.mxu0 %v570
        %v1777 = vpop.f32.mrf.mxu0
        %v1778 = vadd.f32 %v994, %v1777
        %v1779 = vpop.f32.mrf.mxu0
        %v1780 = vadd.f32 %v998, %v1779
        %1781 = vmatprep.mubr.f32.mxu0 0.0
        %1782 = vmatmul.mubr.f32.gmra.mxu0 %v571
        %v1783 = vpop.f32.mrf.mxu0
        %v1784 = vadd.f32 %v994, %v1783
        %v1785 = vpop.f32.mrf.mxu0
        %v1786 = vadd.f32 %v998, %v1785
        %1787 = vmatprep.mubr.f32.mxu0 0.0
        %1788 = vmatmul.mubr.f32.gmra.mxu0 %v572
        %v1789 = vpop.f32.mrf.mxu0
        %v1790 = vadd.f32 %v994, %v1789
        %v1791 = vpop.f32.mrf.mxu0
        %v1792 = vadd.f32 %v998, %v1791
        %1793 = vmatprep.mubr.f32.mxu0 0.0
        %1794 = vmatmul.mubr.f32.gmra.mxu0 %v573
        %v1795 = vpop.f32.mrf.mxu0
        %v1796 = vadd.f32 %v994, %v1795
        %v1797 = vpop.f32.mrf.mxu0
        %v1798 = vadd.f32 %v998, %v1797
        %1799 = vmatprep.mubr.f32.mxu0 0.0
        %1800 = vmatmul.mubr.f32.gmra.mxu0 %v574
        %v1801 = vpop.f32.mrf.mxu0
        %v1802 = vadd.f32 %v994, %v1801
        %v1803 = vpop.f32.mrf.mxu0
        %v1804 = vadd.f32 %v998, %v1803
        %1805 = vmatprep.mubr.f32.mxu0 0.0
        %1806 = vmatmul.mubr.f32.gmra.mxu0 %v575
        %v1807 = vpop.f32.mrf.mxu0
        %v1808 = vadd.f32 %v994, %v1807
        %v1809 = vpop.f32.mrf.mxu0
        %v1810 = vadd.f32 %v998, %v1809
        %1811 = vmatprep.mubr.f32.mxu0 0.0
        %1812 = vmatmul.mubr.f32.gmra.mxu0 %v576
        %v1813 = vpop.f32.mrf.mxu0
        %v1814 = vadd.f32 %v994, %v1813
        %v1815 = vpop.f32.mrf.mxu0
        %v1816 = vadd.f32 %v998, %v1815
        %1817 = vmatprep.mubr.f32.mxu0 0.0
        %1818 = vmatmul.mubr.f32.gmra.mxu0 %v577
        %v1819 = vpop.f32.mrf.mxu0
        %v1820 = vadd.f32 %v994, %v1819
        %v1821 = vpop.f32.mrf.mxu0
        %v1822 = vadd.f32 %v998, %v1821
        %1823 = vmatprep.mubr.f32.mxu0 0.0
        %1824 = vmatmul.mubr.f32.gmra.mxu0 %v578
        %v1825 = vpop.f32.mrf.mxu0
        %v1826 = vadd.f32 %v994, %v1825
        %v1827 = vpop.f32.mrf.mxu0
        %v1828 = vadd.f32 %v998, %v1827
        %1829 = vmatprep.mubr.f32.mxu0 0.0
        %1830 = vmatmul.mubr.f32.gmra.mxu0 %v579
        %v1831 = vpop.f32.mrf.mxu0
        %v1832 = vadd.f32 %v994, %v1831
        %v1833 = vpop.f32.mrf.mxu0
        %v1834 = vadd.f32 %v998, %v1833
        %1835 = vmatprep.mubr.f32.mxu0 0.0
        %1836 = vmatmul.mubr.f32.gmra.mxu0 %v580
        %v1837 = vpop.f32.mrf.mxu0
        %v1838 = vadd.f32 %v994, %v1837
        %v1839 = vpop.f32.mrf.mxu0
        %v1840 = vadd.f32 %v998, %v1839
        %1841 = vmatprep.mubr.f32.mxu0 0.0
        %1842 = vmatmul.mubr.f32.gmra.mxu0 %v581
        %v1843 = vpop.f32.mrf.mxu0
        %v1844 = vadd.f32 %v994, %v1843
        %v1845 = vpop.f32.mrf.mxu0
        %v1846 = vadd.f32 %v998, %v1845
        %1847 = vmatprep.mubr.f32.mxu0 0.0
        %1848 = vmatmul.mubr.f32.gmra.mxu0 %v582
        %v1849 = vpop.f32.mrf.mxu0
        %v1850 = vadd.f32 %v994, %v1849
        %v1851 = vpop.f32.mrf.mxu0
        %v1852 = vadd.f32 %v998, %v1851
        %1853 = vmatprep.mubr.f32.mxu0 0.0
        %1854 = vmatmul.mubr.f32.gmra.mxu0 %v583
        %v1855 = vpop.f32.mrf.mxu0
        %v1856 = vadd.f32 %v994, %v1855
        %v1857 = vpop.f32.mrf.mxu0
        %v1858 = vadd.f32 %v998, %v1857
        %1859 = vmatprep.mubr.f32.mxu0 0.0
        %1860 = vmatmul.mubr.f32.gmra.mxu0 %v584
        %v1861 = vpop.f32.mrf.mxu0
        %v1862 = vadd.f32 %v994, %v1861
        %v1863 = vpop.f32.mrf.mxu0
        %v1864 = vadd.f32 %v998, %v1863
        %1865 = vdwg.mxu0
        %1866 = vmatprep.subr.mxu0 %v952
        %1867 = vmatpush1.msra.mxu0 %v951
        %1868 = vmatprep.subr.mxu0 %v928
        %1869 = vmatpush1.msra.mxu0 %v927
        %1870 = vmatprep.subr.mxu0 %v904
        %1871 = vmatpush1.msra.mxu0 %v903
        %1872 = vmatprep.subr.mxu0 %v880
        %1873 = vmatpush1.msra.mxu0 %v879
        %1874 = vmatprep.subr.mxu0 %v856
        %1875 = vmatpush1.msra.mxu0 %v855
        %1876 = vmatprep.subr.mxu0 %v832
        %1877 = vmatpush1.msra.mxu0 %v831
        %1878 = vmatprep.subr.mxu0 %v808
        %1879 = vmatpush1.msra.mxu0 %v807
        %1880 = vmatprep.subr.mxu0 %v784
        %1881 = vmatpush1.msra.mxu0 %v783
        %1882 = vmatprep.subr.mxu0 %v760
        %1883 = vmatpush1.msra.mxu0 %v759
        %1884 = vmatprep.subr.mxu0 %v736
        %1885 = vmatpush1.msra.mxu0 %v735
        %1886 = vmatprep.subr.mxu0 %v712
        %1887 = vmatpush1.msra.mxu0 %v711
        %1888 = vmatprep.subr.mxu0 %v688
        %1889 = vmatpush1.msra.mxu0 %v687
        %1890 = vmatprep.subr.mxu0 %v664
        %1891 = vmatpush1.msra.mxu0 %v663
        %1892 = vmatprep.subr.mxu0 %v640
        %1893 = vmatpush1.msra.mxu0 %v639
        %1894 = vmatprep.subr.mxu0 %v616
        %1895 = vmatpush1.msra.mxu0 %v615
        %1896 = vmatprep.subr.mxu0 %v592
        %1897 = vmatpush1.msra.mxu0 %v591
        %1898 = vmatprep.subr.mxu0 0.0
        %1899 = vmatpush2.msra.mxu0 0.0
        %1900 = vmatprep.subr.mxu0 0.0
        %1901 = vmatpush2.msra.mxu0 0.0
        %1902 = vmatprep.subr.mxu0 0.0
        %1903 = vmatpush2.msra.mxu0 0.0
        %1904 = vmatprep.subr.mxu0 0.0
        %1905 = vmatpush2.msra.mxu0 0.0
        %1906 = vmatprep.subr.mxu0 0.0
        %1907 = vmatpush2.msra.mxu0 0.0
        %1908 = vmatprep.subr.mxu0 0.0
        %1909 = vmatpush2.msra.mxu0 0.0
        %1910 = vmatprep.subr.mxu0 0.0
        %1911 = vmatpush2.msra.mxu0 0.0
        %1912 = vmatprep.subr.mxu0 0.0
        %1913 = vmatpush2.msra.mxu0 0.0
        %1914 = vmatprep.subr.mxu0 0.0
        %1915 = vmatpush2.msra.mxu0 0.0
        %1916 = vmatprep.subr.mxu0 0.0
        %1917 = vmatpush2.msra.mxu0 0.0
        %1918 = vmatprep.subr.mxu0 0.0
        %1919 = vmatpush2.msra.mxu0 0.0
        %1920 = vmatprep.subr.mxu0 0.0
        %1921 = vmatpush2.msra.mxu0 0.0
        %1922 = vmatprep.subr.mxu0 0.0
        %1923 = vmatpush2.msra.mxu0 0.0
        %1924 = vmatprep.subr.mxu0 0.0
        %1925 = vmatpush2.msra.mxu0 0.0
        %1926 = vmatprep.subr.mxu0 0.0
        %1927 = vmatpush2.msra.mxu0 0.0
        %1928 = vmatprep.subr.mxu0 0.0
        %1929 = vmatpush2.msra.mxu0 0.0
        %1930 = vmatprep.mubr.f32.mxu0 0.0
        %1931 = vmatmul.mubr.f32.gmra.mxu0 %v553
        %v1932 = vpop.f32.mrf.mxu0
        %v1933 = vadd.f32 %v1002, %v1932
        %v1934 = vpop.f32.mrf.mxu0
        %v1935 = vadd.f32 %v1006, %v1934
        %1936 = vmatprep.mubr.f32.mxu0 0.0
        %1937 = vmatmul.mubr.f32.gmra.mxu0 %v554
        %v1938 = vpop.f32.mrf.mxu0
        %v1939 = vadd.f32 %v1002, %v1938
        %v1940 = vpop.f32.mrf.mxu0
        %v1941 = vadd.f32 %v1006, %v1940
        %1942 = vmatprep.mubr.f32.mxu0 0.0
        %1943 = vmatmul.mubr.f32.gmra.mxu0 %v555
        %v1944 = vpop.f32.mrf.mxu0
        %v1945 = vadd.f32 %v1002, %v1944
        %v1946 = vpop.f32.mrf.mxu0
        %v1947 = vadd.f32 %v1006, %v1946
        %1948 = vmatprep.mubr.f32.mxu0 0.0
        %1949 = vmatmul.mubr.f32.gmra.mxu0 %v556
        %v1950 = vpop.f32.mrf.mxu0
        %v1951 = vadd.f32 %v1002, %v1950
        %v1952 = vpop.f32.mrf.mxu0
        %v1953 = vadd.f32 %v1006, %v1952
        %1954 = vmatprep.mubr.f32.mxu0 0.0
        %1955 = vmatmul.mubr.f32.gmra.mxu0 %v557
        %v1956 = vpop.f32.mrf.mxu0
        %v1957 = vadd.f32 %v1002, %v1956
        %v1958 = vpop.f32.mrf.mxu0
        %v1959 = vadd.f32 %v1006, %v1958
        %1960 = vmatprep.mubr.f32.mxu0 0.0
        %1961 = vmatmul.mubr.f32.gmra.mxu0 %v558
        %v1962 = vpop.f32.mrf.mxu0
        %v1963 = vadd.f32 %v1002, %v1962
        %v1964 = vpop.f32.mrf.mxu0
        %v1965 = vadd.f32 %v1006, %v1964
        %1966 = vmatprep.mubr.f32.mxu0 0.0
        %1967 = vmatmul.mubr.f32.gmra.mxu0 %v559
        %v1968 = vpop.f32.mrf.mxu0
        %v1969 = vadd.f32 %v1002, %v1968
        %v1970 = vpop.f32.mrf.mxu0
        %v1971 = vadd.f32 %v1006, %v1970
        %1972 = vmatprep.mubr.f32.mxu0 0.0
        %1973 = vmatmul.mubr.f32.gmra.mxu0 %v560
        %v1974 = vpop.f32.mrf.mxu0
        %v1975 = vadd.f32 %v1002, %v1974
        %v1976 = vpop.f32.mrf.mxu0
        %v1977 = vadd.f32 %v1006, %v1976
        %1978 = vmatprep.mubr.f32.mxu0 0.0
        %1979 = vmatmul.mubr.f32.gmra.mxu0 %v561
        %v1980 = vpop.f32.mrf.mxu0
        %v1981 = vadd.f32 %v1002, %v1980
        %v1982 = vpop.f32.mrf.mxu0
        %v1983 = vadd.f32 %v1006, %v1982
        %1984 = vmatprep.mubr.f32.mxu0 0.0
        %1985 = vmatmul.mubr.f32.gmra.mxu0 %v562
        %v1986 = vpop.f32.mrf.mxu0
        %v1987 = vadd.f32 %v1002, %v1986
        %v1988 = vpop.f32.mrf.mxu0
        %v1989 = vadd.f32 %v1006, %v1988
        %1990 = vmatprep.mubr.f32.mxu0 0.0
        %1991 = vmatmul.mubr.f32.gmra.mxu0 %v563
        %v1992 = vpop.f32.mrf.mxu0
        %v1993 = vadd.f32 %v1002, %v1992
        %v1994 = vpop.f32.mrf.mxu0
        %v1995 = vadd.f32 %v1006, %v1994
        %1996 = vmatprep.mubr.f32.mxu0 0.0
        %1997 = vmatmul.mubr.f32.gmra.mxu0 %v564
        %v1998 = vpop.f32.mrf.mxu0
        %v1999 = vadd.f32 %v1002, %v1998
        %v2000 = vpop.f32.mrf.mxu0
        %v2001 = vadd.f32 %v1006, %v2000
        %2002 = vmatprep.mubr.f32.mxu0 0.0
        %2003 = vmatmul.mubr.f32.gmra.mxu0 %v565
        %v2004 = vpop.f32.mrf.mxu0
        %v2005 = vadd.f32 %v1002, %v2004
        %v2006 = vpop.f32.mrf.mxu0
        %v2007 = vadd.f32 %v1006, %v2006
        %2008 = vmatprep.mubr.f32.mxu0 0.0
        %2009 = vmatmul.mubr.f32.gmra.mxu0 %v566
        %v2010 = vpop.f32.mrf.mxu0
        %v2011 = vadd.f32 %v1002, %v2010
        %v2012 = vpop.f32.mrf.mxu0
        %v2013 = vadd.f32 %v1006, %v2012
        %2014 = vmatprep.mubr.f32.mxu0 0.0
        %2015 = vmatmul.mubr.f32.gmra.mxu0 %v567
        %v2016 = vpop.f32.mrf.mxu0
        %v2017 = vadd.f32 %v1002, %v2016
        %v2018 = vpop.f32.mrf.mxu0
        %v2019 = vadd.f32 %v1006, %v2018
        %2020 = vmatprep.mubr.f32.mxu0 0.0
        %2021 = vmatmul.mubr.f32.gmra.mxu0 %v568
        %v2022 = vpop.f32.mrf.mxu0
        %v2023 = vadd.f32 %v1002, %v2022
        %v2024 = vpop.f32.mrf.mxu0
        %v2025 = vadd.f32 %v1006, %v2024
        %2026 = vmatprep.mubr.f32.mxu0 0.0
        %2027 = vmatmul.mubr.f32.gmra.mxu0 %v569
        %v2028 = vpop.f32.mrf.mxu0
        %v2029 = vadd.f32 %v1002, %v2028
        %v2030 = vpop.f32.mrf.mxu0
        %v2031 = vadd.f32 %v1006, %v2030
        %2032 = vmatprep.mubr.f32.mxu0 0.0
        %2033 = vmatmul.mubr.f32.gmra.mxu0 %v570
        %v2034 = vpop.f32.mrf.mxu0
        %v2035 = vadd.f32 %v1002, %v2034
        %v2036 = vpop.f32.mrf.mxu0
        %v2037 = vadd.f32 %v1006, %v2036
        %2038 = vmatprep.mubr.f32.mxu0 0.0
        %2039 = vmatmul.mubr.f32.gmra.mxu0 %v571
        %v2040 = vpop.f32.mrf.mxu0
        %v2041 = vadd.f32 %v1002, %v2040
        %v2042 = vpop.f32.mrf.mxu0
        %v2043 = vadd.f32 %v1006, %v2042
        %2044 = vmatprep.mubr.f32.mxu0 0.0
        %2045 = vmatmul.mubr.f32.gmra.mxu0 %v572
        %v2046 = vpop.f32.mrf.mxu0
        %v2047 = vadd.f32 %v1002, %v2046
        %v2048 = vpop.f32.mrf.mxu0
        %v2049 = vadd.f32 %v1006, %v2048
        %2050 = vmatprep.mubr.f32.mxu0 0.0
        %2051 = vmatmul.mubr.f32.gmra.mxu0 %v573
        %v2052 = vpop.f32.mrf.mxu0
        %v2053 = vadd.f32 %v1002, %v2052
        %v2054 = vpop.f32.mrf.mxu0
        %v2055 = vadd.f32 %v1006, %v2054
        %2056 = vmatprep.mubr.f32.mxu0 0.0
        %2057 = vmatmul.mubr.f32.gmra.mxu0 %v574
        %v2058 = vpop.f32.mrf.mxu0
        %v2059 = vadd.f32 %v1002, %v2058
        %v2060 = vpop.f32.mrf.mxu0
        %v2061 = vadd.f32 %v1006, %v2060
        %2062 = vmatprep.mubr.f32.mxu0 0.0
        %2063 = vmatmul.mubr.f32.gmra.mxu0 %v575
        %v2064 = vpop.f32.mrf.mxu0
        %v2065 = vadd.f32 %v1002, %v2064
        %v2066 = vpop.f32.mrf.mxu0
        %v2067 = vadd.f32 %v1006, %v2066
        %2068 = vmatprep.mubr.f32.mxu0 0.0
        %2069 = vmatmul.mubr.f32.gmra.mxu0 %v576
        %v2070 = vpop.f32.mrf.mxu0
        %v2071 = vadd.f32 %v1002, %v2070
        %v2072 = vpop.f32.mrf.mxu0
        %v2073 = vadd.f32 %v1006, %v2072
        %2074 = vmatprep.mubr.f32.mxu0 0.0
        %2075 = vmatmul.mubr.f32.gmra.mxu0 %v577
        %v2076 = vpop.f32.mrf.mxu0
        %v2077 = vadd.f32 %v1002, %v2076
        %v2078 = vpop.f32.mrf.mxu0
        %v2079 = vadd.f32 %v1006, %v2078
        %2080 = vmatprep.mubr.f32.mxu0 0.0
        %2081 = vmatmul.mubr.f32.gmra.mxu0 %v578
        %v2082 = vpop.f32.mrf.mxu0
        %v2083 = vadd.f32 %v1002, %v2082
        %v2084 = vpop.f32.mrf.mxu0
        %v2085 = vadd.f32 %v1006, %v2084
        %2086 = vmatprep.mubr.f32.mxu0 0.0
        %2087 = vmatmul.mubr.f32.gmra.mxu0 %v579
        %v2088 = vpop.f32.mrf.mxu0
        %v2089 = vadd.f32 %v1002, %v2088
        %v2090 = vpop.f32.mrf.mxu0
        %v2091 = vadd.f32 %v1006, %v2090
        %2092 = vmatprep.mubr.f32.mxu0 0.0
        %2093 = vmatmul.mubr.f32.gmra.mxu0 %v580
        %v2094 = vpop.f32.mrf.mxu0
        %v2095 = vadd.f32 %v1002, %v2094
        %v2096 = vpop.f32.mrf.mxu0
        %v2097 = vadd.f32 %v1006, %v2096
        %2098 = vmatprep.mubr.f32.mxu0 0.0
        %2099 = vmatmul.mubr.f32.gmra.mxu0 %v581
        %v2100 = vpop.f32.mrf.mxu0
        %v2101 = vadd.f32 %v1002, %v2100
        %v2102 = vpop.f32.mrf.mxu0
        %v2103 = vadd.f32 %v1006, %v2102
        %2104 = vmatprep.mubr.f32.mxu0 0.0
        %2105 = vmatmul.mubr.f32.gmra.mxu0 %v582
        %v2106 = vpop.f32.mrf.mxu0
        %v2107 = vadd.f32 %v1002, %v2106
        %v2108 = vpop.f32.mrf.mxu0
        %v2109 = vadd.f32 %v1006, %v2108
        %2110 = vmatprep.mubr.f32.mxu0 0.0
        %2111 = vmatmul.mubr.f32.gmra.mxu0 %v583
        %v2112 = vpop.f32.mrf.mxu0
        %v2113 = vadd.f32 %v1002, %v2112
        %v2114 = vpop.f32.mrf.mxu0
        %v2115 = vadd.f32 %v1006, %v2114
        %2116 = vmatprep.mubr.f32.mxu0 0.0
        %2117 = vmatmul.mubr.f32.gmra.mxu0 %v584
        %v2118 = vpop.f32.mrf.mxu0
        %v2119 = vadd.f32 %v1002, %v2118
        %v2120 = vpop.f32.mrf.mxu0
        %v2121 = vadd.f32 %v1006, %v2120
        %2122 = vdwg.mxu0
        %2123 = vmatprep.subr.mxu0 %v954
        %2124 = vmatpush1.msra.mxu0 %v953
        %2125 = vmatprep.subr.mxu0 %v930
        %2126 = vmatpush1.msra.mxu0 %v929
        %2127 = vmatprep.subr.mxu0 %v906
        %2128 = vmatpush1.msra.mxu0 %v905
        %2129 = vmatprep.subr.mxu0 %v882
        %2130 = vmatpush1.msra.mxu0 %v881
        %2131 = vmatprep.subr.mxu0 %v858
        %2132 = vmatpush1.msra.mxu0 %v857
        %2133 = vmatprep.subr.mxu0 %v834
        %2134 = vmatpush1.msra.mxu0 %v833
        %2135 = vmatprep.subr.mxu0 %v810
        %2136 = vmatpush1.msra.mxu0 %v809
        %2137 = vmatprep.subr.mxu0 %v786
        %2138 = vmatpush1.msra.mxu0 %v785
        %2139 = vmatprep.subr.mxu0 %v762
        %2140 = vmatpush1.msra.mxu0 %v761
        %2141 = vmatprep.subr.mxu0 %v738
        %2142 = vmatpush1.msra.mxu0 %v737
        %2143 = vmatprep.subr.mxu0 %v714
        %2144 = vmatpush1.msra.mxu0 %v713
        %2145 = vmatprep.subr.mxu0 %v690
        %2146 = vmatpush1.msra.mxu0 %v689
        %2147 = vmatprep.subr.mxu0 %v666
        %2148 = vmatpush1.msra.mxu0 %v665
        %2149 = vmatprep.subr.mxu0 %v642
        %2150 = vmatpush1.msra.mxu0 %v641
        %2151 = vmatprep.subr.mxu0 %v618
        %2152 = vmatpush1.msra.mxu0 %v617
        %2153 = vmatprep.subr.mxu0 %v594
        %2154 = vmatpush1.msra.mxu0 %v593
        %2155 = vmatprep.subr.mxu0 0.0
        %2156 = vmatpush2.msra.mxu0 0.0
        %2157 = vmatprep.subr.mxu0 0.0
        %2158 = vmatpush2.msra.mxu0 0.0
        %2159 = vmatprep.subr.mxu0 0.0
        %2160 = vmatpush2.msra.mxu0 0.0
        %2161 = vmatprep.subr.mxu0 0.0
        %2162 = vmatpush2.msra.mxu0 0.0
        %2163 = vmatprep.subr.mxu0 0.0
        %2164 = vmatpush2.msra.mxu0 0.0
        %2165 = vmatprep.subr.mxu0 0.0
        %2166 = vmatpush2.msra.mxu0 0.0
        %2167 = vmatprep.subr.mxu0 0.0
        %2168 = vmatpush2.msra.mxu0 0.0
        %2169 = vmatprep.subr.mxu0 0.0
        %2170 = vmatpush2.msra.mxu0 0.0
        %2171 = vmatprep.subr.mxu0 0.0
        %2172 = vmatpush2.msra.mxu0 0.0
        %2173 = vmatprep.subr.mxu0 0.0
        %2174 = vmatpush2.msra.mxu0 0.0
        %2175 = vmatprep.subr.mxu0 0.0
        %2176 = vmatpush2.msra.mxu0 0.0
        %2177 = vmatprep.subr.mxu0 0.0
        %2178 = vmatpush2.msra.mxu0 0.0
        %2179 = vmatprep.subr.mxu0 0.0
        %2180 = vmatpush2.msra.mxu0 0.0
        %2181 = vmatprep.subr.mxu0 0.0
        %2182 = vmatpush2.msra.mxu0 0.0
        %2183 = vmatprep.subr.mxu0 0.0
        %2184 = vmatpush2.msra.mxu0 0.0
        %2185 = vmatprep.subr.mxu0 0.0
        %2186 = vmatpush2.msra.mxu0 0.0
        %2187 = vmatprep.mubr.f32.mxu0 0.0
        %2188 = vmatmul.mubr.f32.gmra.mxu0 %v553
        %v2189 = vpop.f32.mrf.mxu0
        %v2190 = vadd.f32 %v1010, %v2189
        %v2191 = vpop.f32.mrf.mxu0
        %v2192 = vadd.f32 %v1014, %v2191
        %2193 = vmatprep.mubr.f32.mxu0 0.0
        %2194 = vmatmul.mubr.f32.gmra.mxu0 %v554
        %v2195 = vpop.f32.mrf.mxu0
        %v2196 = vadd.f32 %v1010, %v2195
        %v2197 = vpop.f32.mrf.mxu0
        %v2198 = vadd.f32 %v1014, %v2197
        %2199 = vmatprep.mubr.f32.mxu0 0.0
        %2200 = vmatmul.mubr.f32.gmra.mxu0 %v555
        %v2201 = vpop.f32.mrf.mxu0
        %v2202 = vadd.f32 %v1010, %v2201
        %v2203 = vpop.f32.mrf.mxu0
        %v2204 = vadd.f32 %v1014, %v2203
        %2205 = vmatprep.mubr.f32.mxu0 0.0
        %2206 = vmatmul.mubr.f32.gmra.mxu0 %v556
        %v2207 = vpop.f32.mrf.mxu0
        %v2208 = vadd.f32 %v1010, %v2207
        %v2209 = vpop.f32.mrf.mxu0
        %v2210 = vadd.f32 %v1014, %v2209
        %2211 = vmatprep.mubr.f32.mxu0 0.0
        %2212 = vmatmul.mubr.f32.gmra.mxu0 %v557
        %v2213 = vpop.f32.mrf.mxu0
        %v2214 = vadd.f32 %v1010, %v2213
        %v2215 = vpop.f32.mrf.mxu0
        %v2216 = vadd.f32 %v1014, %v2215
        %2217 = vmatprep.mubr.f32.mxu0 0.0
        %2218 = vmatmul.mubr.f32.gmra.mxu0 %v558
        %v2219 = vpop.f32.mrf.mxu0
        %v2220 = vadd.f32 %v1010, %v2219
        %v2221 = vpop.f32.mrf.mxu0
        %v2222 = vadd.f32 %v1014, %v2221
        %2223 = vmatprep.mubr.f32.mxu0 0.0
        %2224 = vmatmul.mubr.f32.gmra.mxu0 %v559
        %v2225 = vpop.f32.mrf.mxu0
        %v2226 = vadd.f32 %v1010, %v2225
        %v2227 = vpop.f32.mrf.mxu0
        %v2228 = vadd.f32 %v1014, %v2227
        %2229 = vmatprep.mubr.f32.mxu0 0.0
        %2230 = vmatmul.mubr.f32.gmra.mxu0 %v560
        %v2231 = vpop.f32.mrf.mxu0
        %v2232 = vadd.f32 %v1010, %v2231
        %v2233 = vpop.f32.mrf.mxu0
        %v2234 = vadd.f32 %v1014, %v2233
        %2235 = vmatprep.mubr.f32.mxu0 0.0
        %2236 = vmatmul.mubr.f32.gmra.mxu0 %v561
        %v2237 = vpop.f32.mrf.mxu0
        %v2238 = vadd.f32 %v1010, %v2237
        %v2239 = vpop.f32.mrf.mxu0
        %v2240 = vadd.f32 %v1014, %v2239
        %2241 = vmatprep.mubr.f32.mxu0 0.0
        %2242 = vmatmul.mubr.f32.gmra.mxu0 %v562
        %v2243 = vpop.f32.mrf.mxu0
        %v2244 = vadd.f32 %v1010, %v2243
        %v2245 = vpop.f32.mrf.mxu0
        %v2246 = vadd.f32 %v1014, %v2245
        %2247 = vmatprep.mubr.f32.mxu0 0.0
        %2248 = vmatmul.mubr.f32.gmra.mxu0 %v563
        %v2249 = vpop.f32.mrf.mxu0
        %v2250 = vadd.f32 %v1010, %v2249
        %v2251 = vpop.f32.mrf.mxu0
        %v2252 = vadd.f32 %v1014, %v2251
        %2253 = vmatprep.mubr.f32.mxu0 0.0
        %2254 = vmatmul.mubr.f32.gmra.mxu0 %v564
        %v2255 = vpop.f32.mrf.mxu0
        %v2256 = vadd.f32 %v1010, %v2255
        %v2257 = vpop.f32.mrf.mxu0
        %v2258 = vadd.f32 %v1014, %v2257
        %2259 = vmatprep.mubr.f32.mxu0 0.0
        %2260 = vmatmul.mubr.f32.gmra.mxu0 %v565
        %v2261 = vpop.f32.mrf.mxu0
        %v2262 = vadd.f32 %v1010, %v2261
        %v2263 = vpop.f32.mrf.mxu0
        %v2264 = vadd.f32 %v1014, %v2263
        %2265 = vmatprep.mubr.f32.mxu0 0.0
        %2266 = vmatmul.mubr.f32.gmra.mxu0 %v566
        %v2267 = vpop.f32.mrf.mxu0
        %v2268 = vadd.f32 %v1010, %v2267
        %v2269 = vpop.f32.mrf.mxu0
        %v2270 = vadd.f32 %v1014, %v2269
        %2271 = vmatprep.mubr.f32.mxu0 0.0
        %2272 = vmatmul.mubr.f32.gmra.mxu0 %v567
        %v2273 = vpop.f32.mrf.mxu0
        %v2274 = vadd.f32 %v1010, %v2273
        %v2275 = vpop.f32.mrf.mxu0
        %v2276 = vadd.f32 %v1014, %v2275
        %2277 = vmatprep.mubr.f32.mxu0 0.0
        %2278 = vmatmul.mubr.f32.gmra.mxu0 %v568
        %v2279 = vpop.f32.mrf.mxu0
        %v2280 = vadd.f32 %v1010, %v2279
        %v2281 = vpop.f32.mrf.mxu0
        %v2282 = vadd.f32 %v1014, %v2281
        %2283 = vmatprep.mubr.f32.mxu0 0.0
        %2284 = vmatmul.mubr.f32.gmra.mxu0 %v569
        %v2285 = vpop.f32.mrf.mxu0
        %v2286 = vadd.f32 %v1010, %v2285
        %v2287 = vpop.f32.mrf.mxu0
        %v2288 = vadd.f32 %v1014, %v2287
        %2289 = vmatprep.mubr.f32.mxu0 0.0
        %2290 = vmatmul.mubr.f32.gmra.mxu0 %v570
        %v2291 = vpop.f32.mrf.mxu0
        %v2292 = vadd.f32 %v1010, %v2291
        %v2293 = vpop.f32.mrf.mxu0
        %v2294 = vadd.f32 %v1014, %v2293
        %2295 = vmatprep.mubr.f32.mxu0 0.0
        %2296 = vmatmul.mubr.f32.gmra.mxu0 %v571
        %v2297 = vpop.f32.mrf.mxu0
        %v2298 = vadd.f32 %v1010, %v2297
        %v2299 = vpop.f32.mrf.mxu0
        %v2300 = vadd.f32 %v1014, %v2299
        %2301 = vmatprep.mubr.f32.mxu0 0.0
        %2302 = vmatmul.mubr.f32.gmra.mxu0 %v572
        %v2303 = vpop.f32.mrf.mxu0
        %v2304 = vadd.f32 %v1010, %v2303
        %v2305 = vpop.f32.mrf.mxu0
        %v2306 = vadd.f32 %v1014, %v2305
        %2307 = vmatprep.mubr.f32.mxu0 0.0
        %2308 = vmatmul.mubr.f32.gmra.mxu0 %v573
        %v2309 = vpop.f32.mrf.mxu0
        %v2310 = vadd.f32 %v1010, %v2309
        %v2311 = vpop.f32.mrf.mxu0
        %v2312 = vadd.f32 %v1014, %v2311
        %2313 = vmatprep.mubr.f32.mxu0 0.0
        %2314 = vmatmul.mubr.f32.gmra.mxu0 %v574
        %v2315 = vpop.f32.mrf.mxu0
        %v2316 = vadd.f32 %v1010, %v2315
        %v2317 = vpop.f32.mrf.mxu0
        %v2318 = vadd.f32 %v1014, %v2317
        %2319 = vmatprep.mubr.f32.mxu0 0.0
        %2320 = vmatmul.mubr.f32.gmra.mxu0 %v575
        %v2321 = vpop.f32.mrf.mxu0
        %v2322 = vadd.f32 %v1010, %v2321
        %v2323 = vpop.f32.mrf.mxu0
        %v2324 = vadd.f32 %v1014, %v2323
        %2325 = vmatprep.mubr.f32.mxu0 0.0
        %2326 = vmatmul.mubr.f32.gmra.mxu0 %v576
        %v2327 = vpop.f32.mrf.mxu0
        %v2328 = vadd.f32 %v1010, %v2327
        %v2329 = vpop.f32.mrf.mxu0
        %v2330 = vadd.f32 %v1014, %v2329
        %2331 = vmatprep.mubr.f32.mxu0 0.0
        %2332 = vmatmul.mubr.f32.gmra.mxu0 %v577
        %v2333 = vpop.f32.mrf.mxu0
        %v2334 = vadd.f32 %v1010, %v2333
        %v2335 = vpop.f32.mrf.mxu0
        %v2336 = vadd.f32 %v1014, %v2335
        %2337 = vmatprep.mubr.f32.mxu0 0.0
        %2338 = vmatmul.mubr.f32.gmra.mxu0 %v578
        %v2339 = vpop.f32.mrf.mxu0
        %v2340 = vadd.f32 %v1010, %v2339
        %v2341 = vpop.f32.mrf.mxu0
        %v2342 = vadd.f32 %v1014, %v2341
        %2343 = vmatprep.mubr.f32.mxu0 0.0
        %2344 = vmatmul.mubr.f32.gmra.mxu0 %v579
        %v2345 = vpop.f32.mrf.mxu0
        %v2346 = vadd.f32 %v1010, %v2345
        %v2347 = vpop.f32.mrf.mxu0
        %v2348 = vadd.f32 %v1014, %v2347
        %2349 = vmatprep.mubr.f32.mxu0 0.0
        %2350 = vmatmul.mubr.f32.gmra.mxu0 %v580
        %v2351 = vpop.f32.mrf.mxu0
        %v2352 = vadd.f32 %v1010, %v2351
        %v2353 = vpop.f32.mrf.mxu0
        %v2354 = vadd.f32 %v1014, %v2353
        %2355 = vmatprep.mubr.f32.mxu0 0.0
        %2356 = vmatmul.mubr.f32.gmra.mxu0 %v581
        %v2357 = vpop.f32.mrf.mxu0
        %v2358 = vadd.f32 %v1010, %v2357
        %v2359 = vpop.f32.mrf.mxu0
        %v2360 = vadd.f32 %v1014, %v2359
        %2361 = vmatprep.mubr.f32.mxu0 0.0
        %2362 = vmatmul.mubr.f32.gmra.mxu0 %v582
        %v2363 = vpop.f32.mrf.mxu0
        %v2364 = vadd.f32 %v1010, %v2363
        %v2365 = vpop.f32.mrf.mxu0
        %v2366 = vadd.f32 %v1014, %v2365
        %2367 = vmatprep.mubr.f32.mxu0 0.0
        %2368 = vmatmul.mubr.f32.gmra.mxu0 %v583
        %v2369 = vpop.f32.mrf.mxu0
        %v2370 = vadd.f32 %v1010, %v2369
        %v2371 = vpop.f32.mrf.mxu0
        %v2372 = vadd.f32 %v1014, %v2371
        %2373 = vmatprep.mubr.f32.mxu0 0.0
        %2374 = vmatmul.mubr.f32.gmra.mxu0 %v584
        %v2375 = vpop.f32.mrf.mxu0
        %v2376 = vadd.f32 %v1010, %v2375
        %v2377 = vpop.f32.mrf.mxu0
        %v2378 = vadd.f32 %v1014, %v2377
        %2379 = vdwg.mxu0
        %2380 = vmatprep.subr.mxu0 %v956
        %2381 = vmatpush1.msra.mxu0 %v955
        %2382 = vmatprep.subr.mxu0 %v932
        %2383 = vmatpush1.msra.mxu0 %v931
        %2384 = vmatprep.subr.mxu0 %v908
        %2385 = vmatpush1.msra.mxu0 %v907
        %2386 = vmatprep.subr.mxu0 %v884
        %2387 = vmatpush1.msra.mxu0 %v883
        %2388 = vmatprep.subr.mxu0 %v860
        %2389 = vmatpush1.msra.mxu0 %v859
        %2390 = vmatprep.subr.mxu0 %v836
        %2391 = vmatpush1.msra.mxu0 %v835
        %2392 = vmatprep.subr.mxu0 %v812
        %2393 = vmatpush1.msra.mxu0 %v811
        %2394 = vmatprep.subr.mxu0 %v788
        %2395 = vmatpush1.msra.mxu0 %v787
        %2396 = vmatprep.subr.mxu0 %v764
        %2397 = vmatpush1.msra.mxu0 %v763
        %2398 = vmatprep.subr.mxu0 %v740
        %2399 = vmatpush1.msra.mxu0 %v739
        %2400 = vmatprep.subr.mxu0 %v716
        %2401 = vmatpush1.msra.mxu0 %v715
        %2402 = vmatprep.subr.mxu0 %v692
        %2403 = vmatpush1.msra.mxu0 %v691
        %2404 = vmatprep.subr.mxu0 %v668
        %2405 = vmatpush1.msra.mxu0 %v667
        %2406 = vmatprep.subr.mxu0 %v644
        %2407 = vmatpush1.msra.mxu0 %v643
        %2408 = vmatprep.subr.mxu0 %v620
        %2409 = vmatpush1.msra.mxu0 %v619
        %2410 = vmatprep.subr.mxu0 %v596
        %2411 = vmatpush1.msra.mxu0 %v595
        %2412 = vmatprep.subr.mxu0 0.0
        %2413 = vmatpush2.msra.mxu0 0.0
        %2414 = vmatprep.subr.mxu0 0.0
        %2415 = vmatpush2.msra.mxu0 0.0
        %2416 = vmatprep.subr.mxu0 0.0
        %2417 = vmatpush2.msra.mxu0 0.0
        %2418 = vmatprep.subr.mxu0 0.0
        %2419 = vmatpush2.msra.mxu0 0.0
        %2420 = vmatprep.subr.mxu0 0.0
        %2421 = vmatpush2.msra.mxu0 0.0
        %2422 = vmatprep.subr.mxu0 0.0
        %2423 = vmatpush2.msra.mxu0 0.0
        %2424 = vmatprep.subr.mxu0 0.0
        %2425 = vmatpush2.msra.mxu0 0.0
        %2426 = vmatprep.subr.mxu0 0.0
        %2427 = vmatpush2.msra.mxu0 0.0
        %2428 = vmatprep.subr.mxu0 0.0
        %2429 = vmatpush2.msra.mxu0 0.0
        %2430 = vmatprep.subr.mxu0 0.0
        %2431 = vmatpush2.msra.mxu0 0.0
        %2432 = vmatprep.subr.mxu0 0.0
        %2433 = vmatpush2.msra.mxu0 0.0
        %2434 = vmatprep.subr.mxu0 0.0
        %2435 = vmatpush2.msra.mxu0 0.0
        %2436 = vmatprep.subr.mxu0 0.0
        %2437 = vmatpush2.msra.mxu0 0.0
        %2438 = vmatprep.subr.mxu0 0.0
        %2439 = vmatpush2.msra.mxu0 0.0
        %2440 = vmatprep.subr.mxu0 0.0
        %2441 = vmatpush2.msra.mxu0 0.0
        %2442 = vmatprep.subr.mxu0 0.0
        %2443 = vmatpush2.msra.mxu0 0.0
        %2444 = vmatprep.mubr.f32.mxu0 0.0
        %2445 = vmatmul.mubr.f32.gmra.mxu0 %v553
        %v2446 = vpop.f32.mrf.mxu0
        %v2447 = vadd.f32 %v1018, %v2446
        %v2448 = vpop.f32.mrf.mxu0
        %v2449 = vadd.f32 %v1022, %v2448
        %2450 = vmatprep.mubr.f32.mxu0 0.0
        %2451 = vmatmul.mubr.f32.gmra.mxu0 %v554
        %v2452 = vpop.f32.mrf.mxu0
        %v2453 = vadd.f32 %v1018, %v2452
        %v2454 = vpop.f32.mrf.mxu0
        %v2455 = vadd.f32 %v1022, %v2454
        %2456 = vmatprep.mubr.f32.mxu0 0.0
        %2457 = vmatmul.mubr.f32.gmra.mxu0 %v555
        %v2458 = vpop.f32.mrf.mxu0
        %v2459 = vadd.f32 %v1018, %v2458
        %v2460 = vpop.f32.mrf.mxu0
        %v2461 = vadd.f32 %v1022, %v2460
        %2462 = vmatprep.mubr.f32.mxu0 0.0
        %2463 = vmatmul.mubr.f32.gmra.mxu0 %v556
        %v2464 = vpop.f32.mrf.mxu0
        %v2465 = vadd.f32 %v1018, %v2464
        %v2466 = vpop.f32.mrf.mxu0
        %v2467 = vadd.f32 %v1022, %v2466
        %2468 = vmatprep.mubr.f32.mxu0 0.0
        %2469 = vmatmul.mubr.f32.gmra.mxu0 %v557
        %v2470 = vpop.f32.mrf.mxu0
        %v2471 = vadd.f32 %v1018, %v2470
        %v2472 = vpop.f32.mrf.mxu0
        %v2473 = vadd.f32 %v1022, %v2472
        %2474 = vmatprep.mubr.f32.mxu0 0.0
        %2475 = vmatmul.mubr.f32.gmra.mxu0 %v558
        %v2476 = vpop.f32.mrf.mxu0
        %v2477 = vadd.f32 %v1018, %v2476
        %v2478 = vpop.f32.mrf.mxu0
        %v2479 = vadd.f32 %v1022, %v2478
        %2480 = vmatprep.mubr.f32.mxu0 0.0
        %2481 = vmatmul.mubr.f32.gmra.mxu0 %v559
        %v2482 = vpop.f32.mrf.mxu0
        %v2483 = vadd.f32 %v1018, %v2482
        %v2484 = vpop.f32.mrf.mxu0
        %v2485 = vadd.f32 %v1022, %v2484
        %2486 = vmatprep.mubr.f32.mxu0 0.0
        %2487 = vmatmul.mubr.f32.gmra.mxu0 %v560
        %v2488 = vpop.f32.mrf.mxu0
        %v2489 = vadd.f32 %v1018, %v2488
        %v2490 = vpop.f32.mrf.mxu0
        %v2491 = vadd.f32 %v1022, %v2490
        %2492 = vmatprep.mubr.f32.mxu0 0.0
        %2493 = vmatmul.mubr.f32.gmra.mxu0 %v561
        %v2494 = vpop.f32.mrf.mxu0
        %v2495 = vadd.f32 %v1018, %v2494
        %v2496 = vpop.f32.mrf.mxu0
        %v2497 = vadd.f32 %v1022, %v2496
        %2498 = vmatprep.mubr.f32.mxu0 0.0
        %2499 = vmatmul.mubr.f32.gmra.mxu0 %v562
        %v2500 = vpop.f32.mrf.mxu0
        %v2501 = vadd.f32 %v1018, %v2500
        %v2502 = vpop.f32.mrf.mxu0
        %v2503 = vadd.f32 %v1022, %v2502
        %2504 = vmatprep.mubr.f32.mxu0 0.0
        %2505 = vmatmul.mubr.f32.gmra.mxu0 %v563
        %v2506 = vpop.f32.mrf.mxu0
        %v2507 = vadd.f32 %v1018, %v2506
        %v2508 = vpop.f32.mrf.mxu0
        %v2509 = vadd.f32 %v1022, %v2508
        %2510 = vmatprep.mubr.f32.mxu0 0.0
        %2511 = vmatmul.mubr.f32.gmra.mxu0 %v564
        %v2512 = vpop.f32.mrf.mxu0
        %v2513 = vadd.f32 %v1018, %v2512
        %v2514 = vpop.f32.mrf.mxu0
        %v2515 = vadd.f32 %v1022, %v2514
        %2516 = vmatprep.mubr.f32.mxu0 0.0
        %2517 = vmatmul.mubr.f32.gmra.mxu0 %v565
        %v2518 = vpop.f32.mrf.mxu0
        %v2519 = vadd.f32 %v1018, %v2518
        %v2520 = vpop.f32.mrf.mxu0
        %v2521 = vadd.f32 %v1022, %v2520
        %2522 = vmatprep.mubr.f32.mxu0 0.0
        %2523 = vmatmul.mubr.f32.gmra.mxu0 %v566
        %v2524 = vpop.f32.mrf.mxu0
        %v2525 = vadd.f32 %v1018, %v2524
        %v2526 = vpop.f32.mrf.mxu0
        %v2527 = vadd.f32 %v1022, %v2526
        %2528 = vmatprep.mubr.f32.mxu0 0.0
        %2529 = vmatmul.mubr.f32.gmra.mxu0 %v567
        %v2530 = vpop.f32.mrf.mxu0
        %v2531 = vadd.f32 %v1018, %v2530
        %v2532 = vpop.f32.mrf.mxu0
        %v2533 = vadd.f32 %v1022, %v2532
        %2534 = vmatprep.mubr.f32.mxu0 0.0
        %2535 = vmatmul.mubr.f32.gmra.mxu0 %v568
        %v2536 = vpop.f32.mrf.mxu0
        %v2537 = vadd.f32 %v1018, %v2536
        %v2538 = vpop.f32.mrf.mxu0
        %v2539 = vadd.f32 %v1022, %v2538
        %2540 = vmatprep.mubr.f32.mxu0 0.0
        %2541 = vmatmul.mubr.f32.gmra.mxu0 %v569
        %v2542 = vpop.f32.mrf.mxu0
        %v2543 = vadd.f32 %v1018, %v2542
        %v2544 = vpop.f32.mrf.mxu0
        %v2545 = vadd.f32 %v1022, %v2544
        %2546 = vmatprep.mubr.f32.mxu0 0.0
        %2547 = vmatmul.mubr.f32.gmra.mxu0 %v570
        %v2548 = vpop.f32.mrf.mxu0
        %v2549 = vadd.f32 %v1018, %v2548
        %v2550 = vpop.f32.mrf.mxu0
        %v2551 = vadd.f32 %v1022, %v2550
        %2552 = vmatprep.mubr.f32.mxu0 0.0
        %2553 = vmatmul.mubr.f32.gmra.mxu0 %v571
        %v2554 = vpop.f32.mrf.mxu0
        %v2555 = vadd.f32 %v1018, %v2554
        %v2556 = vpop.f32.mrf.mxu0
        %v2557 = vadd.f32 %v1022, %v2556
        %2558 = vmatprep.mubr.f32.mxu0 0.0
        %2559 = vmatmul.mubr.f32.gmra.mxu0 %v572
        %v2560 = vpop.f32.mrf.mxu0
        %v2561 = vadd.f32 %v1018, %v2560
        %v2562 = vpop.f32.mrf.mxu0
        %v2563 = vadd.f32 %v1022, %v2562
        %2564 = vmatprep.mubr.f32.mxu0 0.0
        %2565 = vmatmul.mubr.f32.gmra.mxu0 %v573
        %v2566 = vpop.f32.mrf.mxu0
        %v2567 = vadd.f32 %v1018, %v2566
        %v2568 = vpop.f32.mrf.mxu0
        %v2569 = vadd.f32 %v1022, %v2568
        %2570 = vmatprep.mubr.f32.mxu0 0.0
        %2571 = vmatmul.mubr.f32.gmra.mxu0 %v574
        %v2572 = vpop.f32.mrf.mxu0
        %v2573 = vadd.f32 %v1018, %v2572
        %v2574 = vpop.f32.mrf.mxu0
        %v2575 = vadd.f32 %v1022, %v2574
        %2576 = vmatprep.mubr.f32.mxu0 0.0
        %2577 = vmatmul.mubr.f32.gmra.mxu0 %v575
        %v2578 = vpop.f32.mrf.mxu0
        %v2579 = vadd.f32 %v1018, %v2578
        %v2580 = vpop.f32.mrf.mxu0
        %v2581 = vadd.f32 %v1022, %v2580
        %2582 = vmatprep.mubr.f32.mxu0 0.0
        %2583 = vmatmul.mubr.f32.gmra.mxu0 %v576
        %v2584 = vpop.f32.mrf.mxu0
        %v2585 = vadd.f32 %v1018, %v2584
        %v2586 = vpop.f32.mrf.mxu0
        %v2587 = vadd.f32 %v1022, %v2586
        %2588 = vmatprep.mubr.f32.mxu0 0.0
        %2589 = vmatmul.mubr.f32.gmra.mxu0 %v577
        %v2590 = vpop.f32.mrf.mxu0
        %v2591 = vadd.f32 %v1018, %v2590
        %v2592 = vpop.f32.mrf.mxu0
        %v2593 = vadd.f32 %v1022, %v2592
        %2594 = vmatprep.mubr.f32.mxu0 0.0
        %2595 = vmatmul.mubr.f32.gmra.mxu0 %v578
        %v2596 = vpop.f32.mrf.mxu0
        %v2597 = vadd.f32 %v1018, %v2596
        %v2598 = vpop.f32.mrf.mxu0
        %v2599 = vadd.f32 %v1022, %v2598
        %2600 = vmatprep.mubr.f32.mxu0 0.0
        %2601 = vmatmul.mubr.f32.gmra.mxu0 %v579
        %v2602 = vpop.f32.mrf.mxu0
        %v2603 = vadd.f32 %v1018, %v2602
        %v2604 = vpop.f32.mrf.mxu0
        %v2605 = vadd.f32 %v1022, %v2604
        %2606 = vmatprep.mubr.f32.mxu0 0.0
        %2607 = vmatmul.mubr.f32.gmra.mxu0 %v580
        %v2608 = vpop.f32.mrf.mxu0
        %v2609 = vadd.f32 %v1018, %v2608
        %v2610 = vpop.f32.mrf.mxu0
        %v2611 = vadd.f32 %v1022, %v2610
        %2612 = vmatprep.mubr.f32.mxu0 0.0
        %2613 = vmatmul.mubr.f32.gmra.mxu0 %v581
        %v2614 = vpop.f32.mrf.mxu0
        %v2615 = vadd.f32 %v1018, %v2614
        %v2616 = vpop.f32.mrf.mxu0
        %v2617 = vadd.f32 %v1022, %v2616
        %2618 = vmatprep.mubr.f32.mxu0 0.0
        %2619 = vmatmul.mubr.f32.gmra.mxu0 %v582
        %v2620 = vpop.f32.mrf.mxu0
        %v2621 = vadd.f32 %v1018, %v2620
        %v2622 = vpop.f32.mrf.mxu0
        %v2623 = vadd.f32 %v1022, %v2622
        %2624 = vmatprep.mubr.f32.mxu0 0.0
        %2625 = vmatmul.mubr.f32.gmra.mxu0 %v583
        %v2626 = vpop.f32.mrf.mxu0
        %v2627 = vadd.f32 %v1018, %v2626
        %v2628 = vpop.f32.mrf.mxu0
        %v2629 = vadd.f32 %v1022, %v2628
        %2630 = vmatprep.mubr.f32.mxu0 0.0
        %2631 = vmatmul.mubr.f32.gmra.mxu0 %v584
        %v2632 = vpop.f32.mrf.mxu0
        %v2633 = vadd.f32 %v1018, %v2632
        %v2634 = vpop.f32.mrf.mxu0
        %v2635 = vadd.f32 %v1022, %v2634
        %2636 = vdwg.mxu0
        %2637 = vmatprep.subr.mxu0 %v958
        %2638 = vmatpush1.msra.mxu0 %v957
        %2639 = vmatprep.subr.mxu0 %v934
        %2640 = vmatpush1.msra.mxu0 %v933
        %2641 = vmatprep.subr.mxu0 %v910
        %2642 = vmatpush1.msra.mxu0 %v909
        %2643 = vmatprep.subr.mxu0 %v886
        %2644 = vmatpush1.msra.mxu0 %v885
        %2645 = vmatprep.subr.mxu0 %v862
        %2646 = vmatpush1.msra.mxu0 %v861
        %2647 = vmatprep.subr.mxu0 %v838
        %2648 = vmatpush1.msra.mxu0 %v837
        %2649 = vmatprep.subr.mxu0 %v814
        %2650 = vmatpush1.msra.mxu0 %v813
        %2651 = vmatprep.subr.mxu0 %v790
        %2652 = vmatpush1.msra.mxu0 %v789
        %2653 = vmatprep.subr.mxu0 %v766
        %2654 = vmatpush1.msra.mxu0 %v765
        %2655 = vmatprep.subr.mxu0 %v742
        %2656 = vmatpush1.msra.mxu0 %v741
        %2657 = vmatprep.subr.mxu0 %v718
        %2658 = vmatpush1.msra.mxu0 %v717
        %2659 = vmatprep.subr.mxu0 %v694
        %2660 = vmatpush1.msra.mxu0 %v693
        %2661 = vmatprep.subr.mxu0 %v670
        %2662 = vmatpush1.msra.mxu0 %v669
        %2663 = vmatprep.subr.mxu0 %v646
        %2664 = vmatpush1.msra.mxu0 %v645
        %2665 = vmatprep.subr.mxu0 %v622
        %2666 = vmatpush1.msra.mxu0 %v621
        %2667 = vmatprep.subr.mxu0 %v598
        %2668 = vmatpush1.msra.mxu0 %v597
        %2669 = vmatprep.subr.mxu0 0.0
        %2670 = vmatpush2.msra.mxu0 0.0
        %2671 = vmatprep.subr.mxu0 0.0
        %2672 = vmatpush2.msra.mxu0 0.0
        %2673 = vmatprep.subr.mxu0 0.0
        %2674 = vmatpush2.msra.mxu0 0.0
        %2675 = vmatprep.subr.mxu0 0.0
        %2676 = vmatpush2.msra.mxu0 0.0
        %2677 = vmatprep.subr.mxu0 0.0
        %2678 = vmatpush2.msra.mxu0 0.0
        %2679 = vmatprep.subr.mxu0 0.0
        %2680 = vmatpush2.msra.mxu0 0.0
        %2681 = vmatprep.subr.mxu0 0.0
        %2682 = vmatpush2.msra.mxu0 0.0
        %2683 = vmatprep.subr.mxu0 0.0
        %2684 = vmatpush2.msra.mxu0 0.0
        %2685 = vmatprep.subr.mxu0 0.0
        %2686 = vmatpush2.msra.mxu0 0.0
        %2687 = vmatprep.subr.mxu0 0.0
        %2688 = vmatpush2.msra.mxu0 0.0
        %2689 = vmatprep.subr.mxu0 0.0
        %2690 = vmatpush2.msra.mxu0 0.0
        %2691 = vmatprep.subr.mxu0 0.0
        %2692 = vmatpush2.msra.mxu0 0.0
        %2693 = vmatprep.subr.mxu0 0.0
        %2694 = vmatpush2.msra.mxu0 0.0
        %2695 = vmatprep.subr.mxu0 0.0
        %2696 = vmatpush2.msra.mxu0 0.0
        %2697 = vmatprep.subr.mxu0 0.0
        %2698 = vmatpush2.msra.mxu0 0.0
        %2699 = vmatprep.subr.mxu0 0.0
        %2700 = vmatpush2.msra.mxu0 0.0
        %2701 = vmatprep.mubr.f32.mxu0 0.0
        %2702 = vmatmul.mubr.f32.gmra.mxu0 %v553
        %v2703 = vpop.f32.mrf.mxu0
        %v2704 = vadd.f32 %v1026, %v2703
        %v2705 = vpop.f32.mrf.mxu0
        %v2706 = vadd.f32 %v1030, %v2705
        %2707 = vmatprep.mubr.f32.mxu0 0.0
        %2708 = vmatmul.mubr.f32.gmra.mxu0 %v554
        %v2709 = vpop.f32.mrf.mxu0
        %v2710 = vadd.f32 %v1026, %v2709
        %v2711 = vpop.f32.mrf.mxu0
        %v2712 = vadd.f32 %v1030, %v2711
        %2713 = vmatprep.mubr.f32.mxu0 0.0
        %2714 = vmatmul.mubr.f32.gmra.mxu0 %v555
        %v2715 = vpop.f32.mrf.mxu0
        %v2716 = vadd.f32 %v1026, %v2715
        %v2717 = vpop.f32.mrf.mxu0
        %v2718 = vadd.f32 %v1030, %v2717
        %2719 = vmatprep.mubr.f32.mxu0 0.0
        %2720 = vmatmul.mubr.f32.gmra.mxu0 %v556
        %v2721 = vpop.f32.mrf.mxu0
        %v2722 = vadd.f32 %v1026, %v2721
        %v2723 = vpop.f32.mrf.mxu0
        %v2724 = vadd.f32 %v1030, %v2723
        %2725 = vmatprep.mubr.f32.mxu0 0.0
        %2726 = vmatmul.mubr.f32.gmra.mxu0 %v557
        %v2727 = vpop.f32.mrf.mxu0
        %v2728 = vadd.f32 %v1026, %v2727
        %v2729 = vpop.f32.mrf.mxu0
        %v2730 = vadd.f32 %v1030, %v2729
        %2731 = vmatprep.mubr.f32.mxu0 0.0
        %2732 = vmatmul.mubr.f32.gmra.mxu0 %v558
        %v2733 = vpop.f32.mrf.mxu0
        %v2734 = vadd.f32 %v1026, %v2733
        %v2735 = vpop.f32.mrf.mxu0
        %v2736 = vadd.f32 %v1030, %v2735
        %2737 = vmatprep.mubr.f32.mxu0 0.0
        %2738 = vmatmul.mubr.f32.gmra.mxu0 %v559
        %v2739 = vpop.f32.mrf.mxu0
        %v2740 = vadd.f32 %v1026, %v2739
        %v2741 = vpop.f32.mrf.mxu0
        %v2742 = vadd.f32 %v1030, %v2741
        %2743 = vmatprep.mubr.f32.mxu0 0.0
        %2744 = vmatmul.mubr.f32.gmra.mxu0 %v560
        %v2745 = vpop.f32.mrf.mxu0
        %v2746 = vadd.f32 %v1026, %v2745
        %v2747 = vpop.f32.mrf.mxu0
        %v2748 = vadd.f32 %v1030, %v2747
        %2749 = vmatprep.mubr.f32.mxu0 0.0
        %2750 = vmatmul.mubr.f32.gmra.mxu0 %v561
        %v2751 = vpop.f32.mrf.mxu0
        %v2752 = vadd.f32 %v1026, %v2751
        %v2753 = vpop.f32.mrf.mxu0
        %v2754 = vadd.f32 %v1030, %v2753
        %2755 = vmatprep.mubr.f32.mxu0 0.0
        %2756 = vmatmul.mubr.f32.gmra.mxu0 %v562
        %v2757 = vpop.f32.mrf.mxu0
        %v2758 = vadd.f32 %v1026, %v2757
        %v2759 = vpop.f32.mrf.mxu0
        %v2760 = vadd.f32 %v1030, %v2759
        %2761 = vmatprep.mubr.f32.mxu0 0.0
        %2762 = vmatmul.mubr.f32.gmra.mxu0 %v563
        %v2763 = vpop.f32.mrf.mxu0
        %v2764 = vadd.f32 %v1026, %v2763
        %v2765 = vpop.f32.mrf.mxu0
        %v2766 = vadd.f32 %v1030, %v2765
        %2767 = vmatprep.mubr.f32.mxu0 0.0
        %2768 = vmatmul.mubr.f32.gmra.mxu0 %v564
        %v2769 = vpop.f32.mrf.mxu0
        %v2770 = vadd.f32 %v1026, %v2769
        %v2771 = vpop.f32.mrf.mxu0
        %v2772 = vadd.f32 %v1030, %v2771
        %2773 = vmatprep.mubr.f32.mxu0 0.0
        %2774 = vmatmul.mubr.f32.gmra.mxu0 %v565
        %v2775 = vpop.f32.mrf.mxu0
        %v2776 = vadd.f32 %v1026, %v2775
        %v2777 = vpop.f32.mrf.mxu0
        %v2778 = vadd.f32 %v1030, %v2777
        %2779 = vmatprep.mubr.f32.mxu0 0.0
        %2780 = vmatmul.mubr.f32.gmra.mxu0 %v566
        %v2781 = vpop.f32.mrf.mxu0
        %v2782 = vadd.f32 %v1026, %v2781
        %v2783 = vpop.f32.mrf.mxu0
        %v2784 = vadd.f32 %v1030, %v2783
        %2785 = vmatprep.mubr.f32.mxu0 0.0
        %2786 = vmatmul.mubr.f32.gmra.mxu0 %v567
        %v2787 = vpop.f32.mrf.mxu0
        %v2788 = vadd.f32 %v1026, %v2787
        %v2789 = vpop.f32.mrf.mxu0
        %v2790 = vadd.f32 %v1030, %v2789
        %2791 = vmatprep.mubr.f32.mxu0 0.0
        %2792 = vmatmul.mubr.f32.gmra.mxu0 %v568
        %v2793 = vpop.f32.mrf.mxu0
        %v2794 = vadd.f32 %v1026, %v2793
        %v2795 = vpop.f32.mrf.mxu0
        %v2796 = vadd.f32 %v1030, %v2795
        %2797 = vmatprep.mubr.f32.mxu0 0.0
        %2798 = vmatmul.mubr.f32.gmra.mxu0 %v569
        %v2799 = vpop.f32.mrf.mxu0
        %v2800 = vadd.f32 %v1026, %v2799
        %v2801 = vpop.f32.mrf.mxu0
        %v2802 = vadd.f32 %v1030, %v2801
        %2803 = vmatprep.mubr.f32.mxu0 0.0
        %2804 = vmatmul.mubr.f32.gmra.mxu0 %v570
        %v2805 = vpop.f32.mrf.mxu0
        %v2806 = vadd.f32 %v1026, %v2805
        %v2807 = vpop.f32.mrf.mxu0
        %v2808 = vadd.f32 %v1030, %v2807
        %2809 = vmatprep.mubr.f32.mxu0 0.0
        %2810 = vmatmul.mubr.f32.gmra.mxu0 %v571
        %v2811 = vpop.f32.mrf.mxu0
        %v2812 = vadd.f32 %v1026, %v2811
        %v2813 = vpop.f32.mrf.mxu0
        %v2814 = vadd.f32 %v1030, %v2813
        %2815 = vmatprep.mubr.f32.mxu0 0.0
        %2816 = vmatmul.mubr.f32.gmra.mxu0 %v572
        %v2817 = vpop.f32.mrf.mxu0
        %v2818 = vadd.f32 %v1026, %v2817
        %v2819 = vpop.f32.mrf.mxu0
        %v2820 = vadd.f32 %v1030, %v2819
        %2821 = vmatprep.mubr.f32.mxu0 0.0
        %2822 = vmatmul.mubr.f32.gmra.mxu0 %v573
        %v2823 = vpop.f32.mrf.mxu0
        %v2824 = vadd.f32 %v1026, %v2823
        %v2825 = vpop.f32.mrf.mxu0
        %v2826 = vadd.f32 %v1030, %v2825
        %2827 = vmatprep.mubr.f32.mxu0 0.0
        %2828 = vmatmul.mubr.f32.gmra.mxu0 %v574
        %v2829 = vpop.f32.mrf.mxu0
        %v2830 = vadd.f32 %v1026, %v2829
        %v2831 = vpop.f32.mrf.mxu0
        %v2832 = vadd.f32 %v1030, %v2831
        %2833 = vmatprep.mubr.f32.mxu0 0.0
        %2834 = vmatmul.mubr.f32.gmra.mxu0 %v575
        %v2835 = vpop.f32.mrf.mxu0
        %v2836 = vadd.f32 %v1026, %v2835
        %v2837 = vpop.f32.mrf.mxu0
        %v2838 = vadd.f32 %v1030, %v2837
        %2839 = vmatprep.mubr.f32.mxu0 0.0
        %2840 = vmatmul.mubr.f32.gmra.mxu0 %v576
        %v2841 = vpop.f32.mrf.mxu0
        %v2842 = vadd.f32 %v1026, %v2841
        %v2843 = vpop.f32.mrf.mxu0
        %v2844 = vadd.f32 %v1030, %v2843
        %2845 = vmatprep.mubr.f32.mxu0 0.0
        %2846 = vmatmul.mubr.f32.gmra.mxu0 %v577
        %v2847 = vpop.f32.mrf.mxu0
        %v2848 = vadd.f32 %v1026, %v2847
        %v2849 = vpop.f32.mrf.mxu0
        %v2850 = vadd.f32 %v1030, %v2849
        %2851 = vmatprep.mubr.f32.mxu0 0.0
        %2852 = vmatmul.mubr.f32.gmra.mxu0 %v578
        %v2853 = vpop.f32.mrf.mxu0
        %v2854 = vadd.f32 %v1026, %v2853
        %v2855 = vpop.f32.mrf.mxu0
        %v2856 = vadd.f32 %v1030, %v2855
        %2857 = vmatprep.mubr.f32.mxu0 0.0
        %2858 = vmatmul.mubr.f32.gmra.mxu0 %v579
        %v2859 = vpop.f32.mrf.mxu0
        %v2860 = vadd.f32 %v1026, %v2859
        %v2861 = vpop.f32.mrf.mxu0
        %v2862 = vadd.f32 %v1030, %v2861
        %2863 = vmatprep.mubr.f32.mxu0 0.0
        %2864 = vmatmul.mubr.f32.gmra.mxu0 %v580
        %v2865 = vpop.f32.mrf.mxu0
        %v2866 = vadd.f32 %v1026, %v2865
        %v2867 = vpop.f32.mrf.mxu0
        %v2868 = vadd.f32 %v1030, %v2867
        %2869 = vmatprep.mubr.f32.mxu0 0.0
        %2870 = vmatmul.mubr.f32.gmra.mxu0 %v581
        %v2871 = vpop.f32.mrf.mxu0
        %v2872 = vadd.f32 %v1026, %v2871
        %v2873 = vpop.f32.mrf.mxu0
        %v2874 = vadd.f32 %v1030, %v2873
        %2875 = vmatprep.mubr.f32.mxu0 0.0
        %2876 = vmatmul.mubr.f32.gmra.mxu0 %v582
        %v2877 = vpop.f32.mrf.mxu0
        %v2878 = vadd.f32 %v1026, %v2877
        %v2879 = vpop.f32.mrf.mxu0
        %v2880 = vadd.f32 %v1030, %v2879
        %2881 = vmatprep.mubr.f32.mxu0 0.0
        %2882 = vmatmul.mubr.f32.gmra.mxu0 %v583
        %v2883 = vpop.f32.mrf.mxu0
        %v2884 = vadd.f32 %v1026, %v2883
        %v2885 = vpop.f32.mrf.mxu0
        %v2886 = vadd.f32 %v1030, %v2885
        %2887 = vmatprep.mubr.f32.mxu0 0.0
        %2888 = vmatmul.mubr.f32.gmra.mxu0 %v584
        %v2889 = vpop.f32.mrf.mxu0
        %v2890 = vadd.f32 %v1026, %v2889
        %v2891 = vpop.f32.mrf.mxu0
        %v2892 = vadd.f32 %v1030, %v2891
        %2893 = vdwg.mxu0
        %2894 = vmatprep.subr.mxu0 %v960
        %2895 = vmatpush1.msra.mxu0 %v959
        %2896 = vmatprep.subr.mxu0 %v936
        %2897 = vmatpush1.msra.mxu0 %v935
        %2898 = vmatprep.subr.mxu0 %v912
        %2899 = vmatpush1.msra.mxu0 %v911
        %2900 = vmatprep.subr.mxu0 %v888
        %2901 = vmatpush1.msra.mxu0 %v887
        %2902 = vmatprep.subr.mxu0 %v864
        %2903 = vmatpush1.msra.mxu0 %v863
        %2904 = vmatprep.subr.mxu0 %v840
        %2905 = vmatpush1.msra.mxu0 %v839
        %2906 = vmatprep.subr.mxu0 %v816
        %2907 = vmatpush1.msra.mxu0 %v815
        %2908 = vmatprep.subr.mxu0 %v792
        %2909 = vmatpush1.msra.mxu0 %v791
        %2910 = vmatprep.subr.mxu0 %v768
        %2911 = vmatpush1.msra.mxu0 %v767
        %2912 = vmatprep.subr.mxu0 %v744
        %2913 = vmatpush1.msra.mxu0 %v743
        %2914 = vmatprep.subr.mxu0 %v720
        %2915 = vmatpush1.msra.mxu0 %v719
        %2916 = vmatprep.subr.mxu0 %v696
        %2917 = vmatpush1.msra.mxu0 %v695
        %2918 = vmatprep.subr.mxu0 %v672
        %2919 = vmatpush1.msra.mxu0 %v671
        %2920 = vmatprep.subr.mxu0 %v648
        %2921 = vmatpush1.msra.mxu0 %v647
        %2922 = vmatprep.subr.mxu0 %v624
        %2923 = vmatpush1.msra.mxu0 %v623
        %2924 = vmatprep.subr.mxu0 %v600
        %2925 = vmatpush1.msra.mxu0 %v599
        %2926 = vmatprep.subr.mxu0 0.0
        %2927 = vmatpush2.msra.mxu0 0.0
        %2928 = vmatprep.subr.mxu0 0.0
        %2929 = vmatpush2.msra.mxu0 0.0
        %2930 = vmatprep.subr.mxu0 0.0
        %2931 = vmatpush2.msra.mxu0 0.0
        %2932 = vmatprep.subr.mxu0 0.0
        %2933 = vmatpush2.msra.mxu0 0.0
        %2934 = vmatprep.subr.mxu0 0.0
        %2935 = vmatpush2.msra.mxu0 0.0
        %2936 = vmatprep.subr.mxu0 0.0
        %2937 = vmatpush2.msra.mxu0 0.0
        %2938 = vmatprep.subr.mxu0 0.0
        %2939 = vmatpush2.msra.mxu0 0.0
        %2940 = vmatprep.subr.mxu0 0.0
        %2941 = vmatpush2.msra.mxu0 0.0
        %2942 = vmatprep.subr.mxu0 0.0
        %2943 = vmatpush2.msra.mxu0 0.0
        %2944 = vmatprep.subr.mxu0 0.0
        %2945 = vmatpush2.msra.mxu0 0.0
        %2946 = vmatprep.subr.mxu0 0.0
        %2947 = vmatpush2.msra.mxu0 0.0
        %2948 = vmatprep.subr.mxu0 0.0
        %2949 = vmatpush2.msra.mxu0 0.0
        %2950 = vmatprep.subr.mxu0 0.0
        %2951 = vmatpush2.msra.mxu0 0.0
        %2952 = vmatprep.subr.mxu0 0.0
        %2953 = vmatpush2.msra.mxu0 0.0
        %2954 = vmatprep.subr.mxu0 0.0
        %2955 = vmatpush2.msra.mxu0 0.0
        %2956 = vmatprep.subr.mxu0 0.0
        %2957 = vmatpush2.msra.mxu0 0.0
        %2958 = vmatprep.mubr.f32.mxu0 0.0
        %2959 = vmatmul.mubr.f32.gmra.mxu0 %v553
        %v2960 = vpop.f32.mrf.mxu0
        %v2961 = vadd.f32 %v1034, %v2960
        %v2962 = vpop.f32.mrf.mxu0
        %v2963 = vadd.f32 %v1038, %v2962
        %2964 = vmatprep.mubr.f32.mxu0 0.0
        %2965 = vmatmul.mubr.f32.gmra.mxu0 %v554
        %v2966 = vpop.f32.mrf.mxu0
        %v2967 = vadd.f32 %v1034, %v2966
        %v2968 = vpop.f32.mrf.mxu0
        %v2969 = vadd.f32 %v1038, %v2968
        %2970 = vmatprep.mubr.f32.mxu0 0.0
        %2971 = vmatmul.mubr.f32.gmra.mxu0 %v555
        %v2972 = vpop.f32.mrf.mxu0
        %v2973 = vadd.f32 %v1034, %v2972
        %v2974 = vpop.f32.mrf.mxu0
        %v2975 = vadd.f32 %v1038, %v2974
        %2976 = vmatprep.mubr.f32.mxu0 0.0
        %2977 = vmatmul.mubr.f32.gmra.mxu0 %v556
        %v2978 = vpop.f32.mrf.mxu0
        %v2979 = vadd.f32 %v1034, %v2978
        %v2980 = vpop.f32.mrf.mxu0
        %v2981 = vadd.f32 %v1038, %v2980
        %2982 = vmatprep.mubr.f32.mxu0 0.0
        %2983 = vmatmul.mubr.f32.gmra.mxu0 %v557
        %v2984 = vpop.f32.mrf.mxu0
        %v2985 = vadd.f32 %v1034, %v2984
        %v2986 = vpop.f32.mrf.mxu0
        %v2987 = vadd.f32 %v1038, %v2986
        %2988 = vmatprep.mubr.f32.mxu0 0.0
        %2989 = vmatmul.mubr.f32.gmra.mxu0 %v558
        %v2990 = vpop.f32.mrf.mxu0
        %v2991 = vadd.f32 %v1034, %v2990
        %v2992 = vpop.f32.mrf.mxu0
        %v2993 = vadd.f32 %v1038, %v2992
        %2994 = vmatprep.mubr.f32.mxu0 0.0
        %2995 = vmatmul.mubr.f32.gmra.mxu0 %v559
        %v2996 = vpop.f32.mrf.mxu0
        %v2997 = vadd.f32 %v1034, %v2996
        %v2998 = vpop.f32.mrf.mxu0
        %v2999 = vadd.f32 %v1038, %v2998
        %3000 = vmatprep.mubr.f32.mxu0 0.0
        %3001 = vmatmul.mubr.f32.gmra.mxu0 %v560
        %v3002 = vpop.f32.mrf.mxu0
        %v3003 = vadd.f32 %v1034, %v3002
        %v3004 = vpop.f32.mrf.mxu0
        %v3005 = vadd.f32 %v1038, %v3004
        %3006 = vmatprep.mubr.f32.mxu0 0.0
        %3007 = vmatmul.mubr.f32.gmra.mxu0 %v561
        %v3008 = vpop.f32.mrf.mxu0
        %v3009 = vadd.f32 %v1034, %v3008
        %v3010 = vpop.f32.mrf.mxu0
        %v3011 = vadd.f32 %v1038, %v3010
        %3012 = vmatprep.mubr.f32.mxu0 0.0
        %3013 = vmatmul.mubr.f32.gmra.mxu0 %v562
        %v3014 = vpop.f32.mrf.mxu0
        %v3015 = vadd.f32 %v1034, %v3014
        %v3016 = vpop.f32.mrf.mxu0
        %v3017 = vadd.f32 %v1038, %v3016
        %3018 = vmatprep.mubr.f32.mxu0 0.0
        %3019 = vmatmul.mubr.f32.gmra.mxu0 %v563
        %v3020 = vpop.f32.mrf.mxu0
        %v3021 = vadd.f32 %v1034, %v3020
        %v3022 = vpop.f32.mrf.mxu0
        %v3023 = vadd.f32 %v1038, %v3022
        %3024 = vmatprep.mubr.f32.mxu0 0.0
        %3025 = vmatmul.mubr.f32.gmra.mxu0 %v564
        %v3026 = vpop.f32.mrf.mxu0
        %v3027 = vadd.f32 %v1034, %v3026
        %v3028 = vpop.f32.mrf.mxu0
        %v3029 = vadd.f32 %v1038, %v3028
        %3030 = vmatprep.mubr.f32.mxu0 0.0
        %3031 = vmatmul.mubr.f32.gmra.mxu0 %v565
        %v3032 = vpop.f32.mrf.mxu0
        %v3033 = vadd.f32 %v1034, %v3032
        %v3034 = vpop.f32.mrf.mxu0
        %v3035 = vadd.f32 %v1038, %v3034
        %3036 = vmatprep.mubr.f32.mxu0 0.0
        %3037 = vmatmul.mubr.f32.gmra.mxu0 %v566
        %v3038 = vpop.f32.mrf.mxu0
        %v3039 = vadd.f32 %v1034, %v3038
        %v3040 = vpop.f32.mrf.mxu0
        %v3041 = vadd.f32 %v1038, %v3040
        %3042 = vmatprep.mubr.f32.mxu0 0.0
        %3043 = vmatmul.mubr.f32.gmra.mxu0 %v567
        %v3044 = vpop.f32.mrf.mxu0
        %v3045 = vadd.f32 %v1034, %v3044
        %v3046 = vpop.f32.mrf.mxu0
        %v3047 = vadd.f32 %v1038, %v3046
        %3048 = vmatprep.mubr.f32.mxu0 0.0
        %3049 = vmatmul.mubr.f32.gmra.mxu0 %v568
        %v3050 = vpop.f32.mrf.mxu0
        %v3051 = vadd.f32 %v1034, %v3050
        %v3052 = vpop.f32.mrf.mxu0
        %v3053 = vadd.f32 %v1038, %v3052
        %3054 = vmatprep.mubr.f32.mxu0 0.0
        %3055 = vmatmul.mubr.f32.gmra.mxu0 %v569
        %v3056 = vpop.f32.mrf.mxu0
        %v3057 = vadd.f32 %v1034, %v3056
        %v3058 = vpop.f32.mrf.mxu0
        %v3059 = vadd.f32 %v1038, %v3058
        %3060 = vmatprep.mubr.f32.mxu0 0.0
        %3061 = vmatmul.mubr.f32.gmra.mxu0 %v570
        %v3062 = vpop.f32.mrf.mxu0
        %v3063 = vadd.f32 %v1034, %v3062
        %v3064 = vpop.f32.mrf.mxu0
        %v3065 = vadd.f32 %v1038, %v3064
        %3066 = vmatprep.mubr.f32.mxu0 0.0
        %3067 = vmatmul.mubr.f32.gmra.mxu0 %v571
        %v3068 = vpop.f32.mrf.mxu0
        %v3069 = vadd.f32 %v1034, %v3068
        %v3070 = vpop.f32.mrf.mxu0
        %v3071 = vadd.f32 %v1038, %v3070
        %3072 = vmatprep.mubr.f32.mxu0 0.0
        %3073 = vmatmul.mubr.f32.gmra.mxu0 %v572
        %v3074 = vpop.f32.mrf.mxu0
        %v3075 = vadd.f32 %v1034, %v3074
        %v3076 = vpop.f32.mrf.mxu0
        %v3077 = vadd.f32 %v1038, %v3076
        %3078 = vmatprep.mubr.f32.mxu0 0.0
        %3079 = vmatmul.mubr.f32.gmra.mxu0 %v573
        %v3080 = vpop.f32.mrf.mxu0
        %v3081 = vadd.f32 %v1034, %v3080
        %v3082 = vpop.f32.mrf.mxu0
        %v3083 = vadd.f32 %v1038, %v3082
        %3084 = vmatprep.mubr.f32.mxu0 0.0
        %3085 = vmatmul.mubr.f32.gmra.mxu0 %v574
        %v3086 = vpop.f32.mrf.mxu0
        %v3087 = vadd.f32 %v1034, %v3086
        %v3088 = vpop.f32.mrf.mxu0
        %v3089 = vadd.f32 %v1038, %v3088
        %3090 = vmatprep.mubr.f32.mxu0 0.0
        %3091 = vmatmul.mubr.f32.gmra.mxu0 %v575
        %v3092 = vpop.f32.mrf.mxu0
        %v3093 = vadd.f32 %v1034, %v3092
        %v3094 = vpop.f32.mrf.mxu0
        %v3095 = vadd.f32 %v1038, %v3094
        %3096 = vmatprep.mubr.f32.mxu0 0.0
        %3097 = vmatmul.mubr.f32.gmra.mxu0 %v576
        %v3098 = vpop.f32.mrf.mxu0
        %v3099 = vadd.f32 %v1034, %v3098
        %v3100 = vpop.f32.mrf.mxu0
        %v3101 = vadd.f32 %v1038, %v3100
        %3102 = vmatprep.mubr.f32.mxu0 0.0
        %3103 = vmatmul.mubr.f32.gmra.mxu0 %v577
        %v3104 = vpop.f32.mrf.mxu0
        %v3105 = vadd.f32 %v1034, %v3104
        %v3106 = vpop.f32.mrf.mxu0
        %v3107 = vadd.f32 %v1038, %v3106
        %3108 = vmatprep.mubr.f32.mxu0 0.0
        %3109 = vmatmul.mubr.f32.gmra.mxu0 %v578
        %v3110 = vpop.f32.mrf.mxu0
        %v3111 = vadd.f32 %v1034, %v3110
        %v3112 = vpop.f32.mrf.mxu0
        %v3113 = vadd.f32 %v1038, %v3112
        %3114 = vmatprep.mubr.f32.mxu0 0.0
        %3115 = vmatmul.mubr.f32.gmra.mxu0 %v579
        %v3116 = vpop.f32.mrf.mxu0
        %v3117 = vadd.f32 %v1034, %v3116
        %v3118 = vpop.f32.mrf.mxu0
        %v3119 = vadd.f32 %v1038, %v3118
        %3120 = vmatprep.mubr.f32.mxu0 0.0
        %3121 = vmatmul.mubr.f32.gmra.mxu0 %v580
        %v3122 = vpop.f32.mrf.mxu0
        %v3123 = vadd.f32 %v1034, %v3122
        %v3124 = vpop.f32.mrf.mxu0
        %v3125 = vadd.f32 %v1038, %v3124
        %3126 = vmatprep.mubr.f32.mxu0 0.0
        %3127 = vmatmul.mubr.f32.gmra.mxu0 %v581
        %v3128 = vpop.f32.mrf.mxu0
        %v3129 = vadd.f32 %v1034, %v3128
        %v3130 = vpop.f32.mrf.mxu0
        %v3131 = vadd.f32 %v1038, %v3130
        %3132 = vmatprep.mubr.f32.mxu0 0.0
        %3133 = vmatmul.mubr.f32.gmra.mxu0 %v582
        %v3134 = vpop.f32.mrf.mxu0
        %v3135 = vadd.f32 %v1034, %v3134
        %v3136 = vpop.f32.mrf.mxu0
        %v3137 = vadd.f32 %v1038, %v3136
        %3138 = vmatprep.mubr.f32.mxu0 0.0
        %3139 = vmatmul.mubr.f32.gmra.mxu0 %v583
        %v3140 = vpop.f32.mrf.mxu0
        %v3141 = vadd.f32 %v1034, %v3140
        %v3142 = vpop.f32.mrf.mxu0
        %v3143 = vadd.f32 %v1038, %v3142
        %3144 = vmatprep.mubr.f32.mxu0 0.0
        %3145 = vmatmul.mubr.f32.gmra.mxu0 %v584
        %v3146 = vpop.f32.mrf.mxu0
        %v3147 = vadd.f32 %v1034, %v3146
        %v3148 = vpop.f32.mrf.mxu0
        %v3149 = vadd.f32 %v1038, %v3148
        %3150 = vdwg.mxu0
        %3151 = vmatprep.subr.mxu0 %v962
        %3152 = vmatpush1.msra.mxu0 %v961
        %3153 = vmatprep.subr.mxu0 %v938
        %3154 = vmatpush1.msra.mxu0 %v937
        %3155 = vmatprep.subr.mxu0 %v914
        %3156 = vmatpush1.msra.mxu0 %v913
        %3157 = vmatprep.subr.mxu0 %v890
        %3158 = vmatpush1.msra.mxu0 %v889
        %3159 = vmatprep.subr.mxu0 %v866
        %3160 = vmatpush1.msra.mxu0 %v865
        %3161 = vmatprep.subr.mxu0 %v842
        %3162 = vmatpush1.msra.mxu0 %v841
        %3163 = vmatprep.subr.mxu0 %v818
        %3164 = vmatpush1.msra.mxu0 %v817
        %3165 = vmatprep.subr.mxu0 %v794
        %3166 = vmatpush1.msra.mxu0 %v793
        %3167 = vmatprep.subr.mxu0 %v770
        %3168 = vmatpush1.msra.mxu0 %v769
        %3169 = vmatprep.subr.mxu0 %v746
        %3170 = vmatpush1.msra.mxu0 %v745
        %3171 = vmatprep.subr.mxu0 %v722
        %3172 = vmatpush1.msra.mxu0 %v721
        %3173 = vmatprep.subr.mxu0 %v698
        %3174 = vmatpush1.msra.mxu0 %v697
        %3175 = vmatprep.subr.mxu0 %v674
        %3176 = vmatpush1.msra.mxu0 %v673
        %3177 = vmatprep.subr.mxu0 %v650
        %3178 = vmatpush1.msra.mxu0 %v649
        %3179 = vmatprep.subr.mxu0 %v626
        %3180 = vmatpush1.msra.mxu0 %v625
        %3181 = vmatprep.subr.mxu0 %v602
        %3182 = vmatpush1.msra.mxu0 %v601
        %3183 = vmatprep.subr.mxu0 0.0
        %3184 = vmatpush2.msra.mxu0 0.0
        %3185 = vmatprep.subr.mxu0 0.0
        %3186 = vmatpush2.msra.mxu0 0.0
        %3187 = vmatprep.subr.mxu0 0.0
        %3188 = vmatpush2.msra.mxu0 0.0
        %3189 = vmatprep.subr.mxu0 0.0
        %3190 = vmatpush2.msra.mxu0 0.0
        %3191 = vmatprep.subr.mxu0 0.0
        %3192 = vmatpush2.msra.mxu0 0.0
        %3193 = vmatprep.subr.mxu0 0.0
        %3194 = vmatpush2.msra.mxu0 0.0
        %3195 = vmatprep.subr.mxu0 0.0
        %3196 = vmatpush2.msra.mxu0 0.0
        %3197 = vmatprep.subr.mxu0 0.0
        %3198 = vmatpush2.msra.mxu0 0.0
        %3199 = vmatprep.subr.mxu0 0.0
        %3200 = vmatpush2.msra.mxu0 0.0
        %3201 = vmatprep.subr.mxu0 0.0
        %3202 = vmatpush2.msra.mxu0 0.0
        %3203 = vmatprep.subr.mxu0 0.0
        %3204 = vmatpush2.msra.mxu0 0.0
        %3205 = vmatprep.subr.mxu0 0.0
        %3206 = vmatpush2.msra.mxu0 0.0
        %3207 = vmatprep.subr.mxu0 0.0
        %3208 = vmatpush2.msra.mxu0 0.0
        %3209 = vmatprep.subr.mxu0 0.0
        %3210 = vmatpush2.msra.mxu0 0.0
        %3211 = vmatprep.subr.mxu0 0.0
        %3212 = vmatpush2.msra.mxu0 0.0
        %3213 = vmatprep.subr.mxu0 0.0
        %3214 = vmatpush2.msra.mxu0 0.0
        %3215 = vmatprep.mubr.f32.mxu0 0.0
        %3216 = vmatmul.mubr.f32.gmra.mxu0 %v553
        %v3217 = vpop.f32.mrf.mxu0
        %v3218 = vadd.f32 %v1042, %v3217
        %v3219 = vpop.f32.mrf.mxu0
        %v3220 = vadd.f32 %v1046, %v3219
        %3221 = vmatprep.mubr.f32.mxu0 0.0
        %3222 = vmatmul.mubr.f32.gmra.mxu0 %v554
        %v3223 = vpop.f32.mrf.mxu0
        %v3224 = vadd.f32 %v1042, %v3223
        %v3225 = vpop.f32.mrf.mxu0
        %v3226 = vadd.f32 %v1046, %v3225
        %3227 = vmatprep.mubr.f32.mxu0 0.0
        %3228 = vmatmul.mubr.f32.gmra.mxu0 %v555
        %v3229 = vpop.f32.mrf.mxu0
        %v3230 = vadd.f32 %v1042, %v3229
        %v3231 = vpop.f32.mrf.mxu0
        %v3232 = vadd.f32 %v1046, %v3231
        %3233 = vmatprep.mubr.f32.mxu0 0.0
        %3234 = vmatmul.mubr.f32.gmra.mxu0 %v556
        %v3235 = vpop.f32.mrf.mxu0
        %v3236 = vadd.f32 %v1042, %v3235
        %v3237 = vpop.f32.mrf.mxu0
        %v3238 = vadd.f32 %v1046, %v3237
        %3239 = vmatprep.mubr.f32.mxu0 0.0
        %3240 = vmatmul.mubr.f32.gmra.mxu0 %v557
        %v3241 = vpop.f32.mrf.mxu0
        %v3242 = vadd.f32 %v1042, %v3241
        %v3243 = vpop.f32.mrf.mxu0
        %v3244 = vadd.f32 %v1046, %v3243
        %3245 = vmatprep.mubr.f32.mxu0 0.0
        %3246 = vmatmul.mubr.f32.gmra.mxu0 %v558
        %v3247 = vpop.f32.mrf.mxu0
        %v3248 = vadd.f32 %v1042, %v3247
        %v3249 = vpop.f32.mrf.mxu0
        %v3250 = vadd.f32 %v1046, %v3249
        %3251 = vmatprep.mubr.f32.mxu0 0.0
        %3252 = vmatmul.mubr.f32.gmra.mxu0 %v559
        %v3253 = vpop.f32.mrf.mxu0
        %v3254 = vadd.f32 %v1042, %v3253
        %v3255 = vpop.f32.mrf.mxu0
        %v3256 = vadd.f32 %v1046, %v3255
        %3257 = vmatprep.mubr.f32.mxu0 0.0
        %3258 = vmatmul.mubr.f32.gmra.mxu0 %v560
        %v3259 = vpop.f32.mrf.mxu0
        %v3260 = vadd.f32 %v1042, %v3259
        %v3261 = vpop.f32.mrf.mxu0
        %v3262 = vadd.f32 %v1046, %v3261
        %3263 = vmatprep.mubr.f32.mxu0 0.0
        %3264 = vmatmul.mubr.f32.gmra.mxu0 %v561
        %v3265 = vpop.f32.mrf.mxu0
        %v3266 = vadd.f32 %v1042, %v3265
        %v3267 = vpop.f32.mrf.mxu0
        %v3268 = vadd.f32 %v1046, %v3267
        %3269 = vmatprep.mubr.f32.mxu0 0.0
        %3270 = vmatmul.mubr.f32.gmra.mxu0 %v562
        %v3271 = vpop.f32.mrf.mxu0
        %v3272 = vadd.f32 %v1042, %v3271
        %v3273 = vpop.f32.mrf.mxu0
        %v3274 = vadd.f32 %v1046, %v3273
        %3275 = vmatprep.mubr.f32.mxu0 0.0
        %3276 = vmatmul.mubr.f32.gmra.mxu0 %v563
        %v3277 = vpop.f32.mrf.mxu0
        %v3278 = vadd.f32 %v1042, %v3277
        %v3279 = vpop.f32.mrf.mxu0
        %v3280 = vadd.f32 %v1046, %v3279
        %3281 = vmatprep.mubr.f32.mxu0 0.0
        %3282 = vmatmul.mubr.f32.gmra.mxu0 %v564
        %v3283 = vpop.f32.mrf.mxu0
        %v3284 = vadd.f32 %v1042, %v3283
        %v3285 = vpop.f32.mrf.mxu0
        %v3286 = vadd.f32 %v1046, %v3285
        %3287 = vmatprep.mubr.f32.mxu0 0.0
        %3288 = vmatmul.mubr.f32.gmra.mxu0 %v565
        %v3289 = vpop.f32.mrf.mxu0
        %v3290 = vadd.f32 %v1042, %v3289
        %v3291 = vpop.f32.mrf.mxu0
        %v3292 = vadd.f32 %v1046, %v3291
        %3293 = vmatprep.mubr.f32.mxu0 0.0
        %3294 = vmatmul.mubr.f32.gmra.mxu0 %v566
        %v3295 = vpop.f32.mrf.mxu0
        %v3296 = vadd.f32 %v1042, %v3295
        %v3297 = vpop.f32.mrf.mxu0
        %v3298 = vadd.f32 %v1046, %v3297
        %3299 = vmatprep.mubr.f32.mxu0 0.0
        %3300 = vmatmul.mubr.f32.gmra.mxu0 %v567
        %v3301 = vpop.f32.mrf.mxu0
        %v3302 = vadd.f32 %v1042, %v3301
        %v3303 = vpop.f32.mrf.mxu0
        %v3304 = vadd.f32 %v1046, %v3303
        %3305 = vmatprep.mubr.f32.mxu0 0.0
        %3306 = vmatmul.mubr.f32.gmra.mxu0 %v568
        %v3307 = vpop.f32.mrf.mxu0
        %v3308 = vadd.f32 %v1042, %v3307
        %v3309 = vpop.f32.mrf.mxu0
        %v3310 = vadd.f32 %v1046, %v3309
        %3311 = vmatprep.mubr.f32.mxu0 0.0
        %3312 = vmatmul.mubr.f32.gmra.mxu0 %v569
        %v3313 = vpop.f32.mrf.mxu0
        %v3314 = vadd.f32 %v1042, %v3313
        %v3315 = vpop.f32.mrf.mxu0
        %v3316 = vadd.f32 %v1046, %v3315
        %3317 = vmatprep.mubr.f32.mxu0 0.0
        %3318 = vmatmul.mubr.f32.gmra.mxu0 %v570
        %v3319 = vpop.f32.mrf.mxu0
        %v3320 = vadd.f32 %v1042, %v3319
        %v3321 = vpop.f32.mrf.mxu0
        %v3322 = vadd.f32 %v1046, %v3321
        %3323 = vmatprep.mubr.f32.mxu0 0.0
        %3324 = vmatmul.mubr.f32.gmra.mxu0 %v571
        %v3325 = vpop.f32.mrf.mxu0
        %v3326 = vadd.f32 %v1042, %v3325
        %v3327 = vpop.f32.mrf.mxu0
        %v3328 = vadd.f32 %v1046, %v3327
        %3329 = vmatprep.mubr.f32.mxu0 0.0
        %3330 = vmatmul.mubr.f32.gmra.mxu0 %v572
        %v3331 = vpop.f32.mrf.mxu0
        %v3332 = vadd.f32 %v1042, %v3331
        %v3333 = vpop.f32.mrf.mxu0
        %v3334 = vadd.f32 %v1046, %v3333
        %3335 = vmatprep.mubr.f32.mxu0 0.0
        %3336 = vmatmul.mubr.f32.gmra.mxu0 %v573
        %v3337 = vpop.f32.mrf.mxu0
        %v3338 = vadd.f32 %v1042, %v3337
        %v3339 = vpop.f32.mrf.mxu0
        %v3340 = vadd.f32 %v1046, %v3339
        %3341 = vmatprep.mubr.f32.mxu0 0.0
        %3342 = vmatmul.mubr.f32.gmra.mxu0 %v574
        %v3343 = vpop.f32.mrf.mxu0
        %v3344 = vadd.f32 %v1042, %v3343
        %v3345 = vpop.f32.mrf.mxu0
        %v3346 = vadd.f32 %v1046, %v3345
        %3347 = vmatprep.mubr.f32.mxu0 0.0
        %3348 = vmatmul.mubr.f32.gmra.mxu0 %v575
        %v3349 = vpop.f32.mrf.mxu0
        %v3350 = vadd.f32 %v1042, %v3349
        %v3351 = vpop.f32.mrf.mxu0
        %v3352 = vadd.f32 %v1046, %v3351
        %3353 = vmatprep.mubr.f32.mxu0 0.0
        %3354 = vmatmul.mubr.f32.gmra.mxu0 %v576
        %v3355 = vpop.f32.mrf.mxu0
        %v3356 = vadd.f32 %v1042, %v3355
        %v3357 = vpop.f32.mrf.mxu0
        %v3358 = vadd.f32 %v1046, %v3357
        %3359 = vmatprep.mubr.f32.mxu0 0.0
        %3360 = vmatmul.mubr.f32.gmra.mxu0 %v577
        %v3361 = vpop.f32.mrf.mxu0
        %v3362 = vadd.f32 %v1042, %v3361
        %v3363 = vpop.f32.mrf.mxu0
        %v3364 = vadd.f32 %v1046, %v3363
        %3365 = vmatprep.mubr.f32.mxu0 0.0
        %3366 = vmatmul.mubr.f32.gmra.mxu0 %v578
        %v3367 = vpop.f32.mrf.mxu0
        %v3368 = vadd.f32 %v1042, %v3367
        %v3369 = vpop.f32.mrf.mxu0
        %v3370 = vadd.f32 %v1046, %v3369
        %3371 = vmatprep.mubr.f32.mxu0 0.0
        %3372 = vmatmul.mubr.f32.gmra.mxu0 %v579
        %v3373 = vpop.f32.mrf.mxu0
        %v3374 = vadd.f32 %v1042, %v3373
        %v3375 = vpop.f32.mrf.mxu0
        %v3376 = vadd.f32 %v1046, %v3375
        %3377 = vmatprep.mubr.f32.mxu0 0.0
        %3378 = vmatmul.mubr.f32.gmra.mxu0 %v580
        %v3379 = vpop.f32.mrf.mxu0
        %v3380 = vadd.f32 %v1042, %v3379
        %v3381 = vpop.f32.mrf.mxu0
        %v3382 = vadd.f32 %v1046, %v3381
        %3383 = vmatprep.mubr.f32.mxu0 0.0
        %3384 = vmatmul.mubr.f32.gmra.mxu0 %v581
        %v3385 = vpop.f32.mrf.mxu0
        %v3386 = vadd.f32 %v1042, %v3385
        %v3387 = vpop.f32.mrf.mxu0
        %v3388 = vadd.f32 %v1046, %v3387
        %3389 = vmatprep.mubr.f32.mxu0 0.0
        %3390 = vmatmul.mubr.f32.gmra.mxu0 %v582
        %v3391 = vpop.f32.mrf.mxu0
        %v3392 = vadd.f32 %v1042, %v3391
        %v3393 = vpop.f32.mrf.mxu0
        %v3394 = vadd.f32 %v1046, %v3393
        %3395 = vmatprep.mubr.f32.mxu0 0.0
        %3396 = vmatmul.mubr.f32.gmra.mxu0 %v583
        %v3397 = vpop.f32.mrf.mxu0
        %v3398 = vadd.f32 %v1042, %v3397
        %v3399 = vpop.f32.mrf.mxu0
        %v3400 = vadd.f32 %v1046, %v3399
        %3401 = vmatprep.mubr.f32.mxu0 0.0
        %3402 = vmatmul.mubr.f32.gmra.mxu0 %v584
        %v3403 = vpop.f32.mrf.mxu0
        %v3404 = vadd.f32 %v1042, %v3403
        %v3405 = vpop.f32.mrf.mxu0
        %v3406 = vadd.f32 %v1046, %v3405
        %3407 = vdwg.mxu0
        %3408 = vmatprep.subr.mxu0 %v964
        %3409 = vmatpush1.msra.mxu0 %v963
        %3410 = vmatprep.subr.mxu0 %v940
        %3411 = vmatpush1.msra.mxu0 %v939
        %3412 = vmatprep.subr.mxu0 %v916
        %3413 = vmatpush1.msra.mxu0 %v915
        %3414 = vmatprep.subr.mxu0 %v892
        %3415 = vmatpush1.msra.mxu0 %v891
        %3416 = vmatprep.subr.mxu0 %v868
        %3417 = vmatpush1.msra.mxu0 %v867
        %3418 = vmatprep.subr.mxu0 %v844
        %3419 = vmatpush1.msra.mxu0 %v843
        %3420 = vmatprep.subr.mxu0 %v820
        %3421 = vmatpush1.msra.mxu0 %v819
        %3422 = vmatprep.subr.mxu0 %v796
        %3423 = vmatpush1.msra.mxu0 %v795
        %3424 = vmatprep.subr.mxu0 %v772
        %3425 = vmatpush1.msra.mxu0 %v771
        %3426 = vmatprep.subr.mxu0 %v748
        %3427 = vmatpush1.msra.mxu0 %v747
        %3428 = vmatprep.subr.mxu0 %v724
        %3429 = vmatpush1.msra.mxu0 %v723
        %3430 = vmatprep.subr.mxu0 %v700
        %3431 = vmatpush1.msra.mxu0 %v699
        %3432 = vmatprep.subr.mxu0 %v676
        %3433 = vmatpush1.msra.mxu0 %v675
        %3434 = vmatprep.subr.mxu0 %v652
        %3435 = vmatpush1.msra.mxu0 %v651
        %3436 = vmatprep.subr.mxu0 %v628
        %3437 = vmatpush1.msra.mxu0 %v627
        %3438 = vmatprep.subr.mxu0 %v604
        %3439 = vmatpush1.msra.mxu0 %v603
        %3440 = vmatprep.subr.mxu0 0.0
        %3441 = vmatpush2.msra.mxu0 0.0
        %3442 = vmatprep.subr.mxu0 0.0
        %3443 = vmatpush2.msra.mxu0 0.0
        %3444 = vmatprep.subr.mxu0 0.0
        %3445 = vmatpush2.msra.mxu0 0.0
        %3446 = vmatprep.subr.mxu0 0.0
        %3447 = vmatpush2.msra.mxu0 0.0
        %3448 = vmatprep.subr.mxu0 0.0
        %3449 = vmatpush2.msra.mxu0 0.0
        %3450 = vmatprep.subr.mxu0 0.0
        %3451 = vmatpush2.msra.mxu0 0.0
        %3452 = vmatprep.subr.mxu0 0.0
        %3453 = vmatpush2.msra.mxu0 0.0
        %3454 = vmatprep.subr.mxu0 0.0
        %3455 = vmatpush2.msra.mxu0 0.0
        %3456 = vmatprep.subr.mxu0 0.0
        %3457 = vmatpush2.msra.mxu0 0.0
        %3458 = vmatprep.subr.mxu0 0.0
        %3459 = vmatpush2.msra.mxu0 0.0
        %3460 = vmatprep.subr.mxu0 0.0
        %3461 = vmatpush2.msra.mxu0 0.0
        %3462 = vmatprep.subr.mxu0 0.0
        %3463 = vmatpush2.msra.mxu0 0.0
        %3464 = vmatprep.subr.mxu0 0.0
        %3465 = vmatpush2.msra.mxu0 0.0
        %3466 = vmatprep.subr.mxu0 0.0
        %3467 = vmatpush2.msra.mxu0 0.0
        %3468 = vmatprep.subr.mxu0 0.0
        %3469 = vmatpush2.msra.mxu0 0.0
        %3470 = vmatprep.subr.mxu0 0.0
        %3471 = vmatpush2.msra.mxu0 0.0
        %3472 = vmatprep.mubr.f32.mxu0 0.0
        %3473 = vmatmul.mubr.f32.gmra.mxu0 %v553
        %v3474 = vpop.f32.mrf.mxu0
        %v3475 = vadd.f32 %v1050, %v3474
        %v3476 = vpop.f32.mrf.mxu0
        %v3477 = vadd.f32 %v1054, %v3476
        %3478 = vmatprep.mubr.f32.mxu0 0.0
        %3479 = vmatmul.mubr.f32.gmra.mxu0 %v554
        %v3480 = vpop.f32.mrf.mxu0
        %v3481 = vadd.f32 %v1050, %v3480
        %v3482 = vpop.f32.mrf.mxu0
        %v3483 = vadd.f32 %v1054, %v3482
        %3484 = vmatprep.mubr.f32.mxu0 0.0
        %3485 = vmatmul.mubr.f32.gmra.mxu0 %v555
        %v3486 = vpop.f32.mrf.mxu0
        %v3487 = vadd.f32 %v1050, %v3486
        %v3488 = vpop.f32.mrf.mxu0
        %v3489 = vadd.f32 %v1054, %v3488
        %3490 = vmatprep.mubr.f32.mxu0 0.0
        %3491 = vmatmul.mubr.f32.gmra.mxu0 %v556
        %v3492 = vpop.f32.mrf.mxu0
        %v3493 = vadd.f32 %v1050, %v3492
        %v3494 = vpop.f32.mrf.mxu0
        %v3495 = vadd.f32 %v1054, %v3494
        %3496 = vmatprep.mubr.f32.mxu0 0.0
        %3497 = vmatmul.mubr.f32.gmra.mxu0 %v557
        %v3498 = vpop.f32.mrf.mxu0
        %v3499 = vadd.f32 %v1050, %v3498
        %v3500 = vpop.f32.mrf.mxu0
        %v3501 = vadd.f32 %v1054, %v3500
        %3502 = vmatprep.mubr.f32.mxu0 0.0
        %3503 = vmatmul.mubr.f32.gmra.mxu0 %v558
        %v3504 = vpop.f32.mrf.mxu0
        %v3505 = vadd.f32 %v1050, %v3504
        %v3506 = vpop.f32.mrf.mxu0
        %v3507 = vadd.f32 %v1054, %v3506
        %3508 = vmatprep.mubr.f32.mxu0 0.0
        %3509 = vmatmul.mubr.f32.gmra.mxu0 %v559
        %v3510 = vpop.f32.mrf.mxu0
        %v3511 = vadd.f32 %v1050, %v3510
        %v3512 = vpop.f32.mrf.mxu0
        %v3513 = vadd.f32 %v1054, %v3512
        %3514 = vmatprep.mubr.f32.mxu0 0.0
        %3515 = vmatmul.mubr.f32.gmra.mxu0 %v560
        %v3516 = vpop.f32.mrf.mxu0
        %v3517 = vadd.f32 %v1050, %v3516
        %v3518 = vpop.f32.mrf.mxu0
        %v3519 = vadd.f32 %v1054, %v3518
        %3520 = vmatprep.mubr.f32.mxu0 0.0
        %3521 = vmatmul.mubr.f32.gmra.mxu0 %v561
        %v3522 = vpop.f32.mrf.mxu0
        %v3523 = vadd.f32 %v1050, %v3522
        %v3524 = vpop.f32.mrf.mxu0
        %v3525 = vadd.f32 %v1054, %v3524
        %3526 = vmatprep.mubr.f32.mxu0 0.0
        %3527 = vmatmul.mubr.f32.gmra.mxu0 %v562
        %v3528 = vpop.f32.mrf.mxu0
        %v3529 = vadd.f32 %v1050, %v3528
        %v3530 = vpop.f32.mrf.mxu0
        %v3531 = vadd.f32 %v1054, %v3530
        %3532 = vmatprep.mubr.f32.mxu0 0.0
        %3533 = vmatmul.mubr.f32.gmra.mxu0 %v563
        %v3534 = vpop.f32.mrf.mxu0
        %v3535 = vadd.f32 %v1050, %v3534
        %v3536 = vpop.f32.mrf.mxu0
        %v3537 = vadd.f32 %v1054, %v3536
        %3538 = vmatprep.mubr.f32.mxu0 0.0
        %3539 = vmatmul.mubr.f32.gmra.mxu0 %v564
        %v3540 = vpop.f32.mrf.mxu0
        %v3541 = vadd.f32 %v1050, %v3540
        %v3542 = vpop.f32.mrf.mxu0
        %v3543 = vadd.f32 %v1054, %v3542
        %3544 = vmatprep.mubr.f32.mxu0 0.0
        %3545 = vmatmul.mubr.f32.gmra.mxu0 %v565
        %v3546 = vpop.f32.mrf.mxu0
        %v3547 = vadd.f32 %v1050, %v3546
        %v3548 = vpop.f32.mrf.mxu0
        %v3549 = vadd.f32 %v1054, %v3548
        %3550 = vmatprep.mubr.f32.mxu0 0.0
        %3551 = vmatmul.mubr.f32.gmra.mxu0 %v566
        %v3552 = vpop.f32.mrf.mxu0
        %v3553 = vadd.f32 %v1050, %v3552
        %v3554 = vpop.f32.mrf.mxu0
        %v3555 = vadd.f32 %v1054, %v3554
        %3556 = vmatprep.mubr.f32.mxu0 0.0
        %3557 = vmatmul.mubr.f32.gmra.mxu0 %v567
        %v3558 = vpop.f32.mrf.mxu0
        %v3559 = vadd.f32 %v1050, %v3558
        %v3560 = vpop.f32.mrf.mxu0
        %v3561 = vadd.f32 %v1054, %v3560
        %3562 = vmatprep.mubr.f32.mxu0 0.0
        %3563 = vmatmul.mubr.f32.gmra.mxu0 %v568
        %v3564 = vpop.f32.mrf.mxu0
        %v3565 = vadd.f32 %v1050, %v3564
        %v3566 = vpop.f32.mrf.mxu0
        %v3567 = vadd.f32 %v1054, %v3566
        %3568 = vmatprep.mubr.f32.mxu0 0.0
        %3569 = vmatmul.mubr.f32.gmra.mxu0 %v569
        %v3570 = vpop.f32.mrf.mxu0
        %v3571 = vadd.f32 %v1050, %v3570
        %v3572 = vpop.f32.mrf.mxu0
        %v3573 = vadd.f32 %v1054, %v3572
        %3574 = vmatprep.mubr.f32.mxu0 0.0
        %3575 = vmatmul.mubr.f32.gmra.mxu0 %v570
        %v3576 = vpop.f32.mrf.mxu0
        %v3577 = vadd.f32 %v1050, %v3576
        %v3578 = vpop.f32.mrf.mxu0
        %v3579 = vadd.f32 %v1054, %v3578
        %3580 = vmatprep.mubr.f32.mxu0 0.0
        %3581 = vmatmul.mubr.f32.gmra.mxu0 %v571
        %v3582 = vpop.f32.mrf.mxu0
        %v3583 = vadd.f32 %v1050, %v3582
        %v3584 = vpop.f32.mrf.mxu0
        %v3585 = vadd.f32 %v1054, %v3584
        %3586 = vmatprep.mubr.f32.mxu0 0.0
        %3587 = vmatmul.mubr.f32.gmra.mxu0 %v572
        %v3588 = vpop.f32.mrf.mxu0
        %v3589 = vadd.f32 %v1050, %v3588
        %v3590 = vpop.f32.mrf.mxu0
        %v3591 = vadd.f32 %v1054, %v3590
        %3592 = vmatprep.mubr.f32.mxu0 0.0
        %3593 = vmatmul.mubr.f32.gmra.mxu0 %v573
        %v3594 = vpop.f32.mrf.mxu0
        %v3595 = vadd.f32 %v1050, %v3594
        %v3596 = vpop.f32.mrf.mxu0
        %v3597 = vadd.f32 %v1054, %v3596
        %3598 = vmatprep.mubr.f32.mxu0 0.0
        %3599 = vmatmul.mubr.f32.gmra.mxu0 %v574
        %v3600 = vpop.f32.mrf.mxu0
        %v3601 = vadd.f32 %v1050, %v3600
        %v3602 = vpop.f32.mrf.mxu0
        %v3603 = vadd.f32 %v1054, %v3602
        %3604 = vmatprep.mubr.f32.mxu0 0.0
        %3605 = vmatmul.mubr.f32.gmra.mxu0 %v575
        %v3606 = vpop.f32.mrf.mxu0
        %v3607 = vadd.f32 %v1050, %v3606
        %v3608 = vpop.f32.mrf.mxu0
        %v3609 = vadd.f32 %v1054, %v3608
        %3610 = vmatprep.mubr.f32.mxu0 0.0
        %3611 = vmatmul.mubr.f32.gmra.mxu0 %v576
        %v3612 = vpop.f32.mrf.mxu0
        %v3613 = vadd.f32 %v1050, %v3612
        %v3614 = vpop.f32.mrf.mxu0
        %v3615 = vadd.f32 %v1054, %v3614
        %3616 = vmatprep.mubr.f32.mxu0 0.0
        %3617 = vmatmul.mubr.f32.gmra.mxu0 %v577
        %v3618 = vpop.f32.mrf.mxu0
        %v3619 = vadd.f32 %v1050, %v3618
        %v3620 = vpop.f32.mrf.mxu0
        %v3621 = vadd.f32 %v1054, %v3620
        %3622 = vmatprep.mubr.f32.mxu0 0.0
        %3623 = vmatmul.mubr.f32.gmra.mxu0 %v578
        %v3624 = vpop.f32.mrf.mxu0
        %v3625 = vadd.f32 %v1050, %v3624
        %v3626 = vpop.f32.mrf.mxu0
        %v3627 = vadd.f32 %v1054, %v3626
        %3628 = vmatprep.mubr.f32.mxu0 0.0
        %3629 = vmatmul.mubr.f32.gmra.mxu0 %v579
        %v3630 = vpop.f32.mrf.mxu0
        %v3631 = vadd.f32 %v1050, %v3630
        %v3632 = vpop.f32.mrf.mxu0
        %v3633 = vadd.f32 %v1054, %v3632
        %3634 = vmatprep.mubr.f32.mxu0 0.0
        %3635 = vmatmul.mubr.f32.gmra.mxu0 %v580
        %v3636 = vpop.f32.mrf.mxu0
        %v3637 = vadd.f32 %v1050, %v3636
        %v3638 = vpop.f32.mrf.mxu0
        %v3639 = vadd.f32 %v1054, %v3638
        %3640 = vmatprep.mubr.f32.mxu0 0.0
        %3641 = vmatmul.mubr.f32.gmra.mxu0 %v581
        %v3642 = vpop.f32.mrf.mxu0
        %v3643 = vadd.f32 %v1050, %v3642
        %v3644 = vpop.f32.mrf.mxu0
        %v3645 = vadd.f32 %v1054, %v3644
        %3646 = vmatprep.mubr.f32.mxu0 0.0
        %3647 = vmatmul.mubr.f32.gmra.mxu0 %v582
        %v3648 = vpop.f32.mrf.mxu0
        %v3649 = vadd.f32 %v1050, %v3648
        %v3650 = vpop.f32.mrf.mxu0
        %v3651 = vadd.f32 %v1054, %v3650
        %3652 = vmatprep.mubr.f32.mxu0 0.0
        %3653 = vmatmul.mubr.f32.gmra.mxu0 %v583
        %v3654 = vpop.f32.mrf.mxu0
        %v3655 = vadd.f32 %v1050, %v3654
        %v3656 = vpop.f32.mrf.mxu0
        %v3657 = vadd.f32 %v1054, %v3656
        %3658 = vmatprep.mubr.f32.mxu0 0.0
        %3659 = vmatmul.mubr.f32.gmra.mxu0 %v584
        %v3660 = vpop.f32.mrf.mxu0
        %v3661 = vadd.f32 %v1050, %v3660
        %v3662 = vpop.f32.mrf.mxu0
        %v3663 = vadd.f32 %v1054, %v3662
        %3664 = vdwg.mxu0
        %3665 = vmatprep.subr.mxu0 %v966
        %3666 = vmatpush1.msra.mxu0 %v965
        %3667 = vmatprep.subr.mxu0 %v942
        %3668 = vmatpush1.msra.mxu0 %v941
        %3669 = vmatprep.subr.mxu0 %v918
        %3670 = vmatpush1.msra.mxu0 %v917
        %3671 = vmatprep.subr.mxu0 %v894
        %3672 = vmatpush1.msra.mxu0 %v893
        %3673 = vmatprep.subr.mxu0 %v870
        %3674 = vmatpush1.msra.mxu0 %v869
        %3675 = vmatprep.subr.mxu0 %v846
        %3676 = vmatpush1.msra.mxu0 %v845
        %3677 = vmatprep.subr.mxu0 %v822
        %3678 = vmatpush1.msra.mxu0 %v821
        %3679 = vmatprep.subr.mxu0 %v798
        %3680 = vmatpush1.msra.mxu0 %v797
        %3681 = vmatprep.subr.mxu0 %v774
        %3682 = vmatpush1.msra.mxu0 %v773
        %3683 = vmatprep.subr.mxu0 %v750
        %3684 = vmatpush1.msra.mxu0 %v749
        %3685 = vmatprep.subr.mxu0 %v726
        %3686 = vmatpush1.msra.mxu0 %v725
        %3687 = vmatprep.subr.mxu0 %v702
        %3688 = vmatpush1.msra.mxu0 %v701
        %3689 = vmatprep.subr.mxu0 %v678
        %3690 = vmatpush1.msra.mxu0 %v677
        %3691 = vmatprep.subr.mxu0 %v654
        %3692 = vmatpush1.msra.mxu0 %v653
        %3693 = vmatprep.subr.mxu0 %v630
        %3694 = vmatpush1.msra.mxu0 %v629
        %3695 = vmatprep.subr.mxu0 %v606
        %3696 = vmatpush1.msra.mxu0 %v605
        %3697 = vmatprep.subr.mxu0 0.0
        %3698 = vmatpush2.msra.mxu0 0.0
        %3699 = vmatprep.subr.mxu0 0.0
        %3700 = vmatpush2.msra.mxu0 0.0
        %3701 = vmatprep.subr.mxu0 0.0
        %3702 = vmatpush2.msra.mxu0 0.0
        %3703 = vmatprep.subr.mxu0 0.0
        %3704 = vmatpush2.msra.mxu0 0.0
        %3705 = vmatprep.subr.mxu0 0.0
        %3706 = vmatpush2.msra.mxu0 0.0
        %3707 = vmatprep.subr.mxu0 0.0
        %3708 = vmatpush2.msra.mxu0 0.0
        %3709 = vmatprep.subr.mxu0 0.0
        %3710 = vmatpush2.msra.mxu0 0.0
        %3711 = vmatprep.subr.mxu0 0.0
        %3712 = vmatpush2.msra.mxu0 0.0
        %3713 = vmatprep.subr.mxu0 0.0
        %3714 = vmatpush2.msra.mxu0 0.0
        %3715 = vmatprep.subr.mxu0 0.0
        %3716 = vmatpush2.msra.mxu0 0.0
        %3717 = vmatprep.subr.mxu0 0.0
        %3718 = vmatpush2.msra.mxu0 0.0
        %3719 = vmatprep.subr.mxu0 0.0
        %3720 = vmatpush2.msra.mxu0 0.0
        %3721 = vmatprep.subr.mxu0 0.0
        %3722 = vmatpush2.msra.mxu0 0.0
        %3723 = vmatprep.subr.mxu0 0.0
        %3724 = vmatpush2.msra.mxu0 0.0
        %3725 = vmatprep.subr.mxu0 0.0
        %3726 = vmatpush2.msra.mxu0 0.0
        %3727 = vmatprep.subr.mxu0 0.0
        %3728 = vmatpush2.msra.mxu0 0.0
        %3729 = vmatprep.mubr.f32.mxu0 0.0
        %3730 = vmatmul.mubr.f32.gmra.mxu0 %v553
        %v3731 = vpop.f32.mrf.mxu0
        %v3732 = vadd.f32 %v1058, %v3731
        %v3733 = vpop.f32.mrf.mxu0
        %v3734 = vadd.f32 %v1062, %v3733
        %3735 = vmatprep.mubr.f32.mxu0 0.0
        %3736 = vmatmul.mubr.f32.gmra.mxu0 %v554
        %v3737 = vpop.f32.mrf.mxu0
        %v3738 = vadd.f32 %v1058, %v3737
        %v3739 = vpop.f32.mrf.mxu0
        %v3740 = vadd.f32 %v1062, %v3739
        %3741 = vmatprep.mubr.f32.mxu0 0.0
        %3742 = vmatmul.mubr.f32.gmra.mxu0 %v555
        %v3743 = vpop.f32.mrf.mxu0
        %v3744 = vadd.f32 %v1058, %v3743
        %v3745 = vpop.f32.mrf.mxu0
        %v3746 = vadd.f32 %v1062, %v3745
        %3747 = vmatprep.mubr.f32.mxu0 0.0
        %3748 = vmatmul.mubr.f32.gmra.mxu0 %v556
        %v3749 = vpop.f32.mrf.mxu0
        %v3750 = vadd.f32 %v1058, %v3749
        %v3751 = vpop.f32.mrf.mxu0
        %v3752 = vadd.f32 %v1062, %v3751
        %3753 = vmatprep.mubr.f32.mxu0 0.0
        %3754 = vmatmul.mubr.f32.gmra.mxu0 %v557
        %v3755 = vpop.f32.mrf.mxu0
        %v3756 = vadd.f32 %v1058, %v3755
        %v3757 = vpop.f32.mrf.mxu0
        %v3758 = vadd.f32 %v1062, %v3757
        %3759 = vmatprep.mubr.f32.mxu0 0.0
        %3760 = vmatmul.mubr.f32.gmra.mxu0 %v558
        %v3761 = vpop.f32.mrf.mxu0
        %v3762 = vadd.f32 %v1058, %v3761
        %v3763 = vpop.f32.mrf.mxu0
        %v3764 = vadd.f32 %v1062, %v3763
        %3765 = vmatprep.mubr.f32.mxu0 0.0
        %3766 = vmatmul.mubr.f32.gmra.mxu0 %v559
        %v3767 = vpop.f32.mrf.mxu0
        %v3768 = vadd.f32 %v1058, %v3767
        %v3769 = vpop.f32.mrf.mxu0
        %v3770 = vadd.f32 %v1062, %v3769
        %3771 = vmatprep.mubr.f32.mxu0 0.0
        %3772 = vmatmul.mubr.f32.gmra.mxu0 %v560
        %v3773 = vpop.f32.mrf.mxu0
        %v3774 = vadd.f32 %v1058, %v3773
        %v3775 = vpop.f32.mrf.mxu0
        %v3776 = vadd.f32 %v1062, %v3775
        %3777 = vmatprep.mubr.f32.mxu0 0.0
        %3778 = vmatmul.mubr.f32.gmra.mxu0 %v561
        %v3779 = vpop.f32.mrf.mxu0
        %v3780 = vadd.f32 %v1058, %v3779
        %v3781 = vpop.f32.mrf.mxu0
        %v3782 = vadd.f32 %v1062, %v3781
        %3783 = vmatprep.mubr.f32.mxu0 0.0
        %3784 = vmatmul.mubr.f32.gmra.mxu0 %v562
        %v3785 = vpop.f32.mrf.mxu0
        %v3786 = vadd.f32 %v1058, %v3785
        %v3787 = vpop.f32.mrf.mxu0
        %v3788 = vadd.f32 %v1062, %v3787
        %3789 = vmatprep.mubr.f32.mxu0 0.0
        %3790 = vmatmul.mubr.f32.gmra.mxu0 %v563
        %v3791 = vpop.f32.mrf.mxu0
        %v3792 = vadd.f32 %v1058, %v3791
        %v3793 = vpop.f32.mrf.mxu0
        %v3794 = vadd.f32 %v1062, %v3793
        %3795 = vmatprep.mubr.f32.mxu0 0.0
        %3796 = vmatmul.mubr.f32.gmra.mxu0 %v564
        %v3797 = vpop.f32.mrf.mxu0
        %v3798 = vadd.f32 %v1058, %v3797
        %v3799 = vpop.f32.mrf.mxu0
        %v3800 = vadd.f32 %v1062, %v3799
        %3801 = vmatprep.mubr.f32.mxu0 0.0
        %3802 = vmatmul.mubr.f32.gmra.mxu0 %v565
        %v3803 = vpop.f32.mrf.mxu0
        %v3804 = vadd.f32 %v1058, %v3803
        %v3805 = vpop.f32.mrf.mxu0
        %v3806 = vadd.f32 %v1062, %v3805
        %3807 = vmatprep.mubr.f32.mxu0 0.0
        %3808 = vmatmul.mubr.f32.gmra.mxu0 %v566
        %v3809 = vpop.f32.mrf.mxu0
        %v3810 = vadd.f32 %v1058, %v3809
        %v3811 = vpop.f32.mrf.mxu0
        %v3812 = vadd.f32 %v1062, %v3811
        %3813 = vmatprep.mubr.f32.mxu0 0.0
        %3814 = vmatmul.mubr.f32.gmra.mxu0 %v567
        %v3815 = vpop.f32.mrf.mxu0
        %v3816 = vadd.f32 %v1058, %v3815
        %v3817 = vpop.f32.mrf.mxu0
        %v3818 = vadd.f32 %v1062, %v3817
        %3819 = vmatprep.mubr.f32.mxu0 0.0
        %3820 = vmatmul.mubr.f32.gmra.mxu0 %v568
        %v3821 = vpop.f32.mrf.mxu0
        %v3822 = vadd.f32 %v1058, %v3821
        %v3823 = vpop.f32.mrf.mxu0
        %v3824 = vadd.f32 %v1062, %v3823
        %3825 = vmatprep.mubr.f32.mxu0 0.0
        %3826 = vmatmul.mubr.f32.gmra.mxu0 %v569
        %v3827 = vpop.f32.mrf.mxu0
        %v3828 = vadd.f32 %v1058, %v3827
        %v3829 = vpop.f32.mrf.mxu0
        %v3830 = vadd.f32 %v1062, %v3829
        %3831 = vmatprep.mubr.f32.mxu0 0.0
        %3832 = vmatmul.mubr.f32.gmra.mxu0 %v570
        %v3833 = vpop.f32.mrf.mxu0
        %v3834 = vadd.f32 %v1058, %v3833
        %v3835 = vpop.f32.mrf.mxu0
        %v3836 = vadd.f32 %v1062, %v3835
        %3837 = vmatprep.mubr.f32.mxu0 0.0
        %3838 = vmatmul.mubr.f32.gmra.mxu0 %v571
        %v3839 = vpop.f32.mrf.mxu0
        %v3840 = vadd.f32 %v1058, %v3839
        %v3841 = vpop.f32.mrf.mxu0
        %v3842 = vadd.f32 %v1062, %v3841
        %3843 = vmatprep.mubr.f32.mxu0 0.0
        %3844 = vmatmul.mubr.f32.gmra.mxu0 %v572
        %v3845 = vpop.f32.mrf.mxu0
        %v3846 = vadd.f32 %v1058, %v3845
        %v3847 = vpop.f32.mrf.mxu0
        %v3848 = vadd.f32 %v1062, %v3847
        %3849 = vmatprep.mubr.f32.mxu0 0.0
        %3850 = vmatmul.mubr.f32.gmra.mxu0 %v573
        %v3851 = vpop.f32.mrf.mxu0
        %v3852 = vadd.f32 %v1058, %v3851
        %v3853 = vpop.f32.mrf.mxu0
        %v3854 = vadd.f32 %v1062, %v3853
        %3855 = vmatprep.mubr.f32.mxu0 0.0
        %3856 = vmatmul.mubr.f32.gmra.mxu0 %v574
        %v3857 = vpop.f32.mrf.mxu0
        %v3858 = vadd.f32 %v1058, %v3857
        %v3859 = vpop.f32.mrf.mxu0
        %v3860 = vadd.f32 %v1062, %v3859
        %3861 = vmatprep.mubr.f32.mxu0 0.0
        %3862 = vmatmul.mubr.f32.gmra.mxu0 %v575
        %v3863 = vpop.f32.mrf.mxu0
        %v3864 = vadd.f32 %v1058, %v3863
        %v3865 = vpop.f32.mrf.mxu0
        %v3866 = vadd.f32 %v1062, %v3865
        %3867 = vmatprep.mubr.f32.mxu0 0.0
        %3868 = vmatmul.mubr.f32.gmra.mxu0 %v576
        %v3869 = vpop.f32.mrf.mxu0
        %v3870 = vadd.f32 %v1058, %v3869
        %v3871 = vpop.f32.mrf.mxu0
        %v3872 = vadd.f32 %v1062, %v3871
        %3873 = vmatprep.mubr.f32.mxu0 0.0
        %3874 = vmatmul.mubr.f32.gmra.mxu0 %v577
        %v3875 = vpop.f32.mrf.mxu0
        %v3876 = vadd.f32 %v1058, %v3875
        %v3877 = vpop.f32.mrf.mxu0
        %v3878 = vadd.f32 %v1062, %v3877
        %3879 = vmatprep.mubr.f32.mxu0 0.0
        %3880 = vmatmul.mubr.f32.gmra.mxu0 %v578
        %v3881 = vpop.f32.mrf.mxu0
        %v3882 = vadd.f32 %v1058, %v3881
        %v3883 = vpop.f32.mrf.mxu0
        %v3884 = vadd.f32 %v1062, %v3883
        %3885 = vmatprep.mubr.f32.mxu0 0.0
        %3886 = vmatmul.mubr.f32.gmra.mxu0 %v579
        %v3887 = vpop.f32.mrf.mxu0
        %v3888 = vadd.f32 %v1058, %v3887
        %v3889 = vpop.f32.mrf.mxu0
        %v3890 = vadd.f32 %v1062, %v3889
        %3891 = vmatprep.mubr.f32.mxu0 0.0
        %3892 = vmatmul.mubr.f32.gmra.mxu0 %v580
        %v3893 = vpop.f32.mrf.mxu0
        %v3894 = vadd.f32 %v1058, %v3893
        %v3895 = vpop.f32.mrf.mxu0
        %v3896 = vadd.f32 %v1062, %v3895
        %3897 = vmatprep.mubr.f32.mxu0 0.0
        %3898 = vmatmul.mubr.f32.gmra.mxu0 %v581
        %v3899 = vpop.f32.mrf.mxu0
        %v3900 = vadd.f32 %v1058, %v3899
        %v3901 = vpop.f32.mrf.mxu0
        %v3902 = vadd.f32 %v1062, %v3901
        %3903 = vmatprep.mubr.f32.mxu0 0.0
        %3904 = vmatmul.mubr.f32.gmra.mxu0 %v582
        %v3905 = vpop.f32.mrf.mxu0
        %v3906 = vadd.f32 %v1058, %v3905
        %v3907 = vpop.f32.mrf.mxu0
        %v3908 = vadd.f32 %v1062, %v3907
        %3909 = vmatprep.mubr.f32.mxu0 0.0
        %3910 = vmatmul.mubr.f32.gmra.mxu0 %v583
        %v3911 = vpop.f32.mrf.mxu0
        %v3912 = vadd.f32 %v1058, %v3911
        %v3913 = vpop.f32.mrf.mxu0
        %v3914 = vadd.f32 %v1062, %v3913
        %3915 = vmatprep.mubr.f32.mxu0 0.0
        %3916 = vmatmul.mubr.f32.gmra.mxu0 %v584
        %v3917 = vpop.f32.mrf.mxu0
        %v3918 = vadd.f32 %v1058, %v3917
        %v3919 = vpop.f32.mrf.mxu0
        %v3920 = vadd.f32 %v1062, %v3919
        %3921 = vdwg.mxu0
        %3922 = vmatprep.subr.mxu0 %v968
        %3923 = vmatpush1.msra.mxu0 %v967
        %3924 = vmatprep.subr.mxu0 %v944
        %3925 = vmatpush1.msra.mxu0 %v943
        %3926 = vmatprep.subr.mxu0 %v920
        %3927 = vmatpush1.msra.mxu0 %v919
        %3928 = vmatprep.subr.mxu0 %v896
        %3929 = vmatpush1.msra.mxu0 %v895
        %3930 = vmatprep.subr.mxu0 %v872
        %3931 = vmatpush1.msra.mxu0 %v871
        %3932 = vmatprep.subr.mxu0 %v848
        %3933 = vmatpush1.msra.mxu0 %v847
        %3934 = vmatprep.subr.mxu0 %v824
        %3935 = vmatpush1.msra.mxu0 %v823
        %3936 = vmatprep.subr.mxu0 %v800
        %3937 = vmatpush1.msra.mxu0 %v799
        %3938 = vmatprep.subr.mxu0 %v776
        %3939 = vmatpush1.msra.mxu0 %v775
        %3940 = vmatprep.subr.mxu0 %v752
        %3941 = vmatpush1.msra.mxu0 %v751
        %3942 = vmatprep.subr.mxu0 %v728
        %3943 = vmatpush1.msra.mxu0 %v727
        %3944 = vmatprep.subr.mxu0 %v704
        %3945 = vmatpush1.msra.mxu0 %v703
        %3946 = vmatprep.subr.mxu0 %v680
        %3947 = vmatpush1.msra.mxu0 %v679
        %3948 = vmatprep.subr.mxu0 %v656
        %3949 = vmatpush1.msra.mxu0 %v655
        %3950 = vmatprep.subr.mxu0 %v632
        %3951 = vmatpush1.msra.mxu0 %v631
        %3952 = vmatprep.subr.mxu0 %v608
        %3953 = vmatpush1.msra.mxu0 %v607
        %3954 = vmatprep.subr.mxu0 0.0
        %3955 = vmatpush2.msra.mxu0 0.0
        %3956 = vmatprep.subr.mxu0 0.0
        %3957 = vmatpush2.msra.mxu0 0.0
        %3958 = vmatprep.subr.mxu0 0.0
        %3959 = vmatpush2.msra.mxu0 0.0
        %3960 = vmatprep.subr.mxu0 0.0
        %3961 = vmatpush2.msra.mxu0 0.0
        %3962 = vmatprep.subr.mxu0 0.0
        %3963 = vmatpush2.msra.mxu0 0.0
        %3964 = vmatprep.subr.mxu0 0.0
        %3965 = vmatpush2.msra.mxu0 0.0
        %3966 = vmatprep.subr.mxu0 0.0
        %3967 = vmatpush2.msra.mxu0 0.0
        %3968 = vmatprep.subr.mxu0 0.0
        %3969 = vmatpush2.msra.mxu0 0.0
        %3970 = vmatprep.subr.mxu0 0.0
        %3971 = vmatpush2.msra.mxu0 0.0
        %3972 = vmatprep.subr.mxu0 0.0
        %3973 = vmatpush2.msra.mxu0 0.0
        %3974 = vmatprep.subr.mxu0 0.0
        %3975 = vmatpush2.msra.mxu0 0.0
        %3976 = vmatprep.subr.mxu0 0.0
        %3977 = vmatpush2.msra.mxu0 0.0
        %3978 = vmatprep.subr.mxu0 0.0
        %3979 = vmatpush2.msra.mxu0 0.0
        %3980 = vmatprep.subr.mxu0 0.0
        %3981 = vmatpush2.msra.mxu0 0.0
        %3982 = vmatprep.subr.mxu0 0.0
        %3983 = vmatpush2.msra.mxu0 0.0
        %3984 = vmatprep.subr.mxu0 0.0
        %3985 = vmatpush2.msra.mxu0 0.0
        %3986 = vmatprep.mubr.f32.mxu0 0.0
        %3987 = vmatmul.mubr.f32.gmra.mxu0 %v553
        %v3988 = vpop.f32.mrf.mxu0
        %v3989 = vadd.f32 %v1066, %v3988
        %v3990 = vpop.f32.mrf.mxu0
        %v3991 = vadd.f32 %v1070, %v3990
        %3992 = vmatprep.mubr.f32.mxu0 0.0
        %3993 = vmatmul.mubr.f32.gmra.mxu0 %v554
        %v3994 = vpop.f32.mrf.mxu0
        %v3995 = vadd.f32 %v1066, %v3994
        %v3996 = vpop.f32.mrf.mxu0
        %v3997 = vadd.f32 %v1070, %v3996
        %3998 = vmatprep.mubr.f32.mxu0 0.0
        %3999 = vmatmul.mubr.f32.gmra.mxu0 %v555
        %v4000 = vpop.f32.mrf.mxu0
        %v4001 = vadd.f32 %v1066, %v4000
        %v4002 = vpop.f32.mrf.mxu0
        %v4003 = vadd.f32 %v1070, %v4002
        %4004 = vmatprep.mubr.f32.mxu0 0.0
        %4005 = vmatmul.mubr.f32.gmra.mxu0 %v556
        %v4006 = vpop.f32.mrf.mxu0
        %v4007 = vadd.f32 %v1066, %v4006
        %v4008 = vpop.f32.mrf.mxu0
        %v4009 = vadd.f32 %v1070, %v4008
        %4010 = vmatprep.mubr.f32.mxu0 0.0
        %4011 = vmatmul.mubr.f32.gmra.mxu0 %v557
        %v4012 = vpop.f32.mrf.mxu0
        %v4013 = vadd.f32 %v1066, %v4012
        %v4014 = vpop.f32.mrf.mxu0
        %v4015 = vadd.f32 %v1070, %v4014
        %4016 = vmatprep.mubr.f32.mxu0 0.0
        %4017 = vmatmul.mubr.f32.gmra.mxu0 %v558
        %v4018 = vpop.f32.mrf.mxu0
        %v4019 = vadd.f32 %v1066, %v4018
        %v4020 = vpop.f32.mrf.mxu0
        %v4021 = vadd.f32 %v1070, %v4020
        %4022 = vmatprep.mubr.f32.mxu0 0.0
        %4023 = vmatmul.mubr.f32.gmra.mxu0 %v559
        %v4024 = vpop.f32.mrf.mxu0
        %v4025 = vadd.f32 %v1066, %v4024
        %v4026 = vpop.f32.mrf.mxu0
        %v4027 = vadd.f32 %v1070, %v4026
        %4028 = vmatprep.mubr.f32.mxu0 0.0
        %4029 = vmatmul.mubr.f32.gmra.mxu0 %v560
        %v4030 = vpop.f32.mrf.mxu0
        %v4031 = vadd.f32 %v1066, %v4030
        %v4032 = vpop.f32.mrf.mxu0
        %v4033 = vadd.f32 %v1070, %v4032
        %4034 = vmatprep.mubr.f32.mxu0 0.0
        %4035 = vmatmul.mubr.f32.gmra.mxu0 %v561
        %v4036 = vpop.f32.mrf.mxu0
        %v4037 = vadd.f32 %v1066, %v4036
        %v4038 = vpop.f32.mrf.mxu0
        %v4039 = vadd.f32 %v1070, %v4038
        %4040 = vmatprep.mubr.f32.mxu0 0.0
        %4041 = vmatmul.mubr.f32.gmra.mxu0 %v562
        %v4042 = vpop.f32.mrf.mxu0
        %v4043 = vadd.f32 %v1066, %v4042
        %v4044 = vpop.f32.mrf.mxu0
        %v4045 = vadd.f32 %v1070, %v4044
        %4046 = vmatprep.mubr.f32.mxu0 0.0
        %4047 = vmatmul.mubr.f32.gmra.mxu0 %v563
        %v4048 = vpop.f32.mrf.mxu0
        %v4049 = vadd.f32 %v1066, %v4048
        %v4050 = vpop.f32.mrf.mxu0
        %v4051 = vadd.f32 %v1070, %v4050
        %4052 = vmatprep.mubr.f32.mxu0 0.0
        %4053 = vmatmul.mubr.f32.gmra.mxu0 %v564
        %v4054 = vpop.f32.mrf.mxu0
        %v4055 = vadd.f32 %v1066, %v4054
        %v4056 = vpop.f32.mrf.mxu0
        %v4057 = vadd.f32 %v1070, %v4056
        %4058 = vmatprep.mubr.f32.mxu0 0.0
        %4059 = vmatmul.mubr.f32.gmra.mxu0 %v565
        %v4060 = vpop.f32.mrf.mxu0
        %v4061 = vadd.f32 %v1066, %v4060
        %v4062 = vpop.f32.mrf.mxu0
        %v4063 = vadd.f32 %v1070, %v4062
        %4064 = vmatprep.mubr.f32.mxu0 0.0
        %4065 = vmatmul.mubr.f32.gmra.mxu0 %v566
        %v4066 = vpop.f32.mrf.mxu0
        %v4067 = vadd.f32 %v1066, %v4066
        %v4068 = vpop.f32.mrf.mxu0
        %v4069 = vadd.f32 %v1070, %v4068
        %4070 = vmatprep.mubr.f32.mxu0 0.0
        %4071 = vmatmul.mubr.f32.gmra.mxu0 %v567
        %v4072 = vpop.f32.mrf.mxu0
        %v4073 = vadd.f32 %v1066, %v4072
        %v4074 = vpop.f32.mrf.mxu0
        %v4075 = vadd.f32 %v1070, %v4074
        %4076 = vmatprep.mubr.f32.mxu0 0.0
        %4077 = vmatmul.mubr.f32.gmra.mxu0 %v568
        %v4078 = vpop.f32.mrf.mxu0
        %v4079 = vadd.f32 %v1066, %v4078
        %v4080 = vpop.f32.mrf.mxu0
        %v4081 = vadd.f32 %v1070, %v4080
        %4082 = vmatprep.mubr.f32.mxu0 0.0
        %4083 = vmatmul.mubr.f32.gmra.mxu0 %v569
        %v4084 = vpop.f32.mrf.mxu0
        %v4085 = vadd.f32 %v1066, %v4084
        %v4086 = vpop.f32.mrf.mxu0
        %v4087 = vadd.f32 %v1070, %v4086
        %4088 = vmatprep.mubr.f32.mxu0 0.0
        %4089 = vmatmul.mubr.f32.gmra.mxu0 %v570
        %v4090 = vpop.f32.mrf.mxu0
        %v4091 = vadd.f32 %v1066, %v4090
        %v4092 = vpop.f32.mrf.mxu0
        %v4093 = vadd.f32 %v1070, %v4092
        %4094 = vmatprep.mubr.f32.mxu0 0.0
        %4095 = vmatmul.mubr.f32.gmra.mxu0 %v571
        %v4096 = vpop.f32.mrf.mxu0
        %v4097 = vadd.f32 %v1066, %v4096
        %v4098 = vpop.f32.mrf.mxu0
        %v4099 = vadd.f32 %v1070, %v4098
        %4100 = vmatprep.mubr.f32.mxu0 0.0
        %4101 = vmatmul.mubr.f32.gmra.mxu0 %v572
        %v4102 = vpop.f32.mrf.mxu0
        %v4103 = vadd.f32 %v1066, %v4102
        %v4104 = vpop.f32.mrf.mxu0
        %v4105 = vadd.f32 %v1070, %v4104
        %4106 = vmatprep.mubr.f32.mxu0 0.0
        %4107 = vmatmul.mubr.f32.gmra.mxu0 %v573
        %v4108 = vpop.f32.mrf.mxu0
        %v4109 = vadd.f32 %v1066, %v4108
        %v4110 = vpop.f32.mrf.mxu0
        %v4111 = vadd.f32 %v1070, %v4110
        %4112 = vmatprep.mubr.f32.mxu0 0.0
        %4113 = vmatmul.mubr.f32.gmra.mxu0 %v574
        %v4114 = vpop.f32.mrf.mxu0
        %v4115 = vadd.f32 %v1066, %v4114
        %v4116 = vpop.f32.mrf.mxu0
        %v4117 = vadd.f32 %v1070, %v4116
        %4118 = vmatprep.mubr.f32.mxu0 0.0
        %4119 = vmatmul.mubr.f32.gmra.mxu0 %v575
        %v4120 = vpop.f32.mrf.mxu0
        %v4121 = vadd.f32 %v1066, %v4120
        %v4122 = vpop.f32.mrf.mxu0
        %v4123 = vadd.f32 %v1070, %v4122
        %4124 = vmatprep.mubr.f32.mxu0 0.0
        %4125 = vmatmul.mubr.f32.gmra.mxu0 %v576
        %v4126 = vpop.f32.mrf.mxu0
        %v4127 = vadd.f32 %v1066, %v4126
        %v4128 = vpop.f32.mrf.mxu0
        %v4129 = vadd.f32 %v1070, %v4128
        %4130 = vmatprep.mubr.f32.mxu0 0.0
        %4131 = vmatmul.mubr.f32.gmra.mxu0 %v577
        %v4132 = vpop.f32.mrf.mxu0
        %v4133 = vadd.f32 %v1066, %v4132
        %v4134 = vpop.f32.mrf.mxu0
        %v4135 = vadd.f32 %v1070, %v4134
        %4136 = vmatprep.mubr.f32.mxu0 0.0
        %4137 = vmatmul.mubr.f32.gmra.mxu0 %v578
        %v4138 = vpop.f32.mrf.mxu0
        %v4139 = vadd.f32 %v1066, %v4138
        %v4140 = vpop.f32.mrf.mxu0
        %v4141 = vadd.f32 %v1070, %v4140
        %4142 = vmatprep.mubr.f32.mxu0 0.0
        %4143 = vmatmul.mubr.f32.gmra.mxu0 %v579
        %v4144 = vpop.f32.mrf.mxu0
        %v4145 = vadd.f32 %v1066, %v4144
        %v4146 = vpop.f32.mrf.mxu0
        %v4147 = vadd.f32 %v1070, %v4146
        %4148 = vmatprep.mubr.f32.mxu0 0.0
        %4149 = vmatmul.mubr.f32.gmra.mxu0 %v580
        %v4150 = vpop.f32.mrf.mxu0
        %v4151 = vadd.f32 %v1066, %v4150
        %v4152 = vpop.f32.mrf.mxu0
        %v4153 = vadd.f32 %v1070, %v4152
        %4154 = vmatprep.mubr.f32.mxu0 0.0
        %4155 = vmatmul.mubr.f32.gmra.mxu0 %v581
        %v4156 = vpop.f32.mrf.mxu0
        %v4157 = vadd.f32 %v1066, %v4156
        %v4158 = vpop.f32.mrf.mxu0
        %v4159 = vadd.f32 %v1070, %v4158
        %4160 = vmatprep.mubr.f32.mxu0 0.0
        %4161 = vmatmul.mubr.f32.gmra.mxu0 %v582
        %v4162 = vpop.f32.mrf.mxu0
        %v4163 = vadd.f32 %v1066, %v4162
        %v4164 = vpop.f32.mrf.mxu0
        %v4165 = vadd.f32 %v1070, %v4164
        %4166 = vmatprep.mubr.f32.mxu0 0.0
        %4167 = vmatmul.mubr.f32.gmra.mxu0 %v583
        %v4168 = vpop.f32.mrf.mxu0
        %v4169 = vadd.f32 %v1066, %v4168
        %v4170 = vpop.f32.mrf.mxu0
        %v4171 = vadd.f32 %v1070, %v4170
        %4172 = vmatprep.mubr.f32.mxu0 0.0
        %4173 = vmatmul.mubr.f32.gmra.mxu0 %v584
        %v4174 = vpop.f32.mrf.mxu0
        %v4175 = vadd.f32 %v1066, %v4174
        %v4176 = vpop.f32.mrf.mxu0
        %v4177 = vadd.f32 %v1070, %v4176
        %4178 = vdwg.mxu0
        %v4179 = vmax.f32 %v1162, 0.0
        %v4180 = vmax.f32 %v1164, 0.0
        %v4181 = vmax.f32 %v1419, 0.0
        %v4182 = vmax.f32 %v1421, 0.0
        %v4183 = vmax.f32 %v1676, 0.0
        %v4184 = vmax.f32 %v1678, 0.0
        %v4185 = vmax.f32 %v1933, 0.0
        %v4186 = vmax.f32 %v1935, 0.0
        %v4187 = vmax.f32 %v2190, 0.0
        %v4188 = vmax.f32 %v2192, 0.0
        %v4189 = vmax.f32 %v2447, 0.0
        %v4190 = vmax.f32 %v2449, 0.0
        %v4191 = vmax.f32 %v2704, 0.0
        %v4192 = vmax.f32 %v2706, 0.0
        %v4193 = vmax.f32 %v2961, 0.0
        %v4194 = vmax.f32 %v2963, 0.0
        %v4195 = vmax.f32 %v3218, 0.0
        %v4196 = vmax.f32 %v3220, 0.0
        %v4197 = vmax.f32 %v3475, 0.0
        %v4198 = vmax.f32 %v3477, 0.0
        %v4199 = vmax.f32 %v3732, 0.0
        %v4200 = vmax.f32 %v3734, 0.0
        %v4201 = vmax.f32 %v3989, 0.0
        %v4202 = vmax.f32 %v3991, 0.0
        %v4203 = vmax.f32 %v1168, 0.0
        %v4204 = vmax.f32 %v1170, 0.0
        %v4205 = vmax.f32 %v1425, 0.0
        %v4206 = vmax.f32 %v1427, 0.0
        %v4207 = vmax.f32 %v1682, 0.0
        %v4208 = vmax.f32 %v1684, 0.0
        %v4209 = vmax.f32 %v1939, 0.0
        %v4210 = vmax.f32 %v1941, 0.0
        %v4211 = vmax.f32 %v2196, 0.0
        %v4212 = vmax.f32 %v2198, 0.0
        %v4213 = vmax.f32 %v2453, 0.0
        %v4214 = vmax.f32 %v2455, 0.0
        %v4215 = vmax.f32 %v2710, 0.0
        %v4216 = vmax.f32 %v2712, 0.0
        %v4217 = vmax.f32 %v2967, 0.0
        %v4218 = vmax.f32 %v2969, 0.0
        %v4219 = vmax.f32 %v3224, 0.0
        %v4220 = vmax.f32 %v3226, 0.0
        %v4221 = vmax.f32 %v3481, 0.0
        %v4222 = vmax.f32 %v3483, 0.0
        %v4223 = vmax.f32 %v3738, 0.0
        %v4224 = vmax.f32 %v3740, 0.0
        %v4225 = vmax.f32 %v3995, 0.0
        %v4226 = vmax.f32 %v3997, 0.0
        %v4227 = vmax.f32 %v1174, 0.0
        %v4228 = vmax.f32 %v1176, 0.0
        %v4229 = vmax.f32 %v1431, 0.0
        %v4230 = vmax.f32 %v1433, 0.0
        %v4231 = vmax.f32 %v1688, 0.0
        %v4232 = vmax.f32 %v1690, 0.0
        %v4233 = vmax.f32 %v1945, 0.0
        %v4234 = vmax.f32 %v1947, 0.0
        %v4235 = vmax.f32 %v2202, 0.0
        %v4236 = vmax.f32 %v2204, 0.0
        %v4237 = vmax.f32 %v2459, 0.0
        %v4238 = vmax.f32 %v2461, 0.0
        %v4239 = vmax.f32 %v2716, 0.0
        %v4240 = vmax.f32 %v2718, 0.0
        %v4241 = vmax.f32 %v2973, 0.0
        %v4242 = vmax.f32 %v2975, 0.0
        %v4243 = vmax.f32 %v3230, 0.0
        %v4244 = vmax.f32 %v3232, 0.0
        %v4245 = vmax.f32 %v3487, 0.0
        %v4246 = vmax.f32 %v3489, 0.0
        %v4247 = vmax.f32 %v3744, 0.0
        %v4248 = vmax.f32 %v3746, 0.0
        %v4249 = vmax.f32 %v4001, 0.0
        %v4250 = vmax.f32 %v4003, 0.0
        %v4251 = vmax.f32 %v1180, 0.0
        %v4252 = vmax.f32 %v1182, 0.0
        %v4253 = vmax.f32 %v1437, 0.0
        %v4254 = vmax.f32 %v1439, 0.0
        %v4255 = vmax.f32 %v1694, 0.0
        %v4256 = vmax.f32 %v1696, 0.0
        %v4257 = vmax.f32 %v1951, 0.0
        %v4258 = vmax.f32 %v1953, 0.0
        %v4259 = vmax.f32 %v2208, 0.0
        %v4260 = vmax.f32 %v2210, 0.0
        %v4261 = vmax.f32 %v2465, 0.0
        %v4262 = vmax.f32 %v2467, 0.0
        %v4263 = vmax.f32 %v2722, 0.0
        %v4264 = vmax.f32 %v2724, 0.0
        %v4265 = vmax.f32 %v2979, 0.0
        %v4266 = vmax.f32 %v2981, 0.0
        %v4267 = vmax.f32 %v3236, 0.0
        %v4268 = vmax.f32 %v3238, 0.0
        %v4269 = vmax.f32 %v3493, 0.0
        %v4270 = vmax.f32 %v3495, 0.0
        %v4271 = vmax.f32 %v3750, 0.0
        %v4272 = vmax.f32 %v3752, 0.0
        %v4273 = vmax.f32 %v4007, 0.0
        %v4274 = vmax.f32 %v4009, 0.0
        %v4275 = vmax.f32 %v1186, 0.0
        %v4276 = vmax.f32 %v1188, 0.0
        %v4277 = vmax.f32 %v1443, 0.0
        %v4278 = vmax.f32 %v1445, 0.0
        %v4279 = vmax.f32 %v1700, 0.0
        %v4280 = vmax.f32 %v1702, 0.0
        %v4281 = vmax.f32 %v1957, 0.0
        %v4282 = vmax.f32 %v1959, 0.0
        %v4283 = vmax.f32 %v2214, 0.0
        %v4284 = vmax.f32 %v2216, 0.0
        %v4285 = vmax.f32 %v2471, 0.0
        %v4286 = vmax.f32 %v2473, 0.0
        %v4287 = vmax.f32 %v2728, 0.0
        %v4288 = vmax.f32 %v2730, 0.0
        %v4289 = vmax.f32 %v2985, 0.0
        %v4290 = vmax.f32 %v2987, 0.0
        %v4291 = vmax.f32 %v3242, 0.0
        %v4292 = vmax.f32 %v3244, 0.0
        %v4293 = vmax.f32 %v3499, 0.0
        %v4294 = vmax.f32 %v3501, 0.0
        %v4295 = vmax.f32 %v3756, 0.0
        %v4296 = vmax.f32 %v3758, 0.0
        %v4297 = vmax.f32 %v4013, 0.0
        %v4298 = vmax.f32 %v4015, 0.0
        %v4299 = vmax.f32 %v1192, 0.0
        %v4300 = vmax.f32 %v1194, 0.0
        %v4301 = vmax.f32 %v1449, 0.0
        %v4302 = vmax.f32 %v1451, 0.0
        %v4303 = vmax.f32 %v1706, 0.0
        %v4304 = vmax.f32 %v1708, 0.0
        %v4305 = vmax.f32 %v1963, 0.0
        %v4306 = vmax.f32 %v1965, 0.0
        %v4307 = vmax.f32 %v2220, 0.0
        %v4308 = vmax.f32 %v2222, 0.0
        %v4309 = vmax.f32 %v2477, 0.0
        %v4310 = vmax.f32 %v2479, 0.0
        %v4311 = vmax.f32 %v2734, 0.0
        %v4312 = vmax.f32 %v2736, 0.0
        %v4313 = vmax.f32 %v2991, 0.0
        %v4314 = vmax.f32 %v2993, 0.0
        %v4315 = vmax.f32 %v3248, 0.0
        %v4316 = vmax.f32 %v3250, 0.0
        %v4317 = vmax.f32 %v3505, 0.0
        %v4318 = vmax.f32 %v3507, 0.0
        %v4319 = vmax.f32 %v3762, 0.0
        %v4320 = vmax.f32 %v3764, 0.0
        %v4321 = vmax.f32 %v4019, 0.0
        %v4322 = vmax.f32 %v4021, 0.0
        %v4323 = vmax.f32 %v1198, 0.0
        %v4324 = vmax.f32 %v1200, 0.0
        %v4325 = vmax.f32 %v1455, 0.0
        %v4326 = vmax.f32 %v1457, 0.0
        %v4327 = vmax.f32 %v1712, 0.0
        %v4328 = vmax.f32 %v1714, 0.0
        %v4329 = vmax.f32 %v1969, 0.0
        %v4330 = vmax.f32 %v1971, 0.0
        %v4331 = vmax.f32 %v2226, 0.0
        %v4332 = vmax.f32 %v2228, 0.0
        %v4333 = vmax.f32 %v2483, 0.0
        %v4334 = vmax.f32 %v2485, 0.0
        %v4335 = vmax.f32 %v2740, 0.0
        %v4336 = vmax.f32 %v2742, 0.0
        %v4337 = vmax.f32 %v2997, 0.0
        %v4338 = vmax.f32 %v2999, 0.0
        %v4339 = vmax.f32 %v3254, 0.0
        %v4340 = vmax.f32 %v3256, 0.0
        %v4341 = vmax.f32 %v3511, 0.0
        %v4342 = vmax.f32 %v3513, 0.0
        %v4343 = vmax.f32 %v3768, 0.0
        %v4344 = vmax.f32 %v3770, 0.0
        %v4345 = vmax.f32 %v4025, 0.0
        %v4346 = vmax.f32 %v4027, 0.0
        %v4347 = vmax.f32 %v1204, 0.0
        %v4348 = vmax.f32 %v1206, 0.0
        %v4349 = vmax.f32 %v1461, 0.0
        %v4350 = vmax.f32 %v1463, 0.0
        %v4351 = vmax.f32 %v1718, 0.0
        %v4352 = vmax.f32 %v1720, 0.0
        %v4353 = vmax.f32 %v1975, 0.0
        %v4354 = vmax.f32 %v1977, 0.0
        %v4355 = vmax.f32 %v2232, 0.0
        %v4356 = vmax.f32 %v2234, 0.0
        %v4357 = vmax.f32 %v2489, 0.0
        %v4358 = vmax.f32 %v2491, 0.0
        %v4359 = vmax.f32 %v2746, 0.0
        %v4360 = vmax.f32 %v2748, 0.0
        %v4361 = vmax.f32 %v3003, 0.0
        %v4362 = vmax.f32 %v3005, 0.0
        %v4363 = vmax.f32 %v3260, 0.0
        %v4364 = vmax.f32 %v3262, 0.0
        %v4365 = vmax.f32 %v3517, 0.0
        %v4366 = vmax.f32 %v3519, 0.0
        %v4367 = vmax.f32 %v3774, 0.0
        %v4368 = vmax.f32 %v3776, 0.0
        %v4369 = vmax.f32 %v4031, 0.0
        %v4370 = vmax.f32 %v4033, 0.0
        %v4371 = vmax.f32 %v1210, 0.0
        %v4372 = vmax.f32 %v1212, 0.0
        %v4373 = vmax.f32 %v1467, 0.0
        %v4374 = vmax.f32 %v1469, 0.0
        %v4375 = vmax.f32 %v1724, 0.0
        %v4376 = vmax.f32 %v1726, 0.0
        %v4377 = vmax.f32 %v1981, 0.0
        %v4378 = vmax.f32 %v1983, 0.0
        %v4379 = vmax.f32 %v2238, 0.0
        %v4380 = vmax.f32 %v2240, 0.0
        %v4381 = vmax.f32 %v2495, 0.0
        %v4382 = vmax.f32 %v2497, 0.0
        %v4383 = vmax.f32 %v2752, 0.0
        %v4384 = vmax.f32 %v2754, 0.0
        %v4385 = vmax.f32 %v3009, 0.0
        %v4386 = vmax.f32 %v3011, 0.0
        %v4387 = vmax.f32 %v3266, 0.0
        %v4388 = vmax.f32 %v3268, 0.0
        %v4389 = vmax.f32 %v3523, 0.0
        %v4390 = vmax.f32 %v3525, 0.0
        %v4391 = vmax.f32 %v3780, 0.0
        %v4392 = vmax.f32 %v3782, 0.0
        %v4393 = vmax.f32 %v4037, 0.0
        %v4394 = vmax.f32 %v4039, 0.0
        %v4395 = vmax.f32 %v1216, 0.0
        %v4396 = vmax.f32 %v1218, 0.0
        %v4397 = vmax.f32 %v1473, 0.0
        %v4398 = vmax.f32 %v1475, 0.0
        %v4399 = vmax.f32 %v1730, 0.0
        %v4400 = vmax.f32 %v1732, 0.0
        %v4401 = vmax.f32 %v1987, 0.0
        %v4402 = vmax.f32 %v1989, 0.0
        %v4403 = vmax.f32 %v2244, 0.0
        %v4404 = vmax.f32 %v2246, 0.0
        %v4405 = vmax.f32 %v2501, 0.0
        %v4406 = vmax.f32 %v2503, 0.0
        %v4407 = vmax.f32 %v2758, 0.0
        %v4408 = vmax.f32 %v2760, 0.0
        %v4409 = vmax.f32 %v3015, 0.0
        %v4410 = vmax.f32 %v3017, 0.0
        %v4411 = vmax.f32 %v3272, 0.0
        %v4412 = vmax.f32 %v3274, 0.0
        %v4413 = vmax.f32 %v3529, 0.0
        %v4414 = vmax.f32 %v3531, 0.0
        %v4415 = vmax.f32 %v3786, 0.0
        %v4416 = vmax.f32 %v3788, 0.0
        %v4417 = vmax.f32 %v4043, 0.0
        %v4418 = vmax.f32 %v4045, 0.0
        %v4419 = vmax.f32 %v1222, 0.0
        %v4420 = vmax.f32 %v1224, 0.0
        %v4421 = vmax.f32 %v1479, 0.0
        %v4422 = vmax.f32 %v1481, 0.0
        %v4423 = vmax.f32 %v1736, 0.0
        %v4424 = vmax.f32 %v1738, 0.0
        %v4425 = vmax.f32 %v1993, 0.0
        %v4426 = vmax.f32 %v1995, 0.0
        %v4427 = vmax.f32 %v2250, 0.0
        %v4428 = vmax.f32 %v2252, 0.0
        %v4429 = vmax.f32 %v2507, 0.0
        %v4430 = vmax.f32 %v2509, 0.0
        %v4431 = vmax.f32 %v2764, 0.0
        %v4432 = vmax.f32 %v2766, 0.0
        %v4433 = vmax.f32 %v3021, 0.0
        %v4434 = vmax.f32 %v3023, 0.0
        %v4435 = vmax.f32 %v3278, 0.0
        %v4436 = vmax.f32 %v3280, 0.0
        %v4437 = vmax.f32 %v3535, 0.0
        %v4438 = vmax.f32 %v3537, 0.0
        %v4439 = vmax.f32 %v3792, 0.0
        %v4440 = vmax.f32 %v3794, 0.0
        %v4441 = vmax.f32 %v4049, 0.0
        %v4442 = vmax.f32 %v4051, 0.0
        %v4443 = vmax.f32 %v1228, 0.0
        %v4444 = vmax.f32 %v1230, 0.0
        %v4445 = vmax.f32 %v1485, 0.0
        %v4446 = vmax.f32 %v1487, 0.0
        %v4447 = vmax.f32 %v1742, 0.0
        %v4448 = vmax.f32 %v1744, 0.0
        %v4449 = vmax.f32 %v1999, 0.0
        %v4450 = vmax.f32 %v2001, 0.0
        %v4451 = vmax.f32 %v2256, 0.0
        %v4452 = vmax.f32 %v2258, 0.0
        %v4453 = vmax.f32 %v2513, 0.0
        %v4454 = vmax.f32 %v2515, 0.0
        %v4455 = vmax.f32 %v2770, 0.0
        %v4456 = vmax.f32 %v2772, 0.0
        %v4457 = vmax.f32 %v3027, 0.0
        %v4458 = vmax.f32 %v3029, 0.0
        %v4459 = vmax.f32 %v3284, 0.0
        %v4460 = vmax.f32 %v3286, 0.0
        %v4461 = vmax.f32 %v3541, 0.0
        %v4462 = vmax.f32 %v3543, 0.0
        %v4463 = vmax.f32 %v3798, 0.0
        %v4464 = vmax.f32 %v3800, 0.0
        %v4465 = vmax.f32 %v4055, 0.0
        %v4466 = vmax.f32 %v4057, 0.0
        %v4467 = vmax.f32 %v1234, 0.0
        %v4468 = vmax.f32 %v1236, 0.0
        %v4469 = vmax.f32 %v1491, 0.0
        %v4470 = vmax.f32 %v1493, 0.0
        %v4471 = vmax.f32 %v1748, 0.0
        %v4472 = vmax.f32 %v1750, 0.0
        %v4473 = vmax.f32 %v2005, 0.0
        %v4474 = vmax.f32 %v2007, 0.0
        %v4475 = vmax.f32 %v2262, 0.0
        %v4476 = vmax.f32 %v2264, 0.0
        %v4477 = vmax.f32 %v2519, 0.0
        %v4478 = vmax.f32 %v2521, 0.0
        %v4479 = vmax.f32 %v2776, 0.0
        %v4480 = vmax.f32 %v2778, 0.0
        %v4481 = vmax.f32 %v3033, 0.0
        %v4482 = vmax.f32 %v3035, 0.0
        %v4483 = vmax.f32 %v3290, 0.0
        %v4484 = vmax.f32 %v3292, 0.0
        %v4485 = vmax.f32 %v3547, 0.0
        %v4486 = vmax.f32 %v3549, 0.0
        %v4487 = vmax.f32 %v3804, 0.0
        %v4488 = vmax.f32 %v3806, 0.0
        %v4489 = vmax.f32 %v4061, 0.0
        %v4490 = vmax.f32 %v4063, 0.0
        %v4491 = vmax.f32 %v1240, 0.0
        %v4492 = vmax.f32 %v1242, 0.0
        %v4493 = vmax.f32 %v1497, 0.0
        %v4494 = vmax.f32 %v1499, 0.0
        %v4495 = vmax.f32 %v1754, 0.0
        %v4496 = vmax.f32 %v1756, 0.0
        %v4497 = vmax.f32 %v2011, 0.0
        %v4498 = vmax.f32 %v2013, 0.0
        %v4499 = vmax.f32 %v2268, 0.0
        %v4500 = vmax.f32 %v2270, 0.0
        %v4501 = vmax.f32 %v2525, 0.0
        %v4502 = vmax.f32 %v2527, 0.0
        %v4503 = vmax.f32 %v2782, 0.0
        %v4504 = vmax.f32 %v2784, 0.0
        %v4505 = vmax.f32 %v3039, 0.0
        %v4506 = vmax.f32 %v3041, 0.0
        %v4507 = vmax.f32 %v3296, 0.0
        %v4508 = vmax.f32 %v3298, 0.0
        %v4509 = vmax.f32 %v3553, 0.0
        %v4510 = vmax.f32 %v3555, 0.0
        %v4511 = vmax.f32 %v3810, 0.0
        %v4512 = vmax.f32 %v3812, 0.0
        %v4513 = vmax.f32 %v4067, 0.0
        %v4514 = vmax.f32 %v4069, 0.0
        %v4515 = vmax.f32 %v1246, 0.0
        %v4516 = vmax.f32 %v1248, 0.0
        %v4517 = vmax.f32 %v1503, 0.0
        %v4518 = vmax.f32 %v1505, 0.0
        %v4519 = vmax.f32 %v1760, 0.0
        %v4520 = vmax.f32 %v1762, 0.0
        %v4521 = vmax.f32 %v2017, 0.0
        %v4522 = vmax.f32 %v2019, 0.0
        %v4523 = vmax.f32 %v2274, 0.0
        %v4524 = vmax.f32 %v2276, 0.0
        %v4525 = vmax.f32 %v2531, 0.0
        %v4526 = vmax.f32 %v2533, 0.0
        %v4527 = vmax.f32 %v2788, 0.0
        %v4528 = vmax.f32 %v2790, 0.0
        %v4529 = vmax.f32 %v3045, 0.0
        %v4530 = vmax.f32 %v3047, 0.0
        %v4531 = vmax.f32 %v3302, 0.0
        %v4532 = vmax.f32 %v3304, 0.0
        %v4533 = vmax.f32 %v3559, 0.0
        %v4534 = vmax.f32 %v3561, 0.0
        %v4535 = vmax.f32 %v3816, 0.0
        %v4536 = vmax.f32 %v3818, 0.0
        %v4537 = vmax.f32 %v4073, 0.0
        %v4538 = vmax.f32 %v4075, 0.0
        %v4539 = vmax.f32 %v1252, 0.0
        %v4540 = vmax.f32 %v1254, 0.0
        %v4541 = vmax.f32 %v1509, 0.0
        %v4542 = vmax.f32 %v1511, 0.0
        %v4543 = vmax.f32 %v1766, 0.0
        %v4544 = vmax.f32 %v1768, 0.0
        %v4545 = vmax.f32 %v2023, 0.0
        %v4546 = vmax.f32 %v2025, 0.0
        %v4547 = vmax.f32 %v2280, 0.0
        %v4548 = vmax.f32 %v2282, 0.0
        %v4549 = vmax.f32 %v2537, 0.0
        %v4550 = vmax.f32 %v2539, 0.0
        %v4551 = vmax.f32 %v2794, 0.0
        %v4552 = vmax.f32 %v2796, 0.0
        %v4553 = vmax.f32 %v3051, 0.0
        %v4554 = vmax.f32 %v3053, 0.0
        %v4555 = vmax.f32 %v3308, 0.0
        %v4556 = vmax.f32 %v3310, 0.0
        %v4557 = vmax.f32 %v3565, 0.0
        %v4558 = vmax.f32 %v3567, 0.0
        %v4559 = vmax.f32 %v3822, 0.0
        %v4560 = vmax.f32 %v3824, 0.0
        %v4561 = vmax.f32 %v4079, 0.0
        %v4562 = vmax.f32 %v4081, 0.0
        %v4563 = vmax.f32 %v1258, 0.0
        %v4564 = vmax.f32 %v1260, 0.0
        %v4565 = vmax.f32 %v1515, 0.0
        %v4566 = vmax.f32 %v1517, 0.0
        %v4567 = vmax.f32 %v1772, 0.0
        %v4568 = vmax.f32 %v1774, 0.0
        %v4569 = vmax.f32 %v2029, 0.0
        %v4570 = vmax.f32 %v2031, 0.0
        %v4571 = vmax.f32 %v2286, 0.0
        %v4572 = vmax.f32 %v2288, 0.0
        %v4573 = vmax.f32 %v2543, 0.0
        %v4574 = vmax.f32 %v2545, 0.0
        %v4575 = vmax.f32 %v2800, 0.0
        %v4576 = vmax.f32 %v2802, 0.0
        %v4577 = vmax.f32 %v3057, 0.0
        %v4578 = vmax.f32 %v3059, 0.0
        %v4579 = vmax.f32 %v3314, 0.0
        %v4580 = vmax.f32 %v3316, 0.0
        %v4581 = vmax.f32 %v3571, 0.0
        %v4582 = vmax.f32 %v3573, 0.0
        %v4583 = vmax.f32 %v3828, 0.0
        %v4584 = vmax.f32 %v3830, 0.0
        %v4585 = vmax.f32 %v4085, 0.0
        %v4586 = vmax.f32 %v4087, 0.0
        %v4587 = vmax.f32 %v1264, 0.0
        %v4588 = vmax.f32 %v1266, 0.0
        %v4589 = vmax.f32 %v1521, 0.0
        %v4590 = vmax.f32 %v1523, 0.0
        %v4591 = vmax.f32 %v1778, 0.0
        %v4592 = vmax.f32 %v1780, 0.0
        %v4593 = vmax.f32 %v2035, 0.0
        %v4594 = vmax.f32 %v2037, 0.0
        %v4595 = vmax.f32 %v2292, 0.0
        %v4596 = vmax.f32 %v2294, 0.0
        %v4597 = vmax.f32 %v2549, 0.0
        %v4598 = vmax.f32 %v2551, 0.0
        %v4599 = vmax.f32 %v2806, 0.0
        %v4600 = vmax.f32 %v2808, 0.0
        %v4601 = vmax.f32 %v3063, 0.0
        %v4602 = vmax.f32 %v3065, 0.0
        %v4603 = vmax.f32 %v3320, 0.0
        %v4604 = vmax.f32 %v3322, 0.0
        %v4605 = vmax.f32 %v3577, 0.0
        %v4606 = vmax.f32 %v3579, 0.0
        %v4607 = vmax.f32 %v3834, 0.0
        %v4608 = vmax.f32 %v3836, 0.0
        %v4609 = vmax.f32 %v4091, 0.0
        %v4610 = vmax.f32 %v4093, 0.0
        %v4611 = vmax.f32 %v1270, 0.0
        %v4612 = vmax.f32 %v1272, 0.0
        %v4613 = vmax.f32 %v1527, 0.0
        %v4614 = vmax.f32 %v1529, 0.0
        %v4615 = vmax.f32 %v1784, 0.0
        %v4616 = vmax.f32 %v1786, 0.0
        %v4617 = vmax.f32 %v2041, 0.0
        %v4618 = vmax.f32 %v2043, 0.0
        %v4619 = vmax.f32 %v2298, 0.0
        %v4620 = vmax.f32 %v2300, 0.0
        %v4621 = vmax.f32 %v2555, 0.0
        %v4622 = vmax.f32 %v2557, 0.0
        %v4623 = vmax.f32 %v2812, 0.0
        %v4624 = vmax.f32 %v2814, 0.0
        %v4625 = vmax.f32 %v3069, 0.0
        %v4626 = vmax.f32 %v3071, 0.0
        %v4627 = vmax.f32 %v3326, 0.0
        %v4628 = vmax.f32 %v3328, 0.0
        %v4629 = vmax.f32 %v3583, 0.0
        %v4630 = vmax.f32 %v3585, 0.0
        %v4631 = vmax.f32 %v3840, 0.0
        %v4632 = vmax.f32 %v3842, 0.0
        %v4633 = vmax.f32 %v4097, 0.0
        %v4634 = vmax.f32 %v4099, 0.0
        %v4635 = vmax.f32 %v1276, 0.0
        %v4636 = vmax.f32 %v1278, 0.0
        %v4637 = vmax.f32 %v1533, 0.0
        %v4638 = vmax.f32 %v1535, 0.0
        %v4639 = vmax.f32 %v1790, 0.0
        %v4640 = vmax.f32 %v1792, 0.0
        %v4641 = vmax.f32 %v2047, 0.0
        %v4642 = vmax.f32 %v2049, 0.0
        %v4643 = vmax.f32 %v2304, 0.0
        %v4644 = vmax.f32 %v2306, 0.0
        %v4645 = vmax.f32 %v2561, 0.0
        %v4646 = vmax.f32 %v2563, 0.0
        %v4647 = vmax.f32 %v2818, 0.0
        %v4648 = vmax.f32 %v2820, 0.0
        %v4649 = vmax.f32 %v3075, 0.0
        %v4650 = vmax.f32 %v3077, 0.0
        %v4651 = vmax.f32 %v3332, 0.0
        %v4652 = vmax.f32 %v3334, 0.0
        %v4653 = vmax.f32 %v3589, 0.0
        %v4654 = vmax.f32 %v3591, 0.0
        %v4655 = vmax.f32 %v3846, 0.0
        %v4656 = vmax.f32 %v3848, 0.0
        %v4657 = vmax.f32 %v4103, 0.0
        %v4658 = vmax.f32 %v4105, 0.0
        %v4659 = vmax.f32 %v1282, 0.0
        %v4660 = vmax.f32 %v1284, 0.0
        %v4661 = vmax.f32 %v1539, 0.0
        %v4662 = vmax.f32 %v1541, 0.0
        %v4663 = vmax.f32 %v1796, 0.0
        %v4664 = vmax.f32 %v1798, 0.0
        %v4665 = vmax.f32 %v2053, 0.0
        %v4666 = vmax.f32 %v2055, 0.0
        %v4667 = vmax.f32 %v2310, 0.0
        %v4668 = vmax.f32 %v2312, 0.0
        %v4669 = vmax.f32 %v2567, 0.0
        %v4670 = vmax.f32 %v2569, 0.0
        %v4671 = vmax.f32 %v2824, 0.0
        %v4672 = vmax.f32 %v2826, 0.0
        %v4673 = vmax.f32 %v3081, 0.0
        %v4674 = vmax.f32 %v3083, 0.0
        %v4675 = vmax.f32 %v3338, 0.0
        %v4676 = vmax.f32 %v3340, 0.0
        %v4677 = vmax.f32 %v3595, 0.0
        %v4678 = vmax.f32 %v3597, 0.0
        %v4679 = vmax.f32 %v3852, 0.0
        %v4680 = vmax.f32 %v3854, 0.0
        %v4681 = vmax.f32 %v4109, 0.0
        %v4682 = vmax.f32 %v4111, 0.0
        %v4683 = vmax.f32 %v1288, 0.0
        %v4684 = vmax.f32 %v1290, 0.0
        %v4685 = vmax.f32 %v1545, 0.0
        %v4686 = vmax.f32 %v1547, 0.0
        %v4687 = vmax.f32 %v1802, 0.0
        %v4688 = vmax.f32 %v1804, 0.0
        %v4689 = vmax.f32 %v2059, 0.0
        %v4690 = vmax.f32 %v2061, 0.0
        %v4691 = vmax.f32 %v2316, 0.0
        %v4692 = vmax.f32 %v2318, 0.0
        %v4693 = vmax.f32 %v2573, 0.0
        %v4694 = vmax.f32 %v2575, 0.0
        %v4695 = vmax.f32 %v2830, 0.0
        %v4696 = vmax.f32 %v2832, 0.0
        %v4697 = vmax.f32 %v3087, 0.0
        %v4698 = vmax.f32 %v3089, 0.0
        %v4699 = vmax.f32 %v3344, 0.0
        %v4700 = vmax.f32 %v3346, 0.0
        %v4701 = vmax.f32 %v3601, 0.0
        %v4702 = vmax.f32 %v3603, 0.0
        %v4703 = vmax.f32 %v3858, 0.0
        %v4704 = vmax.f32 %v3860, 0.0
        %v4705 = vmax.f32 %v4115, 0.0
        %v4706 = vmax.f32 %v4117, 0.0
        %v4707 = vmax.f32 %v1294, 0.0
        %v4708 = vmax.f32 %v1296, 0.0
        %v4709 = vmax.f32 %v1551, 0.0
        %v4710 = vmax.f32 %v1553, 0.0
        %v4711 = vmax.f32 %v1808, 0.0
        %v4712 = vmax.f32 %v1810, 0.0
        %v4713 = vmax.f32 %v2065, 0.0
        %v4714 = vmax.f32 %v2067, 0.0
        %v4715 = vmax.f32 %v2322, 0.0
        %v4716 = vmax.f32 %v2324, 0.0
        %v4717 = vmax.f32 %v2579, 0.0
        %v4718 = vmax.f32 %v2581, 0.0
        %v4719 = vmax.f32 %v2836, 0.0
        %v4720 = vmax.f32 %v2838, 0.0
        %v4721 = vmax.f32 %v3093, 0.0
        %v4722 = vmax.f32 %v3095, 0.0
        %v4723 = vmax.f32 %v3350, 0.0
        %v4724 = vmax.f32 %v3352, 0.0
        %v4725 = vmax.f32 %v3607, 0.0
        %v4726 = vmax.f32 %v3609, 0.0
        %v4727 = vmax.f32 %v3864, 0.0
        %v4728 = vmax.f32 %v3866, 0.0
        %v4729 = vmax.f32 %v4121, 0.0
        %v4730 = vmax.f32 %v4123, 0.0
        %v4731 = vmax.f32 %v1300, 0.0
        %v4732 = vmax.f32 %v1302, 0.0
        %v4733 = vmax.f32 %v1557, 0.0
        %v4734 = vmax.f32 %v1559, 0.0
        %v4735 = vmax.f32 %v1814, 0.0
        %v4736 = vmax.f32 %v1816, 0.0
        %v4737 = vmax.f32 %v2071, 0.0
        %v4738 = vmax.f32 %v2073, 0.0
        %v4739 = vmax.f32 %v2328, 0.0
        %v4740 = vmax.f32 %v2330, 0.0
        %v4741 = vmax.f32 %v2585, 0.0
        %v4742 = vmax.f32 %v2587, 0.0
        %v4743 = vmax.f32 %v2842, 0.0
        %v4744 = vmax.f32 %v2844, 0.0
        %v4745 = vmax.f32 %v3099, 0.0
        %v4746 = vmax.f32 %v3101, 0.0
        %v4747 = vmax.f32 %v3356, 0.0
        %v4748 = vmax.f32 %v3358, 0.0
        %v4749 = vmax.f32 %v3613, 0.0
        %v4750 = vmax.f32 %v3615, 0.0
        %v4751 = vmax.f32 %v3870, 0.0
        %v4752 = vmax.f32 %v3872, 0.0
        %v4753 = vmax.f32 %v4127, 0.0
        %v4754 = vmax.f32 %v4129, 0.0
        %v4755 = vmax.f32 %v1306, 0.0
        %v4756 = vmax.f32 %v1308, 0.0
        %v4757 = vmax.f32 %v1563, 0.0
        %v4758 = vmax.f32 %v1565, 0.0
        %v4759 = vmax.f32 %v1820, 0.0
        %v4760 = vmax.f32 %v1822, 0.0
        %v4761 = vmax.f32 %v2077, 0.0
        %v4762 = vmax.f32 %v2079, 0.0
        %v4763 = vmax.f32 %v2334, 0.0
        %v4764 = vmax.f32 %v2336, 0.0
        %v4765 = vmax.f32 %v2591, 0.0
        %v4766 = vmax.f32 %v2593, 0.0
        %v4767 = vmax.f32 %v2848, 0.0
        %v4768 = vmax.f32 %v2850, 0.0
        %v4769 = vmax.f32 %v3105, 0.0
        %v4770 = vmax.f32 %v3107, 0.0
        %v4771 = vmax.f32 %v3362, 0.0
        %v4772 = vmax.f32 %v3364, 0.0
        %v4773 = vmax.f32 %v3619, 0.0
        %v4774 = vmax.f32 %v3621, 0.0
        %v4775 = vmax.f32 %v3876, 0.0
        %v4776 = vmax.f32 %v3878, 0.0
        %v4777 = vmax.f32 %v4133, 0.0
        %v4778 = vmax.f32 %v4135, 0.0
        %v4779 = vmax.f32 %v1312, 0.0
        %v4780 = vmax.f32 %v1314, 0.0
        %v4781 = vmax.f32 %v1569, 0.0
        %v4782 = vmax.f32 %v1571, 0.0
        %v4783 = vmax.f32 %v1826, 0.0
        %v4784 = vmax.f32 %v1828, 0.0
        %v4785 = vmax.f32 %v2083, 0.0
        %v4786 = vmax.f32 %v2085, 0.0
        %v4787 = vmax.f32 %v2340, 0.0
        %v4788 = vmax.f32 %v2342, 0.0
        %v4789 = vmax.f32 %v2597, 0.0
        %v4790 = vmax.f32 %v2599, 0.0
        %v4791 = vmax.f32 %v2854, 0.0
        %v4792 = vmax.f32 %v2856, 0.0
        %v4793 = vmax.f32 %v3111, 0.0
        %v4794 = vmax.f32 %v3113, 0.0
        %v4795 = vmax.f32 %v3368, 0.0
        %v4796 = vmax.f32 %v3370, 0.0
        %v4797 = vmax.f32 %v3625, 0.0
        %v4798 = vmax.f32 %v3627, 0.0
        %v4799 = vmax.f32 %v3882, 0.0
        %v4800 = vmax.f32 %v3884, 0.0
        %v4801 = vmax.f32 %v4139, 0.0
        %v4802 = vmax.f32 %v4141, 0.0
        %v4803 = vmax.f32 %v1318, 0.0
        %v4804 = vmax.f32 %v1320, 0.0
        %v4805 = vmax.f32 %v1575, 0.0
        %v4806 = vmax.f32 %v1577, 0.0
        %v4807 = vmax.f32 %v1832, 0.0
        %v4808 = vmax.f32 %v1834, 0.0
        %v4809 = vmax.f32 %v2089, 0.0
        %v4810 = vmax.f32 %v2091, 0.0
        %v4811 = vmax.f32 %v2346, 0.0
        %v4812 = vmax.f32 %v2348, 0.0
        %v4813 = vmax.f32 %v2603, 0.0
        %v4814 = vmax.f32 %v2605, 0.0
        %v4815 = vmax.f32 %v2860, 0.0
        %v4816 = vmax.f32 %v2862, 0.0
        %v4817 = vmax.f32 %v3117, 0.0
        %v4818 = vmax.f32 %v3119, 0.0
        %v4819 = vmax.f32 %v3374, 0.0
        %v4820 = vmax.f32 %v3376, 0.0
        %v4821 = vmax.f32 %v3631, 0.0
        %v4822 = vmax.f32 %v3633, 0.0
        %v4823 = vmax.f32 %v3888, 0.0
        %v4824 = vmax.f32 %v3890, 0.0
        %v4825 = vmax.f32 %v4145, 0.0
        %v4826 = vmax.f32 %v4147, 0.0
        %v4827 = vmax.f32 %v1324, 0.0
        %v4828 = vmax.f32 %v1326, 0.0
        %v4829 = vmax.f32 %v1581, 0.0
        %v4830 = vmax.f32 %v1583, 0.0
        %v4831 = vmax.f32 %v1838, 0.0
        %v4832 = vmax.f32 %v1840, 0.0
        %v4833 = vmax.f32 %v2095, 0.0
        %v4834 = vmax.f32 %v2097, 0.0
        %v4835 = vmax.f32 %v2352, 0.0
        %v4836 = vmax.f32 %v2354, 0.0
        %v4837 = vmax.f32 %v2609, 0.0
        %v4838 = vmax.f32 %v2611, 0.0
        %v4839 = vmax.f32 %v2866, 0.0
        %v4840 = vmax.f32 %v2868, 0.0
        %v4841 = vmax.f32 %v3123, 0.0
        %v4842 = vmax.f32 %v3125, 0.0
        %v4843 = vmax.f32 %v3380, 0.0
        %v4844 = vmax.f32 %v3382, 0.0
        %v4845 = vmax.f32 %v3637, 0.0
        %v4846 = vmax.f32 %v3639, 0.0
        %v4847 = vmax.f32 %v3894, 0.0
        %v4848 = vmax.f32 %v3896, 0.0
        %v4849 = vmax.f32 %v4151, 0.0
        %v4850 = vmax.f32 %v4153, 0.0
        %v4851 = vmax.f32 %v1330, 0.0
        %v4852 = vmax.f32 %v1332, 0.0
        %v4853 = vmax.f32 %v1587, 0.0
        %v4854 = vmax.f32 %v1589, 0.0
        %v4855 = vmax.f32 %v1844, 0.0
        %v4856 = vmax.f32 %v1846, 0.0
        %v4857 = vmax.f32 %v2101, 0.0
        %v4858 = vmax.f32 %v2103, 0.0
        %v4859 = vmax.f32 %v2358, 0.0
        %v4860 = vmax.f32 %v2360, 0.0
        %v4861 = vmax.f32 %v2615, 0.0
        %v4862 = vmax.f32 %v2617, 0.0
        %v4863 = vmax.f32 %v2872, 0.0
        %v4864 = vmax.f32 %v2874, 0.0
        %v4865 = vmax.f32 %v3129, 0.0
        %v4866 = vmax.f32 %v3131, 0.0
        %v4867 = vmax.f32 %v3386, 0.0
        %v4868 = vmax.f32 %v3388, 0.0
        %v4869 = vmax.f32 %v3643, 0.0
        %v4870 = vmax.f32 %v3645, 0.0
        %v4871 = vmax.f32 %v3900, 0.0
        %v4872 = vmax.f32 %v3902, 0.0
        %v4873 = vmax.f32 %v4157, 0.0
        %v4874 = vmax.f32 %v4159, 0.0
        %v4875 = vmax.f32 %v1336, 0.0
        %v4876 = vmax.f32 %v1338, 0.0
        %v4877 = vmax.f32 %v1593, 0.0
        %v4878 = vmax.f32 %v1595, 0.0
        %v4879 = vmax.f32 %v1850, 0.0
        %v4880 = vmax.f32 %v1852, 0.0
        %v4881 = vmax.f32 %v2107, 0.0
        %v4882 = vmax.f32 %v2109, 0.0
        %v4883 = vmax.f32 %v2364, 0.0
        %v4884 = vmax.f32 %v2366, 0.0
        %v4885 = vmax.f32 %v2621, 0.0
        %v4886 = vmax.f32 %v2623, 0.0
        %v4887 = vmax.f32 %v2878, 0.0
        %v4888 = vmax.f32 %v2880, 0.0
        %v4889 = vmax.f32 %v3135, 0.0
        %v4890 = vmax.f32 %v3137, 0.0
        %v4891 = vmax.f32 %v3392, 0.0
        %v4892 = vmax.f32 %v3394, 0.0
        %v4893 = vmax.f32 %v3649, 0.0
        %v4894 = vmax.f32 %v3651, 0.0
        %v4895 = vmax.f32 %v3906, 0.0
        %v4896 = vmax.f32 %v3908, 0.0
        %v4897 = vmax.f32 %v4163, 0.0
        %v4898 = vmax.f32 %v4165, 0.0
        %v4899 = vmax.f32 %v1342, 0.0
        %v4900 = vmax.f32 %v1344, 0.0
        %v4901 = vmax.f32 %v1599, 0.0
        %v4902 = vmax.f32 %v1601, 0.0
        %v4903 = vmax.f32 %v1856, 0.0
        %v4904 = vmax.f32 %v1858, 0.0
        %v4905 = vmax.f32 %v2113, 0.0
        %v4906 = vmax.f32 %v2115, 0.0
        %v4907 = vmax.f32 %v2370, 0.0
        %v4908 = vmax.f32 %v2372, 0.0
        %v4909 = vmax.f32 %v2627, 0.0
        %v4910 = vmax.f32 %v2629, 0.0
        %v4911 = vmax.f32 %v2884, 0.0
        %v4912 = vmax.f32 %v2886, 0.0
        %v4913 = vmax.f32 %v3141, 0.0
        %v4914 = vmax.f32 %v3143, 0.0
        %v4915 = vmax.f32 %v3398, 0.0
        %v4916 = vmax.f32 %v3400, 0.0
        %v4917 = vmax.f32 %v3655, 0.0
        %v4918 = vmax.f32 %v3657, 0.0
        %v4919 = vmax.f32 %v3912, 0.0
        %v4920 = vmax.f32 %v3914, 0.0
        %v4921 = vmax.f32 %v4169, 0.0
        %v4922 = vmax.f32 %v4171, 0.0
        %v4923 = vmax.f32 %v1348, 0.0
        %v4924 = vmax.f32 %v1350, 0.0
        %v4925 = vmax.f32 %v1605, 0.0
        %v4926 = vmax.f32 %v1607, 0.0
        %v4927 = vmax.f32 %v1862, 0.0
        %v4928 = vmax.f32 %v1864, 0.0
        %v4929 = vmax.f32 %v2119, 0.0
        %v4930 = vmax.f32 %v2121, 0.0
        %v4931 = vmax.f32 %v2376, 0.0
        %v4932 = vmax.f32 %v2378, 0.0
        %v4933 = vmax.f32 %v2633, 0.0
        %v4934 = vmax.f32 %v2635, 0.0
        %v4935 = vmax.f32 %v2890, 0.0
        %v4936 = vmax.f32 %v2892, 0.0
        %v4937 = vmax.f32 %v3147, 0.0
        %v4938 = vmax.f32 %v3149, 0.0
        %v4939 = vmax.f32 %v3404, 0.0
        %v4940 = vmax.f32 %v3406, 0.0
        %v4941 = vmax.f32 %v3661, 0.0
        %v4942 = vmax.f32 %v3663, 0.0
        %v4943 = vmax.f32 %v3918, 0.0
        %v4944 = vmax.f32 %v3920, 0.0
        %v4945 = vmax.f32 %v4175, 0.0
        %v4946 = vmax.f32 %v4177, 0.0
        %v4947 = vadd.f32 %v4179, %v4180
        %v4948 = vadd.f32 %v4203, %v4204
        %v4949 = vadd.f32 %v4227, %v4228
        %v4950 = vadd.f32 %v4251, %v4252
        %v4951 = vadd.f32 %v4275, %v4276
        %v4952 = vadd.f32 %v4299, %v4300
        %v4953 = vadd.f32 %v4323, %v4324
        %v4954 = vadd.f32 %v4347, %v4348
        %v4955 = vadd.f32 %v4371, %v4372
        %v4956 = vadd.f32 %v4395, %v4396
        %v4957 = vadd.f32 %v4419, %v4420
        %v4958 = vadd.f32 %v4443, %v4444
        %v4959 = vadd.f32 %v4467, %v4468
        %v4960 = vadd.f32 %v4491, %v4492
        %v4961 = vadd.f32 %v4515, %v4516
        %v4962 = vadd.f32 %v4539, %v4540
        %v4963 = vadd.f32 %v4563, %v4564
        %v4964 = vadd.f32 %v4587, %v4588
        %v4965 = vadd.f32 %v4611, %v4612
        %v4966 = vadd.f32 %v4635, %v4636
        %v4967 = vadd.f32 %v4659, %v4660
        %v4968 = vadd.f32 %v4683, %v4684
        %v4969 = vadd.f32 %v4707, %v4708
        %v4970 = vadd.f32 %v4731, %v4732
        %v4971 = vadd.f32 %v4755, %v4756
        %v4972 = vadd.f32 %v4779, %v4780
        %v4973 = vadd.f32 %v4803, %v4804
        %v4974 = vadd.f32 %v4827, %v4828
        %v4975 = vadd.f32 %v4851, %v4852
        %v4976 = vadd.f32 %v4875, %v4876
        %v4977 = vadd.f32 %v4899, %v4900
        %v4978 = vadd.f32 %v4923, %v4924
        %v4979 = vadd.f32 %v4947, %v4181
        %v4980 = vadd.f32 %v4948, %v4205
        %v4981 = vadd.f32 %v4949, %v4229
        %v4982 = vadd.f32 %v4950, %v4253
        %v4983 = vadd.f32 %v4951, %v4277
        %v4984 = vadd.f32 %v4952, %v4301
        %v4985 = vadd.f32 %v4953, %v4325
        %v4986 = vadd.f32 %v4954, %v4349
        %v4987 = vadd.f32 %v4955, %v4373
        %v4988 = vadd.f32 %v4956, %v4397
        %v4989 = vadd.f32 %v4957, %v4421
        %v4990 = vadd.f32 %v4958, %v4445
        %v4991 = vadd.f32 %v4959, %v4469
        %v4992 = vadd.f32 %v4960, %v4493
        %v4993 = vadd.f32 %v4961, %v4517
        %v4994 = vadd.f32 %v4962, %v4541
        %v4995 = vadd.f32 %v4963, %v4565
        %v4996 = vadd.f32 %v4964, %v4589
        %v4997 = vadd.f32 %v4965, %v4613
        %v4998 = vadd.f32 %v4966, %v4637
        %v4999 = vadd.f32 %v4967, %v4661
        %v5000 = vadd.f32 %v4968, %v4685
        %v5001 = vadd.f32 %v4969, %v4709
        %v5002 = vadd.f32 %v4970, %v4733
        %v5003 = vadd.f32 %v4971, %v4757
        %v5004 = vadd.f32 %v4972, %v4781
        %v5005 = vadd.f32 %v4973, %v4805
        %v5006 = vadd.f32 %v4974, %v4829
        %v5007 = vadd.f32 %v4975, %v4853
        %v5008 = vadd.f32 %v4976, %v4877
        %v5009 = vadd.f32 %v4977, %v4901
        %v5010 = vadd.f32 %v4978, %v4925
        %v5011 = vadd.f32 %v4979, %v4182
        %v5012 = vadd.f32 %v4980, %v4206
        %v5013 = vadd.f32 %v4981, %v4230
        %v5014 = vadd.f32 %v4982, %v4254
        %v5015 = vadd.f32 %v4983, %v4278
        %v5016 = vadd.f32 %v4984, %v4302
        %v5017 = vadd.f32 %v4985, %v4326
        %v5018 = vadd.f32 %v4986, %v4350
        %v5019 = vadd.f32 %v4987, %v4374
        %v5020 = vadd.f32 %v4988, %v4398
        %v5021 = vadd.f32 %v4989, %v4422
        %v5022 = vadd.f32 %v4990, %v4446
        %v5023 = vadd.f32 %v4991, %v4470
        %v5024 = vadd.f32 %v4992, %v4494
        %v5025 = vadd.f32 %v4993, %v4518
        %v5026 = vadd.f32 %v4994, %v4542
        %v5027 = vadd.f32 %v4995, %v4566
        %v5028 = vadd.f32 %v4996, %v4590
        %v5029 = vadd.f32 %v4997, %v4614
        %v5030 = vadd.f32 %v4998, %v4638
        %v5031 = vadd.f32 %v4999, %v4662
        %v5032 = vadd.f32 %v5000, %v4686
        %v5033 = vadd.f32 %v5001, %v4710
        %v5034 = vadd.f32 %v5002, %v4734
        %v5035 = vadd.f32 %v5003, %v4758
        %v5036 = vadd.f32 %v5004, %v4782
        %v5037 = vadd.f32 %v5005, %v4806
        %v5038 = vadd.f32 %v5006, %v4830
        %v5039 = vadd.f32 %v5007, %v4854
        %v5040 = vadd.f32 %v5008, %v4878
        %v5041 = vadd.f32 %v5009, %v4902
        %v5042 = vadd.f32 %v5010, %v4926
        %v5043 = vadd.f32 %v5011, %v4183
        %v5044 = vadd.f32 %v5012, %v4207
        %v5045 = vadd.f32 %v5013, %v4231
        %v5046 = vadd.f32 %v5014, %v4255
        %v5047 = vadd.f32 %v5015, %v4279
        %v5048 = vadd.f32 %v5016, %v4303
        %v5049 = vadd.f32 %v5017, %v4327
        %v5050 = vadd.f32 %v5018, %v4351
        %v5051 = vadd.f32 %v5019, %v4375
        %v5052 = vadd.f32 %v5020, %v4399
        %v5053 = vadd.f32 %v5021, %v4423
        %v5054 = vadd.f32 %v5022, %v4447
        %v5055 = vadd.f32 %v5023, %v4471
        %v5056 = vadd.f32 %v5024, %v4495
        %v5057 = vadd.f32 %v5025, %v4519
        %v5058 = vadd.f32 %v5026, %v4543
        %v5059 = vadd.f32 %v5027, %v4567
        %v5060 = vadd.f32 %v5028, %v4591
        %v5061 = vadd.f32 %v5029, %v4615
        %v5062 = vadd.f32 %v5030, %v4639
        %v5063 = vadd.f32 %v5031, %v4663
        %v5064 = vadd.f32 %v5032, %v4687
        %v5065 = vadd.f32 %v5033, %v4711
        %v5066 = vadd.f32 %v5034, %v4735
        %v5067 = vadd.f32 %v5035, %v4759
        %v5068 = vadd.f32 %v5036, %v4783
        %v5069 = vadd.f32 %v5037, %v4807
        %v5070 = vadd.f32 %v5038, %v4831
        %v5071 = vadd.f32 %v5039, %v4855
        %v5072 = vadd.f32 %v5040, %v4879
        %v5073 = vadd.f32 %v5041, %v4903
        %v5074 = vadd.f32 %v5042, %v4927
        %v5075 = vadd.f32 %v5043, %v4184
        %v5076 = vadd.f32 %v5044, %v4208
        %v5077 = vadd.f32 %v5045, %v4232
        %v5078 = vadd.f32 %v5046, %v4256
        %v5079 = vadd.f32 %v5047, %v4280
        %v5080 = vadd.f32 %v5048, %v4304
        %v5081 = vadd.f32 %v5049, %v4328
        %v5082 = vadd.f32 %v5050, %v4352
        %v5083 = vadd.f32 %v5051, %v4376
        %v5084 = vadd.f32 %v5052, %v4400
        %v5085 = vadd.f32 %v5053, %v4424
        %v5086 = vadd.f32 %v5054, %v4448
        %v5087 = vadd.f32 %v5055, %v4472
        %v5088 = vadd.f32 %v5056, %v4496
        %v5089 = vadd.f32 %v5057, %v4520
        %v5090 = vadd.f32 %v5058, %v4544
        %v5091 = vadd.f32 %v5059, %v4568
        %v5092 = vadd.f32 %v5060, %v4592
        %v5093 = vadd.f32 %v5061, %v4616
        %v5094 = vadd.f32 %v5062, %v4640
        %v5095 = vadd.f32 %v5063, %v4664
        %v5096 = vadd.f32 %v5064, %v4688
        %v5097 = vadd.f32 %v5065, %v4712
        %v5098 = vadd.f32 %v5066, %v4736
        %v5099 = vadd.f32 %v5067, %v4760
        %v5100 = vadd.f32 %v5068, %v4784
        %v5101 = vadd.f32 %v5069, %v4808
        %v5102 = vadd.f32 %v5070, %v4832
        %v5103 = vadd.f32 %v5071, %v4856
        %v5104 = vadd.f32 %v5072, %v4880
        %v5105 = vadd.f32 %v5073, %v4904
        %v5106 = vadd.f32 %v5074, %v4928
        %v5107 = vadd.f32 %v5075, %v4185
        %v5108 = vadd.f32 %v5076, %v4209
        %v5109 = vadd.f32 %v5077, %v4233
        %v5110 = vadd.f32 %v5078, %v4257
        %v5111 = vadd.f32 %v5079, %v4281
        %v5112 = vadd.f32 %v5080, %v4305
        %v5113 = vadd.f32 %v5081, %v4329
        %v5114 = vadd.f32 %v5082, %v4353
        %v5115 = vadd.f32 %v5083, %v4377
        %v5116 = vadd.f32 %v5084, %v4401
        %v5117 = vadd.f32 %v5085, %v4425
        %v5118 = vadd.f32 %v5086, %v4449
        %v5119 = vadd.f32 %v5087, %v4473
        %v5120 = vadd.f32 %v5088, %v4497
        %v5121 = vadd.f32 %v5089, %v4521
        %v5122 = vadd.f32 %v5090, %v4545
        %v5123 = vadd.f32 %v5091, %v4569
        %v5124 = vadd.f32 %v5092, %v4593
        %v5125 = vadd.f32 %v5093, %v4617
        %v5126 = vadd.f32 %v5094, %v4641
        %v5127 = vadd.f32 %v5095, %v4665
        %v5128 = vadd.f32 %v5096, %v4689
        %v5129 = vadd.f32 %v5097, %v4713
        %v5130 = vadd.f32 %v5098, %v4737
        %v5131 = vadd.f32 %v5099, %v4761
        %v5132 = vadd.f32 %v5100, %v4785
        %v5133 = vadd.f32 %v5101, %v4809
        %v5134 = vadd.f32 %v5102, %v4833
        %v5135 = vadd.f32 %v5103, %v4857
        %v5136 = vadd.f32 %v5104, %v4881
        %v5137 = vadd.f32 %v5105, %v4905
        %v5138 = vadd.f32 %v5106, %v4929
        %v5139 = vadd.f32 %v5107, %v4186
        %v5140 = vadd.f32 %v5108, %v4210
        %v5141 = vadd.f32 %v5109, %v4234
        %v5142 = vadd.f32 %v5110, %v4258
        %v5143 = vadd.f32 %v5111, %v4282
        %v5144 = vadd.f32 %v5112, %v4306
        %v5145 = vadd.f32 %v5113, %v4330
        %v5146 = vadd.f32 %v5114, %v4354
        %v5147 = vadd.f32 %v5115, %v4378
        %v5148 = vadd.f32 %v5116, %v4402
        %v5149 = vadd.f32 %v5117, %v4426
        %v5150 = vadd.f32 %v5118, %v4450
        %v5151 = vadd.f32 %v5119, %v4474
        %v5152 = vadd.f32 %v5120, %v4498
        %v5153 = vadd.f32 %v5121, %v4522
        %v5154 = vadd.f32 %v5122, %v4546
        %v5155 = vadd.f32 %v5123, %v4570
        %v5156 = vadd.f32 %v5124, %v4594
        %v5157 = vadd.f32 %v5125, %v4618
        %v5158 = vadd.f32 %v5126, %v4642
        %v5159 = vadd.f32 %v5127, %v4666
        %v5160 = vadd.f32 %v5128, %v4690
        %v5161 = vadd.f32 %v5129, %v4714
        %v5162 = vadd.f32 %v5130, %v4738
        %v5163 = vadd.f32 %v5131, %v4762
        %v5164 = vadd.f32 %v5132, %v4786
        %v5165 = vadd.f32 %v5133, %v4810
        %v5166 = vadd.f32 %v5134, %v4834
        %v5167 = vadd.f32 %v5135, %v4858
        %v5168 = vadd.f32 %v5136, %v4882
        %v5169 = vadd.f32 %v5137, %v4906
        %v5170 = vadd.f32 %v5138, %v4930
        %v5171 = vadd.f32 %v5139, %v4187
        %v5172 = vadd.f32 %v5140, %v4211
        %v5173 = vadd.f32 %v5141, %v4235
        %v5174 = vadd.f32 %v5142, %v4259
        %v5175 = vadd.f32 %v5143, %v4283
        %v5176 = vadd.f32 %v5144, %v4307
        %v5177 = vadd.f32 %v5145, %v4331
        %v5178 = vadd.f32 %v5146, %v4355
        %v5179 = vadd.f32 %v5147, %v4379
        %v5180 = vadd.f32 %v5148, %v4403
        %v5181 = vadd.f32 %v5149, %v4427
        %v5182 = vadd.f32 %v5150, %v4451
        %v5183 = vadd.f32 %v5151, %v4475
        %v5184 = vadd.f32 %v5152, %v4499
        %v5185 = vadd.f32 %v5153, %v4523
        %v5186 = vadd.f32 %v5154, %v4547
        %v5187 = vadd.f32 %v5155, %v4571
        %v5188 = vadd.f32 %v5156, %v4595
        %v5189 = vadd.f32 %v5157, %v4619
        %v5190 = vadd.f32 %v5158, %v4643
        %v5191 = vadd.f32 %v5159, %v4667
        %v5192 = vadd.f32 %v5160, %v4691
        %v5193 = vadd.f32 %v5161, %v4715
        %v5194 = vadd.f32 %v5162, %v4739
        %v5195 = vadd.f32 %v5163, %v4763
        %v5196 = vadd.f32 %v5164, %v4787
        %v5197 = vadd.f32 %v5165, %v4811
        %v5198 = vadd.f32 %v5166, %v4835
        %v5199 = vadd.f32 %v5167, %v4859
        %v5200 = vadd.f32 %v5168, %v4883
        %v5201 = vadd.f32 %v5169, %v4907
        %v5202 = vadd.f32 %v5170, %v4931
        %v5203 = vadd.f32 %v5171, %v4188
        %v5204 = vadd.f32 %v5172, %v4212
        %v5205 = vadd.f32 %v5173, %v4236
        %v5206 = vadd.f32 %v5174, %v4260
        %v5207 = vadd.f32 %v5175, %v4284
        %v5208 = vadd.f32 %v5176, %v4308
        %v5209 = vadd.f32 %v5177, %v4332
        %v5210 = vadd.f32 %v5178, %v4356
        %v5211 = vadd.f32 %v5179, %v4380
        %v5212 = vadd.f32 %v5180, %v4404
        %v5213 = vadd.f32 %v5181, %v4428
        %v5214 = vadd.f32 %v5182, %v4452
        %v5215 = vadd.f32 %v5183, %v4476
        %v5216 = vadd.f32 %v5184, %v4500
        %v5217 = vadd.f32 %v5185, %v4524
        %v5218 = vadd.f32 %v5186, %v4548
        %v5219 = vadd.f32 %v5187, %v4572
        %v5220 = vadd.f32 %v5188, %v4596
        %v5221 = vadd.f32 %v5189, %v4620
        %v5222 = vadd.f32 %v5190, %v4644
        %v5223 = vadd.f32 %v5191, %v4668
        %v5224 = vadd.f32 %v5192, %v4692
        %v5225 = vadd.f32 %v5193, %v4716
        %v5226 = vadd.f32 %v5194, %v4740
        %v5227 = vadd.f32 %v5195, %v4764
        %v5228 = vadd.f32 %v5196, %v4788
        %v5229 = vadd.f32 %v5197, %v4812
        %v5230 = vadd.f32 %v5198, %v4836
        %v5231 = vadd.f32 %v5199, %v4860
        %v5232 = vadd.f32 %v5200, %v4884
        %v5233 = vadd.f32 %v5201, %v4908
        %v5234 = vadd.f32 %v5202, %v4932
        %v5235 = vadd.f32 %v5203, %v4189
        %v5236 = vadd.f32 %v5204, %v4213
        %v5237 = vadd.f32 %v5205, %v4237
        %v5238 = vadd.f32 %v5206, %v4261
        %v5239 = vadd.f32 %v5207, %v4285
        %v5240 = vadd.f32 %v5208, %v4309
        %v5241 = vadd.f32 %v5209, %v4333
        %v5242 = vadd.f32 %v5210, %v4357
        %v5243 = vadd.f32 %v5211, %v4381
        %v5244 = vadd.f32 %v5212, %v4405
        %v5245 = vadd.f32 %v5213, %v4429
        %v5246 = vadd.f32 %v5214, %v4453
        %v5247 = vadd.f32 %v5215, %v4477
        %v5248 = vadd.f32 %v5216, %v4501
        %v5249 = vadd.f32 %v5217, %v4525
        %v5250 = vadd.f32 %v5218, %v4549
        %v5251 = vadd.f32 %v5219, %v4573
        %v5252 = vadd.f32 %v5220, %v4597
        %v5253 = vadd.f32 %v5221, %v4621
        %v5254 = vadd.f32 %v5222, %v4645
        %v5255 = vadd.f32 %v5223, %v4669
        %v5256 = vadd.f32 %v5224, %v4693
        %v5257 = vadd.f32 %v5225, %v4717
        %v5258 = vadd.f32 %v5226, %v4741
        %v5259 = vadd.f32 %v5227, %v4765
        %v5260 = vadd.f32 %v5228, %v4789
        %v5261 = vadd.f32 %v5229, %v4813
        %v5262 = vadd.f32 %v5230, %v4837
        %v5263 = vadd.f32 %v5231, %v4861
        %v5264 = vadd.f32 %v5232, %v4885
        %v5265 = vadd.f32 %v5233, %v4909
        %v5266 = vadd.f32 %v5234, %v4933
        %v5267 = vadd.f32 %v5235, %v4190
        %v5268 = vadd.f32 %v5236, %v4214
        %v5269 = vadd.f32 %v5237, %v4238
        %v5270 = vadd.f32 %v5238, %v4262
        %v5271 = vadd.f32 %v5239, %v4286
        %v5272 = vadd.f32 %v5240, %v4310
        %v5273 = vadd.f32 %v5241, %v4334
        %v5274 = vadd.f32 %v5242, %v4358
        %v5275 = vadd.f32 %v5243, %v4382
        %v5276 = vadd.f32 %v5244, %v4406
        %v5277 = vadd.f32 %v5245, %v4430
        %v5278 = vadd.f32 %v5246, %v4454
        %v5279 = vadd.f32 %v5247, %v4478
        %v5280 = vadd.f32 %v5248, %v4502
        %v5281 = vadd.f32 %v5249, %v4526
        %v5282 = vadd.f32 %v5250, %v4550
        %v5283 = vadd.f32 %v5251, %v4574
        %v5284 = vadd.f32 %v5252, %v4598
        %v5285 = vadd.f32 %v5253, %v4622
        %v5286 = vadd.f32 %v5254, %v4646
        %v5287 = vadd.f32 %v5255, %v4670
        %v5288 = vadd.f32 %v5256, %v4694
        %v5289 = vadd.f32 %v5257, %v4718
        %v5290 = vadd.f32 %v5258, %v4742
        %v5291 = vadd.f32 %v5259, %v4766
        %v5292 = vadd.f32 %v5260, %v4790
        %v5293 = vadd.f32 %v5261, %v4814
        %v5294 = vadd.f32 %v5262, %v4838
        %v5295 = vadd.f32 %v5263, %v4862
        %v5296 = vadd.f32 %v5264, %v4886
        %v5297 = vadd.f32 %v5265, %v4910
        %v5298 = vadd.f32 %v5266, %v4934
        %v5299 = vadd.f32 %v5267, %v4191
        %v5300 = vadd.f32 %v5268, %v4215
        %v5301 = vadd.f32 %v5269, %v4239
        %v5302 = vadd.f32 %v5270, %v4263
        %v5303 = vadd.f32 %v5271, %v4287
        %v5304 = vadd.f32 %v5272, %v4311
        %v5305 = vadd.f32 %v5273, %v4335
        %v5306 = vadd.f32 %v5274, %v4359
        %v5307 = vadd.f32 %v5275, %v4383
        %v5308 = vadd.f32 %v5276, %v4407
        %v5309 = vadd.f32 %v5277, %v4431
        %v5310 = vadd.f32 %v5278, %v4455
        %v5311 = vadd.f32 %v5279, %v4479
        %v5312 = vadd.f32 %v5280, %v4503
        %v5313 = vadd.f32 %v5281, %v4527
        %v5314 = vadd.f32 %v5282, %v4551
        %v5315 = vadd.f32 %v5283, %v4575
        %v5316 = vadd.f32 %v5284, %v4599
        %v5317 = vadd.f32 %v5285, %v4623
        %v5318 = vadd.f32 %v5286, %v4647
        %v5319 = vadd.f32 %v5287, %v4671
        %v5320 = vadd.f32 %v5288, %v4695
        %v5321 = vadd.f32 %v5289, %v4719
        %v5322 = vadd.f32 %v5290, %v4743
        %v5323 = vadd.f32 %v5291, %v4767
        %v5324 = vadd.f32 %v5292, %v4791
        %v5325 = vadd.f32 %v5293, %v4815
        %v5326 = vadd.f32 %v5294, %v4839
        %v5327 = vadd.f32 %v5295, %v4863
        %v5328 = vadd.f32 %v5296, %v4887
        %v5329 = vadd.f32 %v5297, %v4911
        %v5330 = vadd.f32 %v5298, %v4935
        %v5331 = vadd.f32 %v5299, %v4192
        %v5332 = vadd.f32 %v5300, %v4216
        %v5333 = vadd.f32 %v5301, %v4240
        %v5334 = vadd.f32 %v5302, %v4264
        %v5335 = vadd.f32 %v5303, %v4288
        %v5336 = vadd.f32 %v5304, %v4312
        %v5337 = vadd.f32 %v5305, %v4336
        %v5338 = vadd.f32 %v5306, %v4360
        %v5339 = vadd.f32 %v5307, %v4384
        %v5340 = vadd.f32 %v5308, %v4408
        %v5341 = vadd.f32 %v5309, %v4432
        %v5342 = vadd.f32 %v5310, %v4456
        %v5343 = vadd.f32 %v5311, %v4480
        %v5344 = vadd.f32 %v5312, %v4504
        %v5345 = vadd.f32 %v5313, %v4528
        %v5346 = vadd.f32 %v5314, %v4552
        %v5347 = vadd.f32 %v5315, %v4576
        %v5348 = vadd.f32 %v5316, %v4600
        %v5349 = vadd.f32 %v5317, %v4624
        %v5350 = vadd.f32 %v5318, %v4648
        %v5351 = vadd.f32 %v5319, %v4672
        %v5352 = vadd.f32 %v5320, %v4696
        %v5353 = vadd.f32 %v5321, %v4720
        %v5354 = vadd.f32 %v5322, %v4744
        %v5355 = vadd.f32 %v5323, %v4768
        %v5356 = vadd.f32 %v5324, %v4792
        %v5357 = vadd.f32 %v5325, %v4816
        %v5358 = vadd.f32 %v5326, %v4840
        %v5359 = vadd.f32 %v5327, %v4864
        %v5360 = vadd.f32 %v5328, %v4888
        %v5361 = vadd.f32 %v5329, %v4912
        %v5362 = vadd.f32 %v5330, %v4936
        %v5363 = vadd.f32 %v5331, %v4193
        %v5364 = vadd.f32 %v5332, %v4217
        %v5365 = vadd.f32 %v5333, %v4241
        %v5366 = vadd.f32 %v5334, %v4265
        %v5367 = vadd.f32 %v5335, %v4289
        %v5368 = vadd.f32 %v5336, %v4313
        %v5369 = vadd.f32 %v5337, %v4337
        %v5370 = vadd.f32 %v5338, %v4361
        %v5371 = vadd.f32 %v5339, %v4385
        %v5372 = vadd.f32 %v5340, %v4409
        %v5373 = vadd.f32 %v5341, %v4433
        %v5374 = vadd.f32 %v5342, %v4457
        %v5375 = vadd.f32 %v5343, %v4481
        %v5376 = vadd.f32 %v5344, %v4505
        %v5377 = vadd.f32 %v5345, %v4529
        %v5378 = vadd.f32 %v5346, %v4553
        %v5379 = vadd.f32 %v5347, %v4577
        %v5380 = vadd.f32 %v5348, %v4601
        %v5381 = vadd.f32 %v5349, %v4625
        %v5382 = vadd.f32 %v5350, %v4649
        %v5383 = vadd.f32 %v5351, %v4673
        %v5384 = vadd.f32 %v5352, %v4697
        %v5385 = vadd.f32 %v5353, %v4721
        %v5386 = vadd.f32 %v5354, %v4745
        %v5387 = vadd.f32 %v5355, %v4769
        %v5388 = vadd.f32 %v5356, %v4793
        %v5389 = vadd.f32 %v5357, %v4817
        %v5390 = vadd.f32 %v5358, %v4841
        %v5391 = vadd.f32 %v5359, %v4865
        %v5392 = vadd.f32 %v5360, %v4889
        %v5393 = vadd.f32 %v5361, %v4913
        %v5394 = vadd.f32 %v5362, %v4937
        %v5395 = vadd.f32 %v5363, %v4194
        %v5396 = vadd.f32 %v5364, %v4218
        %v5397 = vadd.f32 %v5365, %v4242
        %v5398 = vadd.f32 %v5366, %v4266
        %v5399 = vadd.f32 %v5367, %v4290
        %v5400 = vadd.f32 %v5368, %v4314
        %v5401 = vadd.f32 %v5369, %v4338
        %v5402 = vadd.f32 %v5370, %v4362
        %v5403 = vadd.f32 %v5371, %v4386
        %v5404 = vadd.f32 %v5372, %v4410
        %v5405 = vadd.f32 %v5373, %v4434
        %v5406 = vadd.f32 %v5374, %v4458
        %v5407 = vadd.f32 %v5375, %v4482
        %v5408 = vadd.f32 %v5376, %v4506
        %v5409 = vadd.f32 %v5377, %v4530
        %v5410 = vadd.f32 %v5378, %v4554
        %v5411 = vadd.f32 %v5379, %v4578
        %v5412 = vadd.f32 %v5380, %v4602
        %v5413 = vadd.f32 %v5381, %v4626
        %v5414 = vadd.f32 %v5382, %v4650
        %v5415 = vadd.f32 %v5383, %v4674
        %v5416 = vadd.f32 %v5384, %v4698
        %v5417 = vadd.f32 %v5385, %v4722
        %v5418 = vadd.f32 %v5386, %v4746
        %v5419 = vadd.f32 %v5387, %v4770
        %v5420 = vadd.f32 %v5388, %v4794
        %v5421 = vadd.f32 %v5389, %v4818
        %v5422 = vadd.f32 %v5390, %v4842
        %v5423 = vadd.f32 %v5391, %v4866
        %v5424 = vadd.f32 %v5392, %v4890
        %v5425 = vadd.f32 %v5393, %v4914
        %v5426 = vadd.f32 %v5394, %v4938
        %v5427 = vadd.f32 %v5395, %v4195
        %v5428 = vadd.f32 %v5396, %v4219
        %v5429 = vadd.f32 %v5397, %v4243
        %v5430 = vadd.f32 %v5398, %v4267
        %v5431 = vadd.f32 %v5399, %v4291
        %v5432 = vadd.f32 %v5400, %v4315
        %v5433 = vadd.f32 %v5401, %v4339
        %v5434 = vadd.f32 %v5402, %v4363
        %v5435 = vadd.f32 %v5403, %v4387
        %v5436 = vadd.f32 %v5404, %v4411
        %v5437 = vadd.f32 %v5405, %v4435
        %v5438 = vadd.f32 %v5406, %v4459
        %v5439 = vadd.f32 %v5407, %v4483
        %v5440 = vadd.f32 %v5408, %v4507
        %v5441 = vadd.f32 %v5409, %v4531
        %v5442 = vadd.f32 %v5410, %v4555
        %v5443 = vadd.f32 %v5411, %v4579
        %v5444 = vadd.f32 %v5412, %v4603
        %v5445 = vadd.f32 %v5413, %v4627
        %v5446 = vadd.f32 %v5414, %v4651
        %v5447 = vadd.f32 %v5415, %v4675
        %v5448 = vadd.f32 %v5416, %v4699
        %v5449 = vadd.f32 %v5417, %v4723
        %v5450 = vadd.f32 %v5418, %v4747
        %v5451 = vadd.f32 %v5419, %v4771
        %v5452 = vadd.f32 %v5420, %v4795
        %v5453 = vadd.f32 %v5421, %v4819
        %v5454 = vadd.f32 %v5422, %v4843
        %v5455 = vadd.f32 %v5423, %v4867
        %v5456 = vadd.f32 %v5424, %v4891
        %v5457 = vadd.f32 %v5425, %v4915
        %v5458 = vadd.f32 %v5426, %v4939
        %v5459 = vadd.f32 %v5427, %v4196
        %v5460 = vadd.f32 %v5428, %v4220
        %v5461 = vadd.f32 %v5429, %v4244
        %v5462 = vadd.f32 %v5430, %v4268
        %v5463 = vadd.f32 %v5431, %v4292
        %v5464 = vadd.f32 %v5432, %v4316
        %v5465 = vadd.f32 %v5433, %v4340
        %v5466 = vadd.f32 %v5434, %v4364
        %v5467 = vadd.f32 %v5435, %v4388
        %v5468 = vadd.f32 %v5436, %v4412
        %v5469 = vadd.f32 %v5437, %v4436
        %v5470 = vadd.f32 %v5438, %v4460
        %v5471 = vadd.f32 %v5439, %v4484
        %v5472 = vadd.f32 %v5440, %v4508
        %v5473 = vadd.f32 %v5441, %v4532
        %v5474 = vadd.f32 %v5442, %v4556
        %v5475 = vadd.f32 %v5443, %v4580
        %v5476 = vadd.f32 %v5444, %v4604
        %v5477 = vadd.f32 %v5445, %v4628
        %v5478 = vadd.f32 %v5446, %v4652
        %v5479 = vadd.f32 %v5447, %v4676
        %v5480 = vadd.f32 %v5448, %v4700
        %v5481 = vadd.f32 %v5449, %v4724
        %v5482 = vadd.f32 %v5450, %v4748
        %v5483 = vadd.f32 %v5451, %v4772
        %v5484 = vadd.f32 %v5452, %v4796
        %v5485 = vadd.f32 %v5453, %v4820
        %v5486 = vadd.f32 %v5454, %v4844
        %v5487 = vadd.f32 %v5455, %v4868
        %v5488 = vadd.f32 %v5456, %v4892
        %v5489 = vadd.f32 %v5457, %v4916
        %v5490 = vadd.f32 %v5458, %v4940
        %v5491 = vadd.f32 %v5459, %v4197
        %v5492 = vadd.f32 %v5460, %v4221
        %v5493 = vadd.f32 %v5461, %v4245
        %v5494 = vadd.f32 %v5462, %v4269
        %v5495 = vadd.f32 %v5463, %v4293
        %v5496 = vadd.f32 %v5464, %v4317
        %v5497 = vadd.f32 %v5465, %v4341
        %v5498 = vadd.f32 %v5466, %v4365
        %v5499 = vadd.f32 %v5467, %v4389
        %v5500 = vadd.f32 %v5468, %v4413
        %v5501 = vadd.f32 %v5469, %v4437
        %v5502 = vadd.f32 %v5470, %v4461
        %v5503 = vadd.f32 %v5471, %v4485
        %v5504 = vadd.f32 %v5472, %v4509
        %v5505 = vadd.f32 %v5473, %v4533
        %v5506 = vadd.f32 %v5474, %v4557
        %v5507 = vadd.f32 %v5475, %v4581
        %v5508 = vadd.f32 %v5476, %v4605
        %v5509 = vadd.f32 %v5477, %v4629
        %v5510 = vadd.f32 %v5478, %v4653
        %v5511 = vadd.f32 %v5479, %v4677
        %v5512 = vadd.f32 %v5480, %v4701
        %v5513 = vadd.f32 %v5481, %v4725
        %v5514 = vadd.f32 %v5482, %v4749
        %v5515 = vadd.f32 %v5483, %v4773
        %v5516 = vadd.f32 %v5484, %v4797
        %v5517 = vadd.f32 %v5485, %v4821
        %v5518 = vadd.f32 %v5486, %v4845
        %v5519 = vadd.f32 %v5487, %v4869
        %v5520 = vadd.f32 %v5488, %v4893
        %v5521 = vadd.f32 %v5489, %v4917
        %v5522 = vadd.f32 %v5490, %v4941
        %v5523 = vadd.f32 %v5491, %v4198
        %v5524 = vadd.f32 %v5492, %v4222
        %v5525 = vadd.f32 %v5493, %v4246
        %v5526 = vadd.f32 %v5494, %v4270
        %v5527 = vadd.f32 %v5495, %v4294
        %v5528 = vadd.f32 %v5496, %v4318
        %v5529 = vadd.f32 %v5497, %v4342
        %v5530 = vadd.f32 %v5498, %v4366
        %v5531 = vadd.f32 %v5499, %v4390
        %v5532 = vadd.f32 %v5500, %v4414
        %v5533 = vadd.f32 %v5501, %v4438
        %v5534 = vadd.f32 %v5502, %v4462
        %v5535 = vadd.f32 %v5503, %v4486
        %v5536 = vadd.f32 %v5504, %v4510
        %v5537 = vadd.f32 %v5505, %v4534
        %v5538 = vadd.f32 %v5506, %v4558
        %v5539 = vadd.f32 %v5507, %v4582
        %v5540 = vadd.f32 %v5508, %v4606
        %v5541 = vadd.f32 %v5509, %v4630
        %v5542 = vadd.f32 %v5510, %v4654
        %v5543 = vadd.f32 %v5511, %v4678
        %v5544 = vadd.f32 %v5512, %v4702
        %v5545 = vadd.f32 %v5513, %v4726
        %v5546 = vadd.f32 %v5514, %v4750
        %v5547 = vadd.f32 %v5515, %v4774
        %v5548 = vadd.f32 %v5516, %v4798
        %v5549 = vadd.f32 %v5517, %v4822
        %v5550 = vadd.f32 %v5518, %v4846
        %v5551 = vadd.f32 %v5519, %v4870
        %v5552 = vadd.f32 %v5520, %v4894
        %v5553 = vadd.f32 %v5521, %v4918
        %v5554 = vadd.f32 %v5522, %v4942
        %v5555 = vadd.f32 %v5523, %v4199
        %v5556 = vadd.f32 %v5524, %v4223
        %v5557 = vadd.f32 %v5525, %v4247
        %v5558 = vadd.f32 %v5526, %v4271
        %v5559 = vadd.f32 %v5527, %v4295
        %v5560 = vadd.f32 %v5528, %v4319
        %v5561 = vadd.f32 %v5529, %v4343
        %v5562 = vadd.f32 %v5530, %v4367
        %v5563 = vadd.f32 %v5531, %v4391
        %v5564 = vadd.f32 %v5532, %v4415
        %v5565 = vadd.f32 %v5533, %v4439
        %v5566 = vadd.f32 %v5534, %v4463
        %v5567 = vadd.f32 %v5535, %v4487
        %v5568 = vadd.f32 %v5536, %v4511
        %v5569 = vadd.f32 %v5537, %v4535
        %v5570 = vadd.f32 %v5538, %v4559
        %v5571 = vadd.f32 %v5539, %v4583
        %v5572 = vadd.f32 %v5540, %v4607
        %v5573 = vadd.f32 %v5541, %v4631
        %v5574 = vadd.f32 %v5542, %v4655
        %v5575 = vadd.f32 %v5543, %v4679
        %v5576 = vadd.f32 %v5544, %v4703
        %v5577 = vadd.f32 %v5545, %v4727
        %v5578 = vadd.f32 %v5546, %v4751
        %v5579 = vadd.f32 %v5547, %v4775
        %v5580 = vadd.f32 %v5548, %v4799
        %v5581 = vadd.f32 %v5549, %v4823
        %v5582 = vadd.f32 %v5550, %v4847
        %v5583 = vadd.f32 %v5551, %v4871
        %v5584 = vadd.f32 %v5552, %v4895
        %v5585 = vadd.f32 %v5553, %v4919
        %v5586 = vadd.f32 %v5554, %v4943
        %v5587 = vadd.f32 %v5555, %v4200
        %v5588 = vadd.f32 %v5556, %v4224
        %v5589 = vadd.f32 %v5557, %v4248
        %v5590 = vadd.f32 %v5558, %v4272
        %v5591 = vadd.f32 %v5559, %v4296
        %v5592 = vadd.f32 %v5560, %v4320
        %v5593 = vadd.f32 %v5561, %v4344
        %v5594 = vadd.f32 %v5562, %v4368
        %v5595 = vadd.f32 %v5563, %v4392
        %v5596 = vadd.f32 %v5564, %v4416
        %v5597 = vadd.f32 %v5565, %v4440
        %v5598 = vadd.f32 %v5566, %v4464
        %v5599 = vadd.f32 %v5567, %v4488
        %v5600 = vadd.f32 %v5568, %v4512
        %v5601 = vadd.f32 %v5569, %v4536
        %v5602 = vadd.f32 %v5570, %v4560
        %v5603 = vadd.f32 %v5571, %v4584
        %v5604 = vadd.f32 %v5572, %v4608
        %v5605 = vadd.f32 %v5573, %v4632
        %v5606 = vadd.f32 %v5574, %v4656
        %v5607 = vadd.f32 %v5575, %v4680
        %v5608 = vadd.f32 %v5576, %v4704
        %v5609 = vadd.f32 %v5577, %v4728
        %v5610 = vadd.f32 %v5578, %v4752
        %v5611 = vadd.f32 %v5579, %v4776
        %v5612 = vadd.f32 %v5580, %v4800
        %v5613 = vadd.f32 %v5581, %v4824
        %v5614 = vadd.f32 %v5582, %v4848
        %v5615 = vadd.f32 %v5583, %v4872
        %v5616 = vadd.f32 %v5584, %v4896
        %v5617 = vadd.f32 %v5585, %v4920
        %v5618 = vadd.f32 %v5586, %v4944
        %v5619 = vadd.f32 %v5587, %v4201
        %v5620 = vadd.f32 %v5588, %v4225
        %v5621 = vadd.f32 %v5589, %v4249
        %v5622 = vadd.f32 %v5590, %v4273
        %v5623 = vadd.f32 %v5591, %v4297
        %v5624 = vadd.f32 %v5592, %v4321
        %v5625 = vadd.f32 %v5593, %v4345
        %v5626 = vadd.f32 %v5594, %v4369
        %v5627 = vadd.f32 %v5595, %v4393
        %v5628 = vadd.f32 %v5596, %v4417
        %v5629 = vadd.f32 %v5597, %v4441
        %v5630 = vadd.f32 %v5598, %v4465
        %v5631 = vadd.f32 %v5599, %v4489
        %v5632 = vadd.f32 %v5600, %v4513
        %v5633 = vadd.f32 %v5601, %v4537
        %v5634 = vadd.f32 %v5602, %v4561
        %v5635 = vadd.f32 %v5603, %v4585
        %v5636 = vadd.f32 %v5604, %v4609
        %v5637 = vadd.f32 %v5605, %v4633
        %v5638 = vadd.f32 %v5606, %v4657
        %v5639 = vadd.f32 %v5607, %v4681
        %v5640 = vadd.f32 %v5608, %v4705
        %v5641 = vadd.f32 %v5609, %v4729
        %v5642 = vadd.f32 %v5610, %v4753
        %v5643 = vadd.f32 %v5611, %v4777
        %v5644 = vadd.f32 %v5612, %v4801
        %v5645 = vadd.f32 %v5613, %v4825
        %v5646 = vadd.f32 %v5614, %v4849
        %v5647 = vadd.f32 %v5615, %v4873
        %v5648 = vadd.f32 %v5616, %v4897
        %v5649 = vadd.f32 %v5617, %v4921
        %v5650 = vadd.f32 %v5618, %v4945
        %v5651 = vadd.f32 %v5619, %v4202
        %v5652 = vadd.f32 %v5620, %v4226
        %v5653 = vadd.f32 %v5621, %v4250
        %v5654 = vadd.f32 %v5622, %v4274
        %v5655 = vadd.f32 %v5623, %v4298
        %v5656 = vadd.f32 %v5624, %v4322
        %v5657 = vadd.f32 %v5625, %v4346
        %v5658 = vadd.f32 %v5626, %v4370
        %v5659 = vadd.f32 %v5627, %v4394
        %v5660 = vadd.f32 %v5628, %v4418
        %v5661 = vadd.f32 %v5629, %v4442
        %v5662 = vadd.f32 %v5630, %v4466
        %v5663 = vadd.f32 %v5631, %v4490
        %v5664 = vadd.f32 %v5632, %v4514
        %v5665 = vadd.f32 %v5633, %v4538
        %v5666 = vadd.f32 %v5634, %v4562
        %v5667 = vadd.f32 %v5635, %v4586
        %v5668 = vadd.f32 %v5636, %v4610
        %v5669 = vadd.f32 %v5637, %v4634
        %v5670 = vadd.f32 %v5638, %v4658
        %v5671 = vadd.f32 %v5639, %v4682
        %v5672 = vadd.f32 %v5640, %v4706
        %v5673 = vadd.f32 %v5641, %v4730
        %v5674 = vadd.f32 %v5642, %v4754
        %v5675 = vadd.f32 %v5643, %v4778
        %v5676 = vadd.f32 %v5644, %v4802
        %v5677 = vadd.f32 %v5645, %v4826
        %v5678 = vadd.f32 %v5646, %v4850
        %v5679 = vadd.f32 %v5647, %v4874
        %v5680 = vadd.f32 %v5648, %v4898
        %v5681 = vadd.f32 %v5649, %v4922
        %v5682 = vadd.f32 %v5650, %v4946
        %v5683 = vmul.f32 %v5651, 0.041666668
        %v5684 = vmul.f32 %v5652, 0.041666668
        %v5685 = vmul.f32 %v5653, 0.041666668
        %v5686 = vmul.f32 %v5654, 0.041666668
        %v5687 = vmul.f32 %v5655, 0.041666668
        %v5688 = vmul.f32 %v5656, 0.041666668
        %v5689 = vmul.f32 %v5657, 0.041666668
        %v5690 = vmul.f32 %v5658, 0.041666668
        %v5691 = vmul.f32 %v5659, 0.041666668
        %v5692 = vmul.f32 %v5660, 0.041666668
        %v5693 = vmul.f32 %v5661, 0.041666668
        %v5694 = vmul.f32 %v5662, 0.041666668
        %v5695 = vmul.f32 %v5663, 0.041666668
        %v5696 = vmul.f32 %v5664, 0.041666668
        %v5697 = vmul.f32 %v5665, 0.041666668
        %v5698 = vmul.f32 %v5666, 0.041666668
        %v5699 = vmul.f32 %v5667, 0.041666668
        %v5700 = vmul.f32 %v5668, 0.041666668
        %v5701 = vmul.f32 %v5669, 0.041666668
        %v5702 = vmul.f32 %v5670, 0.041666668
        %v5703 = vmul.f32 %v5671, 0.041666668
        %v5704 = vmul.f32 %v5672, 0.041666668
        %v5705 = vmul.f32 %v5673, 0.041666668
        %v5706 = vmul.f32 %v5674, 0.041666668
        %v5707 = vmul.f32 %v5675, 0.041666668
        %v5708 = vmul.f32 %v5676, 0.041666668
        %v5709 = vmul.f32 %v5677, 0.041666668
        %v5710 = vmul.f32 %v5678, 0.041666668
        %v5711 = vmul.f32 %v5679, 0.041666668
        %v5712 = vmul.f32 %v5680, 0.041666668
        %v5713 = vmul.f32 %v5681, 0.041666668
        %v5714 = vmul.f32 %v5682, 0.041666668
        %v5715 = vld [vmem:[%s3] sm:$0xff]
        %v5716 = vld [vmem:[%s3 + $0x8] sm:$0xff]
        %v5717 = vld [vmem:[%s3 + $0x10] sm:$0xff]
        %v5718 = vld [vmem:[%s3 + $0x18] sm:$0xff]
        %v5719 = vld [vmem:[%s3 + $0x20] sm:$0xff]
        %v5720 = vld [vmem:[%s3 + $0x28] sm:$0xff]
        %v5721 = vld [vmem:[%s3 + $0x30] sm:$0xff]
        %v5722 = vld [vmem:[%s3 + $0x38] sm:$0xff]
        %v5723 = vld [vmem:[%s3 + $0x40] sm:$0xff]
        %v5724 = vld [vmem:[%s3 + $0x48] sm:$0xff]
        %v5725 = vld [vmem:[%s3 + $0x50] sm:$0xff]
        %v5726 = vld [vmem:[%s3 + $0x58] sm:$0xff]
        %v5727 = vld [vmem:[%s3 + $0x60] sm:$0xff]
        %v5728 = vld [vmem:[%s3 + $0x68] sm:$0xff]
        %v5729 = vld [vmem:[%s3 + $0x70] sm:$0xff]
        %v5730 = vld [vmem:[%s3 + $0x78] sm:$0xff]
        %v5731 = vld [vmem:[#allocation7] sm:$0x1]
        %v5733 = vlaneseq
        %v5734 = vshrl.u32 %v5733, 7
        %v5735 = vsub.s32 0, %v5734
        %v5736 = vrot.slane %v5731, %v5735
        %5738 = vmatprep.subr.mxu0 0.0
        %5739 = vmatpush1.msra.mxu0 %v5730
        %5740 = vmatprep.subr.mxu0 0.0
        %5741 = vmatpush1.msra.mxu0 %v5729
        %5742 = vmatprep.subr.mxu0 0.0
        %5743 = vmatpush1.msra.mxu0 %v5728
        %5744 = vmatprep.subr.mxu0 0.0
        %5745 = vmatpush1.msra.mxu0 %v5727
        %5746 = vmatprep.subr.mxu0 0.0
        %5747 = vmatpush1.msra.mxu0 %v5726
        %5748 = vmatprep.subr.mxu0 0.0
        %5749 = vmatpush1.msra.mxu0 %v5725
        %5750 = vmatprep.subr.mxu0 0.0
        %5751 = vmatpush1.msra.mxu0 %v5724
        %5752 = vmatprep.subr.mxu0 0.0
        %5753 = vmatpush1.msra.mxu0 %v5723
        %5754 = vmatprep.subr.mxu0 0.0
        %5755 = vmatpush1.msra.mxu0 %v5722
        %5756 = vmatprep.subr.mxu0 0.0
        %5757 = vmatpush1.msra.mxu0 %v5721
        %5758 = vmatprep.subr.mxu0 0.0
        %5759 = vmatpush1.msra.mxu0 %v5720
        %5760 = vmatprep.subr.mxu0 0.0
        %5761 = vmatpush1.msra.mxu0 %v5719
        %5762 = vmatprep.subr.mxu0 0.0
        %5763 = vmatpush1.msra.mxu0 %v5718
        %5764 = vmatprep.subr.mxu0 0.0
        %5765 = vmatpush1.msra.mxu0 %v5717
        %5766 = vmatprep.subr.mxu0 0.0
        %5767 = vmatpush1.msra.mxu0 %v5716
        %5768 = vmatprep.subr.mxu0 0.0
        %5769 = vmatpush1.msra.mxu0 %v5715
        %5770 = vmatprep.subr.mxu0 0.0
        %5771 = vmatpush2.msra.mxu0 0.0
        %5772 = vmatprep.subr.mxu0 0.0
        %5773 = vmatpush2.msra.mxu0 0.0
        %5774 = vmatprep.subr.mxu0 0.0
        %5775 = vmatpush2.msra.mxu0 0.0
        %5776 = vmatprep.subr.mxu0 0.0
        %5777 = vmatpush2.msra.mxu0 0.0
        %5778 = vmatprep.subr.mxu0 0.0
        %5779 = vmatpush2.msra.mxu0 0.0
        %5780 = vmatprep.subr.mxu0 0.0
        %5781 = vmatpush2.msra.mxu0 0.0
        %5782 = vmatprep.subr.mxu0 0.0
        %5783 = vmatpush2.msra.mxu0 0.0
        %5784 = vmatprep.subr.mxu0 0.0
        %5785 = vmatpush2.msra.mxu0 0.0
        %5786 = vmatprep.subr.mxu0 0.0
        %5787 = vmatpush2.msra.mxu0 0.0
        %5788 = vmatprep.subr.mxu0 0.0
        %5789 = vmatpush2.msra.mxu0 0.0
        %5790 = vmatprep.subr.mxu0 0.0
        %5791 = vmatpush2.msra.mxu0 0.0
        %5792 = vmatprep.subr.mxu0 0.0
        %5793 = vmatpush2.msra.mxu0 0.0
        %5794 = vmatprep.subr.mxu0 0.0
        %5795 = vmatpush2.msra.mxu0 0.0
        %5796 = vmatprep.subr.mxu0 0.0
        %5797 = vmatpush2.msra.mxu0 0.0
        %5798 = vmatprep.subr.mxu0 0.0
        %5799 = vmatpush2.msra.mxu0 0.0
        %5800 = vmatprep.subr.mxu0 0.0
        %5801 = vmatpush2.msra.mxu0 0.0
        %5802 = vmatprep.mubr.f32.mxu0 0.0
        %5803 = vmatmul.mubr.f32.gmra.mxu0 %v5683
        %v5804 = vpop.f32.mrf.mxu0
        %v5805 = vadd.f32 %v5736, %v5804
        %v5806 = vpop.f32.mrf.mxu0
        %5807 = vmatprep.mubr.f32.mxu0 0.0
        %5808 = vmatmul.mubr.f32.gmra.mxu0 %v5684
        %v5809 = vpop.f32.mrf.mxu0
        %v5810 = vadd.f32 %v5736, %v5809
        %v5811 = vpop.f32.mrf.mxu0
        %5812 = vmatprep.mubr.f32.mxu0 0.0
        %5813 = vmatmul.mubr.f32.gmra.mxu0 %v5685
        %v5814 = vpop.f32.mrf.mxu0
        %v5815 = vadd.f32 %v5736, %v5814
        %v5816 = vpop.f32.mrf.mxu0
        %5817 = vmatprep.mubr.f32.mxu0 0.0
        %5818 = vmatmul.mubr.f32.gmra.mxu0 %v5686
        %v5819 = vpop.f32.mrf.mxu0
        %v5820 = vadd.f32 %v5736, %v5819
        %v5821 = vpop.f32.mrf.mxu0
        %5822 = vmatprep.mubr.f32.mxu0 0.0
        %5823 = vmatmul.mubr.f32.gmra.mxu0 %v5687
        %v5824 = vpop.f32.mrf.mxu0
        %v5825 = vadd.f32 %v5736, %v5824
        %v5826 = vpop.f32.mrf.mxu0
        %5827 = vmatprep.mubr.f32.mxu0 0.0
        %5828 = vmatmul.mubr.f32.gmra.mxu0 %v5688
        %v5829 = vpop.f32.mrf.mxu0
        %v5830 = vadd.f32 %v5736, %v5829
        %v5831 = vpop.f32.mrf.mxu0
        %5832 = vmatprep.mubr.f32.mxu0 0.0
        %5833 = vmatmul.mubr.f32.gmra.mxu0 %v5689
        %v5834 = vpop.f32.mrf.mxu0
        %v5835 = vadd.f32 %v5736, %v5834
        %v5836 = vpop.f32.mrf.mxu0
        %5837 = vmatprep.mubr.f32.mxu0 0.0
        %5838 = vmatmul.mubr.f32.gmra.mxu0 %v5690
        %v5839 = vpop.f32.mrf.mxu0
        %v5840 = vadd.f32 %v5736, %v5839
        %v5841 = vpop.f32.mrf.mxu0
        %5842 = vmatprep.mubr.f32.mxu0 0.0
        %5843 = vmatmul.mubr.f32.gmra.mxu0 %v5691
        %v5844 = vpop.f32.mrf.mxu0
        %v5845 = vadd.f32 %v5736, %v5844
        %v5846 = vpop.f32.mrf.mxu0
        %5847 = vmatprep.mubr.f32.mxu0 0.0
        %5848 = vmatmul.mubr.f32.gmra.mxu0 %v5692
        %v5849 = vpop.f32.mrf.mxu0
        %v5850 = vadd.f32 %v5736, %v5849
        %v5851 = vpop.f32.mrf.mxu0
        %5852 = vmatprep.mubr.f32.mxu0 0.0
        %5853 = vmatmul.mubr.f32.gmra.mxu0 %v5693
        %v5854 = vpop.f32.mrf.mxu0
        %v5855 = vadd.f32 %v5736, %v5854
        %v5856 = vpop.f32.mrf.mxu0
        %5857 = vmatprep.mubr.f32.mxu0 0.0
        %5858 = vmatmul.mubr.f32.gmra.mxu0 %v5694
        %v5859 = vpop.f32.mrf.mxu0
        %v5860 = vadd.f32 %v5736, %v5859
        %v5861 = vpop.f32.mrf.mxu0
        %5862 = vmatprep.mubr.f32.mxu0 0.0
        %5863 = vmatmul.mubr.f32.gmra.mxu0 %v5695
        %v5864 = vpop.f32.mrf.mxu0
        %v5865 = vadd.f32 %v5736, %v5864
        %v5866 = vpop.f32.mrf.mxu0
        %5867 = vmatprep.mubr.f32.mxu0 0.0
        %5868 = vmatmul.mubr.f32.gmra.mxu0 %v5696
        %v5869 = vpop.f32.mrf.mxu0
        %v5870 = vadd.f32 %v5736, %v5869
        %v5871 = vpop.f32.mrf.mxu0
        %5872 = vmatprep.mubr.f32.mxu0 0.0
        %5873 = vmatmul.mubr.f32.gmra.mxu0 %v5697
        %v5874 = vpop.f32.mrf.mxu0
        %v5875 = vadd.f32 %v5736, %v5874
        %v5876 = vpop.f32.mrf.mxu0
        %5877 = vmatprep.mubr.f32.mxu0 0.0
        %5878 = vmatmul.mubr.f32.gmra.mxu0 %v5698
        %v5879 = vpop.f32.mrf.mxu0
        %v5880 = vadd.f32 %v5736, %v5879
        %v5881 = vpop.f32.mrf.mxu0
        %5882 = vmatprep.mubr.f32.mxu0 0.0
        %5883 = vmatmul.mubr.f32.gmra.mxu0 %v5699
        %v5884 = vpop.f32.mrf.mxu0
        %v5885 = vadd.f32 %v5736, %v5884
        %v5886 = vpop.f32.mrf.mxu0
        %5887 = vmatprep.mubr.f32.mxu0 0.0
        %5888 = vmatmul.mubr.f32.gmra.mxu0 %v5700
        %v5889 = vpop.f32.mrf.mxu0
        %v5890 = vadd.f32 %v5736, %v5889
        %v5891 = vpop.f32.mrf.mxu0
        %5892 = vmatprep.mubr.f32.mxu0 0.0
        %5893 = vmatmul.mubr.f32.gmra.mxu0 %v5701
        %v5894 = vpop.f32.mrf.mxu0
        %v5895 = vadd.f32 %v5736, %v5894
        %v5896 = vpop.f32.mrf.mxu0
        %5897 = vmatprep.mubr.f32.mxu0 0.0
        %5898 = vmatmul.mubr.f32.gmra.mxu0 %v5702
        %v5899 = vpop.f32.mrf.mxu0
        %v5900 = vadd.f32 %v5736, %v5899
        %v5901 = vpop.f32.mrf.mxu0
        %5902 = vmatprep.mubr.f32.mxu0 0.0
        %5903 = vmatmul.mubr.f32.gmra.mxu0 %v5703
        %v5904 = vpop.f32.mrf.mxu0
        %v5905 = vadd.f32 %v5736, %v5904
        %v5906 = vpop.f32.mrf.mxu0
        %5907 = vmatprep.mubr.f32.mxu0 0.0
        %5908 = vmatmul.mubr.f32.gmra.mxu0 %v5704
        %v5909 = vpop.f32.mrf.mxu0
        %v5910 = vadd.f32 %v5736, %v5909
        %v5911 = vpop.f32.mrf.mxu0
        %5912 = vmatprep.mubr.f32.mxu0 0.0
        %5913 = vmatmul.mubr.f32.gmra.mxu0 %v5705
        %v5914 = vpop.f32.mrf.mxu0
        %v5915 = vadd.f32 %v5736, %v5914
        %v5916 = vpop.f32.mrf.mxu0
        %5917 = vmatprep.mubr.f32.mxu0 0.0
        %5918 = vmatmul.mubr.f32.gmra.mxu0 %v5706
        %v5919 = vpop.f32.mrf.mxu0
        %v5920 = vadd.f32 %v5736, %v5919
        %v5921 = vpop.f32.mrf.mxu0
        %5922 = vmatprep.mubr.f32.mxu0 0.0
        %5923 = vmatmul.mubr.f32.gmra.mxu0 %v5707
        %v5924 = vpop.f32.mrf.mxu0
        %v5925 = vadd.f32 %v5736, %v5924
        %v5926 = vpop.f32.mrf.mxu0
        %5927 = vmatprep.mubr.f32.mxu0 0.0
        %5928 = vmatmul.mubr.f32.gmra.mxu0 %v5708
        %v5929 = vpop.f32.mrf.mxu0
        %v5930 = vadd.f32 %v5736, %v5929
        %v5931 = vpop.f32.mrf.mxu0
        %5932 = vmatprep.mubr.f32.mxu0 0.0
        %5933 = vmatmul.mubr.f32.gmra.mxu0 %v5709
        %v5934 = vpop.f32.mrf.mxu0
        %v5935 = vadd.f32 %v5736, %v5934
        %v5936 = vpop.f32.mrf.mxu0
        %5937 = vmatprep.mubr.f32.mxu0 0.0
        %5938 = vmatmul.mubr.f32.gmra.mxu0 %v5710
        %v5939 = vpop.f32.mrf.mxu0
        %v5940 = vadd.f32 %v5736, %v5939
        %v5941 = vpop.f32.mrf.mxu0
        %5942 = vmatprep.mubr.f32.mxu0 0.0
        %5943 = vmatmul.mubr.f32.gmra.mxu0 %v5711
        %v5944 = vpop.f32.mrf.mxu0
        %v5945 = vadd.f32 %v5736, %v5944
        %v5946 = vpop.f32.mrf.mxu0
        %5947 = vmatprep.mubr.f32.mxu0 0.0
        %5948 = vmatmul.mubr.f32.gmra.mxu0 %v5712
        %v5949 = vpop.f32.mrf.mxu0
        %v5950 = vadd.f32 %v5736, %v5949
        %v5951 = vpop.f32.mrf.mxu0
        %5952 = vmatprep.mubr.f32.mxu0 0.0
        %5953 = vmatmul.mubr.f32.gmra.mxu0 %v5713
        %v5954 = vpop.f32.mrf.mxu0
        %v5955 = vadd.f32 %v5736, %v5954
        %v5956 = vpop.f32.mrf.mxu0
        %5957 = vmatprep.mubr.f32.mxu0 0.0
        %5958 = vmatmul.mubr.f32.gmra.mxu0 %v5714
        %v5959 = vpop.f32.mrf.mxu0
        %v5960 = vadd.f32 %v5736, %v5959
        %v5961 = vpop.f32.mrf.mxu0
        %5962 = vdwg.mxu0
        %v5963 = vmax.f32 %v5805, 0.0
        %v5964 = vmax.f32 %v5810, 0.0
        %v5965 = vmax.f32 %v5815, 0.0
        %v5966 = vmax.f32 %v5820, 0.0
        %v5967 = vmax.f32 %v5825, 0.0
        %v5968 = vmax.f32 %v5830, 0.0
        %v5969 = vmax.f32 %v5835, 0.0
        %v5970 = vmax.f32 %v5840, 0.0
        %v5971 = vmax.f32 %v5845, 0.0
        %v5972 = vmax.f32 %v5850, 0.0
        %v5973 = vmax.f32 %v5855, 0.0
        %v5974 = vmax.f32 %v5860, 0.0
        %v5975 = vmax.f32 %v5865, 0.0
        %v5976 = vmax.f32 %v5870, 0.0
        %v5977 = vmax.f32 %v5875, 0.0
        %v5978 = vmax.f32 %v5880, 0.0
        %v5979 = vmax.f32 %v5885, 0.0
        %v5980 = vmax.f32 %v5890, 0.0
        %v5981 = vmax.f32 %v5895, 0.0
        %v5982 = vmax.f32 %v5900, 0.0
        %v5983 = vmax.f32 %v5905, 0.0
        %v5984 = vmax.f32 %v5910, 0.0
        %v5985 = vmax.f32 %v5915, 0.0
        %v5986 = vmax.f32 %v5920, 0.0
        %v5987 = vmax.f32 %v5925, 0.0
        %v5988 = vmax.f32 %v5930, 0.0
        %v5989 = vmax.f32 %v5935, 0.0
        %v5990 = vmax.f32 %v5940, 0.0
        %v5991 = vmax.f32 %v5945, 0.0
        %v5992 = vmax.f32 %v5950, 0.0
        %v5993 = vmax.f32 %v5955, 0.0
        %v5994 = vmax.f32 %v5960, 0.0
        %v5995 = vld [vmem:[%s5] sm:$0xff]
        %v5996 = vld [vmem:[%s5 + $0x8] sm:$0xff]
        %v5997 = vld [vmem:[%s5 + $0x10] sm:$0xff]
        %v5998 = vld [vmem:[%s5 + $0x18] sm:$0xff]
        %v5999 = vld [vmem:[%s5 + $0x20] sm:$0xff]
        %v6000 = vld [vmem:[%s5 + $0x28] sm:$0xff]
        %v6001 = vld [vmem:[%s5 + $0x30] sm:$0xff]
        %v6002 = vld [vmem:[%s5 + $0x38] sm:$0xff]
        %v6003 = vld [vmem:[#allocation9] sm:$0x1]
        %v6005 = vlaneseq
        %v6006 = vshrl.u32 %v6005, 7
        %v6007 = vsub.s32 0, %v6006
        %v6008 = vrot.slane %v6003, %v6007
        %vm6010 = vcmask 523264
        %v6012 = vsel %vm6010, %v5963, 0
        %v6015 = vsel %vm6010, %v5964, 0
        %v6018 = vsel %vm6010, %v5965, 0
        %v6021 = vsel %vm6010, %v5966, 0
        %v6024 = vsel %vm6010, %v5967, 0
        %v6027 = vsel %vm6010, %v5968, 0
        %v6030 = vsel %vm6010, %v5969, 0
        %v6033 = vsel %vm6010, %v5970, 0
        %v6036 = vsel %vm6010, %v5971, 0
        %v6039 = vsel %vm6010, %v5972, 0
        %v6042 = vsel %vm6010, %v5973, 0
        %v6045 = vsel %vm6010, %v5974, 0
        %v6048 = vsel %vm6010, %v5975, 0
        %v6051 = vsel %vm6010, %v5976, 0
        %v6054 = vsel %vm6010, %v5977, 0
        %v6057 = vsel %vm6010, %v5978, 0
        %v6060 = vsel %vm6010, %v5979, 0
        %v6063 = vsel %vm6010, %v5980, 0
        %v6066 = vsel %vm6010, %v5981, 0
        %v6069 = vsel %vm6010, %v5982, 0
        %v6072 = vsel %vm6010, %v5983, 0
        %v6075 = vsel %vm6010, %v5984, 0
        %v6078 = vsel %vm6010, %v5985, 0
        %v6081 = vsel %vm6010, %v5986, 0
        %v6084 = vsel %vm6010, %v5987, 0
        %v6087 = vsel %vm6010, %v5988, 0
        %v6090 = vsel %vm6010, %v5989, 0
        %v6093 = vsel %vm6010, %v5990, 0
        %v6096 = vsel %vm6010, %v5991, 0
        %v6099 = vsel %vm6010, %v5992, 0
        %v6102 = vsel %vm6010, %v5993, 0
        %v6105 = vsel %vm6010, %v5994, 0
        %6107 = vmatprep.subr.mxu0 0.0
        %6108 = vmatpush1.msra.mxu0 0.0
        %6109 = vmatprep.subr.mxu0 0.0
        %6110 = vmatpush1.msra.mxu0 0.0
        %6111 = vmatprep.subr.mxu0 0.0
        %6112 = vmatpush1.msra.mxu0 0.0
        %6113 = vmatprep.subr.mxu0 0.0
        %6114 = vmatpush1.msra.mxu0 0.0
        %6115 = vmatprep.subr.mxu0 0.0
        %6116 = vmatpush1.msra.mxu0 0.0
        %6117 = vmatprep.subr.mxu0 0.0
        %6118 = vmatpush1.msra.mxu0 0.0
        %6119 = vmatprep.subr.mxu0 0.0
        %6120 = vmatpush1.msra.mxu0 0.0
        %6121 = vmatprep.subr.mxu0 0.0
        %6122 = vmatpush1.msra.mxu0 0.0
        %6123 = vmatprep.subr.mxu0 0.0
        %6124 = vmatpush1.msra.mxu0 %v6002
        %6125 = vmatprep.subr.mxu0 0.0
        %6126 = vmatpush1.msra.mxu0 %v6001
        %6127 = vmatprep.subr.mxu0 0.0
        %6128 = vmatpush1.msra.mxu0 %v6000
        %6129 = vmatprep.subr.mxu0 0.0
        %6130 = vmatpush1.msra.mxu0 %v5999
        %6131 = vmatprep.subr.mxu0 0.0
        %6132 = vmatpush1.msra.mxu0 %v5998
        %6133 = vmatprep.subr.mxu0 0.0
        %6134 = vmatpush1.msra.mxu0 %v5997
        %6135 = vmatprep.subr.mxu0 0.0
        %6136 = vmatpush1.msra.mxu0 %v5996
        %6137 = vmatprep.subr.mxu0 0.0
        %6138 = vmatpush1.msra.mxu0 %v5995
        %6139 = vmatprep.subr.mxu0 0.0
        %6140 = vmatpush2.msra.mxu0 0.0
        %6141 = vmatprep.subr.mxu0 0.0
        %6142 = vmatpush2.msra.mxu0 0.0
        %6143 = vmatprep.subr.mxu0 0.0
        %6144 = vmatpush2.msra.mxu0 0.0
        %6145 = vmatprep.subr.mxu0 0.0
        %6146 = vmatpush2.msra.mxu0 0.0
        %6147 = vmatprep.subr.mxu0 0.0
        %6148 = vmatpush2.msra.mxu0 0.0
        %6149 = vmatprep.subr.mxu0 0.0
        %6150 = vmatpush2.msra.mxu0 0.0
        %6151 = vmatprep.subr.mxu0 0.0
        %6152 = vmatpush2.msra.mxu0 0.0
        %6153 = vmatprep.subr.mxu0 0.0
        %6154 = vmatpush2.msra.mxu0 0.0
        %6155 = vmatprep.subr.mxu0 0.0
        %6156 = vmatpush2.msra.mxu0 0.0
        %6157 = vmatprep.subr.mxu0 0.0
        %6158 = vmatpush2.msra.mxu0 0.0
        %6159 = vmatprep.subr.mxu0 0.0
        %6160 = vmatpush2.msra.mxu0 0.0
        %6161 = vmatprep.subr.mxu0 0.0
        %6162 = vmatpush2.msra.mxu0 0.0
        %6163 = vmatprep.subr.mxu0 0.0
        %6164 = vmatpush2.msra.mxu0 0.0
        %6165 = vmatprep.subr.mxu0 0.0
        %6166 = vmatpush2.msra.mxu0 0.0
        %6167 = vmatprep.subr.mxu0 0.0
        %6168 = vmatpush2.msra.mxu0 0.0
        %6169 = vmatprep.subr.mxu0 0.0
        %6170 = vmatpush2.msra.mxu0 0.0
        %6171 = vmatprep.mubr.f32.mxu0 0.0
        %6172 = vmatmul.mubr.f32.gmra.mxu0 %v6012
        %v6173 = vpop.f32.mrf.mxu0
        %v6174 = vadd.f32 %v6008, %v6173
        %v6175 = vpop.f32.mrf.mxu0
        %6176 = vmatprep.mubr.f32.mxu0 0.0
        %6177 = vmatmul.mubr.f32.gmra.mxu0 %v6015
        %v6178 = vpop.f32.mrf.mxu0
        %v6179 = vadd.f32 %v6008, %v6178
        %v6180 = vpop.f32.mrf.mxu0
        %6181 = vmatprep.mubr.f32.mxu0 0.0
        %6182 = vmatmul.mubr.f32.gmra.mxu0 %v6018
        %v6183 = vpop.f32.mrf.mxu0
        %v6184 = vadd.f32 %v6008, %v6183
        %v6185 = vpop.f32.mrf.mxu0
        %6186 = vmatprep.mubr.f32.mxu0 0.0
        %6187 = vmatmul.mubr.f32.gmra.mxu0 %v6021
        %v6188 = vpop.f32.mrf.mxu0
        %v6189 = vadd.f32 %v6008, %v6188
        %v6190 = vpop.f32.mrf.mxu0
        %6191 = vmatprep.mubr.f32.mxu0 0.0
        %6192 = vmatmul.mubr.f32.gmra.mxu0 %v6024
        %v6193 = vpop.f32.mrf.mxu0
        %v6194 = vadd.f32 %v6008, %v6193
        %v6195 = vpop.f32.mrf.mxu0
        %6196 = vmatprep.mubr.f32.mxu0 0.0
        %6197 = vmatmul.mubr.f32.gmra.mxu0 %v6027
        %v6198 = vpop.f32.mrf.mxu0
        %v6199 = vadd.f32 %v6008, %v6198
        %v6200 = vpop.f32.mrf.mxu0
        %6201 = vmatprep.mubr.f32.mxu0 0.0
        %6202 = vmatmul.mubr.f32.gmra.mxu0 %v6030
        %v6203 = vpop.f32.mrf.mxu0
        %v6204 = vadd.f32 %v6008, %v6203
        %v6205 = vpop.f32.mrf.mxu0
        %6206 = vmatprep.mubr.f32.mxu0 0.0
        %6207 = vmatmul.mubr.f32.gmra.mxu0 %v6033
        %v6208 = vpop.f32.mrf.mxu0
        %v6209 = vadd.f32 %v6008, %v6208
        %v6210 = vpop.f32.mrf.mxu0
        %6211 = vmatprep.mubr.f32.mxu0 0.0
        %6212 = vmatmul.mubr.f32.gmra.mxu0 %v6036
        %v6213 = vpop.f32.mrf.mxu0
        %v6214 = vadd.f32 %v6008, %v6213
        %v6215 = vpop.f32.mrf.mxu0
        %6216 = vmatprep.mubr.f32.mxu0 0.0
        %6217 = vmatmul.mubr.f32.gmra.mxu0 %v6039
        %v6218 = vpop.f32.mrf.mxu0
        %v6219 = vadd.f32 %v6008, %v6218
        %v6220 = vpop.f32.mrf.mxu0
        %6221 = vmatprep.mubr.f32.mxu0 0.0
        %6222 = vmatmul.mubr.f32.gmra.mxu0 %v6042
        %v6223 = vpop.f32.mrf.mxu0
        %v6224 = vadd.f32 %v6008, %v6223
        %v6225 = vpop.f32.mrf.mxu0
        %6226 = vmatprep.mubr.f32.mxu0 0.0
        %6227 = vmatmul.mubr.f32.gmra.mxu0 %v6045
        %v6228 = vpop.f32.mrf.mxu0
        %v6229 = vadd.f32 %v6008, %v6228
        %v6230 = vpop.f32.mrf.mxu0
        %6231 = vmatprep.mubr.f32.mxu0 0.0
        %6232 = vmatmul.mubr.f32.gmra.mxu0 %v6048
        %v6233 = vpop.f32.mrf.mxu0
        %v6234 = vadd.f32 %v6008, %v6233
        %v6235 = vpop.f32.mrf.mxu0
        %6236 = vmatprep.mubr.f32.mxu0 0.0
        %6237 = vmatmul.mubr.f32.gmra.mxu0 %v6051
        %v6238 = vpop.f32.mrf.mxu0
        %v6239 = vadd.f32 %v6008, %v6238
        %v6240 = vpop.f32.mrf.mxu0
        %6241 = vmatprep.mubr.f32.mxu0 0.0
        %6242 = vmatmul.mubr.f32.gmra.mxu0 %v6054
        %v6243 = vpop.f32.mrf.mxu0
        %v6244 = vadd.f32 %v6008, %v6243
        %v6245 = vpop.f32.mrf.mxu0
        %6246 = vmatprep.mubr.f32.mxu0 0.0
        %6247 = vmatmul.mubr.f32.gmra.mxu0 %v6057
        %v6248 = vpop.f32.mrf.mxu0
        %v6249 = vadd.f32 %v6008, %v6248
        %v6250 = vpop.f32.mrf.mxu0
        %6251 = vmatprep.mubr.f32.mxu0 0.0
        %6252 = vmatmul.mubr.f32.gmra.mxu0 %v6060
        %v6253 = vpop.f32.mrf.mxu0
        %v6254 = vadd.f32 %v6008, %v6253
        %v6255 = vpop.f32.mrf.mxu0
        %6256 = vmatprep.mubr.f32.mxu0 0.0
        %6257 = vmatmul.mubr.f32.gmra.mxu0 %v6063
        %v6258 = vpop.f32.mrf.mxu0
        %v6259 = vadd.f32 %v6008, %v6258
        %v6260 = vpop.f32.mrf.mxu0
        %6261 = vmatprep.mubr.f32.mxu0 0.0
        %6262 = vmatmul.mubr.f32.gmra.mxu0 %v6066
        %v6263 = vpop.f32.mrf.mxu0
        %v6264 = vadd.f32 %v6008, %v6263
        %v6265 = vpop.f32.mrf.mxu0
        %6266 = vmatprep.mubr.f32.mxu0 0.0
        %6267 = vmatmul.mubr.f32.gmra.mxu0 %v6069
        %v6268 = vpop.f32.mrf.mxu0
        %v6269 = vadd.f32 %v6008, %v6268
        %v6270 = vpop.f32.mrf.mxu0
        %6271 = vmatprep.mubr.f32.mxu0 0.0
        %6272 = vmatmul.mubr.f32.gmra.mxu0 %v6072
        %v6273 = vpop.f32.mrf.mxu0
        %v6274 = vadd.f32 %v6008, %v6273
        %v6275 = vpop.f32.mrf.mxu0
        %6276 = vmatprep.mubr.f32.mxu0 0.0
        %6277 = vmatmul.mubr.f32.gmra.mxu0 %v6075
        %v6278 = vpop.f32.mrf.mxu0
        %v6279 = vadd.f32 %v6008, %v6278
        %v6280 = vpop.f32.mrf.mxu0
        %6281 = vmatprep.mubr.f32.mxu0 0.0
        %6282 = vmatmul.mubr.f32.gmra.mxu0 %v6078
        %v6283 = vpop.f32.mrf.mxu0
        %v6284 = vadd.f32 %v6008, %v6283
        %v6285 = vpop.f32.mrf.mxu0
        %6286 = vmatprep.mubr.f32.mxu0 0.0
        %6287 = vmatmul.mubr.f32.gmra.mxu0 %v6081
        %v6288 = vpop.f32.mrf.mxu0
        %v6289 = vadd.f32 %v6008, %v6288
        %v6290 = vpop.f32.mrf.mxu0
        %6291 = vmatprep.mubr.f32.mxu0 0.0
        %6292 = vmatmul.mubr.f32.gmra.mxu0 %v6084
        %v6293 = vpop.f32.mrf.mxu0
        %v6294 = vadd.f32 %v6008, %v6293
        %v6295 = vpop.f32.mrf.mxu0
        %6296 = vmatprep.mubr.f32.mxu0 0.0
        %6297 = vmatmul.mubr.f32.gmra.mxu0 %v6087
        %v6298 = vpop.f32.mrf.mxu0
        %v6299 = vadd.f32 %v6008, %v6298
        %v6300 = vpop.f32.mrf.mxu0
        %6301 = vmatprep.mubr.f32.mxu0 0.0
        %6302 = vmatmul.mubr.f32.gmra.mxu0 %v6090
        %v6303 = vpop.f32.mrf.mxu0
        %v6304 = vadd.f32 %v6008, %v6303
        %v6305 = vpop.f32.mrf.mxu0
        %6306 = vmatprep.mubr.f32.mxu0 0.0
        %6307 = vmatmul.mubr.f32.gmra.mxu0 %v6093
        %v6308 = vpop.f32.mrf.mxu0
        %v6309 = vadd.f32 %v6008, %v6308
        %v6310 = vpop.f32.mrf.mxu0
        %6311 = vmatprep.mubr.f32.mxu0 0.0
        %6312 = vmatmul.mubr.f32.gmra.mxu0 %v6096
        %v6313 = vpop.f32.mrf.mxu0
        %v6314 = vadd.f32 %v6008, %v6313
        %v6315 = vpop.f32.mrf.mxu0
        %6316 = vmatprep.mubr.f32.mxu0 0.0
        %6317 = vmatmul.mubr.f32.gmra.mxu0 %v6099
        %v6318 = vpop.f32.mrf.mxu0
        %v6319 = vadd.f32 %v6008, %v6318
        %v6320 = vpop.f32.mrf.mxu0
        %6321 = vmatprep.mubr.f32.mxu0 0.0
        %6322 = vmatmul.mubr.f32.gmra.mxu0 %v6102
        %v6323 = vpop.f32.mrf.mxu0
        %v6324 = vadd.f32 %v6008, %v6323
        %v6325 = vpop.f32.mrf.mxu0
        %6326 = vmatprep.mubr.f32.mxu0 0.0
        %6327 = vmatmul.mubr.f32.gmra.mxu0 %v6105
        %v6328 = vpop.f32.mrf.mxu0
        %v6329 = vadd.f32 %v6008, %v6328
        %v6330 = vpop.f32.mrf.mxu0
        %6331 = vdwg.mxu0
        %v6332 = vmax.f32 %v6174, 0.0
        %v6333 = vmax.f32 %v6179, 0.0
        %v6334 = vmax.f32 %v6184, 0.0
        %v6335 = vmax.f32 %v6189, 0.0
        %v6336 = vmax.f32 %v6194, 0.0
        %v6337 = vmax.f32 %v6199, 0.0
        %v6338 = vmax.f32 %v6204, 0.0
        %v6339 = vmax.f32 %v6209, 0.0
        %v6340 = vmax.f32 %v6214, 0.0
        %v6341 = vmax.f32 %v6219, 0.0
        %v6342 = vmax.f32 %v6224, 0.0
        %v6343 = vmax.f32 %v6229, 0.0
        %v6344 = vmax.f32 %v6234, 0.0
        %v6345 = vmax.f32 %v6239, 0.0
        %v6346 = vmax.f32 %v6244, 0.0
        %v6347 = vmax.f32 %v6249, 0.0
        %v6348 = vmax.f32 %v6254, 0.0
        %v6349 = vmax.f32 %v6259, 0.0
        %v6350 = vmax.f32 %v6264, 0.0
        %v6351 = vmax.f32 %v6269, 0.0
        %v6352 = vmax.f32 %v6274, 0.0
        %v6353 = vmax.f32 %v6279, 0.0
        %v6354 = vmax.f32 %v6284, 0.0
        %v6355 = vmax.f32 %v6289, 0.0
        %v6356 = vmax.f32 %v6294, 0.0
        %v6357 = vmax.f32 %v6299, 0.0
        %v6358 = vmax.f32 %v6304, 0.0
        %v6359 = vmax.f32 %v6309, 0.0
        %v6360 = vmax.f32 %v6314, 0.0
        %v6361 = vmax.f32 %v6319, 0.0
        %v6362 = vmax.f32 %v6324, 0.0
        %v6363 = vmax.f32 %v6329, 0.0
        %v6364 = vld [vmem:[%s7] sm:$0xff]
        %v6365 = vld [vmem:[%s7 + $0x8] sm:$0xff]
        %v6366 = vld [vmem:[%s7 + $0x10] sm:$0xff]
        %v6367 = vld [vmem:[%s7 + $0x18] sm:$0xff]
        %v6368 = vld [vmem:[#allocation10] sm:$0x1]
        %v6370 = vlaneseq
        %v6371 = vshrl.u32 %v6370, 7
        %v6372 = vsub.s32 0, %v6371
        %v6373 = vrot.slane %v6368, %v6372
        %vm6375 = vcmask 261120
        %v6377 = vsel %vm6375, %v6332, 0
        %v6380 = vsel %vm6375, %v6333, 0
        %v6383 = vsel %vm6375, %v6334, 0
        %v6386 = vsel %vm6375, %v6335, 0
        %v6389 = vsel %vm6375, %v6336, 0
        %v6392 = vsel %vm6375, %v6337, 0
        %v6395 = vsel %vm6375, %v6338, 0
        %v6398 = vsel %vm6375, %v6339, 0
        %v6401 = vsel %vm6375, %v6340, 0
        %v6404 = vsel %vm6375, %v6341, 0
        %v6407 = vsel %vm6375, %v6342, 0
        %v6410 = vsel %vm6375, %v6343, 0
        %v6413 = vsel %vm6375, %v6344, 0
        %v6416 = vsel %vm6375, %v6345, 0
        %v6419 = vsel %vm6375, %v6346, 0
        %v6422 = vsel %vm6375, %v6347, 0
        %v6425 = vsel %vm6375, %v6348, 0
        %v6428 = vsel %vm6375, %v6349, 0
        %v6431 = vsel %vm6375, %v6350, 0
        %v6434 = vsel %vm6375, %v6351, 0
        %v6437 = vsel %vm6375, %v6352, 0
        %v6440 = vsel %vm6375, %v6353, 0
        %v6443 = vsel %vm6375, %v6354, 0
        %v6446 = vsel %vm6375, %v6355, 0
        %v6449 = vsel %vm6375, %v6356, 0
        %v6452 = vsel %vm6375, %v6357, 0
        %v6455 = vsel %vm6375, %v6358, 0
        %v6458 = vsel %vm6375, %v6359, 0
        %v6461 = vsel %vm6375, %v6360, 0
        %v6464 = vsel %vm6375, %v6361, 0
        %v6467 = vsel %vm6375, %v6362, 0
        %v6470 = vsel %vm6375, %v6363, 0
        %6472 = vmatprep.subr.mxu0 0.0
        %6473 = vmatpush1.msra.mxu0 0.0
        %6474 = vmatprep.subr.mxu0 0.0
        %6475 = vmatpush1.msra.mxu0 0.0
        %6476 = vmatprep.subr.mxu0 0.0
        %6477 = vmatpush1.msra.mxu0 0.0
        %6478 = vmatprep.subr.mxu0 0.0
        %6479 = vmatpush1.msra.mxu0 0.0
        %6480 = vmatprep.subr.mxu0 0.0
        %6481 = vmatpush1.msra.mxu0 0.0
        %6482 = vmatprep.subr.mxu0 0.0
        %6483 = vmatpush1.msra.mxu0 0.0
        %6484 = vmatprep.subr.mxu0 0.0
        %6485 = vmatpush1.msra.mxu0 0.0
        %6486 = vmatprep.subr.mxu0 0.0
        %6487 = vmatpush1.msra.mxu0 0.0
        %6488 = vmatprep.subr.mxu0 0.0
        %6489 = vmatpush1.msra.mxu0 0.0
        %6490 = vmatprep.subr.mxu0 0.0
        %6491 = vmatpush1.msra.mxu0 0.0
        %6492 = vmatprep.subr.mxu0 0.0
        %6493 = vmatpush1.msra.mxu0 0.0
        %6494 = vmatprep.subr.mxu0 0.0
        %6495 = vmatpush1.msra.mxu0 0.0
        %6496 = vmatprep.subr.mxu0 0.0
        %6497 = vmatpush1.msra.mxu0 %v6367
        %6498 = vmatprep.subr.mxu0 0.0
        %6499 = vmatpush1.msra.mxu0 %v6366
        %6500 = vmatprep.subr.mxu0 0.0
        %6501 = vmatpush1.msra.mxu0 %v6365
        %6502 = vmatprep.subr.mxu0 0.0
        %6503 = vmatpush1.msra.mxu0 %v6364
        %6504 = vmatprep.subr.mxu0 0.0
        %6505 = vmatpush2.msra.mxu0 0.0
        %6506 = vmatprep.subr.mxu0 0.0
        %6507 = vmatpush2.msra.mxu0 0.0
        %6508 = vmatprep.subr.mxu0 0.0
        %6509 = vmatpush2.msra.mxu0 0.0
        %6510 = vmatprep.subr.mxu0 0.0
        %6511 = vmatpush2.msra.mxu0 0.0
        %6512 = vmatprep.subr.mxu0 0.0
        %6513 = vmatpush2.msra.mxu0 0.0
        %6514 = vmatprep.subr.mxu0 0.0
        %6515 = vmatpush2.msra.mxu0 0.0
        %6516 = vmatprep.subr.mxu0 0.0
        %6517 = vmatpush2.msra.mxu0 0.0
        %6518 = vmatprep.subr.mxu0 0.0
        %6519 = vmatpush2.msra.mxu0 0.0
        %6520 = vmatprep.subr.mxu0 0.0
        %6521 = vmatpush2.msra.mxu0 0.0
        %6522 = vmatprep.subr.mxu0 0.0
        %6523 = vmatpush2.msra.mxu0 0.0
        %6524 = vmatprep.subr.mxu0 0.0
        %6525 = vmatpush2.msra.mxu0 0.0
        %6526 = vmatprep.subr.mxu0 0.0
        %6527 = vmatpush2.msra.mxu0 0.0
        %6528 = vmatprep.subr.mxu0 0.0
        %6529 = vmatpush2.msra.mxu0 0.0
        %6530 = vmatprep.subr.mxu0 0.0
        %6531 = vmatpush2.msra.mxu0 0.0
        %6532 = vmatprep.subr.mxu0 0.0
        %6533 = vmatpush2.msra.mxu0 0.0
        %6534 = vmatprep.subr.mxu0 0.0
        %6535 = vmatpush2.msra.mxu0 0.0
        %6536 = vmatprep.mubr.f32.mxu0 0.0
        %6537 = vmatmul.mubr.f32.gmra.mxu0 %v6377
        %v6538 = vpop.f32.mrf.mxu0
        %v6539 = vadd.f32 %v6373, %v6538
        %v6540 = vpop.f32.mrf.mxu0
        %6541 = vmatprep.mubr.f32.mxu0 0.0
        %6542 = vmatmul.mubr.f32.gmra.mxu0 %v6380
        %v6543 = vpop.f32.mrf.mxu0
        %v6544 = vadd.f32 %v6373, %v6543
        %v6545 = vpop.f32.mrf.mxu0
        %6546 = vmatprep.mubr.f32.mxu0 0.0
        %6547 = vmatmul.mubr.f32.gmra.mxu0 %v6383
        %v6548 = vpop.f32.mrf.mxu0
        %v6549 = vadd.f32 %v6373, %v6548
        %v6550 = vpop.f32.mrf.mxu0
        %6551 = vmatprep.mubr.f32.mxu0 0.0
        %6552 = vmatmul.mubr.f32.gmra.mxu0 %v6386
        %v6553 = vpop.f32.mrf.mxu0
        %v6554 = vadd.f32 %v6373, %v6553
        %v6555 = vpop.f32.mrf.mxu0
        %6556 = vmatprep.mubr.f32.mxu0 0.0
        %6557 = vmatmul.mubr.f32.gmra.mxu0 %v6389
        %v6558 = vpop.f32.mrf.mxu0
        %v6559 = vadd.f32 %v6373, %v6558
        %v6560 = vpop.f32.mrf.mxu0
        %6561 = vmatprep.mubr.f32.mxu0 0.0
        %6562 = vmatmul.mubr.f32.gmra.mxu0 %v6392
        %v6563 = vpop.f32.mrf.mxu0
        %v6564 = vadd.f32 %v6373, %v6563
        %v6565 = vpop.f32.mrf.mxu0
        %6566 = vmatprep.mubr.f32.mxu0 0.0
        %6567 = vmatmul.mubr.f32.gmra.mxu0 %v6395
        %v6568 = vpop.f32.mrf.mxu0
        %v6569 = vadd.f32 %v6373, %v6568
        %v6570 = vpop.f32.mrf.mxu0
        %6571 = vmatprep.mubr.f32.mxu0 0.0
        %6572 = vmatmul.mubr.f32.gmra.mxu0 %v6398
        %v6573 = vpop.f32.mrf.mxu0
        %v6574 = vadd.f32 %v6373, %v6573
        %v6575 = vpop.f32.mrf.mxu0
        %6576 = vmatprep.mubr.f32.mxu0 0.0
        %6577 = vmatmul.mubr.f32.gmra.mxu0 %v6401
        %v6578 = vpop.f32.mrf.mxu0
        %v6579 = vadd.f32 %v6373, %v6578
        %v6580 = vpop.f32.mrf.mxu0
        %6581 = vmatprep.mubr.f32.mxu0 0.0
        %6582 = vmatmul.mubr.f32.gmra.mxu0 %v6404
        %v6583 = vpop.f32.mrf.mxu0
        %v6584 = vadd.f32 %v6373, %v6583
        %v6585 = vpop.f32.mrf.mxu0
        %6586 = vmatprep.mubr.f32.mxu0 0.0
        %6587 = vmatmul.mubr.f32.gmra.mxu0 %v6407
        %v6588 = vpop.f32.mrf.mxu0
        %v6589 = vadd.f32 %v6373, %v6588
        %v6590 = vpop.f32.mrf.mxu0
        %6591 = vmatprep.mubr.f32.mxu0 0.0
        %6592 = vmatmul.mubr.f32.gmra.mxu0 %v6410
        %v6593 = vpop.f32.mrf.mxu0
        %v6594 = vadd.f32 %v6373, %v6593
        %v6595 = vpop.f32.mrf.mxu0
        %6596 = vmatprep.mubr.f32.mxu0 0.0
        %6597 = vmatmul.mubr.f32.gmra.mxu0 %v6413
        %v6598 = vpop.f32.mrf.mxu0
        %v6599 = vadd.f32 %v6373, %v6598
        %v6600 = vpop.f32.mrf.mxu0
        %6601 = vmatprep.mubr.f32.mxu0 0.0
        %6602 = vmatmul.mubr.f32.gmra.mxu0 %v6416
        %v6603 = vpop.f32.mrf.mxu0
        %v6604 = vadd.f32 %v6373, %v6603
        %v6605 = vpop.f32.mrf.mxu0
        %6606 = vmatprep.mubr.f32.mxu0 0.0
        %6607 = vmatmul.mubr.f32.gmra.mxu0 %v6419
        %v6608 = vpop.f32.mrf.mxu0
        %v6609 = vadd.f32 %v6373, %v6608
        %v6610 = vpop.f32.mrf.mxu0
        %6611 = vmatprep.mubr.f32.mxu0 0.0
        %6612 = vmatmul.mubr.f32.gmra.mxu0 %v6422
        %v6613 = vpop.f32.mrf.mxu0
        %v6614 = vadd.f32 %v6373, %v6613
        %v6615 = vpop.f32.mrf.mxu0
        %6616 = vmatprep.mubr.f32.mxu0 0.0
        %6617 = vmatmul.mubr.f32.gmra.mxu0 %v6425
        %v6618 = vpop.f32.mrf.mxu0
        %v6619 = vadd.f32 %v6373, %v6618
        %v6620 = vpop.f32.mrf.mxu0
        %6621 = vmatprep.mubr.f32.mxu0 0.0
        %6622 = vmatmul.mubr.f32.gmra.mxu0 %v6428
        %v6623 = vpop.f32.mrf.mxu0
        %v6624 = vadd.f32 %v6373, %v6623
        %v6625 = vpop.f32.mrf.mxu0
        %6626 = vmatprep.mubr.f32.mxu0 0.0
        %6627 = vmatmul.mubr.f32.gmra.mxu0 %v6431
        %v6628 = vpop.f32.mrf.mxu0
        %v6629 = vadd.f32 %v6373, %v6628
        %v6630 = vpop.f32.mrf.mxu0
        %6631 = vmatprep.mubr.f32.mxu0 0.0
        %6632 = vmatmul.mubr.f32.gmra.mxu0 %v6434
        %v6633 = vpop.f32.mrf.mxu0
        %v6634 = vadd.f32 %v6373, %v6633
        %v6635 = vpop.f32.mrf.mxu0
        %6636 = vmatprep.mubr.f32.mxu0 0.0
        %6637 = vmatmul.mubr.f32.gmra.mxu0 %v6437
        %v6638 = vpop.f32.mrf.mxu0
        %v6639 = vadd.f32 %v6373, %v6638
        %v6640 = vpop.f32.mrf.mxu0
        %6641 = vmatprep.mubr.f32.mxu0 0.0
        %6642 = vmatmul.mubr.f32.gmra.mxu0 %v6440
        %v6643 = vpop.f32.mrf.mxu0
        %v6644 = vadd.f32 %v6373, %v6643
        %v6645 = vpop.f32.mrf.mxu0
        %6646 = vmatprep.mubr.f32.mxu0 0.0
        %6647 = vmatmul.mubr.f32.gmra.mxu0 %v6443
        %v6648 = vpop.f32.mrf.mxu0
        %v6649 = vadd.f32 %v6373, %v6648
        %v6650 = vpop.f32.mrf.mxu0
        %6651 = vmatprep.mubr.f32.mxu0 0.0
        %6652 = vmatmul.mubr.f32.gmra.mxu0 %v6446
        %v6653 = vpop.f32.mrf.mxu0
        %v6654 = vadd.f32 %v6373, %v6653
        %v6655 = vpop.f32.mrf.mxu0
        %6656 = vmatprep.mubr.f32.mxu0 0.0
        %6657 = vmatmul.mubr.f32.gmra.mxu0 %v6449
        %v6658 = vpop.f32.mrf.mxu0
        %v6659 = vadd.f32 %v6373, %v6658
        %v6660 = vpop.f32.mrf.mxu0
        %6661 = vmatprep.mubr.f32.mxu0 0.0
        %6662 = vmatmul.mubr.f32.gmra.mxu0 %v6452
        %v6663 = vpop.f32.mrf.mxu0
        %v6664 = vadd.f32 %v6373, %v6663
        %v6665 = vpop.f32.mrf.mxu0
        %6666 = vmatprep.mubr.f32.mxu0 0.0
        %6667 = vmatmul.mubr.f32.gmra.mxu0 %v6455
        %v6668 = vpop.f32.mrf.mxu0
        %v6669 = vadd.f32 %v6373, %v6668
        %v6670 = vpop.f32.mrf.mxu0
        %6671 = vmatprep.mubr.f32.mxu0 0.0
        %6672 = vmatmul.mubr.f32.gmra.mxu0 %v6458
        %v6673 = vpop.f32.mrf.mxu0
        %v6674 = vadd.f32 %v6373, %v6673
        %v6675 = vpop.f32.mrf.mxu0
        %6676 = vmatprep.mubr.f32.mxu0 0.0
        %6677 = vmatmul.mubr.f32.gmra.mxu0 %v6461
        %v6678 = vpop.f32.mrf.mxu0
        %v6679 = vadd.f32 %v6373, %v6678
        %v6680 = vpop.f32.mrf.mxu0
        %6681 = vmatprep.mubr.f32.mxu0 0.0
        %6682 = vmatmul.mubr.f32.gmra.mxu0 %v6464
        %v6683 = vpop.f32.mrf.mxu0
        %v6684 = vadd.f32 %v6373, %v6683
        %v6685 = vpop.f32.mrf.mxu0
        %6686 = vmatprep.mubr.f32.mxu0 0.0
        %6687 = vmatmul.mubr.f32.gmra.mxu0 %v6467
        %v6688 = vpop.f32.mrf.mxu0
        %v6689 = vadd.f32 %v6373, %v6688
        %v6690 = vpop.f32.mrf.mxu0
        %6691 = vmatprep.mubr.f32.mxu0 0.0
        %6692 = vmatmul.mubr.f32.gmra.mxu0 %v6470
        %v6693 = vpop.f32.mrf.mxu0
        %v6694 = vadd.f32 %v6373, %v6693
        %v6695 = vpop.f32.mrf.mxu0
        %6696 = vdwg.mxu0
        %v6697 = vmax.f32 %v6539, 0.0
        %v6698 = vmax.f32 %v6544, 0.0
        %v6699 = vmax.f32 %v6549, 0.0
        %v6700 = vmax.f32 %v6554, 0.0
        %v6701 = vmax.f32 %v6559, 0.0
        %v6702 = vmax.f32 %v6564, 0.0
        %v6703 = vmax.f32 %v6569, 0.0
        %v6704 = vmax.f32 %v6574, 0.0
        %v6705 = vmax.f32 %v6579, 0.0
        %v6706 = vmax.f32 %v6584, 0.0
        %v6707 = vmax.f32 %v6589, 0.0
        %v6708 = vmax.f32 %v6594, 0.0
        %v6709 = vmax.f32 %v6599, 0.0
        %v6710 = vmax.f32 %v6604, 0.0
        %v6711 = vmax.f32 %v6609, 0.0
        %v6712 = vmax.f32 %v6614, 0.0
        %v6713 = vmax.f32 %v6619, 0.0
        %v6714 = vmax.f32 %v6624, 0.0
        %v6715 = vmax.f32 %v6629, 0.0
        %v6716 = vmax.f32 %v6634, 0.0
        %v6717 = vmax.f32 %v6639, 0.0
        %v6718 = vmax.f32 %v6644, 0.0
        %v6719 = vmax.f32 %v6649, 0.0
        %v6720 = vmax.f32 %v6654, 0.0
        %v6721 = vmax.f32 %v6659, 0.0
        %v6722 = vmax.f32 %v6664, 0.0
        %v6723 = vmax.f32 %v6669, 0.0
        %v6724 = vmax.f32 %v6674, 0.0
        %v6725 = vmax.f32 %v6679, 0.0
        %v6726 = vmax.f32 %v6684, 0.0
        %v6727 = vmax.f32 %v6689, 0.0
        %v6728 = vmax.f32 %v6694, 0.0
        %v6729 = vld [vmem:[%s9] sm:$0xff]
        %v6730 = vld [vmem:[%s9 + $0x8] sm:$0xff]
        %v6731 = vld [vmem:[#allocation12] sm:$0x1]
        %v6733 = vlaneseq
        %v6734 = vshrl.u32 %v6733, 7
        %v6735 = vsub.s32 0, %v6734
        %v6736 = vrot.slane %v6731, %v6735
        %vm6738 = vcmask 130048
        %v6740 = vsel %vm6738, %v6697, 0
        %v6743 = vsel %vm6738, %v6698, 0
        %v6746 = vsel %vm6738, %v6699, 0
        %v6749 = vsel %vm6738, %v6700, 0
        %v6752 = vsel %vm6738, %v6701, 0
        %v6755 = vsel %vm6738, %v6702, 0
        %v6758 = vsel %vm6738, %v6703, 0
        %v6761 = vsel %vm6738, %v6704, 0
        %v6764 = vsel %vm6738, %v6705, 0
        %v6767 = vsel %vm6738, %v6706, 0
        %v6770 = vsel %vm6738, %v6707, 0
        %v6773 = vsel %vm6738, %v6708, 0
        %v6776 = vsel %vm6738, %v6709, 0
        %v6779 = vsel %vm6738, %v6710, 0
        %v6782 = vsel %vm6738, %v6711, 0
        %v6785 = vsel %vm6738, %v6712, 0
        %v6788 = vsel %vm6738, %v6713, 0
        %v6791 = vsel %vm6738, %v6714, 0
        %v6794 = vsel %vm6738, %v6715, 0
        %v6797 = vsel %vm6738, %v6716, 0
        %v6800 = vsel %vm6738, %v6717, 0
        %v6803 = vsel %vm6738, %v6718, 0
        %v6806 = vsel %vm6738, %v6719, 0
        %v6809 = vsel %vm6738, %v6720, 0
        %v6812 = vsel %vm6738, %v6721, 0
        %v6815 = vsel %vm6738, %v6722, 0
        %v6818 = vsel %vm6738, %v6723, 0
        %v6821 = vsel %vm6738, %v6724, 0
        %v6824 = vsel %vm6738, %v6725, 0
        %v6827 = vsel %vm6738, %v6726, 0
        %v6830 = vsel %vm6738, %v6727, 0
        %v6833 = vsel %vm6738, %v6728, 0
        %6835 = vmatprep.subr.mxu0 0.0
        %6836 = vmatpush1.msra.mxu0 0.0
        %6837 = vmatprep.subr.mxu0 0.0
        %6838 = vmatpush1.msra.mxu0 0.0
        %6839 = vmatprep.subr.mxu0 0.0
        %6840 = vmatpush1.msra.mxu0 0.0
        %6841 = vmatprep.subr.mxu0 0.0
        %6842 = vmatpush1.msra.mxu0 0.0
        %6843 = vmatprep.subr.mxu0 0.0
        %6844 = vmatpush1.msra.mxu0 0.0
        %6845 = vmatprep.subr.mxu0 0.0
        %6846 = vmatpush1.msra.mxu0 0.0
        %6847 = vmatprep.subr.mxu0 0.0
        %6848 = vmatpush1.msra.mxu0 0.0
        %6849 = vmatprep.subr.mxu0 0.0
        %6850 = vmatpush1.msra.mxu0 0.0
        %6851 = vmatprep.subr.mxu0 0.0
        %6852 = vmatpush1.msra.mxu0 0.0
        %6853 = vmatprep.subr.mxu0 0.0
        %6854 = vmatpush1.msra.mxu0 0.0
        %6855 = vmatprep.subr.mxu0 0.0
        %6856 = vmatpush1.msra.mxu0 0.0
        %6857 = vmatprep.subr.mxu0 0.0
        %6858 = vmatpush1.msra.mxu0 0.0
        %6859 = vmatprep.subr.mxu0 0.0
        %6860 = vmatpush1.msra.mxu0 0.0
        %6861 = vmatprep.subr.mxu0 0.0
        %6862 = vmatpush1.msra.mxu0 0.0
        %6863 = vmatprep.subr.mxu0 0.0
        %6864 = vmatpush1.msra.mxu0 %v6730
        %6865 = vmatprep.subr.mxu0 0.0
        %6866 = vmatpush1.msra.mxu0 %v6729
        %6867 = vmatprep.subr.mxu0 0.0
        %6868 = vmatpush2.msra.mxu0 0.0
        %6869 = vmatprep.subr.mxu0 0.0
        %6870 = vmatpush2.msra.mxu0 0.0
        %6871 = vmatprep.subr.mxu0 0.0
        %6872 = vmatpush2.msra.mxu0 0.0
        %6873 = vmatprep.subr.mxu0 0.0
        %6874 = vmatpush2.msra.mxu0 0.0
        %6875 = vmatprep.subr.mxu0 0.0
        %6876 = vmatpush2.msra.mxu0 0.0
        %6877 = vmatprep.subr.mxu0 0.0
        %6878 = vmatpush2.msra.mxu0 0.0
        %6879 = vmatprep.subr.mxu0 0.0
        %6880 = vmatpush2.msra.mxu0 0.0
        %6881 = vmatprep.subr.mxu0 0.0
        %6882 = vmatpush2.msra.mxu0 0.0
        %6883 = vmatprep.subr.mxu0 0.0
        %6884 = vmatpush2.msra.mxu0 0.0
        %6885 = vmatprep.subr.mxu0 0.0
        %6886 = vmatpush2.msra.mxu0 0.0
        %6887 = vmatprep.subr.mxu0 0.0
        %6888 = vmatpush2.msra.mxu0 0.0
        %6889 = vmatprep.subr.mxu0 0.0
        %6890 = vmatpush2.msra.mxu0 0.0
        %6891 = vmatprep.subr.mxu0 0.0
        %6892 = vmatpush2.msra.mxu0 0.0
        %6893 = vmatprep.subr.mxu0 0.0
        %6894 = vmatpush2.msra.mxu0 0.0
        %6895 = vmatprep.subr.mxu0 0.0
        %6896 = vmatpush2.msra.mxu0 0.0
        %6897 = vmatprep.subr.mxu0 0.0
        %6898 = vmatpush2.msra.mxu0 0.0
        %6899 = vmatprep.mubr.f32.mxu0 0.0
        %6900 = vmatmul.mubr.f32.gmra.mxu0 %v6740
        %v6901 = vpop.f32.mrf.mxu0
        %v6902 = vadd.f32 %v6736, %v6901
        %v6903 = vpop.f32.mrf.mxu0
        %6904 = vmatprep.mubr.f32.mxu0 0.0
        %6905 = vmatmul.mubr.f32.gmra.mxu0 %v6743
        %v6906 = vpop.f32.mrf.mxu0
        %v6907 = vadd.f32 %v6736, %v6906
        %v6908 = vpop.f32.mrf.mxu0
        %6909 = vmatprep.mubr.f32.mxu0 0.0
        %6910 = vmatmul.mubr.f32.gmra.mxu0 %v6746
        %v6911 = vpop.f32.mrf.mxu0
        %v6912 = vadd.f32 %v6736, %v6911
        %v6913 = vpop.f32.mrf.mxu0
        %6914 = vmatprep.mubr.f32.mxu0 0.0
        %6915 = vmatmul.mubr.f32.gmra.mxu0 %v6749
        %v6916 = vpop.f32.mrf.mxu0
        %v6917 = vadd.f32 %v6736, %v6916
        %v6918 = vpop.f32.mrf.mxu0
        %6919 = vmatprep.mubr.f32.mxu0 0.0
        %6920 = vmatmul.mubr.f32.gmra.mxu0 %v6752
        %v6921 = vpop.f32.mrf.mxu0
        %v6922 = vadd.f32 %v6736, %v6921
        %v6923 = vpop.f32.mrf.mxu0
        %6924 = vmatprep.mubr.f32.mxu0 0.0
        %6925 = vmatmul.mubr.f32.gmra.mxu0 %v6755
        %v6926 = vpop.f32.mrf.mxu0
        %v6927 = vadd.f32 %v6736, %v6926
        %v6928 = vpop.f32.mrf.mxu0
        %6929 = vmatprep.mubr.f32.mxu0 0.0
        %6930 = vmatmul.mubr.f32.gmra.mxu0 %v6758
        %v6931 = vpop.f32.mrf.mxu0
        %v6932 = vadd.f32 %v6736, %v6931
        %v6933 = vpop.f32.mrf.mxu0
        %6934 = vmatprep.mubr.f32.mxu0 0.0
        %6935 = vmatmul.mubr.f32.gmra.mxu0 %v6761
        %v6936 = vpop.f32.mrf.mxu0
        %v6937 = vadd.f32 %v6736, %v6936
        %v6938 = vpop.f32.mrf.mxu0
        %6939 = vmatprep.mubr.f32.mxu0 0.0
        %6940 = vmatmul.mubr.f32.gmra.mxu0 %v6764
        %v6941 = vpop.f32.mrf.mxu0
        %v6942 = vadd.f32 %v6736, %v6941
        %v6943 = vpop.f32.mrf.mxu0
        %6944 = vmatprep.mubr.f32.mxu0 0.0
        %6945 = vmatmul.mubr.f32.gmra.mxu0 %v6767
        %v6946 = vpop.f32.mrf.mxu0
        %v6947 = vadd.f32 %v6736, %v6946
        %v6948 = vpop.f32.mrf.mxu0
        %6949 = vmatprep.mubr.f32.mxu0 0.0
        %6950 = vmatmul.mubr.f32.gmra.mxu0 %v6770
        %v6951 = vpop.f32.mrf.mxu0
        %v6952 = vadd.f32 %v6736, %v6951
        %v6953 = vpop.f32.mrf.mxu0
        %6954 = vmatprep.mubr.f32.mxu0 0.0
        %6955 = vmatmul.mubr.f32.gmra.mxu0 %v6773
        %v6956 = vpop.f32.mrf.mxu0
        %v6957 = vadd.f32 %v6736, %v6956
        %v6958 = vpop.f32.mrf.mxu0
        %6959 = vmatprep.mubr.f32.mxu0 0.0
        %6960 = vmatmul.mubr.f32.gmra.mxu0 %v6776
        %v6961 = vpop.f32.mrf.mxu0
        %v6962 = vadd.f32 %v6736, %v6961
        %v6963 = vpop.f32.mrf.mxu0
        %6964 = vmatprep.mubr.f32.mxu0 0.0
        %6965 = vmatmul.mubr.f32.gmra.mxu0 %v6779
        %v6966 = vpop.f32.mrf.mxu0
        %v6967 = vadd.f32 %v6736, %v6966
        %v6968 = vpop.f32.mrf.mxu0
        %6969 = vmatprep.mubr.f32.mxu0 0.0
        %6970 = vmatmul.mubr.f32.gmra.mxu0 %v6782
        %v6971 = vpop.f32.mrf.mxu0
        %v6972 = vadd.f32 %v6736, %v6971
        %v6973 = vpop.f32.mrf.mxu0
        %6974 = vmatprep.mubr.f32.mxu0 0.0
        %6975 = vmatmul.mubr.f32.gmra.mxu0 %v6785
        %v6976 = vpop.f32.mrf.mxu0
        %v6977 = vadd.f32 %v6736, %v6976
        %v6978 = vpop.f32.mrf.mxu0
        %6979 = vmatprep.mubr.f32.mxu0 0.0
        %6980 = vmatmul.mubr.f32.gmra.mxu0 %v6788
        %v6981 = vpop.f32.mrf.mxu0
        %v6982 = vadd.f32 %v6736, %v6981
        %v6983 = vpop.f32.mrf.mxu0
        %6984 = vmatprep.mubr.f32.mxu0 0.0
        %6985 = vmatmul.mubr.f32.gmra.mxu0 %v6791
        %v6986 = vpop.f32.mrf.mxu0
        %v6987 = vadd.f32 %v6736, %v6986
        %v6988 = vpop.f32.mrf.mxu0
        %6989 = vmatprep.mubr.f32.mxu0 0.0
        %6990 = vmatmul.mubr.f32.gmra.mxu0 %v6794
        %v6991 = vpop.f32.mrf.mxu0
        %v6992 = vadd.f32 %v6736, %v6991
        %v6993 = vpop.f32.mrf.mxu0
        %6994 = vmatprep.mubr.f32.mxu0 0.0
        %6995 = vmatmul.mubr.f32.gmra.mxu0 %v6797
        %v6996 = vpop.f32.mrf.mxu0
        %v6997 = vadd.f32 %v6736, %v6996
        %v6998 = vpop.f32.mrf.mxu0
        %6999 = vmatprep.mubr.f32.mxu0 0.0
        %7000 = vmatmul.mubr.f32.gmra.mxu0 %v6800
        %v7001 = vpop.f32.mrf.mxu0
        %v7002 = vadd.f32 %v6736, %v7001
        %v7003 = vpop.f32.mrf.mxu0
        %7004 = vmatprep.mubr.f32.mxu0 0.0
        %7005 = vmatmul.mubr.f32.gmra.mxu0 %v6803
        %v7006 = vpop.f32.mrf.mxu0
        %v7007 = vadd.f32 %v6736, %v7006
        %v7008 = vpop.f32.mrf.mxu0
        %7009 = vmatprep.mubr.f32.mxu0 0.0
        %7010 = vmatmul.mubr.f32.gmra.mxu0 %v6806
        %v7011 = vpop.f32.mrf.mxu0
        %v7012 = vadd.f32 %v6736, %v7011
        %v7013 = vpop.f32.mrf.mxu0
        %7014 = vmatprep.mubr.f32.mxu0 0.0
        %7015 = vmatmul.mubr.f32.gmra.mxu0 %v6809
        %v7016 = vpop.f32.mrf.mxu0
        %v7017 = vadd.f32 %v6736, %v7016
        %v7018 = vpop.f32.mrf.mxu0
        %7019 = vmatprep.mubr.f32.mxu0 0.0
        %7020 = vmatmul.mubr.f32.gmra.mxu0 %v6812
        %v7021 = vpop.f32.mrf.mxu0
        %v7022 = vadd.f32 %v6736, %v7021
        %v7023 = vpop.f32.mrf.mxu0
        %7024 = vmatprep.mubr.f32.mxu0 0.0
        %7025 = vmatmul.mubr.f32.gmra.mxu0 %v6815
        %v7026 = vpop.f32.mrf.mxu0
        %v7027 = vadd.f32 %v6736, %v7026
        %v7028 = vpop.f32.mrf.mxu0
        %7029 = vmatprep.mubr.f32.mxu0 0.0
        %7030 = vmatmul.mubr.f32.gmra.mxu0 %v6818
        %v7031 = vpop.f32.mrf.mxu0
        %v7032 = vadd.f32 %v6736, %v7031
        %v7033 = vpop.f32.mrf.mxu0
        %7034 = vmatprep.mubr.f32.mxu0 0.0
        %7035 = vmatmul.mubr.f32.gmra.mxu0 %v6821
        %v7036 = vpop.f32.mrf.mxu0
        %v7037 = vadd.f32 %v6736, %v7036
        %v7038 = vpop.f32.mrf.mxu0
        %7039 = vmatprep.mubr.f32.mxu0 0.0
        %7040 = vmatmul.mubr.f32.gmra.mxu0 %v6824
        %v7041 = vpop.f32.mrf.mxu0
        %v7042 = vadd.f32 %v6736, %v7041
        %v7043 = vpop.f32.mrf.mxu0
        %7044 = vmatprep.mubr.f32.mxu0 0.0
        %7045 = vmatmul.mubr.f32.gmra.mxu0 %v6827
        %v7046 = vpop.f32.mrf.mxu0
        %v7047 = vadd.f32 %v6736, %v7046
        %v7048 = vpop.f32.mrf.mxu0
        %7049 = vmatprep.mubr.f32.mxu0 0.0
        %7050 = vmatmul.mubr.f32.gmra.mxu0 %v6830
        %v7051 = vpop.f32.mrf.mxu0
        %v7052 = vadd.f32 %v6736, %v7051
        %v7053 = vpop.f32.mrf.mxu0
        %7054 = vmatprep.mubr.f32.mxu0 0.0
        %7055 = vmatmul.mubr.f32.gmra.mxu0 %v6833
        %v7056 = vpop.f32.mrf.mxu0
        %v7057 = vadd.f32 %v6736, %v7056
        %v7058 = vpop.f32.mrf.mxu0
        %7059 = vdwg.mxu0
        %v7060 = vmax.f32 %v6902, 0.0
        %v7061 = vmax.f32 %v6907, 0.0
        %v7062 = vmax.f32 %v6912, 0.0
        %v7063 = vmax.f32 %v6917, 0.0
        %v7064 = vmax.f32 %v6922, 0.0
        %v7065 = vmax.f32 %v6927, 0.0
        %v7066 = vmax.f32 %v6932, 0.0
        %v7067 = vmax.f32 %v6937, 0.0
        %v7068 = vmax.f32 %v6942, 0.0
        %v7069 = vmax.f32 %v6947, 0.0
        %v7070 = vmax.f32 %v6952, 0.0
        %v7071 = vmax.f32 %v6957, 0.0
        %v7072 = vmax.f32 %v6962, 0.0
        %v7073 = vmax.f32 %v6967, 0.0
        %v7074 = vmax.f32 %v6972, 0.0
        %v7075 = vmax.f32 %v6977, 0.0
        %v7076 = vmax.f32 %v6982, 0.0
        %v7077 = vmax.f32 %v6987, 0.0
        %v7078 = vmax.f32 %v6992, 0.0
        %v7079 = vmax.f32 %v6997, 0.0
        %v7080 = vmax.f32 %v7002, 0.0
        %v7081 = vmax.f32 %v7007, 0.0
        %v7082 = vmax.f32 %v7012, 0.0
        %v7083 = vmax.f32 %v7017, 0.0
        %v7084 = vmax.f32 %v7022, 0.0
        %v7085 = vmax.f32 %v7027, 0.0
        %v7086 = vmax.f32 %v7032, 0.0
        %v7087 = vmax.f32 %v7037, 0.0
        %v7088 = vmax.f32 %v7042, 0.0
        %v7089 = vmax.f32 %v7047, 0.0
        %v7090 = vmax.f32 %v7052, 0.0
        %v7091 = vmax.f32 %v7057, 0.0
        %v7092 = vld [vmem:[%s11] sm:$0xff]
        %v7093 = vld [vmem:[#allocation13] sm:$0x1]
        %v7095 = vlaneseq
        %v7096 = vshrl.u32 %v7095, 7
        %v7097 = vsub.s32 0, %v7096
        %v7098 = vrot.slane %v7093, %v7097
        %vm7100 = vcmask 64512
        %v7102 = vsel %vm7100, %v7060, 0
        %v7105 = vsel %vm7100, %v7061, 0
        %v7108 = vsel %vm7100, %v7062, 0
        %v7111 = vsel %vm7100, %v7063, 0
        %v7114 = vsel %vm7100, %v7064, 0
        %v7117 = vsel %vm7100, %v7065, 0
        %v7120 = vsel %vm7100, %v7066, 0
        %v7123 = vsel %vm7100, %v7067, 0
        %v7126 = vsel %vm7100, %v7068, 0
        %v7129 = vsel %vm7100, %v7069, 0
        %v7132 = vsel %vm7100, %v7070, 0
        %v7135 = vsel %vm7100, %v7071, 0
        %v7138 = vsel %vm7100, %v7072, 0
        %v7141 = vsel %vm7100, %v7073, 0
        %v7144 = vsel %vm7100, %v7074, 0
        %v7147 = vsel %vm7100, %v7075, 0
        %v7150 = vsel %vm7100, %v7076, 0
        %v7153 = vsel %vm7100, %v7077, 0
        %v7156 = vsel %vm7100, %v7078, 0
        %v7159 = vsel %vm7100, %v7079, 0
        %v7162 = vsel %vm7100, %v7080, 0
        %v7165 = vsel %vm7100, %v7081, 0
        %v7168 = vsel %vm7100, %v7082, 0
        %v7171 = vsel %vm7100, %v7083, 0
        %v7174 = vsel %vm7100, %v7084, 0
        %v7177 = vsel %vm7100, %v7085, 0
        %v7180 = vsel %vm7100, %v7086, 0
        %v7183 = vsel %vm7100, %v7087, 0
        %v7186 = vsel %vm7100, %v7088, 0
        %v7189 = vsel %vm7100, %v7089, 0
        %v7192 = vsel %vm7100, %v7090, 0
        %v7195 = vsel %vm7100, %v7091, 0
        %7197 = vmatprep.subr.mxu0 0.0
        %7198 = vmatpush1.msra.mxu0 0.0
        %7199 = vmatprep.subr.mxu0 0.0
        %7200 = vmatpush1.msra.mxu0 0.0
        %7201 = vmatprep.subr.mxu0 0.0
        %7202 = vmatpush1.msra.mxu0 0.0
        %7203 = vmatprep.subr.mxu0 0.0
        %7204 = vmatpush1.msra.mxu0 0.0
        %7205 = vmatprep.subr.mxu0 0.0
        %7206 = vmatpush1.msra.mxu0 0.0
        %7207 = vmatprep.subr.mxu0 0.0
        %7208 = vmatpush1.msra.mxu0 0.0
        %7209 = vmatprep.subr.mxu0 0.0
        %7210 = vmatpush1.msra.mxu0 0.0
        %7211 = vmatprep.subr.mxu0 0.0
        %7212 = vmatpush1.msra.mxu0 0.0
        %7213 = vmatprep.subr.mxu0 0.0
        %7214 = vmatpush1.msra.mxu0 0.0
        %7215 = vmatprep.subr.mxu0 0.0
        %7216 = vmatpush1.msra.mxu0 0.0
        %7217 = vmatprep.subr.mxu0 0.0
        %7218 = vmatpush1.msra.mxu0 0.0
        %7219 = vmatprep.subr.mxu0 0.0
        %7220 = vmatpush1.msra.mxu0 0.0
        %7221 = vmatprep.subr.mxu0 0.0
        %7222 = vmatpush1.msra.mxu0 0.0
        %7223 = vmatprep.subr.mxu0 0.0
        %7224 = vmatpush1.msra.mxu0 0.0
        %7225 = vmatprep.subr.mxu0 0.0
        %7226 = vmatpush1.msra.mxu0 0.0
        %7227 = vmatprep.subr.mxu0 0.0
        %7228 = vmatpush1.msra.mxu0 %v7092
        %7229 = vmatprep.subr.mxu0 0.0
        %7230 = vmatpush2.msra.mxu0 0.0
        %7231 = vmatprep.subr.mxu0 0.0
        %7232 = vmatpush2.msra.mxu0 0.0
        %7233 = vmatprep.subr.mxu0 0.0
        %7234 = vmatpush2.msra.mxu0 0.0
        %7235 = vmatprep.subr.mxu0 0.0
        %7236 = vmatpush2.msra.mxu0 0.0
        %7237 = vmatprep.subr.mxu0 0.0
        %7238 = vmatpush2.msra.mxu0 0.0
        %7239 = vmatprep.subr.mxu0 0.0
        %7240 = vmatpush2.msra.mxu0 0.0
        %7241 = vmatprep.subr.mxu0 0.0
        %7242 = vmatpush2.msra.mxu0 0.0
        %7243 = vmatprep.subr.mxu0 0.0
        %7244 = vmatpush2.msra.mxu0 0.0
        %7245 = vmatprep.subr.mxu0 0.0
        %7246 = vmatpush2.msra.mxu0 0.0
        %7247 = vmatprep.subr.mxu0 0.0
        %7248 = vmatpush2.msra.mxu0 0.0
        %7249 = vmatprep.subr.mxu0 0.0
        %7250 = vmatpush2.msra.mxu0 0.0
        %7251 = vmatprep.subr.mxu0 0.0
        %7252 = vmatpush2.msra.mxu0 0.0
        %7253 = vmatprep.subr.mxu0 0.0
        %7254 = vmatpush2.msra.mxu0 0.0
        %7255 = vmatprep.subr.mxu0 0.0
        %7256 = vmatpush2.msra.mxu0 0.0
        %7257 = vmatprep.subr.mxu0 0.0
        %7258 = vmatpush2.msra.mxu0 0.0
        %7259 = vmatprep.subr.mxu0 0.0
        %7260 = vmatpush2.msra.mxu0 0.0
        %7261 = vmatprep.mubr.f32.mxu0 0.0
        %7262 = vmatmul.mubr.f32.gmra.mxu0 %v7102
        %v7263 = vpop.f32.mrf.mxu0
        %v7264 = vadd.f32 %v7098, %v7263
        %v7265 = vpop.f32.mrf.mxu0
        %7266 = vmatprep.mubr.f32.mxu0 0.0
        %7267 = vmatmul.mubr.f32.gmra.mxu0 %v7105
        %v7268 = vpop.f32.mrf.mxu0
        %v7269 = vadd.f32 %v7098, %v7268
        %v7270 = vpop.f32.mrf.mxu0
        %7271 = vmatprep.mubr.f32.mxu0 0.0
        %7272 = vmatmul.mubr.f32.gmra.mxu0 %v7108
        %v7273 = vpop.f32.mrf.mxu0
        %v7274 = vadd.f32 %v7098, %v7273
        %v7275 = vpop.f32.mrf.mxu0
        %7276 = vmatprep.mubr.f32.mxu0 0.0
        %7277 = vmatmul.mubr.f32.gmra.mxu0 %v7111
        %v7278 = vpop.f32.mrf.mxu0
        %v7279 = vadd.f32 %v7098, %v7278
        %v7280 = vpop.f32.mrf.mxu0
        %7281 = vmatprep.mubr.f32.mxu0 0.0
        %7282 = vmatmul.mubr.f32.gmra.mxu0 %v7114
        %v7283 = vpop.f32.mrf.mxu0
        %v7284 = vadd.f32 %v7098, %v7283
        %v7285 = vpop.f32.mrf.mxu0
        %7286 = vmatprep.mubr.f32.mxu0 0.0
        %7287 = vmatmul.mubr.f32.gmra.mxu0 %v7117
        %v7288 = vpop.f32.mrf.mxu0
        %v7289 = vadd.f32 %v7098, %v7288
        %v7290 = vpop.f32.mrf.mxu0
        %7291 = vmatprep.mubr.f32.mxu0 0.0
        %7292 = vmatmul.mubr.f32.gmra.mxu0 %v7120
        %v7293 = vpop.f32.mrf.mxu0
        %v7294 = vadd.f32 %v7098, %v7293
        %v7295 = vpop.f32.mrf.mxu0
        %7296 = vmatprep.mubr.f32.mxu0 0.0
        %7297 = vmatmul.mubr.f32.gmra.mxu0 %v7123
        %v7298 = vpop.f32.mrf.mxu0
        %v7299 = vadd.f32 %v7098, %v7298
        %v7300 = vpop.f32.mrf.mxu0
        %7301 = vmatprep.mubr.f32.mxu0 0.0
        %7302 = vmatmul.mubr.f32.gmra.mxu0 %v7126
        %v7303 = vpop.f32.mrf.mxu0
        %v7304 = vadd.f32 %v7098, %v7303
        %v7305 = vpop.f32.mrf.mxu0
        %7306 = vmatprep.mubr.f32.mxu0 0.0
        %7307 = vmatmul.mubr.f32.gmra.mxu0 %v7129
        %v7308 = vpop.f32.mrf.mxu0
        %v7309 = vadd.f32 %v7098, %v7308
        %v7310 = vpop.f32.mrf.mxu0
        %7311 = vmatprep.mubr.f32.mxu0 0.0
        %7312 = vmatmul.mubr.f32.gmra.mxu0 %v7132
        %v7313 = vpop.f32.mrf.mxu0
        %v7314 = vadd.f32 %v7098, %v7313
        %v7315 = vpop.f32.mrf.mxu0
        %7316 = vmatprep.mubr.f32.mxu0 0.0
        %7317 = vmatmul.mubr.f32.gmra.mxu0 %v7135
        %v7318 = vpop.f32.mrf.mxu0
        %v7319 = vadd.f32 %v7098, %v7318
        %v7320 = vpop.f32.mrf.mxu0
        %7321 = vmatprep.mubr.f32.mxu0 0.0
        %7322 = vmatmul.mubr.f32.gmra.mxu0 %v7138
        %v7323 = vpop.f32.mrf.mxu0
        %v7324 = vadd.f32 %v7098, %v7323
        %v7325 = vpop.f32.mrf.mxu0
        %7326 = vmatprep.mubr.f32.mxu0 0.0
        %7327 = vmatmul.mubr.f32.gmra.mxu0 %v7141
        %v7328 = vpop.f32.mrf.mxu0
        %v7329 = vadd.f32 %v7098, %v7328
        %v7330 = vpop.f32.mrf.mxu0
        %7331 = vmatprep.mubr.f32.mxu0 0.0
        %7332 = vmatmul.mubr.f32.gmra.mxu0 %v7144
        %v7333 = vpop.f32.mrf.mxu0
        %v7334 = vadd.f32 %v7098, %v7333
        %v7335 = vpop.f32.mrf.mxu0
        %7336 = vmatprep.mubr.f32.mxu0 0.0
        %7337 = vmatmul.mubr.f32.gmra.mxu0 %v7147
        %v7338 = vpop.f32.mrf.mxu0
        %v7339 = vadd.f32 %v7098, %v7338
        %v7340 = vpop.f32.mrf.mxu0
        %7341 = vmatprep.mubr.f32.mxu0 0.0
        %7342 = vmatmul.mubr.f32.gmra.mxu0 %v7150
        %v7343 = vpop.f32.mrf.mxu0
        %v7344 = vadd.f32 %v7098, %v7343
        %v7345 = vpop.f32.mrf.mxu0
        %7346 = vmatprep.mubr.f32.mxu0 0.0
        %7347 = vmatmul.mubr.f32.gmra.mxu0 %v7153
        %v7348 = vpop.f32.mrf.mxu0
        %v7349 = vadd.f32 %v7098, %v7348
        %v7350 = vpop.f32.mrf.mxu0
        %7351 = vmatprep.mubr.f32.mxu0 0.0
        %7352 = vmatmul.mubr.f32.gmra.mxu0 %v7156
        %v7353 = vpop.f32.mrf.mxu0
        %v7354 = vadd.f32 %v7098, %v7353
        %v7355 = vpop.f32.mrf.mxu0
        %7356 = vmatprep.mubr.f32.mxu0 0.0
        %7357 = vmatmul.mubr.f32.gmra.mxu0 %v7159
        %v7358 = vpop.f32.mrf.mxu0
        %v7359 = vadd.f32 %v7098, %v7358
        %v7360 = vpop.f32.mrf.mxu0
        %7361 = vmatprep.mubr.f32.mxu0 0.0
        %7362 = vmatmul.mubr.f32.gmra.mxu0 %v7162
        %v7363 = vpop.f32.mrf.mxu0
        %v7364 = vadd.f32 %v7098, %v7363
        %v7365 = vpop.f32.mrf.mxu0
        %7366 = vmatprep.mubr.f32.mxu0 0.0
        %7367 = vmatmul.mubr.f32.gmra.mxu0 %v7165
        %v7368 = vpop.f32.mrf.mxu0
        %v7369 = vadd.f32 %v7098, %v7368
        %v7370 = vpop.f32.mrf.mxu0
        %7371 = vmatprep.mubr.f32.mxu0 0.0
        %7372 = vmatmul.mubr.f32.gmra.mxu0 %v7168
        %v7373 = vpop.f32.mrf.mxu0
        %v7374 = vadd.f32 %v7098, %v7373
        %v7375 = vpop.f32.mrf.mxu0
        %7376 = vmatprep.mubr.f32.mxu0 0.0
        %7377 = vmatmul.mubr.f32.gmra.mxu0 %v7171
        %v7378 = vpop.f32.mrf.mxu0
        %v7379 = vadd.f32 %v7098, %v7378
        %v7380 = vpop.f32.mrf.mxu0
        %7381 = vmatprep.mubr.f32.mxu0 0.0
        %7382 = vmatmul.mubr.f32.gmra.mxu0 %v7174
        %v7383 = vpop.f32.mrf.mxu0
        %v7384 = vadd.f32 %v7098, %v7383
        %v7385 = vpop.f32.mrf.mxu0
        %7386 = vmatprep.mubr.f32.mxu0 0.0
        %7387 = vmatmul.mubr.f32.gmra.mxu0 %v7177
        %v7388 = vpop.f32.mrf.mxu0
        %v7389 = vadd.f32 %v7098, %v7388
        %v7390 = vpop.f32.mrf.mxu0
        %7391 = vmatprep.mubr.f32.mxu0 0.0
        %7392 = vmatmul.mubr.f32.gmra.mxu0 %v7180
        %v7393 = vpop.f32.mrf.mxu0
        %v7394 = vadd.f32 %v7098, %v7393
        %v7395 = vpop.f32.mrf.mxu0
        %7396 = vmatprep.mubr.f32.mxu0 0.0
        %7397 = vmatmul.mubr.f32.gmra.mxu0 %v7183
        %v7398 = vpop.f32.mrf.mxu0
        %v7399 = vadd.f32 %v7098, %v7398
        %v7400 = vpop.f32.mrf.mxu0
        %7401 = vmatprep.mubr.f32.mxu0 0.0
        %7402 = vmatmul.mubr.f32.gmra.mxu0 %v7186
        %v7403 = vpop.f32.mrf.mxu0
        %v7404 = vadd.f32 %v7098, %v7403
        %v7405 = vpop.f32.mrf.mxu0
        %7406 = vmatprep.mubr.f32.mxu0 0.0
        %7407 = vmatmul.mubr.f32.gmra.mxu0 %v7189
        %v7408 = vpop.f32.mrf.mxu0
        %v7409 = vadd.f32 %v7098, %v7408
        %v7410 = vpop.f32.mrf.mxu0
        %7411 = vmatprep.mubr.f32.mxu0 0.0
        %7412 = vmatmul.mubr.f32.gmra.mxu0 %v7192
        %v7413 = vpop.f32.mrf.mxu0
        %v7414 = vadd.f32 %v7098, %v7413
        %v7415 = vpop.f32.mrf.mxu0
        %7416 = vmatprep.mubr.f32.mxu0 0.0
        %7417 = vmatmul.mubr.f32.gmra.mxu0 %v7195
        %v7418 = vpop.f32.mrf.mxu0
        %v7419 = vadd.f32 %v7098, %v7418
        %v7420 = vpop.f32.mrf.mxu0
        %7421 = vdwg.mxu0
        %v7422 = vmax.f32 %v7264, 0.0
        %v7423 = vmax.f32 %v7269, 0.0
        %v7424 = vmax.f32 %v7274, 0.0
        %v7425 = vmax.f32 %v7279, 0.0
        %v7426 = vmax.f32 %v7284, 0.0
        %v7427 = vmax.f32 %v7289, 0.0
        %v7428 = vmax.f32 %v7294, 0.0
        %v7429 = vmax.f32 %v7299, 0.0
        %v7430 = vmax.f32 %v7304, 0.0
        %v7431 = vmax.f32 %v7309, 0.0
        %v7432 = vmax.f32 %v7314, 0.0
        %v7433 = vmax.f32 %v7319, 0.0
        %v7434 = vmax.f32 %v7324, 0.0
        %v7435 = vmax.f32 %v7329, 0.0
        %v7436 = vmax.f32 %v7334, 0.0
        %v7437 = vmax.f32 %v7339, 0.0
        %v7438 = vmax.f32 %v7344, 0.0
        %v7439 = vmax.f32 %v7349, 0.0
        %v7440 = vmax.f32 %v7354, 0.0
        %v7441 = vmax.f32 %v7359, 0.0
        %v7442 = vmax.f32 %v7364, 0.0
        %v7443 = vmax.f32 %v7369, 0.0
        %v7444 = vmax.f32 %v7374, 0.0
        %v7445 = vmax.f32 %v7379, 0.0
        %v7446 = vmax.f32 %v7384, 0.0
        %v7447 = vmax.f32 %v7389, 0.0
        %v7448 = vmax.f32 %v7394, 0.0
        %v7449 = vmax.f32 %v7399, 0.0
        %v7450 = vmax.f32 %v7404, 0.0
        %v7451 = vmax.f32 %v7409, 0.0
        %v7452 = vmax.f32 %v7414, 0.0
        %v7453 = vmax.f32 %v7419, 0.0
        %vm7454 = vcmask 15360
        %7455 = vst.msk [vmem:[%s551] sm:$0xff] %vm7454, %v7422
        %7456 = vst.msk [vmem:[%s551 + $0x8] sm:$0xff] %vm7454, %v7423
        %7457 = vst.msk [vmem:[%s551 + $0x10] sm:$0xff] %vm7454, %v7424
        %7458 = vst.msk [vmem:[%s551 + $0x18] sm:$0xff] %vm7454, %v7425
        %7459 = vst.msk [vmem:[%s551 + $0x20] sm:$0xff] %vm7454, %v7426
        %7460 = vst.msk [vmem:[%s551 + $0x28] sm:$0xff] %vm7454, %v7427
        %7461 = vst.msk [vmem:[%s551 + $0x30] sm:$0xff] %vm7454, %v7428
        %7462 = vst.msk [vmem:[%s551 + $0x38] sm:$0xff] %vm7454, %v7429
        %7463 = vst.msk [vmem:[%s551 + $0x40] sm:$0xff] %vm7454, %v7430
        %7464 = vst.msk [vmem:[%s551 + $0x48] sm:$0xff] %vm7454, %v7431
        %7465 = vst.msk [vmem:[%s551 + $0x50] sm:$0xff] %vm7454, %v7432
        %7466 = vst.msk [vmem:[%s551 + $0x58] sm:$0xff] %vm7454, %v7433
        %7467 = vst.msk [vmem:[%s551 + $0x60] sm:$0xff] %vm7454, %v7434
        %7468 = vst.msk [vmem:[%s551 + $0x68] sm:$0xff] %vm7454, %v7435
        %7469 = vst.msk [vmem:[%s551 + $0x70] sm:$0xff] %vm7454, %v7436
        %7470 = vst.msk [vmem:[%s551 + $0x78] sm:$0xff] %vm7454, %v7437
        %7471 = vst.msk [vmem:[%s551 + $0x80] sm:$0xff] %vm7454, %v7438
        %7472 = vst.msk [vmem:[%s551 + $0x88] sm:$0xff] %vm7454, %v7439
        %7473 = vst.msk [vmem:[%s551 + $0x90] sm:$0xff] %vm7454, %v7440
        %7474 = vst.msk [vmem:[%s551 + $0x98] sm:$0xff] %vm7454, %v7441
        %7475 = vst.msk [vmem:[%s551 + $0xa0] sm:$0xff] %vm7454, %v7442
        %7476 = vst.msk [vmem:[%s551 + $0xa8] sm:$0xff] %vm7454, %v7443
        %7477 = vst.msk [vmem:[%s551 + $0xb0] sm:$0xff] %vm7454, %v7444
        %7478 = vst.msk [vmem:[%s551 + $0xb8] sm:$0xff] %vm7454, %v7445
        %7479 = vst.msk [vmem:[%s551 + $0xc0] sm:$0xff] %vm7454, %v7446
        %7480 = vst.msk [vmem:[%s551 + $0xc8] sm:$0xff] %vm7454, %v7447
        %7481 = vst.msk [vmem:[%s551 + $0xd0] sm:$0xff] %vm7454, %v7448
        %7482 = vst.msk [vmem:[%s551 + $0xd8] sm:$0xff] %vm7454, %v7449
        %7483 = vst.msk [vmem:[%s551 + $0xe0] sm:$0xff] %vm7454, %v7450
        %7484 = vst.msk [vmem:[%s551 + $0xe8] sm:$0xff] %vm7454, %v7451
        %7485 = vst.msk [vmem:[%s551 + $0xf0] sm:$0xff] %vm7454, %v7452
        %7486 = vst.msk [vmem:[%s551 + $0xf8] sm:$0xff] %vm7454, %v7453
        %s7487 = smul.u32 32, %s31
        %p7488 = scmp.lt.s32.totalorder %s7487, 63
        %s7489 = scalar_select %p7488, %s7487, 63
        %s7490 = smul.addr %s7489, 8
        %s7491 = scalar_lea.vmem %s13, %s7490
        // Predicated region
        $region105: #{tpu_custom_call.1} parent=71 // pred_check
          %p7492 = pneg %p327
        $region106: #{tpu_custom_call.1} parent=71 // pred_check_branch
          %7494 = sbr.rel (%p7492) target = $region108
        $region107: #{tpu_custom_call.1} parent=71 // pred_region
          %s7495 = smul.u32 32, %s31
        $region108: #{tpu_custom_call.1} parent=71 // pred_fallthru
          _
      $region72: #{tpu_custom_call.1} parent=5 // pred_fallthru
        _
      %p7496 = scmp.le.s32.totalorder 2, %s26
      // Predicated region
      $region109: #{tpu_custom_call.1} parent=5 // pred_check
        %p7497 = pneg %p7496
      $region110: #{tpu_custom_call.1} parent=5 // pred_check_branch
        %7499 = sbr.rel (%p7497) target = $region112
      $region111: #{tpu_custom_call.1} parent=5 // pred_region
        %s7500 = ssub.s32 %s26, 2
        // Predicated region
        $region113: #{tpu_custom_call.1} parent=111 // pred_check
          %p7501 = pneg %p333
        $region114: #{tpu_custom_call.1} parent=111 // pred_check_branch
          %7503 = sbr.rel (%p7501) target = $region116
        $region115: #{tpu_custom_call.1} parent=111 // pred_region
          %s7504 = smul.u32 32, %s32
          %p7505 = scmp.lt.s32.totalorder %s7504, 63
          %s7506 = scalar_select %p7505, %s7504, 63
          %s7507 = smul.addr %s7506, 8
          %s7508 = scalar_lea.vmem %s13, %s7507
        $region116: #{tpu_custom_call.1} parent=111 // pred_fallthru
          _
      $region112: #{tpu_custom_call.1} parent=5 // pred_fallthru
        _
    $region6: #{tpu_custom_call.1} parent=1 // loop_footer
      %s30 = sadd.s32 1, %s26
    $region7: #{tpu_custom_call.1} parent=1 // loop_footer_branch
      %25 = sbr.rel target = $region3
    $region8: #{tpu_custom_call.1} parent=1 // loop_exit
      _
    %7509 = vsyncpa [#allocation3], 1
    %s7510 = scalar_lea.sflag [#allocation3], 1
    %7511 = vsyncpa %s7510, 1
    %7512 = vsyncpa [#allocation5], 1
    %7513 = vsyncpa [#allocation8], 1
    %7514 = vsyncpa [#allocation11], 1
    %7515 = vsyncpa [#allocation14], 1

</llo_original>
